<compile_context>
chip_gen: v6e
topology: v6e:2x2x1
jax: 0.10.0
libtpu: 0.0.40
codegen_flags: <defaults>
</compile_context>

<pallas_src>
import numpy as np
import jax
import jax.numpy as jnp
from jax.experimental import pallas as pl
from jax.experimental.pallas import tpu as pltpu

# ----------------------------- model hyper-params -----------------------------
VOCAB = 100          # vocab_size
EMB = 32             # embedding_size
SEQ = 52             # sequence length -> (52-2)//2 + (52-4)//2 = 49 per branch, *2 = 98
KFUSE = 5            # fused conv tap count (k=3 taps are zero-padded to 5)
LPAD = SEQ + 2       # sequence padded so the fused conv has Lo = 50
CONV_CH = 64
FC1_IN = CONV_CH * 98    # 6272, as hard-coded in the PyTorch module
FC1_OUT = 100
FC1_PAD = 128            # fc1 output padded to a full lane width (zeros beyond 100)
FC2_OUT = 64
POOL_T = (LPAD - KFUSE + 1) // 2   # 25 pooled time steps per fused branch


# --------------------------------- kernel -------------------------------------
def multicnn_kernel(emb_ref, semb_ref,
                    wca_ref, bca_ref, wcb_ref, bcb_ref,
                    fc1wa_ref, fc1wb_ref, fc1b_ref,
                    fc2w_ref, fc2b_ref, fc3w_ref, fc3b_ref,
                    out_ref):

    def branch_features(x, w, b):
        # x: (TB, LPAD, E) bf16 ; w: (5*E, 2C) = (160, 128) bf16 ; b: (1, 128) f32
        TB, Lp, E = x.shape
        Lo = Lp - KFUSE + 1                       # 50
        C2 = 2 * CONV_CH                          # 128 fused output channels
        # Fused im2col: lane-concat the 5 shifted views -> one MXU matmul with K = 5*E.
        patches = jnp.concatenate([x[:, dk:dk + Lo, :] for dk in range(KFUSE)], axis=-1)
        patches = patches.reshape(TB * Lo, KFUSE * E)                       # (TB*50, 160) bf16
        acc = jnp.dot(patches, w, preferred_element_type=jnp.float32)       # (TB*50, 128) f32
        acc = jnp.maximum(acc + b, 0.0)                                     # bias + ReLU (f32 VPU)
        # MaxPool1d(kernel=2, stride=2): merge adjacent time rows into lanes, compare halves.
        pairs = acc.reshape(TB, Lo // 2, 2 * C2)                            # (TB, 25, 256)
        pooled = jnp.maximum(pairs[:, :, :C2], pairs[:, :, C2:])            # (TB, 25, 128)
        # Time-major flatten (t*128 + c); fc1 weight rows were permuted to match in
        # make_params (and zeroed for the k=5 half's invalid pooled row 24).
        return pooled.astype(jnp.bfloat16).reshape(TB, (Lo // 2) * C2)      # (TB, 3200) bf16

    # Branch A (sentence): conv -> pool -> flatten -> accumulate straight into h1.
    fa = branch_features(emb_ref[...], wca_ref[...], bca_ref[...])
    h1 = jnp.dot(fa, fc1wa_ref[...], preferred_element_type=jnp.float32) + fc1b_ref[...]
    # Branch B (shortest path): branch A activations are dead by now (lower VMEM peak).
    fb = branch_features(semb_ref[...], wcb_ref[...], bcb_ref[...])
    h1 = h1 + jnp.dot(fb, fc1wb_ref[...], preferred_element_type=jnp.float32)
    h1 = jnp.maximum(h1, 0.0)                                               # ReLU(fc1), (TB, 128)

    h2 = jnp.maximum(
        jnp.dot(h1.astype(jnp.bfloat16), fc2w_ref[...],
                preferred_element_type=jnp.float32) + fc2b_ref[...], 0.0)   # (TB, 64)

    # fc3 has N=1: VPU multiply + lane reduction instead of a 1-wide MXU matmul.
    h3 = jnp.sum(h2 * fc3w_ref[...], axis=-1, keepdims=True) + fc3b_ref[...]  # (TB, 1)
    out_ref[...] = jax.nn.sigmoid(h3)


# --------------------------------- wrapper -------------------------------------
def _pick_batch_tile(B):
    if B <= 8:
        return B
    # >= 2 grid steps once the batch is big enough (both v7x TensorCores, pipelined DMA),
    # tile a multiple of 8 sublanes, capped at 128 rows to stay well inside v7x's 64 MiB VMEM.
    tb = max(8, (((B + 1) // 2) // 8) * 8)
    return min(tb, 128)


def multicnn_forward(params, sentence, features, shortest):
    # `features` is accepted but unused, exactly as in the PyTorch forward.
    del features
    B = sentence.shape[0]

    # Embedding gathers (XLA glue, not the hot path); cast to bf16 and pad the sequence by
    # 2 trailing zeros so the fused k=3/k=5 conv sees Lo = 50 for both halves.
    emb = jnp.take(params["emb_w"], sentence, axis=0).astype(jnp.bfloat16)    # (B, 52, E)
    semb = jnp.take(params["s_emb_w"], shortest, axis=0).astype(jnp.bfloat16)
    pad = LPAD - SEQ
    emb = jnp.pad(emb, ((0, 0), (0, pad), (0, 0)))                            # (B, 54, E)
    semb = jnp.pad(semb, ((0, 0), (0, pad), (0, 0)))

    kernel_inputs = (
        emb, semb,
        params["wca"], params["bca"], params["wcb"], params["bcb"],
        params["fc1wa"], params["fc1wb"], params["fc1b"],
        params["fc2w"], params["fc2b"], params["fc3w"], params["fc3b"],
    )

    TB = _pick_batch_tile(B)
    grid = (pl.cdiv(B, TB),)

    def resident_spec(arr):
        nd = arr.ndim
        return pl.BlockSpec(arr.shape, lambda i, _nd=nd: (0,) * _nd)

    in_specs = [pl.BlockSpec((TB, LPAD, EMB), lambda i: (i, 0, 0)),
                pl.BlockSpec((TB, LPAD, EMB), lambda i: (i, 0, 0))]
    in_specs += [resident_spec(a) for a in kernel_inputs[2:]]
    out_specs = pl.BlockSpec((TB, 1), lambda i: (i, 0))

    # Rough cost estimate so XLA schedules the gathers + kernel sensibly.
    lo = LPAD - KFUSE + 1
    per_sample = (2 * (2 * lo * KFUSE * EMB * 2 * CONV_CH)          # two fused conv matmuls
                  + 2 * (2 * POOL_T * 2 * CONV_CH * FC1_PAD)        # two fc1 segment matmuls
                  + 2 * FC1_PAD * FC2_OUT + 2 * FC2_OUT)
    bytes_accessed = sum(int(np.prod(a.shape)) * a.dtype.itemsize for a in kernel_inputs) + B * 4
    cost = pl.CostEstimate(flops=int(B * per_sample), transcendentals=int(2 * B),
                           bytes_accessed=int(bytes_accessed))

    return pl.pallas_call(
        multicnn_kernel,
        out_shape=jax.ShapeDtypeStruct((B, 1), jnp.float32),
        grid=grid,
        in_specs=in_specs,
        out_specs=out_specs,
        compiler_params=pltpu.CompilerParams(
            dimension_semantics=("parallel",),
            vmem_limit_bytes=48 * 1024 * 1024),   # > v5e/v6e defaults, < v7x 64 MiB physical
        cost_estimate=cost,
    )(*kernel_inputs)


# ----------------------------- parameter creation ------------------------------
def make_params(seed=0):
    """Returns (kernel_params, torch_layout_params)."""
    rng = np.random.default_rng(seed)

    def randn(*shape, scale=0.05):
        return (rng.standard_normal(shape) * scale).astype(np.float32)

    # weights_matrix (shared init for both embedding tables, as in __init__)
    weights_matrix = randn(VOCAB, EMB, scale=1.0)

    # ---- torch-layout parameters (used by the pure-JAX reference) ----
    wc1_t, wc2_t = randn(CONV_CH, EMB, 3), randn(CONV_CH, EMB, 5)
    wsc1_t, wsc2_t = randn(CONV_CH, EMB, 3), randn(CONV_CH, EMB, 5)
    bc1_t, bc2_t = randn(CONV_CH), randn(CONV_CH)
    bsc1_t, bsc2_t = randn(CONV_CH), randn(CONV_CH)
    fc1w_t, fc1b_t = randn(FC1_OUT, FC1_IN), randn(FC1_OUT)
    fc2w_t, fc2b_t = randn(FC2_OUT, FC1_OUT), randn(FC2_OUT)
    fc3w_t, fc3b_t = randn(1, FC2_OUT), randn(1)

    f32 = lambda a: jnp.asarray(a, dtype=jnp.float32)
    torch_params = {
        "emb_w": f32(weights_matrix), "s_emb_w": f32(weights_matrix.copy()),
        "wc1": f32(wc1_t), "bc1": f32(bc1_t), "wc2": f32(wc2_t), "bc2": f32(bc2_t),
        "wsc1": f32(wsc1_t), "bsc1": f32(bsc1_t), "wsc2": f32(wsc2_t), "bsc2": f32(bsc2_t),
        "fc1w": f32(fc1w_t), "fc1b": f32(fc1b_t),
        "fc2w": f32(fc2w_t), "fc2b": f32(fc2b_t),
        "fc3w": f32(fc3w_t), "fc3b": f32(fc3b_t),
    }

    # ---- kernel-layout parameters ----
    def fuse_conv_pair(w3, w5, b3, b5):
        # torch (C_out, C_in, k) -> taps-major (k, C_in, C_out); pad k=3 taps with zeros to 5.
        w3p = np.zeros((KFUSE, EMB, CONV_CH), np.float32)
        w3p[:3] = np.ascontiguousarray(w3.transpose(2, 1, 0))
        w5p = np.ascontiguousarray(w5.transpose(2, 1, 0))
        w = np.concatenate([w3p, w5p], axis=-1).reshape(KFUSE * EMB, 2 * CONV_CH)  # (160, 128)
        b = np.concatenate([b3, b5])[None, :]                                      # (1, 128)
        return w, b

    wca, bca = fuse_conv_pair(wc1_t, wc2_t, bc1_t, bc2_t)      # sentence branch
    wcb, bcb = fuse_conv_pair(wsc1_t, wsc2_t, bsc1_t, bsc2_t)  # shortest-path branch

    # fc1: torch cat order flat1|flat2|short_flat1|short_flat2, each flattened channel-major
    # (c*Lp + t). The kernel flattens each fused branch time-major as (t*128 + cc) with
    # cc<64 -> k=3 channels (Lp=25 valid rows) and cc>=64 -> k=5 channels (Lp=24 valid rows;
    # pooled row 24 is built from padded positions and gets ZERO weights).
    fc1wT = fc1w_t.T                                           # (6272, 100)

    def fc1_segment(base3, base5):
        col = np.full((POOL_T, 2 * CONV_CH), -1, np.int64)
        col[:, :CONV_CH] = base3 + np.arange(CONV_CH)[None, :] * 25 + np.arange(25)[:, None]
        col[:24, CONV_CH:] = base5 + np.arange(CONV_CH)[None, :] * 24 + np.arange(24)[:, None]
        col = col.reshape(-1)
        seg = np.zeros((col.size, FC1_PAD), np.float32)        # (3200, 128), padded out cols = 0
        valid = col >= 0
        seg[valid, :FC1_OUT] = fc1wT[col[valid], :]
        return seg

    fc1wa = fc1_segment(0, 1600)          # flat1 @ 0, flat2 @ 1600
    fc1wb = fc1_segment(3136, 4736)       # short_flat1 @ 3136, short_flat2 @ 4736
    fc1b = np.zeros((1, FC1_PAD), np.float32)
    fc1b[0, :FC1_OUT] = fc1b_t

    # fc2: pad contraction rows 100 -> 128 with zeros so padded h1 lanes cannot leak through.
    fc2w = np.zeros((FC1_PAD, FC2_OUT), np.float32)
    fc2w[:FC1_OUT] = fc2w_t.T
    fc2b = fc2b_t[None, :]
    fc3w = fc3w_t                         # (1, 64), used on the VPU
    fc3b = fc3b_t[None, :]                # (1, 1)

    bf16 = lambda a: jnp.asarray(a).astype(jnp.bfloat16)       # MXU weights only
    kernel_params = {
        "emb_w": f32(weights_matrix), "s_emb_w": f32(weights_matrix.copy()),
        "wca": bf16(wca), "bca": f32(bca), "wcb": bf16(wcb), "bcb": f32(bcb),
        "fc1wa": bf16(fc1wa), "fc1wb": bf16(fc1wb), "fc1b": f32(fc1b),
        "fc2w": bf16(fc2w), "fc2b": f32(fc2b),
        "fc3w": f32(fc3w), "fc3b": f32(fc3b),
    }
    return kernel_params, torch_params


# ------------------------- pure-JAX f32 reference (spec) -------------------------
def multicnn_ref(tp, sentence, shortest):
    emb = jnp.take(tp["emb_w"], sentence, axis=0)      # (B, 52, E)
    semb = jnp.take(tp["s_emb_w"], shortest, axis=0)

    def branch(x, w, b, k):
        B, L, E = x.shape
        Lo = L - k + 1
        patches = jnp.stack([x[:, d:d + Lo, :] for d in range(k)], axis=2)     # (B, Lo, k, E)
        out = jnp.einsum("btke,cek->btc", patches, w) + b[None, None, :]
        out = jax.nn.relu(out)
        Lp = Lo // 2
        pooled = jnp.maximum(out[:, 0:2 * Lp:2, :], out[:, 1:2 * Lp:2, :])     # (B, Lp, C)
        return jnp.transpose(pooled, (0, 2, 1)).reshape(B, -1)                 # channel-major

    f1 = branch(emb, tp["wc1"], tp["bc1"], 3)
    f2 = branch(emb, tp["wc2"], tp["bc2"], 5)
    f3 = branch(semb, tp["wsc1"], tp["bsc1"], 3)
    f4 = branch(semb, tp["wsc2"], tp["bsc2"], 5)
    cat = jnp.concatenate([f1, f2, f3, f4], axis=1)
    h1 = jax.nn.relu(cat @ tp["fc1w"].T + tp["fc1b"])
    h2 = jax.nn.relu(h1 @ tp["fc2w"].T + tp["fc2b"])
    return jax.nn.sigmoid(h2 @ tp["fc3w"].T + tp["fc3b"])


# ----------------------------------- main ---------------------------------------
if __name__ == "__main__":
    B = 2
    kparams, tparams = make_params(seed=0)

    key = jax.random.PRNGKey(0)
    k1, k2, k3 = jax.random.split(key, 3)
    sentence = jax.random.randint(k1, (B, SEQ), 0, VOCAB, dtype=jnp.int32)
    shortest = jax.random.randint(k2, (B, SEQ), 0, VOCAB, dtype=jnp.int32)
    features = jax.random.normal(k3, (B, 8), dtype=jnp.float32)  # unused, as in torch forward

    out = jax.jit(multicnn_forward)(kparams, sentence, features, shortest)
    out = jax.block_until_ready(out)

    assert out.shape == (B, 1), out.shape
    assert bool(jnp.all(jnp.isfinite(out)))
    assert bool(jnp.all((out >= 0.0) & (out <= 1.0)))            # sigmoid range sanity check

    # bf16 MXU path vs. pure-f32 reference: relaxed tolerance.
    ref = jax.block_until_ready(multicnn_ref(tparams, sentence, shortest))
    np.testing.assert_allclose(np.asarray(out), np.asarray(ref), rtol=5e-2, atol=5e-2)

    print("KERNEL_OK")
</pallas_src>

<mosaic_0001>
module attributes {stable_mosaic.version = 11 : i64} {
  func.func @multicnn_kernel(%arg0: i32, %arg1: memref<2x54x32xbf16, #tpu.memory_space<vmem>>, %arg2: memref<2x54x32xbf16, #tpu.memory_space<vmem>>, %arg3: memref<160x128xbf16, #tpu.memory_space<vmem>>, %arg4: memref<1x128xf32, #tpu.memory_space<vmem>>, %arg5: memref<160x128xbf16, #tpu.memory_space<vmem>>, %arg6: memref<1x128xf32, #tpu.memory_space<vmem>>, %arg7: memref<3200x128xbf16, #tpu.memory_space<vmem>>, %arg8: memref<3200x128xbf16, #tpu.memory_space<vmem>>, %arg9: memref<1x128xf32, #tpu.memory_space<vmem>>, %arg10: memref<128x64xbf16, #tpu.memory_space<vmem>>, %arg11: memref<1x64xf32, #tpu.memory_space<vmem>>, %arg12: memref<1x64xf32, #tpu.memory_space<vmem>>, %arg13: memref<1x1xf32, #tpu.memory_space<vmem>>, %arg14: memref<2x1xf32, #tpu.memory_space<vmem>>) attributes {dimension_semantics = [#tpu.dimension_semantics<parallel>], iteration_bounds = array<i64: 1>, scalar_prefetch = 0 : i64, scratch_operands = 0 : i64, tpu.core_type = #tpu.core_type<tc>, window_params = [{transform_indices = @transform_0, window_bounds = array<i64: 2, 54, 32>}, {transform_indices = @transform_1, window_bounds = array<i64: 2, 54, 32>}, {pipeline_mode = #tpu.pipeline_mode<synchronous>, transform_indices = @transform_2, window_bounds = array<i64: 160, 128>}, {pipeline_mode = #tpu.pipeline_mode<synchronous>, transform_indices = @transform_3, window_bounds = array<i64: 1, 128>}, {pipeline_mode = #tpu.pipeline_mode<synchronous>, transform_indices = @transform_4, window_bounds = array<i64: 160, 128>}, {pipeline_mode = #tpu.pipeline_mode<synchronous>, transform_indices = @transform_5, window_bounds = array<i64: 1, 128>}, {pipeline_mode = #tpu.pipeline_mode<synchronous>, transform_indices = @transform_6, window_bounds = array<i64: 3200, 128>}, {pipeline_mode = #tpu.pipeline_mode<synchronous>, transform_indices = @transform_7, window_bounds = array<i64: 3200, 128>}, {pipeline_mode = #tpu.pipeline_mode<synchronous>, transform_indices = @transform_8, window_bounds = array<i64: 1, 128>}, {pipeline_mode = #tpu.pipeline_mode<synchronous>, transform_indices = @transform_9, window_bounds = array<i64: 128, 64>}, {pipeline_mode = #tpu.pipeline_mode<synchronous>, transform_indices = @transform_10, window_bounds = array<i64: 1, 64>}, {pipeline_mode = #tpu.pipeline_mode<synchronous>, transform_indices = @transform_11, window_bounds = array<i64: 1, 64>}, {pipeline_mode = #tpu.pipeline_mode<synchronous>, transform_indices = @transform_12, window_bounds = array<i64: 1, 1>}, {transform_indices = @transform_13, window_bounds = array<i64: 2, 1>}]} {
    %c0 = arith.constant 0 : index
    %c0_0 = arith.constant 0 : index
    %c0_1 = arith.constant 0 : index
    %0 = vector.load %arg1[%c0, %c0_0, %c0_1] : memref<2x54x32xbf16, #tpu.memory_space<vmem>>, vector<2x54x32xbf16>
    %c0_2 = arith.constant 0 : index
    %c0_3 = arith.constant 0 : index
    %1 = vector.load %arg3[%c0_2, %c0_3] : memref<160x128xbf16, #tpu.memory_space<vmem>>, vector<160x128xbf16>
    %c0_4 = arith.constant 0 : index
    %c0_5 = arith.constant 0 : index
    %2 = vector.load %arg4[%c0_4, %c0_5] : memref<1x128xf32, #tpu.memory_space<vmem>>, vector<1x128xf32>
    %3 = vector.extract_strided_slice %0 {offsets = [0, 0, 0], sizes = [2, 50, 32], strides = [1, 1, 1]} : vector<2x54x32xbf16> to vector<2x50x32xbf16>
    %4 = vector.extract_strided_slice %0 {offsets = [0, 1, 0], sizes = [2, 50, 32], strides = [1, 1, 1]} : vector<2x54x32xbf16> to vector<2x50x32xbf16>
    %5 = vector.extract_strided_slice %0 {offsets = [0, 2, 0], sizes = [2, 50, 32], strides = [1, 1, 1]} : vector<2x54x32xbf16> to vector<2x50x32xbf16>
    %6 = vector.extract_strided_slice %0 {offsets = [0, 3, 0], sizes = [2, 50, 32], strides = [1, 1, 1]} : vector<2x54x32xbf16> to vector<2x50x32xbf16>
    %7 = vector.extract_strided_slice %0 {offsets = [0, 4, 0], sizes = [2, 50, 32], strides = [1, 1, 1]} : vector<2x54x32xbf16> to vector<2x50x32xbf16>
    %8 = tpu.concatenate %3, %4, %5, %6, %7 in 2 : vector<2x50x32xbf16>, vector<2x50x32xbf16>, vector<2x50x32xbf16>, vector<2x50x32xbf16>, vector<2x50x32xbf16> -> vector<2x50x160xbf16>
    %9 = vector.shape_cast %8 : vector<2x50x160xbf16> to vector<100x160xbf16>
    %cst = arith.constant dense<0.000000e+00> : vector<100x128xf32>
    %10 = tpu.matmul %9, %1, %cst {dimension_numbers = #tpu.dot_dimension_numbers<[1], [0], [0], [1], [0, 0, 1, 1], [], []>} : vector<100x160xbf16>, vector<160x128xbf16>, vector<100x128xf32> -> vector<100x128xf32>
    %11 = vector.broadcast %2 : vector<1x128xf32> to vector<100x128xf32>
    %12 = arith.addf %10, %11 : vector<100x128xf32>
    %cst_6 = arith.constant 0.000000e+00 : f32
    %13 = vector.broadcast %cst_6 : f32 to vector<100x128xf32>
    %14 = arith.maximumf %12, %13 : vector<100x128xf32>
    %15 = vector.shape_cast %14 : vector<100x128xf32> to vector<2x25x256xf32>
    %16 = vector.extract_strided_slice %15 {offsets = [0, 0, 0], sizes = [2, 25, 128], strides = [1, 1, 1]} : vector<2x25x256xf32> to vector<2x25x128xf32>
    %17 = vector.extract_strided_slice %15 {offsets = [0, 0, 128], sizes = [2, 25, 128], strides = [1, 1, 1]} : vector<2x25x256xf32> to vector<2x25x128xf32>
    %18 = arith.maximumf %16, %17 : vector<2x25x128xf32>
    %19 = arith.truncf %18 : vector<2x25x128xf32> to vector<2x25x128xbf16>
    %20 = vector.shape_cast %19 : vector<2x25x128xbf16> to vector<2x3200xbf16>
    %c0_7 = arith.constant 0 : index
    %c0_8 = arith.constant 0 : index
    %21 = vector.load %arg7[%c0_7, %c0_8] : memref<3200x128xbf16, #tpu.memory_space<vmem>>, vector<3200x128xbf16>
    %cst_9 = arith.constant dense<0.000000e+00> : vector<2x128xf32>
    %22 = tpu.matmul %20, %21, %cst_9 {dimension_numbers = #tpu.dot_dimension_numbers<[1], [0], [0], [1], [0, 0, 1, 1], [], []>} : vector<2x3200xbf16>, vector<3200x128xbf16>, vector<2x128xf32> -> vector<2x128xf32>
    %c0_10 = arith.constant 0 : index
    %c0_11 = arith.constant 0 : index
    %23 = vector.load %arg9[%c0_10, %c0_11] : memref<1x128xf32, #tpu.memory_space<vmem>>, vector<1x128xf32>
    %24 = vector.broadcast %23 : vector<1x128xf32> to vector<2x128xf32>
    %25 = arith.addf %22, %24 : vector<2x128xf32>
    %c0_12 = arith.constant 0 : index
    %c0_13 = arith.constant 0 : index
    %c0_14 = arith.constant 0 : index
    %26 = vector.load %arg2[%c0_12, %c0_13, %c0_14] : memref<2x54x32xbf16, #tpu.memory_space<vmem>>, vector<2x54x32xbf16>
    %c0_15 = arith.constant 0 : index
    %c0_16 = arith.constant 0 : index
    %27 = vector.load %arg5[%c0_15, %c0_16] : memref<160x128xbf16, #tpu.memory_space<vmem>>, vector<160x128xbf16>
    %c0_17 = arith.constant 0 : index
    %c0_18 = arith.constant 0 : index
    %28 = vector.load %arg6[%c0_17, %c0_18] : memref<1x128xf32, #tpu.memory_space<vmem>>, vector<1x128xf32>
    %29 = vector.extract_strided_slice %26 {offsets = [0, 0, 0], sizes = [2, 50, 32], strides = [1, 1, 1]} : vector<2x54x32xbf16> to vector<2x50x32xbf16>
    %30 = vector.extract_strided_slice %26 {offsets = [0, 1, 0], sizes = [2, 50, 32], strides = [1, 1, 1]} : vector<2x54x32xbf16> to vector<2x50x32xbf16>
    %31 = vector.extract_strided_slice %26 {offsets = [0, 2, 0], sizes = [2, 50, 32], strides = [1, 1, 1]} : vector<2x54x32xbf16> to vector<2x50x32xbf16>
    %32 = vector.extract_strided_slice %26 {offsets = [0, 3, 0], sizes = [2, 50, 32], strides = [1, 1, 1]} : vector<2x54x32xbf16> to vector<2x50x32xbf16>
    %33 = vector.extract_strided_slice %26 {offsets = [0, 4, 0], sizes = [2, 50, 32], strides = [1, 1, 1]} : vector<2x54x32xbf16> to vector<2x50x32xbf16>
    %34 = tpu.concatenate %29, %30, %31, %32, %33 in 2 : vector<2x50x32xbf16>, vector<2x50x32xbf16>, vector<2x50x32xbf16>, vector<2x50x32xbf16>, vector<2x50x32xbf16> -> vector<2x50x160xbf16>
    %35 = vector.shape_cast %34 : vector<2x50x160xbf16> to vector<100x160xbf16>
    %cst_19 = arith.constant dense<0.000000e+00> : vector<100x128xf32>
    %36 = tpu.matmul %35, %27, %cst_19 {dimension_numbers = #tpu.dot_dimension_numbers<[1], [0], [0], [1], [0, 0, 1, 1], [], []>} : vector<100x160xbf16>, vector<160x128xbf16>, vector<100x128xf32> -> vector<100x128xf32>
    %37 = vector.broadcast %28 : vector<1x128xf32> to vector<100x128xf32>
    %38 = arith.addf %36, %37 : vector<100x128xf32>
    %cst_20 = arith.constant 0.000000e+00 : f32
    %39 = vector.broadcast %cst_20 : f32 to vector<100x128xf32>
    %40 = arith.maximumf %38, %39 : vector<100x128xf32>
    %41 = vector.shape_cast %40 : vector<100x128xf32> to vector<2x25x256xf32>
    %42 = vector.extract_strided_slice %41 {offsets = [0, 0, 0], sizes = [2, 25, 128], strides = [1, 1, 1]} : vector<2x25x256xf32> to vector<2x25x128xf32>
    %43 = vector.extract_strided_slice %41 {offsets = [0, 0, 128], sizes = [2, 25, 128], strides = [1, 1, 1]} : vector<2x25x256xf32> to vector<2x25x128xf32>
    %44 = arith.maximumf %42, %43 : vector<2x25x128xf32>
    %45 = arith.truncf %44 : vector<2x25x128xf32> to vector<2x25x128xbf16>
    %46 = vector.shape_cast %45 : vector<2x25x128xbf16> to vector<2x3200xbf16>
    %c0_21 = arith.constant 0 : index
    %c0_22 = arith.constant 0 : index
    %47 = vector.load %arg8[%c0_21, %c0_22] : memref<3200x128xbf16, #tpu.memory_space<vmem>>, vector<3200x128xbf16>
    %cst_23 = arith.constant dense<0.000000e+00> : vector<2x128xf32>
    %48 = tpu.matmul %46, %47, %cst_23 {dimension_numbers = #tpu.dot_dimension_numbers<[1], [0], [0], [1], [0, 0, 1, 1], [], []>} : vector<2x3200xbf16>, vector<3200x128xbf16>, vector<2x128xf32> -> vector<2x128xf32>
    %49 = arith.addf %25, %48 : vector<2x128xf32>
    %cst_24 = arith.constant 0.000000e+00 : f32
    %50 = vector.broadcast %cst_24 : f32 to vector<2x128xf32>
    %51 = arith.maximumf %49, %50 : vector<2x128xf32>
    %52 = arith.truncf %51 : vector<2x128xf32> to vector<2x128xbf16>
    %c0_25 = arith.constant 0 : index
    %c0_26 = arith.constant 0 : index
    %53 = vector.load %arg10[%c0_25, %c0_26] : memref<128x64xbf16, #tpu.memory_space<vmem>>, vector<128x64xbf16>
    %cst_27 = arith.constant dense<0.000000e+00> : vector<2x64xf32>
    %54 = tpu.matmul %52, %53, %cst_27 {dimension_numbers = #tpu.dot_dimension_numbers<[1], [0], [0], [1], [0, 0, 1, 1], [], []>} : vector<2x128xbf16>, vector<128x64xbf16>, vector<2x64xf32> -> vector<2x64xf32>
    %c0_28 = arith.constant 0 : index
    %c0_29 = arith.constant 0 : index
    %55 = vector.load %arg11[%c0_28, %c0_29] : memref<1x64xf32, #tpu.memory_space<vmem>>, vector<1x64xf32>
    %56 = vector.broadcast %55 : vector<1x64xf32> to vector<2x64xf32>
    %57 = arith.addf %54, %56 : vector<2x64xf32>
    %cst_30 = arith.constant 0.000000e+00 : f32
    %58 = vector.broadcast %cst_30 : f32 to vector<2x64xf32>
    %59 = arith.maximumf %57, %58 : vector<2x64xf32>
    %c0_31 = arith.constant 0 : index
    %c0_32 = arith.constant 0 : index
    %60 = vector.load %arg12[%c0_31, %c0_32] : memref<1x64xf32, #tpu.memory_space<vmem>>, vector<1x64xf32>
    %61 = vector.broadcast %60 : vector<1x64xf32> to vector<2x64xf32>
    %62 = arith.mulf %59, %61 : vector<2x64xf32>
    %cst_33 = arith.constant dense<0.000000e+00> : vector<2xf32>
    %63 = vector.multi_reduction <add>, %62, %cst_33 [1] : vector<2x64xf32> to vector<2xf32>
    %64 = vector.shape_cast %63 : vector<2xf32> to vector<2x1xf32>
    %c0_34 = arith.constant 0 : index
    %c0_35 = arith.constant 0 : index
    %65 = vector.load %arg13[%c0_34, %c0_35] : memref<1x1xf32, #tpu.memory_space<vmem>>, vector<1x1xf32>
    %66 = vector.broadcast %65 : vector<1x1xf32> to vector<2x1xf32>
    %67 = arith.addf %64, %66 : vector<2x1xf32>
    %68 = arith.negf %67 : vector<2x1xf32>
    %69 = math.exp %68 : vector<2x1xf32>
    %cst_36 = arith.constant 1.000000e+00 : f32
    %70 = vector.broadcast %cst_36 : f32 to vector<2x1xf32>
    %71 = arith.addf %70, %69 : vector<2x1xf32>
    %72 = arith.divf %70, %71 : vector<2x1xf32>
    %c0_37 = arith.constant 0 : index
    %c0_38 = arith.constant 0 : index
    %73 = vector.load %arg14[%c0_37, %c0_38] : memref<2x1xf32, #tpu.memory_space<vmem>>, vector<2x1xf32>
    tpu.vector_store %arg14[%c0_37, %c0_38], %72 {strides = array<i32>} : memref<2x1xf32, #tpu.memory_space<vmem>>, vector<2x1xf32>,
    return
  }
  func.func @transform_0(%arg0: i32) -> (i32, i32, i32) {
    %c0_i32 = arith.constant 0 : i32
    %c0_i32_0 = arith.constant 0 : i32
    %c0_i32_1 = arith.constant 0 : i32
    return %arg0, %c0_i32, %c0_i32_0 : i32, i32, i32
  }
  func.func @transform_1(%arg0: i32) -> (i32, i32, i32) {
    %c0_i32 = arith.constant 0 : i32
    %c0_i32_0 = arith.constant 0 : i32
    %c0_i32_1 = arith.constant 0 : i32
    return %arg0, %c0_i32, %c0_i32_0 : i32, i32, i32
  }
  func.func @transform_2(%arg0: i32) -> (i32, i32) {
    %c0_i32 = arith.constant 0 : i32
    %c0_i32_0 = arith.constant 0 : i32
    %c0_i32_1 = arith.constant 0 : i32
    return %c0_i32, %c0_i32_0 : i32, i32
  }
  func.func @transform_3(%arg0: i32) -> (i32, i32) {
    %c0_i32 = arith.constant 0 : i32
    %c0_i32_0 = arith.constant 0 : i32
    %c0_i32_1 = arith.constant 0 : i32
    return %c0_i32, %c0_i32_0 : i32, i32
  }
  func.func @transform_4(%arg0: i32) -> (i32, i32) {
    %c0_i32 = arith.constant 0 : i32
    %c0_i32_0 = arith.constant 0 : i32
    %c0_i32_1 = arith.constant 0 : i32
    return %c0_i32, %c0_i32_0 : i32, i32
  }
  func.func @transform_5(%arg0: i32) -> (i32, i32) {
    %c0_i32 = arith.constant 0 : i32
    %c0_i32_0 = arith.constant 0 : i32
    %c0_i32_1 = arith.constant 0 : i32
    return %c0_i32, %c0_i32_0 : i32, i32
  }
  func.func @transform_6(%arg0: i32) -> (i32, i32) {
    %c0_i32 = arith.constant 0 : i32
    %c0_i32_0 = arith.constant 0 : i32
    %c0_i32_1 = arith.constant 0 : i32
    return %c0_i32, %c0_i32_0 : i32, i32
  }
  func.func @transform_7(%arg0: i32) -> (i32, i32) {
    %c0_i32 = arith.constant 0 : i32
    %c0_i32_0 = arith.constant 0 : i32
    %c0_i32_1 = arith.constant 0 : i32
    return %c0_i32, %c0_i32_0 : i32, i32
  }
  func.func @transform_8(%arg0: i32) -> (i32, i32) {
    %c0_i32 = arith.constant 0 : i32
    %c0_i32_0 = arith.constant 0 : i32
    %c0_i32_1 = arith.constant 0 : i32
    return %c0_i32, %c0_i32_0 : i32, i32
  }
  func.func @transform_9(%arg0: i32) -> (i32, i32) {
    %c0_i32 = arith.constant 0 : i32
    %c0_i32_0 = arith.constant 0 : i32
    %c0_i32_1 = arith.constant 0 : i32
    return %c0_i32, %c0_i32_0 : i32, i32
  }
  func.func @transform_10(%arg0: i32) -> (i32, i32) {
    %c0_i32 = arith.constant 0 : i32
    %c0_i32_0 = arith.constant 0 : i32
    %c0_i32_1 = arith.constant 0 : i32
    return %c0_i32, %c0_i32_0 : i32, i32
  }
  func.func @transform_11(%arg0: i32) -> (i32, i32) {
    %c0_i32 = arith.constant 0 : i32
    %c0_i32_0 = arith.constant 0 : i32
    %c0_i32_1 = arith.constant 0 : i32
    return %c0_i32, %c0_i32_0 : i32, i32
  }
  func.func @transform_12(%arg0: i32) -> (i32, i32) {
    %c0_i32 = arith.constant 0 : i32
    %c0_i32_0 = arith.constant 0 : i32
    %c0_i32_1 = arith.constant 0 : i32
    return %c0_i32, %c0_i32_0 : i32, i32
  }
  func.func @transform_13(%arg0: i32) -> (i32, i32) {
    %c0_i32 = arith.constant 0 : i32
    %c0_i32_0 = arith.constant 0 : i32
    return %arg0, %c0_i32 : i32, i32
  }
}

</mosaic_0001>

<llo_original>
// kernel: multicnn_forward.1
$region0: #{multicnn_forward.1}
  #allocation0 [shape = 'u32[]', space=smem, size = 0x4, offset = 0x4, fixed_abs, tag = 'smem constant byte address 0x4 - core index']
  #allocation1 [shape = 'u32[144,128]{1,0:T(1,128)}', space=vmem, size = 0x12000, scoped, tag = 'internal scratch']
  #allocation2 [shape = 'f32[1,1]{1,0:T(1,128)S(1)}', space=vmem, size = 0x200, scoped, tag = 'scoped memory for multicnn_forward.1']
  %s0 = inlined_call_operand.vmem [shape: bf16[2,54,32], index: 0, kind: input, shape index: {}]
  %s1 = inlined_call_operand.vmem [shape: bf16[2,54,32], index: 1, kind: input, shape index: {}]
  %s2 = inlined_call_operand.vmem [shape: bf16[160,128], index: 2, kind: input, shape index: {}]
  %s3 = inlined_call_operand.vmem [shape: f32[1,128], index: 3, kind: input, shape index: {}]
  %s4 = inlined_call_operand.vmem [shape: bf16[160,128], index: 4, kind: input, shape index: {}]
  %s5 = inlined_call_operand.vmem [shape: f32[1,128], index: 5, kind: input, shape index: {}]
  %s6 = inlined_call_operand.vmem [shape: bf16[3200,128], index: 6, kind: input, shape index: {}]
  %s7 = inlined_call_operand.hbm [shape: bf16[3200,128], index: 7, kind: input, shape index: {}]
  %s8 = inlined_call_operand.vmem [shape: f32[1,128], index: 8, kind: input, shape index: {}]
  %s9 = inlined_call_operand.vmem [shape: bf16[128,64], index: 9, kind: input, shape index: {}]
  %s10 = inlined_call_operand.vmem [shape: f32[1,64], index: 10, kind: input, shape index: {}]
  %s11 = inlined_call_operand.vmem [shape: f32[1,64], index: 11, kind: input, shape index: {}]
  %s12 = inlined_call_operand.<no memory space> [shape: f32[1,1], index: 12, kind: input, shape index: {}]
  %s13 = inlined_call_operand.vmem [shape: f32[2,1], index: 13, kind: output, shape index: {}]
  %s14 = sld [smem:[#allocation0]]
  $region66: #{multicnn_forward.1} parent=0
    _
  %s16 = ssub.s32 1, %s14
  %s17 = scalar_select 0, %s16, %s14
  %v18 = vstv %s12
  %19 = vst [vmem:[#allocation2] sm:$0x1] %v18
  $region1: #{multicnn_forward.1} parent=0
    #allocation3 [shape = 'u8[819200]{0}', space=vmem, size = 0xc8000, scoped, tag = 'input window, operand 7, single buffered']
    #allocation4 [shape = 's32[1]{0}', space=sflag, size = 0x4, scoped, tag = 'scoped memory for multicnn_forward.1']
    %20 = vsyncpa [#allocation4], 0
    // Predicated region
    $region2: #{multicnn_forward.1} parent=1 // pred_check
      _
    $region3: #{multicnn_forward.1} parent=1 // pred_check_branch
      %22 = sbr.rel (0) target = $region5
    $region4: #{multicnn_forward.1} parent=1 // pred_region
      _
    $region5: #{multicnn_forward.1} parent=1 // pred_fallthru
      _
    // Predicated region
    $region6: #{multicnn_forward.1} parent=1 // pred_check
      _
    $region7: #{multicnn_forward.1} parent=1 // pred_check_branch
      %24 = sbr.rel (0) target = $region9
    $region8: #{multicnn_forward.1} parent=1 // pred_region
      _
    $region9: #{multicnn_forward.1} parent=1 // pred_fallthru
      _
    // Predicated region
    $region10: #{multicnn_forward.1} parent=1 // pred_check
      _
    $region11: #{multicnn_forward.1} parent=1 // pred_check_branch
      %26 = sbr.rel (0) target = $region13
    $region12: #{multicnn_forward.1} parent=1 // pred_region
      _
    $region13: #{multicnn_forward.1} parent=1 // pred_fallthru
      _
    // Predicated region
    $region14: #{multicnn_forward.1} parent=1 // pred_check
      _
    $region15: #{multicnn_forward.1} parent=1 // pred_check_branch
      %28 = sbr.rel (0) target = $region17
    $region16: #{multicnn_forward.1} parent=1 // pred_region
      _
    $region17: #{multicnn_forward.1} parent=1 // pred_fallthru
      _
    // Predicated region
    $region18: #{multicnn_forward.1} parent=1 // pred_check
      _
    $region19: #{multicnn_forward.1} parent=1 // pred_check_branch
      %30 = sbr.rel (0) target = $region21
    $region20: #{multicnn_forward.1} parent=1 // pred_region
      _
    $region21: #{multicnn_forward.1} parent=1 // pred_fallthru
      _
    // Predicated region
    $region22: #{multicnn_forward.1} parent=1 // pred_check
      _
    $region23: #{multicnn_forward.1} parent=1 // pred_check_branch
      %32 = sbr.rel (0) target = $region25
    $region24: #{multicnn_forward.1} parent=1 // pred_region
      _
    $region25: #{multicnn_forward.1} parent=1 // pred_fallthru
      _
    // Predicated region
    $region26: #{multicnn_forward.1} parent=1 // pred_check
      _
    $region27: #{multicnn_forward.1} parent=1 // pred_check_branch
      %34 = sbr.rel (0) target = $region29
    $region28: #{multicnn_forward.1} parent=1 // pred_region
      _
    $region29: #{multicnn_forward.1} parent=1 // pred_fallthru
      _
    // Predicated region
    $region30: #{multicnn_forward.1} parent=1 // pred_check
      _
    $region31: #{multicnn_forward.1} parent=1 // pred_check_branch
      %36 = sbr.rel (0) target = $region33
    $region32: #{multicnn_forward.1} parent=1 // pred_region
      %s38 = ssub.s32 25600, 25600
      %39 = vsyncadd [#allocation4], %s38
      %s40 = sshll.u32 [#allocation3], 4
      %s41 = int_to_ptr.vmem [resolvable:$true] %s40
      %46 = dma.hbm_to_vmem [thread:$0]  %s7, 25600, %s41, [#allocation4], 64, 64, 4
    $region33: #{multicnn_forward.1} parent=1 // pred_fallthru
      _
    // Predicated region
    $region34: #{multicnn_forward.1} parent=1 // pred_check
      _
    $region35: #{multicnn_forward.1} parent=1 // pred_check_branch
      %48 = sbr.rel (0) target = $region37
    $region36: #{multicnn_forward.1} parent=1 // pred_region
      _
    $region37: #{multicnn_forward.1} parent=1 // pred_fallthru
      _
    // Predicated region
    $region38: #{multicnn_forward.1} parent=1 // pred_check
      _
    $region39: #{multicnn_forward.1} parent=1 // pred_check_branch
      %50 = sbr.rel (0) target = $region41
    $region40: #{multicnn_forward.1} parent=1 // pred_region
      _
    $region41: #{multicnn_forward.1} parent=1 // pred_fallthru
      _
    // Predicated region
    $region42: #{multicnn_forward.1} parent=1 // pred_check
      _
    $region43: #{multicnn_forward.1} parent=1 // pred_check_branch
      %52 = sbr.rel (0) target = $region45
    $region44: #{multicnn_forward.1} parent=1 // pred_region
      _
    $region45: #{multicnn_forward.1} parent=1 // pred_fallthru
      _
    // Predicated region
    $region46: #{multicnn_forward.1} parent=1 // pred_check
      _
    $region47: #{multicnn_forward.1} parent=1 // pred_check_branch
      %54 = sbr.rel (0) target = $region49
    $region48: #{multicnn_forward.1} parent=1 // pred_region
      _
    $region49: #{multicnn_forward.1} parent=1 // pred_fallthru
      _
    // Predicated region
    $region50: #{multicnn_forward.1} parent=1 // pred_check
      _
    $region51: #{multicnn_forward.1} parent=1 // pred_check_branch
      %56 = sbr.rel (0) target = $region53
    $region52: #{multicnn_forward.1} parent=1 // pred_region
      _
    $region53: #{multicnn_forward.1} parent=1 // pred_fallthru
      _
    // Predicated region
    $region54: #{multicnn_forward.1} parent=1 // pred_check
      _
    $region55: #{multicnn_forward.1} parent=1 // pred_check_branch
      %58 = sbr.rel (0) target = $region57
    $region56: #{multicnn_forward.1} parent=1 // pred_region
      %59 = dma.done [#allocation4], 25600
    $region57: #{multicnn_forward.1} parent=1 // pred_fallthru
      _
    %v61 = vld [vmem:[%s0] sm:$0xf]
    %v62 = vld [vmem:[%s0 + $0x4] sm:$0xf]
    %v63 = vld [vmem:[%s0 + $0x8] sm:$0xf]
    %v64 = vld [vmem:[%s0 + $0xc] sm:$0xf]
    %v65 = vld [vmem:[%s0 + $0x10] sm:$0xf]
    %v66 = vld [vmem:[%s0 + $0x14] sm:$0xf]
    %v67 = vld [vmem:[%s0 + $0x18] sm:$0x7]
    %v68 = vld [vmem:[%s0 + $0x1c] sm:$0xf]
    %v69 = vld [vmem:[%s0 + $0x20] sm:$0xf]
    %v70 = vld [vmem:[%s0 + $0x24] sm:$0xf]
    %v71 = vld [vmem:[%s0 + $0x28] sm:$0xf]
    %v72 = vld [vmem:[%s0 + $0x2c] sm:$0xf]
    %v73 = vld [vmem:[%s0 + $0x30] sm:$0xf]
    %v74 = vld [vmem:[%s0 + $0x34] sm:$0x7]
    %v75 = vld [vmem:[%s2] sm:$0xf]
    %v76 = vld [vmem:[%s2 + $0x4] sm:$0xf]
    %v77 = vld [vmem:[%s2 + $0x8] sm:$0xf]
    %v78 = vld [vmem:[%s2 + $0xc] sm:$0xf]
    %v79 = vld [vmem:[%s2 + $0x10] sm:$0xf]
    %v80 = vld [vmem:[%s2 + $0x14] sm:$0xf]
    %v81 = vld [vmem:[%s2 + $0x18] sm:$0xf]
    %v82 = vld [vmem:[%s2 + $0x1c] sm:$0xf]
    %v83 = vld [vmem:[%s2 + $0x20] sm:$0xf]
    %v84 = vld [vmem:[%s2 + $0x24] sm:$0xf]
    %v85 = vld [vmem:[%s2 + $0x28] sm:$0xf]
    %v86 = vld [vmem:[%s2 + $0x2c] sm:$0xf]
    %v87 = vld [vmem:[%s2 + $0x30] sm:$0xf]
    %v88 = vld [vmem:[%s2 + $0x34] sm:$0xf]
    %v89 = vld [vmem:[%s2 + $0x38] sm:$0xf]
    %v90 = vld [vmem:[%s2 + $0x3c] sm:$0xf]
    %v91 = vld [vmem:[%s2 + $0x40] sm:$0xf]
    %v92 = vld [vmem:[%s2 + $0x44] sm:$0xf]
    %v93 = vld [vmem:[%s2 + $0x48] sm:$0xf]
    %v94 = vld [vmem:[%s2 + $0x4c] sm:$0xf]
    %v95 = vld [vmem:[%s3] sm:$0x1]
    %v110 = vunpack.c.l.b16 %v61
    %v111 = vunpack.c.l.b16 %v62
    %v112 = vunpack.c.l.b16 %v63
    %v113 = vunpack.c.l.b16 %v64
    %v114 = vunpack.c.l.b16 %v65
    %v115 = vunpack.c.l.b16 %v66
    %v116 = vunpack.c.l.b16 %v67
    %v117 = vunpack.c.l.b16 %v68
    %v118 = vunpack.c.l.b16 %v69
    %v119 = vunpack.c.l.b16 %v70
    %v120 = vunpack.c.l.b16 %v71
    %v121 = vunpack.c.l.b16 %v72
    %v122 = vunpack.c.l.b16 %v73
    %v123 = vunpack.c.l.b16 %v74
    %v124 = vpack.c.b16 %v111, %v110
    %v125 = vpack.c.b16 %v113, %v112
    %v126 = vpack.c.b16 %v115, %v114
    %v127 = vpack.c.b16 %v116, %v116
    %v128 = vpack.c.b16 %v118, %v117
    %v129 = vpack.c.b16 %v120, %v119
    %v130 = vpack.c.b16 %v122, %v121
    %v131 = vpack.c.b16 %v123, %v123
    %vm132 = vsmask.f32 7424
    %v134 = vshrl.u32 %v124, 16
    %v136 = vshll.u32 %v124, 16
    %v138 = vrot.slane %v136, 1
    %v139 = vor.u32 %v134, %v138
    %v141 = vshll.u32 %v125, 16
    %v143 = vrot.slane %v141, 1
    %v144 = vsel %vm132, %v139, %v143
    %v145 = vshrl.u32 %v125, 16
    %v147 = vor.u32 %v145, %v143
    %v149 = vshll.u32 %v126, 16
    %v151 = vrot.slane %v149, 1
    %v152 = vsel %vm132, %v147, %v151
    %v153 = vshrl.u32 %v126, 16
    %v155 = vor.u32 %v153, %v151
    %v157 = vshll.u32 %v127, 16
    %v159 = vrot.slane %v157, 1
    %v160 = vsel %vm132, %v155, %v159
    %v161 = vshrl.u32 %v127, 16
    %v163 = vor.u32 %v161, %v159
    %v165 = vshrl.u32 %v128, 16
    %v167 = vshll.u32 %v128, 16
    %v169 = vrot.slane %v167, 1
    %v170 = vor.u32 %v165, %v169
    %v172 = vshll.u32 %v129, 16
    %v174 = vrot.slane %v172, 1
    %v175 = vsel %vm132, %v170, %v174
    %v176 = vshrl.u32 %v129, 16
    %v178 = vor.u32 %v176, %v174
    %v180 = vshll.u32 %v130, 16
    %v182 = vrot.slane %v180, 1
    %v183 = vsel %vm132, %v178, %v182
    %v184 = vshrl.u32 %v130, 16
    %v186 = vor.u32 %v184, %v182
    %v188 = vshll.u32 %v131, 16
    %v190 = vrot.slane %v188, 1
    %v191 = vsel %vm132, %v186, %v190
    %v192 = vshrl.u32 %v131, 16
    %v194 = vor.u32 %v192, %v190
    %195 = vrot.lane.b32.xlu0 %v144, 32
    %v196 = vpop.permute.xlu0 %195
    %197 = vrot.lane.b32.xlu0 %v152, 32
    %v198 = vpop.permute.xlu0 %197
    %199 = vrot.lane.b32.xlu0 %v160, 32
    %v200 = vpop.permute.xlu0 %199
    %201 = vrot.lane.b32.xlu0 %v163, 32
    %v202 = vpop.permute.xlu0 %201
    %203 = vrot.lane.b32.xlu0 %v175, 32
    %v204 = vpop.permute.xlu0 %203
    %205 = vrot.lane.b32.xlu0 %v183, 32
    %v206 = vpop.permute.xlu0 %205
    %207 = vrot.lane.b32.xlu0 %v191, 32
    %v208 = vpop.permute.xlu0 %207
    %209 = vrot.lane.b32.xlu0 %v194, 32
    %v210 = vpop.permute.xlu0 %209
    %vm211 = vcmask 1046528
    %v212 = vrot.slane %v124, 1
    %v213 = vrot.slane %v125, 1
    %v214 = vsel %vm211, %v212, %v213
    %v215 = vrot.slane %v126, 1
    %v216 = vsel %vm211, %v213, %v215
    %v217 = vrot.slane %v127, 1
    %v218 = vsel %vm211, %v215, %v217
    %v219 = vrot.slane %v128, 1
    %v220 = vrot.slane %v129, 1
    %v221 = vsel %vm211, %v219, %v220
    %v222 = vrot.slane %v130, 1
    %v223 = vsel %vm211, %v220, %v222
    %v224 = vrot.slane %v131, 1
    %v225 = vsel %vm211, %v222, %v224
    %226 = vrot.lane.b32.xlu0 %v214, 64
    %v227 = vpop.permute.xlu0 %226
    %228 = vrot.lane.b32.xlu0 %v216, 64
    %v229 = vpop.permute.xlu0 %228
    %230 = vrot.lane.b32.xlu0 %v218, 64
    %v231 = vpop.permute.xlu0 %230
    %232 = vrot.lane.b32.xlu0 %v217, 64
    %v233 = vpop.permute.xlu0 %232
    %234 = vrot.lane.b32.xlu0 %v221, 64
    %v235 = vpop.permute.xlu0 %234
    %236 = vrot.lane.b32.xlu0 %v223, 64
    %v237 = vpop.permute.xlu0 %236
    %238 = vrot.lane.b32.xlu0 %v225, 64
    %v239 = vpop.permute.xlu0 %238
    %240 = vrot.lane.b32.xlu0 %v224, 64
    %v241 = vpop.permute.xlu0 %240
    %vm242 = vsmask.f32 6400
    %v243 = vrot.slane %v134, 1
    %v244 = vrot.slane %v136, 2
    %v245 = vor.u32 %v243, %v244
    %v246 = vrot.slane %v145, 1
    %v247 = vrot.slane %v141, 2
    %v248 = vor.u32 %v246, %v247
    %v249 = vsel %vm242, %v245, %v248
    %v250 = vrot.slane %v153, 1
    %v251 = vrot.slane %v149, 2
    %v252 = vor.u32 %v250, %v251
    %v253 = vsel %vm242, %v248, %v252
    %v254 = vrot.slane %v161, 1
    %v255 = vrot.slane %v157, 2
    %v256 = vor.u32 %v254, %v255
    %v257 = vsel %vm242, %v252, %v256
    %v258 = vrot.slane %v165, 1
    %v259 = vrot.slane %v167, 2
    %v260 = vor.u32 %v258, %v259
    %v261 = vrot.slane %v176, 1
    %v262 = vrot.slane %v172, 2
    %v263 = vor.u32 %v261, %v262
    %v264 = vsel %vm242, %v260, %v263
    %v265 = vrot.slane %v184, 1
    %v266 = vrot.slane %v180, 2
    %v267 = vor.u32 %v265, %v266
    %v268 = vsel %vm242, %v263, %v267
    %v269 = vrot.slane %v192, 1
    %v270 = vrot.slane %v188, 2
    %v271 = vor.u32 %v269, %v270
    %v272 = vsel %vm242, %v267, %v271
    %273 = vrot.lane.b32.xlu0 %v249, 96
    %v274 = vpop.permute.xlu0 %273
    %275 = vrot.lane.b32.xlu0 %v253, 96
    %v276 = vpop.permute.xlu0 %275
    %277 = vrot.lane.b32.xlu0 %v257, 96
    %v278 = vpop.permute.xlu0 %277
    %279 = vrot.lane.b32.xlu0 %v256, 96
    %v280 = vpop.permute.xlu0 %279
    %281 = vrot.lane.b32.xlu0 %v264, 96
    %v282 = vpop.permute.xlu0 %281
    %283 = vrot.lane.b32.xlu0 %v268, 96
    %v284 = vpop.permute.xlu0 %283
    %285 = vrot.lane.b32.xlu0 %v272, 96
    %v286 = vpop.permute.xlu0 %285
    %287 = vrot.lane.b32.xlu0 %v271, 96
    %v288 = vpop.permute.xlu0 %287
    %vm289 = vcmask 1045504
    %v290 = vrot.slane %v124, 2
    %v291 = vrot.slane %v125, 2
    %v292 = vsel %vm289, %v290, %v291
    %v293 = vrot.slane %v126, 2
    %v294 = vsel %vm289, %v291, %v293
    %v295 = vrot.slane %v127, 2
    %v296 = vsel %vm289, %v293, %v295
    %v297 = vrot.slane %v128, 2
    %v298 = vrot.slane %v129, 2
    %v299 = vsel %vm289, %v297, %v298
    %v300 = vrot.slane %v130, 2
    %v301 = vsel %vm289, %v298, %v300
    %v302 = vrot.slane %v131, 2
    %v303 = vsel %vm289, %v300, %v302
    %vm304 = vcmask 261120
    %v306 = vsel %vm304, %v124, %v196
    %v308 = vsel %vm304, %v125, %v198
    %v310 = vsel %vm304, %v126, %v200
    %v312 = vsel %vm304, %v127, %v202
    %v314 = vsel %vm304, %v128, %v204
    %v316 = vsel %vm304, %v129, %v206
    %v318 = vsel %vm304, %v130, %v208
    %v320 = vsel %vm304, %v131, %v210
    %vm321 = vcmask 523264
    %v323 = vsel %vm321, %v306, %v227
    %v325 = vsel %vm321, %v308, %v229
    %v327 = vsel %vm321, %v310, %v231
    %v329 = vsel %vm321, %v312, %v233
    %v331 = vsel %vm321, %v314, %v235
    %v333 = vsel %vm321, %v316, %v237
    %v335 = vsel %vm321, %v318, %v239
    %v337 = vsel %vm321, %v320, %v241
    %vm338 = vcmask 785408
    %v340 = vsel %vm338, %v323, %v274
    %v342 = vsel %vm338, %v325, %v276
    %v344 = vsel %vm338, %v327, %v278
    %v346 = vsel %vm338, %v329, %v280
    %v348 = vsel %vm338, %v331, %v282
    %v350 = vsel %vm338, %v333, %v284
    %v352 = vsel %vm338, %v335, %v286
    %v354 = vsel %vm338, %v337, %v288
    %v363 = vcombine.low %v340, %v292
    %v364 = vcombine.high %v340, %v292
    %v366 = vunpack.c.l.s4 1966171168
    %v367 = vunpack.c.0.s8 %v366
    %v368 = vlaneseq
    %v369 = vshrl.u32 %v368, 7
    %v370 = vsub.s32 %v367, %v369
    %v371 = vrot.slane %v363, %v370
    %v373 = vunpack.c.l.s4 1966171168
    %v374 = vunpack.c.0.s8 %v373
    %v375 = vlaneseq
    %v376 = vshrl.u32 %v375, 7
    %v377 = vsub.s32 %v374, %v376
    %v378 = vrot.slane %v364, %v377
    %v379 = vcombine.high %v371, %v371
    %v380 = vcombine.high %v378, %v378
    %v382 = vunpack.c.l.s4 1966171168
    %v383 = vunpack.c.0.s8 %v382
    %v384 = vlaneseq
    %v385 = vshrl.u32 %v384, 7
    %v386 = vsub.s32 %v383, %v385
    %v387 = vrot.slane %v371, %v386
    %v389 = vunpack.c.l.s4 1966171168
    %v390 = vunpack.c.0.s8 %v389
    %v391 = vlaneseq
    %v392 = vshrl.u32 %v391, 7
    %v393 = vsub.s32 %v390, %v392
    %v394 = vrot.slane %v378, %v393
    %v396 = vunpack.c.l.s4 1966171168
    %v397 = vunpack.c.0.s8 %v396
    %v398 = vlaneseq
    %v399 = vshrl.u32 %v398, 7
    %v400 = vsub.s32 %v397, %v399
    %v401 = vrot.slane %v379, %v400
    %v403 = vunpack.c.l.s4 1966171168
    %v404 = vunpack.c.0.s8 %v403
    %v405 = vlaneseq
    %v406 = vshrl.u32 %v405, 7
    %v407 = vsub.s32 %v404, %v406
    %v408 = vrot.slane %v380, %v407
    %v409 = vcombine.high %v387, %v387
    %v410 = vcombine.high %v394, %v394
    %v411 = vcombine.high %v401, %v401
    %v412 = vcombine.high %v408, %v408
    %v413 = vcombine.low %v342, %v294
    %v414 = vcombine.high %v342, %v294
    %v416 = vunpack.c.l.s4 1966171168
    %v417 = vunpack.c.0.s8 %v416
    %v418 = vlaneseq
    %v419 = vshrl.u32 %v418, 7
    %v420 = vsub.s32 %v417, %v419
    %v421 = vrot.slane %v413, %v420
    %v423 = vunpack.c.l.s4 1966171168
    %v424 = vunpack.c.0.s8 %v423
    %v425 = vlaneseq
    %v426 = vshrl.u32 %v425, 7
    %v427 = vsub.s32 %v424, %v426
    %v428 = vrot.slane %v414, %v427
    %v429 = vcombine.high %v421, %v421
    %v430 = vcombine.high %v428, %v428
    %v432 = vunpack.c.l.s4 1966171168
    %v433 = vunpack.c.0.s8 %v432
    %v434 = vlaneseq
    %v435 = vshrl.u32 %v434, 7
    %v436 = vsub.s32 %v433, %v435
    %v437 = vrot.slane %v421, %v436
    %v439 = vunpack.c.l.s4 1966171168
    %v440 = vunpack.c.0.s8 %v439
    %v441 = vlaneseq
    %v442 = vshrl.u32 %v441, 7
    %v443 = vsub.s32 %v440, %v442
    %v444 = vrot.slane %v428, %v443
    %v446 = vunpack.c.l.s4 1966171168
    %v447 = vunpack.c.0.s8 %v446
    %v448 = vlaneseq
    %v449 = vshrl.u32 %v448, 7
    %v450 = vsub.s32 %v447, %v449
    %v451 = vrot.slane %v429, %v450
    %v453 = vunpack.c.l.s4 1966171168
    %v454 = vunpack.c.0.s8 %v453
    %v455 = vlaneseq
    %v456 = vshrl.u32 %v455, 7
    %v457 = vsub.s32 %v454, %v456
    %v458 = vrot.slane %v430, %v457
    %v459 = vcombine.high %v437, %v437
    %v460 = vcombine.high %v444, %v444
    %v461 = vcombine.high %v451, %v451
    %v462 = vcombine.high %v458, %v458
    %v463 = vcombine.low %v344, %v296
    %v464 = vcombine.high %v344, %v296
    %v466 = vunpack.c.l.s4 1966171168
    %v467 = vunpack.c.0.s8 %v466
    %v468 = vlaneseq
    %v469 = vshrl.u32 %v468, 7
    %v470 = vsub.s32 %v467, %v469
    %v471 = vrot.slane %v463, %v470
    %v473 = vunpack.c.l.s4 1966171168
    %v474 = vunpack.c.0.s8 %v473
    %v475 = vlaneseq
    %v476 = vshrl.u32 %v475, 7
    %v477 = vsub.s32 %v474, %v476
    %v478 = vrot.slane %v464, %v477
    %v479 = vcombine.high %v471, %v471
    %v480 = vcombine.high %v478, %v478
    %v482 = vunpack.c.l.s4 1966171168
    %v483 = vunpack.c.0.s8 %v482
    %v484 = vlaneseq
    %v485 = vshrl.u32 %v484, 7
    %v486 = vsub.s32 %v483, %v485
    %v487 = vrot.slane %v471, %v486
    %v489 = vunpack.c.l.s4 1966171168
    %v490 = vunpack.c.0.s8 %v489
    %v491 = vlaneseq
    %v492 = vshrl.u32 %v491, 7
    %v493 = vsub.s32 %v490, %v492
    %v494 = vrot.slane %v478, %v493
    %v496 = vunpack.c.l.s4 1966171168
    %v497 = vunpack.c.0.s8 %v496
    %v498 = vlaneseq
    %v499 = vshrl.u32 %v498, 7
    %v500 = vsub.s32 %v497, %v499
    %v501 = vrot.slane %v479, %v500
    %v503 = vunpack.c.l.s4 1966171168
    %v504 = vunpack.c.0.s8 %v503
    %v505 = vlaneseq
    %v506 = vshrl.u32 %v505, 7
    %v507 = vsub.s32 %v504, %v506
    %v508 = vrot.slane %v480, %v507
    %v509 = vcombine.high %v487, %v487
    %v510 = vcombine.high %v494, %v494
    %v511 = vcombine.high %v501, %v501
    %v512 = vcombine.high %v508, %v508
    %v513 = vcombine.low %v346, %v295
    %v515 = vunpack.c.l.s4 1966171168
    %v516 = vunpack.c.0.s8 %v515
    %v517 = vlaneseq
    %v518 = vshrl.u32 %v517, 7
    %v519 = vsub.s32 %v516, %v518
    %v520 = vrot.slane %v513, %v519
    %v522 = vunpack.c.l.s4 1966171168
    %v523 = vunpack.c.0.s8 %v522
    %v524 = vlaneseq
    %v525 = vshrl.u32 %v524, 7
    %v526 = vsub.s32 %v523, %v525
    %v527 = vrot.slane %v520, %v526
    %v528 = vcombine.low %v348, %v299
    %v529 = vcombine.high %v348, %v299
    %v531 = vunpack.c.l.s4 1966171168
    %v532 = vunpack.c.0.s8 %v531
    %v533 = vlaneseq
    %v534 = vshrl.u32 %v533, 7
    %v535 = vsub.s32 %v532, %v534
    %v536 = vrot.slane %v528, %v535
    %v538 = vunpack.c.l.s4 1966171168
    %v539 = vunpack.c.0.s8 %v538
    %v540 = vlaneseq
    %v541 = vshrl.u32 %v540, 7
    %v542 = vsub.s32 %v539, %v541
    %v543 = vrot.slane %v529, %v542
    %v544 = vcombine.high %v536, %v536
    %v545 = vcombine.high %v543, %v543
    %v547 = vunpack.c.l.s4 1966171168
    %v548 = vunpack.c.0.s8 %v547
    %v549 = vlaneseq
    %v550 = vshrl.u32 %v549, 7
    %v551 = vsub.s32 %v548, %v550
    %v552 = vrot.slane %v536, %v551
    %v554 = vunpack.c.l.s4 1966171168
    %v555 = vunpack.c.0.s8 %v554
    %v556 = vlaneseq
    %v557 = vshrl.u32 %v556, 7
    %v558 = vsub.s32 %v555, %v557
    %v559 = vrot.slane %v543, %v558
    %v561 = vunpack.c.l.s4 1966171168
    %v562 = vunpack.c.0.s8 %v561
    %v563 = vlaneseq
    %v564 = vshrl.u32 %v563, 7
    %v565 = vsub.s32 %v562, %v564
    %v566 = vrot.slane %v544, %v565
    %v568 = vunpack.c.l.s4 1966171168
    %v569 = vunpack.c.0.s8 %v568
    %v570 = vlaneseq
    %v571 = vshrl.u32 %v570, 7
    %v572 = vsub.s32 %v569, %v571
    %v573 = vrot.slane %v545, %v572
    %v574 = vcombine.high %v552, %v552
    %v575 = vcombine.high %v559, %v559
    %v576 = vcombine.high %v566, %v566
    %v577 = vcombine.high %v573, %v573
    %v578 = vcombine.low %v350, %v301
    %v579 = vcombine.high %v350, %v301
    %v581 = vunpack.c.l.s4 1966171168
    %v582 = vunpack.c.0.s8 %v581
    %v583 = vlaneseq
    %v584 = vshrl.u32 %v583, 7
    %v585 = vsub.s32 %v582, %v584
    %v586 = vrot.slane %v578, %v585
    %v588 = vunpack.c.l.s4 1966171168
    %v589 = vunpack.c.0.s8 %v588
    %v590 = vlaneseq
    %v591 = vshrl.u32 %v590, 7
    %v592 = vsub.s32 %v589, %v591
    %v593 = vrot.slane %v579, %v592
    %v594 = vcombine.high %v586, %v586
    %v595 = vcombine.high %v593, %v593
    %v597 = vunpack.c.l.s4 1966171168
    %v598 = vunpack.c.0.s8 %v597
    %v599 = vlaneseq
    %v600 = vshrl.u32 %v599, 7
    %v601 = vsub.s32 %v598, %v600
    %v602 = vrot.slane %v586, %v601
    %v604 = vunpack.c.l.s4 1966171168
    %v605 = vunpack.c.0.s8 %v604
    %v606 = vlaneseq
    %v607 = vshrl.u32 %v606, 7
    %v608 = vsub.s32 %v605, %v607
    %v609 = vrot.slane %v593, %v608
    %v611 = vunpack.c.l.s4 1966171168
    %v612 = vunpack.c.0.s8 %v611
    %v613 = vlaneseq
    %v614 = vshrl.u32 %v613, 7
    %v615 = vsub.s32 %v612, %v614
    %v616 = vrot.slane %v594, %v615
    %v618 = vunpack.c.l.s4 1966171168
    %v619 = vunpack.c.0.s8 %v618
    %v620 = vlaneseq
    %v621 = vshrl.u32 %v620, 7
    %v622 = vsub.s32 %v619, %v621
    %v623 = vrot.slane %v595, %v622
    %v624 = vcombine.high %v602, %v602
    %v625 = vcombine.high %v609, %v609
    %v626 = vcombine.high %v616, %v616
    %v627 = vcombine.high %v623, %v623
    %v628 = vcombine.low %v352, %v303
    %v629 = vcombine.high %v352, %v303
    %v631 = vunpack.c.l.s4 1966171168
    %v632 = vunpack.c.0.s8 %v631
    %v633 = vlaneseq
    %v634 = vshrl.u32 %v633, 7
    %v635 = vsub.s32 %v632, %v634
    %v636 = vrot.slane %v628, %v635
    %v638 = vunpack.c.l.s4 1966171168
    %v639 = vunpack.c.0.s8 %v638
    %v640 = vlaneseq
    %v641 = vshrl.u32 %v640, 7
    %v642 = vsub.s32 %v639, %v641
    %v643 = vrot.slane %v629, %v642
    %v644 = vcombine.high %v636, %v636
    %v645 = vcombine.high %v643, %v643
    %v647 = vunpack.c.l.s4 1966171168
    %v648 = vunpack.c.0.s8 %v647
    %v649 = vlaneseq
    %v650 = vshrl.u32 %v649, 7
    %v651 = vsub.s32 %v648, %v650
    %v652 = vrot.slane %v636, %v651
    %v654 = vunpack.c.l.s4 1966171168
    %v655 = vunpack.c.0.s8 %v654
    %v656 = vlaneseq
    %v657 = vshrl.u32 %v656, 7
    %v658 = vsub.s32 %v655, %v657
    %v659 = vrot.slane %v643, %v658
    %v661 = vunpack.c.l.s4 1966171168
    %v662 = vunpack.c.0.s8 %v661
    %v663 = vlaneseq
    %v664 = vshrl.u32 %v663, 7
    %v665 = vsub.s32 %v662, %v664
    %v666 = vrot.slane %v644, %v665
    %v668 = vunpack.c.l.s4 1966171168
    %v669 = vunpack.c.0.s8 %v668
    %v670 = vlaneseq
    %v671 = vshrl.u32 %v670, 7
    %v672 = vsub.s32 %v669, %v671
    %v673 = vrot.slane %v645, %v672
    %v674 = vcombine.high %v652, %v652
    %v675 = vcombine.high %v659, %v659
    %v676 = vcombine.high %v666, %v666
    %v677 = vcombine.high %v673, %v673
    %v678 = vcombine.low %v354, %v302
    %v680 = vunpack.c.l.s4 1966171168
    %v681 = vunpack.c.0.s8 %v680
    %v682 = vlaneseq
    %v683 = vshrl.u32 %v682, 7
    %v684 = vsub.s32 %v681, %v683
    %v685 = vrot.slane %v678, %v684
    %v687 = vunpack.c.l.s4 1966171168
    %v688 = vunpack.c.0.s8 %v687
    %v689 = vlaneseq
    %v690 = vshrl.u32 %v689, 7
    %v691 = vsub.s32 %v688, %v690
    %v692 = vrot.slane %v685, %v691
    %v694 = vlaneseq
    %v695 = vshrl.u32 %v694, 7
    %v696 = vsub.s32 0, %v695
    %v697 = vrot.slane %v95, %v696
    %v699 = vcombine.low %v387, %v401
    %v700 = vcombine.low %v409, %v411
    %v701 = vcombine.low %v394, %v408
    %v702 = vcombine.low %v410, %v412
    %v704 = vunpack.c.l.s4 1966171168
    %v705 = vunpack.c.0.s8 %v704
    %v706 = vlaneseq
    %v707 = vshrl.u32 %v706, 7
    %v708 = vsub.s32 %v705, %v707
    %v709 = vrot.slane %v699, %v708
    %v711 = vunpack.c.l.s4 1966171168
    %v712 = vunpack.c.0.s8 %v711
    %v713 = vlaneseq
    %v714 = vshrl.u32 %v713, 7
    %v715 = vsub.s32 %v712, %v714
    %v716 = vrot.slane %v700, %v715
    %v718 = vunpack.c.l.s4 1966171168
    %v719 = vunpack.c.0.s8 %v718
    %v720 = vlaneseq
    %v721 = vshrl.u32 %v720, 7
    %v722 = vsub.s32 %v719, %v721
    %v723 = vrot.slane %v701, %v722
    %v725 = vunpack.c.l.s4 1966171168
    %v726 = vunpack.c.0.s8 %v725
    %v727 = vlaneseq
    %v728 = vshrl.u32 %v727, 7
    %v729 = vsub.s32 %v726, %v728
    %v730 = vrot.slane %v702, %v729
    %v731 = vcombine.low %v709, %v716
    %v732 = vcombine.high %v709, %v716
    %v733 = vcombine.low %v723, %v730
    %v734 = vcombine.high %v723, %v730
    %v736 = vunpack.c.l.s4 1966171168
    %v737 = vunpack.c.0.s8 %v736
    %v738 = vlaneseq
    %v739 = vshrl.u32 %v738, 7
    %v740 = vsub.s32 %v737, %v739
    %v741 = vrot.slane %v731, %v740
    %v743 = vunpack.c.l.s4 1966171168
    %v744 = vunpack.c.0.s8 %v743
    %v745 = vlaneseq
    %v746 = vshrl.u32 %v745, 7
    %v747 = vsub.s32 %v744, %v746
    %v748 = vrot.slane %v732, %v747
    %v750 = vunpack.c.l.s4 1966171168
    %v751 = vunpack.c.0.s8 %v750
    %v752 = vlaneseq
    %v753 = vshrl.u32 %v752, 7
    %v754 = vsub.s32 %v751, %v753
    %v755 = vrot.slane %v733, %v754
    %v757 = vunpack.c.l.s4 1966171168
    %v758 = vunpack.c.0.s8 %v757
    %v759 = vlaneseq
    %v760 = vshrl.u32 %v759, 7
    %v761 = vsub.s32 %v758, %v760
    %v762 = vrot.slane %v734, %v761
    %v763 = vcombine.low %v741, %v755
    %v764 = vcombine.low %v748, %v762
    %v765 = vcombine.low %v437, %v451
    %v766 = vcombine.low %v459, %v461
    %v767 = vcombine.low %v444, %v458
    %v768 = vcombine.low %v460, %v462
    %v770 = vunpack.c.l.s4 1966171168
    %v771 = vunpack.c.0.s8 %v770
    %v772 = vlaneseq
    %v773 = vshrl.u32 %v772, 7
    %v774 = vsub.s32 %v771, %v773
    %v775 = vrot.slane %v765, %v774
    %v777 = vunpack.c.l.s4 1966171168
    %v778 = vunpack.c.0.s8 %v777
    %v779 = vlaneseq
    %v780 = vshrl.u32 %v779, 7
    %v781 = vsub.s32 %v778, %v780
    %v782 = vrot.slane %v766, %v781
    %v784 = vunpack.c.l.s4 1966171168
    %v785 = vunpack.c.0.s8 %v784
    %v786 = vlaneseq
    %v787 = vshrl.u32 %v786, 7
    %v788 = vsub.s32 %v785, %v787
    %v789 = vrot.slane %v767, %v788
    %v791 = vunpack.c.l.s4 1966171168
    %v792 = vunpack.c.0.s8 %v791
    %v793 = vlaneseq
    %v794 = vshrl.u32 %v793, 7
    %v795 = vsub.s32 %v792, %v794
    %v796 = vrot.slane %v768, %v795
    %v797 = vcombine.low %v775, %v782
    %v798 = vcombine.high %v775, %v782
    %v799 = vcombine.low %v789, %v796
    %v800 = vcombine.high %v789, %v796
    %v802 = vunpack.c.l.s4 1966171168
    %v803 = vunpack.c.0.s8 %v802
    %v804 = vlaneseq
    %v805 = vshrl.u32 %v804, 7
    %v806 = vsub.s32 %v803, %v805
    %v807 = vrot.slane %v797, %v806
    %v809 = vunpack.c.l.s4 1966171168
    %v810 = vunpack.c.0.s8 %v809
    %v811 = vlaneseq
    %v812 = vshrl.u32 %v811, 7
    %v813 = vsub.s32 %v810, %v812
    %v814 = vrot.slane %v798, %v813
    %v816 = vunpack.c.l.s4 1966171168
    %v817 = vunpack.c.0.s8 %v816
    %v818 = vlaneseq
    %v819 = vshrl.u32 %v818, 7
    %v820 = vsub.s32 %v817, %v819
    %v821 = vrot.slane %v799, %v820
    %v823 = vunpack.c.l.s4 1966171168
    %v824 = vunpack.c.0.s8 %v823
    %v825 = vlaneseq
    %v826 = vshrl.u32 %v825, 7
    %v827 = vsub.s32 %v824, %v826
    %v828 = vrot.slane %v800, %v827
    %v829 = vcombine.low %v807, %v821
    %v830 = vcombine.low %v814, %v828
    %v831 = vcombine.low %v487, %v501
    %v832 = vcombine.low %v509, %v511
    %v833 = vcombine.low %v494, %v508
    %v834 = vcombine.low %v510, %v512
    %v836 = vunpack.c.l.s4 1966171168
    %v837 = vunpack.c.0.s8 %v836
    %v838 = vlaneseq
    %v839 = vshrl.u32 %v838, 7
    %v840 = vsub.s32 %v837, %v839
    %v841 = vrot.slane %v831, %v840
    %v843 = vunpack.c.l.s4 1966171168
    %v844 = vunpack.c.0.s8 %v843
    %v845 = vlaneseq
    %v846 = vshrl.u32 %v845, 7
    %v847 = vsub.s32 %v844, %v846
    %v848 = vrot.slane %v832, %v847
    %v850 = vunpack.c.l.s4 1966171168
    %v851 = vunpack.c.0.s8 %v850
    %v852 = vlaneseq
    %v853 = vshrl.u32 %v852, 7
    %v854 = vsub.s32 %v851, %v853
    %v855 = vrot.slane %v833, %v854
    %v857 = vunpack.c.l.s4 1966171168
    %v858 = vunpack.c.0.s8 %v857
    %v859 = vlaneseq
    %v860 = vshrl.u32 %v859, 7
    %v861 = vsub.s32 %v858, %v860
    %v862 = vrot.slane %v834, %v861
    %v863 = vcombine.low %v841, %v848
    %v864 = vcombine.high %v841, %v848
    %v865 = vcombine.low %v855, %v862
    %v866 = vcombine.high %v855, %v862
    %v868 = vunpack.c.l.s4 1966171168
    %v869 = vunpack.c.0.s8 %v868
    %v870 = vlaneseq
    %v871 = vshrl.u32 %v870, 7
    %v872 = vsub.s32 %v869, %v871
    %v873 = vrot.slane %v863, %v872
    %v875 = vunpack.c.l.s4 1966171168
    %v876 = vunpack.c.0.s8 %v875
    %v877 = vlaneseq
    %v878 = vshrl.u32 %v877, 7
    %v879 = vsub.s32 %v876, %v878
    %v880 = vrot.slane %v864, %v879
    %v882 = vunpack.c.l.s4 1966171168
    %v883 = vunpack.c.0.s8 %v882
    %v884 = vlaneseq
    %v885 = vshrl.u32 %v884, 7
    %v886 = vsub.s32 %v883, %v885
    %v887 = vrot.slane %v865, %v886
    %v889 = vunpack.c.l.s4 1966171168
    %v890 = vunpack.c.0.s8 %v889
    %v891 = vlaneseq
    %v892 = vshrl.u32 %v891, 7
    %v893 = vsub.s32 %v890, %v892
    %v894 = vrot.slane %v866, %v893
    %v895 = vcombine.low %v873, %v887
    %v896 = vcombine.low %v880, %v894
    %v897 = vcombine.low %v527, %v552
    %v898 = vcombine.low %v566, %v574
    %v899 = vcombine.low %v576, %v559
    %v900 = vcombine.low %v573, %v575
    %v902 = vunpack.c.l.s4 1966171168
    %v903 = vunpack.c.0.s8 %v902
    %v904 = vlaneseq
    %v905 = vshrl.u32 %v904, 7
    %v906 = vsub.s32 %v903, %v905
    %v907 = vrot.slane %v897, %v906
    %v909 = vunpack.c.l.s4 1966171168
    %v910 = vunpack.c.0.s8 %v909
    %v911 = vlaneseq
    %v912 = vshrl.u32 %v911, 7
    %v913 = vsub.s32 %v910, %v912
    %v914 = vrot.slane %v898, %v913
    %v916 = vunpack.c.l.s4 1966171168
    %v917 = vunpack.c.0.s8 %v916
    %v918 = vlaneseq
    %v919 = vshrl.u32 %v918, 7
    %v920 = vsub.s32 %v917, %v919
    %v921 = vrot.slane %v899, %v920
    %v923 = vunpack.c.l.s4 1966171168
    %v924 = vunpack.c.0.s8 %v923
    %v925 = vlaneseq
    %v926 = vshrl.u32 %v925, 7
    %v927 = vsub.s32 %v924, %v926
    %v928 = vrot.slane %v900, %v927
    %v929 = vcombine.low %v907, %v914
    %v930 = vcombine.high %v907, %v914
    %v931 = vcombine.low %v921, %v928
    %v932 = vcombine.high %v921, %v928
    %v934 = vunpack.c.l.s4 1966171168
    %v935 = vunpack.c.0.s8 %v934
    %v936 = vlaneseq
    %v937 = vshrl.u32 %v936, 7
    %v938 = vsub.s32 %v935, %v937
    %v939 = vrot.slane %v929, %v938
    %v941 = vunpack.c.l.s4 1966171168
    %v942 = vunpack.c.0.s8 %v941
    %v943 = vlaneseq
    %v944 = vshrl.u32 %v943, 7
    %v945 = vsub.s32 %v942, %v944
    %v946 = vrot.slane %v930, %v945
    %v948 = vunpack.c.l.s4 1966171168
    %v949 = vunpack.c.0.s8 %v948
    %v950 = vlaneseq
    %v951 = vshrl.u32 %v950, 7
    %v952 = vsub.s32 %v949, %v951
    %v953 = vrot.slane %v931, %v952
    %v955 = vunpack.c.l.s4 1966171168
    %v956 = vunpack.c.0.s8 %v955
    %v957 = vlaneseq
    %v958 = vshrl.u32 %v957, 7
    %v959 = vsub.s32 %v956, %v958
    %v960 = vrot.slane %v932, %v959
    %v961 = vcombine.low %v939, %v953
    %v962 = vcombine.low %v946, %v960
    %v963 = vcombine.low %v577, %v602
    %v964 = vcombine.low %v616, %v624
    %v965 = vcombine.low %v626, %v609
    %v966 = vcombine.low %v623, %v625
    %v968 = vunpack.c.l.s4 1966171168
    %v969 = vunpack.c.0.s8 %v968
    %v970 = vlaneseq
    %v971 = vshrl.u32 %v970, 7
    %v972 = vsub.s32 %v969, %v971
    %v973 = vrot.slane %v963, %v972
    %v975 = vunpack.c.l.s4 1966171168
    %v976 = vunpack.c.0.s8 %v975
    %v977 = vlaneseq
    %v978 = vshrl.u32 %v977, 7
    %v979 = vsub.s32 %v976, %v978
    %v980 = vrot.slane %v964, %v979
    %v982 = vunpack.c.l.s4 1966171168
    %v983 = vunpack.c.0.s8 %v982
    %v984 = vlaneseq
    %v985 = vshrl.u32 %v984, 7
    %v986 = vsub.s32 %v983, %v985
    %v987 = vrot.slane %v965, %v986
    %v989 = vunpack.c.l.s4 1966171168
    %v990 = vunpack.c.0.s8 %v989
    %v991 = vlaneseq
    %v992 = vshrl.u32 %v991, 7
    %v993 = vsub.s32 %v990, %v992
    %v994 = vrot.slane %v966, %v993
    %v995 = vcombine.low %v973, %v980
    %v996 = vcombine.high %v973, %v980
    %v997 = vcombine.low %v987, %v994
    %v998 = vcombine.high %v987, %v994
    %v1000 = vunpack.c.l.s4 1966171168
    %v1001 = vunpack.c.0.s8 %v1000
    %v1002 = vlaneseq
    %v1003 = vshrl.u32 %v1002, 7
    %v1004 = vsub.s32 %v1001, %v1003
    %v1005 = vrot.slane %v995, %v1004
    %v1007 = vunpack.c.l.s4 1966171168
    %v1008 = vunpack.c.0.s8 %v1007
    %v1009 = vlaneseq
    %v1010 = vshrl.u32 %v1009, 7
    %v1011 = vsub.s32 %v1008, %v1010
    %v1012 = vrot.slane %v996, %v1011
    %v1014 = vunpack.c.l.s4 1966171168
    %v1015 = vunpack.c.0.s8 %v1014
    %v1016 = vlaneseq
    %v1017 = vshrl.u32 %v1016, 7
    %v1018 = vsub.s32 %v1015, %v1017
    %v1019 = vrot.slane %v997, %v1018
    %v1021 = vunpack.c.l.s4 1966171168
    %v1022 = vunpack.c.0.s8 %v1021
    %v1023 = vlaneseq
    %v1024 = vshrl.u32 %v1023, 7
    %v1025 = vsub.s32 %v1022, %v1024
    %v1026 = vrot.slane %v998, %v1025
    %v1027 = vcombine.low %v1005, %v1019
    %v1028 = vcombine.low %v1012, %v1026
    %v1029 = vcombine.low %v627, %v652
    %v1030 = vcombine.low %v666, %v674
    %v1031 = vcombine.low %v676, %v659
    %v1032 = vcombine.low %v673, %v675
    %v1034 = vunpack.c.l.s4 1966171168
    %v1035 = vunpack.c.0.s8 %v1034
    %v1036 = vlaneseq
    %v1037 = vshrl.u32 %v1036, 7
    %v1038 = vsub.s32 %v1035, %v1037
    %v1039 = vrot.slane %v1029, %v1038
    %v1041 = vunpack.c.l.s4 1966171168
    %v1042 = vunpack.c.0.s8 %v1041
    %v1043 = vlaneseq
    %v1044 = vshrl.u32 %v1043, 7
    %v1045 = vsub.s32 %v1042, %v1044
    %v1046 = vrot.slane %v1030, %v1045
    %v1048 = vunpack.c.l.s4 1966171168
    %v1049 = vunpack.c.0.s8 %v1048
    %v1050 = vlaneseq
    %v1051 = vshrl.u32 %v1050, 7
    %v1052 = vsub.s32 %v1049, %v1051
    %v1053 = vrot.slane %v1031, %v1052
    %v1055 = vunpack.c.l.s4 1966171168
    %v1056 = vunpack.c.0.s8 %v1055
    %v1057 = vlaneseq
    %v1058 = vshrl.u32 %v1057, 7
    %v1059 = vsub.s32 %v1056, %v1058
    %v1060 = vrot.slane %v1032, %v1059
    %v1061 = vcombine.low %v1039, %v1046
    %v1062 = vcombine.high %v1039, %v1046
    %v1063 = vcombine.low %v1053, %v1060
    %v1064 = vcombine.high %v1053, %v1060
    %v1066 = vunpack.c.l.s4 1966171168
    %v1067 = vunpack.c.0.s8 %v1066
    %v1068 = vlaneseq
    %v1069 = vshrl.u32 %v1068, 7
    %v1070 = vsub.s32 %v1067, %v1069
    %v1071 = vrot.slane %v1061, %v1070
    %v1073 = vunpack.c.l.s4 1966171168
    %v1074 = vunpack.c.0.s8 %v1073
    %v1075 = vlaneseq
    %v1076 = vshrl.u32 %v1075, 7
    %v1077 = vsub.s32 %v1074, %v1076
    %v1078 = vrot.slane %v1062, %v1077
    %v1080 = vunpack.c.l.s4 1966171168
    %v1081 = vunpack.c.0.s8 %v1080
    %v1082 = vlaneseq
    %v1083 = vshrl.u32 %v1082, 7
    %v1084 = vsub.s32 %v1081, %v1083
    %v1085 = vrot.slane %v1063, %v1084
    %v1087 = vunpack.c.l.s4 1966171168
    %v1088 = vunpack.c.0.s8 %v1087
    %v1089 = vlaneseq
    %v1090 = vshrl.u32 %v1089, 7
    %v1091 = vsub.s32 %v1088, %v1090
    %v1092 = vrot.slane %v1064, %v1091
    %v1093 = vcombine.low %v1071, %v1085
    %v1094 = vcombine.low %v1078, %v1092
    %v1095 = vcombine.low %v677, %v692
    %v1097 = vunpack.c.l.s4 1966171168
    %v1098 = vunpack.c.0.s8 %v1097
    %v1099 = vlaneseq
    %v1100 = vshrl.u32 %v1099, 7
    %v1101 = vsub.s32 %v1098, %v1100
    %v1102 = vrot.slane %v1095, %v1101
    %v1103 = vcombine.high %v1102, %v1102
    %v1105 = vunpack.c.l.s4 1966171168
    %v1106 = vunpack.c.0.s8 %v1105
    %v1107 = vlaneseq
    %v1108 = vshrl.u32 %v1107, 7
    %v1109 = vsub.s32 %v1106, %v1108
    %v1110 = vrot.slane %v1102, %v1109
    %v1112 = vunpack.c.l.s4 1966171168
    %v1113 = vunpack.c.0.s8 %v1112
    %v1114 = vlaneseq
    %v1115 = vshrl.u32 %v1114, 7
    %v1116 = vsub.s32 %v1113, %v1115
    %v1117 = vrot.slane %v1103, %v1116
    %v1145 = vunpack.c.l.b16 %v75
    %v1146 = vunpack.c.l.b16 %v76
    %v1147 = vunpack.c.l.b16 %v77
    %v1148 = vunpack.c.l.b16 %v78
    %v1149 = vunpack.c.l.b16 %v79
    %v1150 = vunpack.c.l.b16 %v80
    %v1151 = vunpack.c.l.b16 %v81
    %v1152 = vunpack.c.l.b16 %v82
    %v1153 = vunpack.c.l.b16 %v83
    %v1154 = vunpack.c.l.b16 %v84
    %v1155 = vunpack.c.l.b16 %v85
    %v1156 = vunpack.c.l.b16 %v86
    %v1157 = vunpack.c.l.b16 %v87
    %v1158 = vunpack.c.l.b16 %v88
    %v1159 = vunpack.c.l.b16 %v89
    %v1160 = vunpack.c.l.b16 %v90
    %v1161 = vunpack.c.l.b16 %v91
    %v1162 = vunpack.c.l.b16 %v92
    %v1163 = vunpack.c.l.b16 %v93
    %v1164 = vunpack.c.l.b16 %v94
    %v1165 = vpack.c.b16 %v1146, %v1145
    %v1166 = vpack.c.b16 %v1148, %v1147
    %v1167 = vpack.c.b16 %v1150, %v1149
    %v1168 = vpack.c.b16 %v1152, %v1151
    %v1169 = vpack.c.b16 %v1154, %v1153
    %v1170 = vpack.c.b16 %v1156, %v1155
    %v1171 = vpack.c.b16 %v1158, %v1157
    %v1172 = vpack.c.b16 %v1160, %v1159
    %v1173 = vpack.c.b16 %v1162, %v1161
    %v1174 = vpack.c.b16 %v1164, %v1163
    %v1186 = vsel %vm304, %v764, 0
    %v1189 = vsel %vm304, %v830, 0
    %v1192 = vsel %vm304, %v896, 0
    %v1195 = vsel %vm304, %v962, 0
    %v1198 = vsel %vm304, %v1028, 0
    %v1201 = vsel %vm304, %v1094, 0
    %v1204 = vsel %vm304, %v1117, 0
    %1206 = vmatprep.subr.bf16.mxu0 0
    %1207 = vmatpush1.bf16.msra.mxu0 %v1172
    %1208 = vmatprep.subr.bf16.mxu0 0
    %1209 = vmatpush1.bf16.msra.mxu0 %v1171
    %1210 = vmatprep.subr.bf16.mxu0 0
    %1211 = vmatpush1.bf16.msra.mxu0 %v1170
    %1212 = vmatprep.subr.bf16.mxu0 0
    %1213 = vmatpush1.bf16.msra.mxu0 %v1169
    %1214 = vmatprep.subr.bf16.mxu0 0
    %1215 = vmatpush1.bf16.msra.mxu0 %v1168
    %1216 = vmatprep.subr.bf16.mxu0 0
    %1217 = vmatpush1.bf16.msra.mxu0 %v1167
    %1218 = vmatprep.subr.bf16.mxu0 0
    %1219 = vmatpush1.bf16.msra.mxu0 %v1166
    %1220 = vmatprep.subr.bf16.mxu0 0
    %1221 = vmatpush1.bf16.msra.mxu0 %v1165
    %1222 = vmatprep.subr.bf16.mxu0 0
    %1223 = vmatpush2.bf16.msra.mxu0 0
    %1224 = vmatprep.subr.bf16.mxu0 0
    %1225 = vmatpush2.bf16.msra.mxu0 0
    %1226 = vmatprep.subr.bf16.mxu0 0
    %1227 = vmatpush2.bf16.msra.mxu0 0
    %1228 = vmatprep.subr.bf16.mxu0 0
    %1229 = vmatpush2.bf16.msra.mxu0 0
    %1230 = vmatprep.subr.bf16.mxu0 0
    %1231 = vmatpush2.bf16.msra.mxu0 0
    %1232 = vmatprep.subr.bf16.mxu0 0
    %1233 = vmatpush2.bf16.msra.mxu0 0
    %1234 = vmatprep.subr.bf16.mxu0 0
    %1235 = vmatpush2.bf16.msra.mxu0 %v1174
    %1236 = vmatprep.subr.bf16.mxu0 0
    %1237 = vmatpush2.bf16.msra.mxu0 %v1173
    %1238 = vmatprep.mubr.bf16.mxu0 %v1186
    %1239 = vmatmul.mubr.bf16.gmra.mxu0 %v763
    %v1240 = vpop.f32.mrf.mxu0
    %v1241 = vadd.f32 %v697, %v1240
    %v1242 = vpop.f32.mrf.mxu0
    %v1243 = vpop.f32.mrf.mxu0
    %v1244 = vadd.f32 %v697, %v1243
    %v1245 = vpop.f32.mrf.mxu0
    %1246 = vmatprep.mubr.bf16.mxu0 %v1189
    %1247 = vmatmul.mubr.bf16.gmra.mxu0 %v829
    %v1248 = vpop.f32.mrf.mxu0
    %v1249 = vadd.f32 %v697, %v1248
    %v1250 = vpop.f32.mrf.mxu0
    %v1251 = vpop.f32.mrf.mxu0
    %v1252 = vadd.f32 %v697, %v1251
    %v1253 = vpop.f32.mrf.mxu0
    %1254 = vmatprep.mubr.bf16.mxu0 %v1192
    %1255 = vmatmul.mubr.bf16.gmra.mxu0 %v895
    %v1256 = vpop.f32.mrf.mxu0
    %v1257 = vadd.f32 %v697, %v1256
    %v1258 = vpop.f32.mrf.mxu0
    %v1259 = vpop.f32.mrf.mxu0
    %v1260 = vadd.f32 %v697, %v1259
    %v1261 = vpop.f32.mrf.mxu0
    %1262 = vmatprep.mubr.bf16.mxu0 %v1195
    %1263 = vmatmul.mubr.bf16.gmra.mxu0 %v961
    %v1264 = vpop.f32.mrf.mxu0
    %v1265 = vadd.f32 %v697, %v1264
    %v1266 = vpop.f32.mrf.mxu0
    %v1267 = vpop.f32.mrf.mxu0
    %v1268 = vadd.f32 %v697, %v1267
    %v1269 = vpop.f32.mrf.mxu0
    %1270 = vmatprep.mubr.bf16.mxu0 %v1198
    %1271 = vmatmul.mubr.bf16.gmra.mxu0 %v1027
    %v1272 = vpop.f32.mrf.mxu0
    %v1273 = vadd.f32 %v697, %v1272
    %v1274 = vpop.f32.mrf.mxu0
    %v1275 = vpop.f32.mrf.mxu0
    %v1276 = vadd.f32 %v697, %v1275
    %v1277 = vpop.f32.mrf.mxu0
    %1278 = vmatprep.mubr.bf16.mxu0 %v1201
    %1279 = vmatmul.mubr.bf16.gmra.mxu0 %v1093
    %v1280 = vpop.f32.mrf.mxu0
    %v1281 = vadd.f32 %v697, %v1280
    %v1282 = vpop.f32.mrf.mxu0
    %v1283 = vpop.f32.mrf.mxu0
    %v1284 = vadd.f32 %v697, %v1283
    %v1285 = vpop.f32.mrf.mxu0
    %1286 = vmatprep.mubr.bf16.mxu0 %v1204
    %1287 = vmatmul.mubr.bf16.gmra.mxu0 %v1110
    %v1288 = vpop.f32.mrf.mxu0
    %v1289 = vadd.f32 %v697, %v1288
    %v1290 = vpop.f32.mrf.mxu0
    %v1291 = vpop.f32.mrf.mxu0
    %v1292 = vpop.f32.mrf.mxu0
    %1293 = vdwg.mxu0
    %v1294 = vmax.f32 %v1241, 0.0
    %v1295 = vmax.f32 %v1244, 0.0
    %v1296 = vmax.f32 %v1249, 0.0
    %v1297 = vmax.f32 %v1252, 0.0
    %v1298 = vmax.f32 %v1257, 0.0
    %v1299 = vmax.f32 %v1260, 0.0
    %v1300 = vmax.f32 %v1265, 0.0
    %v1301 = vmax.f32 %v1268, 0.0
    %v1302 = vmax.f32 %v1273, 0.0
    %v1303 = vmax.f32 %v1276, 0.0
    %v1304 = vmax.f32 %v1281, 0.0
    %v1305 = vmax.f32 %v1284, 0.0
    %v1306 = vmax.f32 %v1289, 0.0
    %vm1307 = vcmask 1040384
    %v1308 = vsel %vm1307, %v1294, 0.0
    %v1309 = vrot.slane %v1294, 1
    %vm1310 = vcmask 1041409
    %v1311 = vsel %vm1310, %v1309, %v1308
    %v1312 = vrot.slane %v1294, 2
    %vm1313 = vcmask 1042434
    %v1314 = vsel %vm1313, %v1312, %v1311
    %v1315 = vrot.slane %v1294, 3
    %vm1316 = vcmask 1043459
    %v1317 = vsel %vm1316, %v1315, %v1314
    %v1318 = vrot.slane %v1295, 4
    %vm1319 = vcmask 1044484
    %v1320 = vsel %vm1319, %v1318, %v1317
    %v1321 = vrot.slane %v1295, 5
    %vm1322 = vcmask 1045509
    %v1323 = vsel %vm1322, %v1321, %v1320
    %v1324 = vrot.slane %v1295, 6
    %vm1325 = vcmask 1046534
    %v1326 = vsel %vm1325, %v1324, %v1323
    %v1327 = vrot.slane %v1295, 7
    %vm1328 = vcmask 1047559
    %v1329 = vsel %vm1328, %v1327, %v1326
    %v1330 = vsel %vm1307, %v1309, 0.0
    %v1331 = vsel %vm1310, %v1312, %v1330
    %v1332 = vsel %vm1313, %v1315, %v1331
    %v1333 = vrot.slane %v1294, 4
    %v1334 = vsel %vm1316, %v1333, %v1332
    %v1335 = vsel %vm1319, %v1321, %v1334
    %v1336 = vsel %vm1322, %v1324, %v1335
    %v1337 = vsel %vm1325, %v1327, %v1336
    %v1338 = vsel %vm1328, %v1295, %v1337
    %v1339 = vsel %vm1307, %v1296, 0.0
    %v1340 = vrot.slane %v1296, 1
    %v1341 = vsel %vm1310, %v1340, %v1339
    %v1342 = vrot.slane %v1296, 2
    %v1343 = vsel %vm1313, %v1342, %v1341
    %v1344 = vrot.slane %v1296, 3
    %v1345 = vsel %vm1316, %v1344, %v1343
    %v1346 = vrot.slane %v1297, 4
    %v1347 = vsel %vm1319, %v1346, %v1345
    %v1348 = vrot.slane %v1297, 5
    %v1349 = vsel %vm1322, %v1348, %v1347
    %v1350 = vrot.slane %v1297, 6
    %v1351 = vsel %vm1325, %v1350, %v1349
    %v1352 = vrot.slane %v1297, 7
    %v1353 = vsel %vm1328, %v1352, %v1351
    %v1354 = vsel %vm1307, %v1340, 0.0
    %v1355 = vsel %vm1310, %v1342, %v1354
    %v1356 = vsel %vm1313, %v1344, %v1355
    %v1357 = vrot.slane %v1296, 4
    %v1358 = vsel %vm1316, %v1357, %v1356
    %v1359 = vsel %vm1319, %v1348, %v1358
    %v1360 = vsel %vm1322, %v1350, %v1359
    %v1361 = vsel %vm1325, %v1352, %v1360
    %v1362 = vsel %vm1328, %v1297, %v1361
    %v1363 = vsel %vm1307, %v1298, 0.0
    %v1364 = vrot.slane %v1298, 1
    %v1365 = vsel %vm1310, %v1364, %v1363
    %v1366 = vrot.slane %v1298, 2
    %v1367 = vsel %vm1313, %v1366, %v1365
    %v1368 = vrot.slane %v1298, 3
    %v1369 = vsel %vm1316, %v1368, %v1367
    %v1370 = vrot.slane %v1299, 4
    %v1371 = vsel %vm1319, %v1370, %v1369
    %v1372 = vrot.slane %v1299, 5
    %v1373 = vsel %vm1322, %v1372, %v1371
    %v1374 = vrot.slane %v1299, 6
    %v1375 = vsel %vm1325, %v1374, %v1373
    %v1376 = vrot.slane %v1299, 7
    %v1377 = vsel %vm1328, %v1376, %v1375
    %v1378 = vsel %vm1307, %v1364, 0.0
    %v1379 = vsel %vm1310, %v1366, %v1378
    %v1380 = vsel %vm1313, %v1368, %v1379
    %v1381 = vrot.slane %v1298, 4
    %v1382 = vsel %vm1316, %v1381, %v1380
    %v1383 = vsel %vm1319, %v1372, %v1382
    %v1384 = vsel %vm1322, %v1374, %v1383
    %v1385 = vsel %vm1325, %v1376, %v1384
    %v1386 = vsel %vm1328, %v1299, %v1385
    %v1387 = vsel %vm1307, %v1300, 0.0
    %v1388 = vrot.slane %v1300, 1
    %v1389 = vsel %vm1307, %v1388, 0.0
    %v1390 = vrot.slane %v1300, 2
    %v1391 = vsel %vm1307, %v1390, 0.0
    %v1392 = vrot.slane %v1300, 3
    %v1393 = vsel %vm1310, %v1392, %v1391
    %v1394 = vrot.slane %v1300, 4
    %v1395 = vsel %vm1313, %v1394, %v1393
    %v1396 = vrot.slane %v1301, 5
    %v1397 = vsel %vm1316, %v1396, %v1395
    %v1398 = vrot.slane %v1301, 6
    %v1399 = vsel %vm1319, %v1398, %v1397
    %v1400 = vrot.slane %v1301, 7
    %v1401 = vsel %vm1322, %v1400, %v1399
    %v1402 = vsel %vm1325, %v1301, %v1401
    %v1403 = vrot.slane %v1302, 1
    %v1404 = vsel %vm1328, %v1403, %v1402
    %v1405 = vsel %vm1307, %v1392, 0.0
    %v1406 = vsel %vm1310, %v1394, %v1405
    %v1407 = vrot.slane %v1300, 5
    %v1408 = vsel %vm1313, %v1407, %v1406
    %v1409 = vsel %vm1316, %v1398, %v1408
    %v1410 = vsel %vm1319, %v1400, %v1409
    %v1411 = vsel %vm1322, %v1301, %v1410
    %v1412 = vrot.slane %v1301, 1
    %v1413 = vsel %vm1325, %v1412, %v1411
    %v1414 = vrot.slane %v1302, 2
    %v1415 = vsel %vm1328, %v1414, %v1413
    %v1416 = vsel %vm1307, %v1414, 0.0
    %v1417 = vrot.slane %v1302, 3
    %v1418 = vsel %vm1310, %v1417, %v1416
    %v1419 = vrot.slane %v1302, 4
    %v1420 = vsel %vm1313, %v1419, %v1418
    %v1421 = vrot.slane %v1303, 5
    %v1422 = vsel %vm1316, %v1421, %v1420
    %v1423 = vrot.slane %v1303, 6
    %v1424 = vsel %vm1319, %v1423, %v1422
    %v1425 = vrot.slane %v1303, 7
    %v1426 = vsel %vm1322, %v1425, %v1424
    %v1427 = vsel %vm1325, %v1303, %v1426
    %v1428 = vrot.slane %v1304, 1
    %v1429 = vsel %vm1328, %v1428, %v1427
    %v1430 = vsel %vm1307, %v1417, 0.0
    %v1431 = vsel %vm1310, %v1419, %v1430
    %v1432 = vrot.slane %v1302, 5
    %v1433 = vsel %vm1313, %v1432, %v1431
    %v1434 = vsel %vm1316, %v1423, %v1433
    %v1435 = vsel %vm1319, %v1425, %v1434
    %v1436 = vsel %vm1322, %v1303, %v1435
    %v1437 = vrot.slane %v1303, 1
    %v1438 = vsel %vm1325, %v1437, %v1436
    %v1439 = vrot.slane %v1304, 2
    %v1440 = vsel %vm1328, %v1439, %v1438
    %v1441 = vsel %vm1307, %v1439, 0.0
    %v1442 = vrot.slane %v1304, 3
    %v1443 = vsel %vm1310, %v1442, %v1441
    %v1444 = vrot.slane %v1304, 4
    %v1445 = vsel %vm1313, %v1444, %v1443
    %v1446 = vrot.slane %v1305, 5
    %v1447 = vsel %vm1316, %v1446, %v1445
    %v1448 = vrot.slane %v1305, 6
    %v1449 = vsel %vm1319, %v1448, %v1447
    %v1450 = vrot.slane %v1305, 7
    %v1451 = vsel %vm1322, %v1450, %v1449
    %v1452 = vsel %vm1325, %v1305, %v1451
    %v1453 = vrot.slane %v1306, 1
    %v1454 = vsel %vm1328, %v1453, %v1452
    %v1455 = vsel %vm1307, %v1442, 0.0
    %v1456 = vsel %vm1310, %v1444, %v1455
    %v1457 = vrot.slane %v1304, 5
    %v1458 = vsel %vm1313, %v1457, %v1456
    %v1459 = vsel %vm1316, %v1448, %v1458
    %v1460 = vsel %vm1319, %v1450, %v1459
    %v1461 = vsel %vm1322, %v1305, %v1460
    %v1462 = vrot.slane %v1305, 1
    %v1463 = vsel %vm1325, %v1462, %v1461
    %v1464 = vrot.slane %v1306, 2
    %v1465 = vsel %vm1328, %v1464, %v1463
    %v1466 = vsel %vm1307, %v1464, 0.0
    %v1467 = vrot.slane %v1306, 3
    %v1468 = vsel %vm1307, %v1467, 0.0
    %v1469 = vmax.f32 %v1329, %v1338
    %v1470 = vmax.f32 %v1353, %v1362
    %v1471 = vmax.f32 %v1377, %v1386
    %v1472 = vmax.f32 %v1387, %v1389
    %v1473 = vmax.f32 %v1404, %v1415
    %v1474 = vmax.f32 %v1429, %v1440
    %v1475 = vmax.f32 %v1454, %v1465
    %v1476 = vmax.f32 %v1466, %v1468
    %v1477 = vpack.c.bf16 %v1470, %v1469
    %v1478 = vpack.c.bf16 %v1472, %v1471
    %v1479 = vpack.c.bf16 %v1474, %v1473
    %v1480 = vpack.c.bf16 %v1476, %v1475
    %v1481 = vcombine.high %v1477, 0
    %v1483 = vunpack.c.l.s4 1983009808
    %v1484 = vunpack.c.0.s8 %v1483
    %v1485 = vlaneseq
    %v1486 = vshrl.u32 %v1485, 7
    %v1487 = vsub.s32 %v1484, %v1486
    %v1488 = vrot.slane %v1477, %v1487
    %v1490 = vunpack.c.l.s4 1983009808
    %v1491 = vunpack.c.0.s8 %v1490
    %v1492 = vlaneseq
    %v1493 = vshrl.u32 %v1492, 7
    %v1494 = vsub.s32 %v1491, %v1493
    %v1495 = vrot.slane %v1481, %v1494
    %v1496 = vcombine.high %v1488, 0
    %v1498 = vunpack.c.l.s4 1934713408
    %v1499 = vunpack.c.0.s8 %v1498
    %v1500 = vlaneseq
    %v1501 = vshrl.u32 %v1500, 7
    %v1502 = vsub.s32 %v1499, %v1501
    %v1503 = vrot.slane %v1488, %v1502
    %v1505 = vunpack.c.l.s4 1934713408
    %v1506 = vunpack.c.0.s8 %v1505
    %v1507 = vlaneseq
    %v1508 = vshrl.u32 %v1507, 7
    %v1509 = vsub.s32 %v1506, %v1508
    %v1510 = vrot.slane %v1496, %v1509
    %v1511 = vcombine.high %v1495, 0
    %v1513 = vunpack.c.l.s4 1934713408
    %v1514 = vunpack.c.0.s8 %v1513
    %v1515 = vlaneseq
    %v1516 = vshrl.u32 %v1515, 7
    %v1517 = vsub.s32 %v1514, %v1516
    %v1518 = vrot.slane %v1495, %v1517
    %v1520 = vunpack.c.l.s4 1934713408
    %v1521 = vunpack.c.0.s8 %v1520
    %v1522 = vlaneseq
    %v1523 = vshrl.u32 %v1522, 7
    %v1524 = vsub.s32 %v1521, %v1523
    %v1525 = vrot.slane %v1511, %v1524
    %v1526 = vcombine.high %v1503, 0
    %v1527 = vcombine.high %v1510, 0
    %v1528 = vcombine.high %v1518, 0
    %v1529 = vcombine.high %v1525, 0
    %v1530 = vcombine.high %v1479, 0
    %v1532 = vunpack.c.l.s4 1983009808
    %v1533 = vunpack.c.0.s8 %v1532
    %v1534 = vlaneseq
    %v1535 = vshrl.u32 %v1534, 7
    %v1536 = vsub.s32 %v1533, %v1535
    %v1537 = vrot.slane %v1479, %v1536
    %v1539 = vunpack.c.l.s4 1983009808
    %v1540 = vunpack.c.0.s8 %v1539
    %v1541 = vlaneseq
    %v1542 = vshrl.u32 %v1541, 7
    %v1543 = vsub.s32 %v1540, %v1542
    %v1544 = vrot.slane %v1530, %v1543
    %v1545 = vcombine.high %v1537, 0
    %v1547 = vunpack.c.l.s4 1934713408
    %v1548 = vunpack.c.0.s8 %v1547
    %v1549 = vlaneseq
    %v1550 = vshrl.u32 %v1549, 7
    %v1551 = vsub.s32 %v1548, %v1550
    %v1552 = vrot.slane %v1537, %v1551
    %v1554 = vunpack.c.l.s4 1934713408
    %v1555 = vunpack.c.0.s8 %v1554
    %v1556 = vlaneseq
    %v1557 = vshrl.u32 %v1556, 7
    %v1558 = vsub.s32 %v1555, %v1557
    %v1559 = vrot.slane %v1545, %v1558
    %v1560 = vcombine.high %v1544, 0
    %v1562 = vunpack.c.l.s4 1934713408
    %v1563 = vunpack.c.0.s8 %v1562
    %v1564 = vlaneseq
    %v1565 = vshrl.u32 %v1564, 7
    %v1566 = vsub.s32 %v1563, %v1565
    %v1567 = vrot.slane %v1544, %v1566
    %v1569 = vunpack.c.l.s4 1934713408
    %v1570 = vunpack.c.0.s8 %v1569
    %v1571 = vlaneseq
    %v1572 = vshrl.u32 %v1571, 7
    %v1573 = vsub.s32 %v1570, %v1572
    %v1574 = vrot.slane %v1560, %v1573
    %v1575 = vcombine.high %v1552, 0
    %v1576 = vcombine.high %v1559, 0
    %v1577 = vcombine.high %v1567, 0
    %v1578 = vcombine.high %v1574, 0
    %v1580 = vunpack.c.l.s4 1983009808
    %v1581 = vunpack.c.0.s8 %v1580
    %v1582 = vlaneseq
    %v1583 = vshrl.u32 %v1582, 7
    %v1584 = vsub.s32 %v1581, %v1583
    %v1585 = vrot.slane %v1478, %v1584
    %v1586 = vcombine.high %v1585, 0
    %v1588 = vunpack.c.l.s4 1934713408
    %v1589 = vunpack.c.0.s8 %v1588
    %v1590 = vlaneseq
    %v1591 = vshrl.u32 %v1590, 7
    %v1592 = vsub.s32 %v1589, %v1591
    %v1593 = vrot.slane %v1585, %v1592
    %v1595 = vunpack.c.l.s4 1934713408
    %v1596 = vunpack.c.0.s8 %v1595
    %v1597 = vlaneseq
    %v1598 = vshrl.u32 %v1597, 7
    %v1599 = vsub.s32 %v1596, %v1598
    %v1600 = vrot.slane %v1586, %v1599
    %v1601 = vcombine.high %v1593, 0
    %v1602 = vcombine.high %v1600, 0
    %v1603 = vcombine.high %v1478, 0
    %v1605 = vunpack.c.l.s4 1983009808
    %v1606 = vunpack.c.0.s8 %v1605
    %v1607 = vlaneseq
    %v1608 = vshrl.u32 %v1607, 7
    %v1609 = vsub.s32 %v1606, %v1608
    %v1610 = vrot.slane %v1480, %v1609
    %v1611 = vcombine.high %v1610, 0
    %v1613 = vunpack.c.l.s4 1934713408
    %v1614 = vunpack.c.0.s8 %v1613
    %v1615 = vlaneseq
    %v1616 = vshrl.u32 %v1615, 7
    %v1617 = vsub.s32 %v1614, %v1616
    %v1618 = vrot.slane %v1610, %v1617
    %v1620 = vunpack.c.l.s4 1934713408
    %v1621 = vunpack.c.0.s8 %v1620
    %v1622 = vlaneseq
    %v1623 = vshrl.u32 %v1622, 7
    %v1624 = vsub.s32 %v1621, %v1623
    %v1625 = vrot.slane %v1611, %v1624
    %v1626 = vcombine.high %v1618, 0
    %v1627 = vcombine.high %v1625, 0
    %v1628 = vcombine.high %v1480, 0
    %v1631 = vpack.i.b16 %v1552, %v1503
    %v1633 = vshrl.u32 %v1503, 16
    %v1634 = vshrl.u32 %v1552, 16
    %v1635 = vpack.i.b16 %v1634, %v1633
    %v1639 = vpack.i.b16 %v1575, %v1526
    %v1641 = vshrl.u32 %v1526, 16
    %v1642 = vshrl.u32 %v1575, 16
    %v1643 = vpack.i.b16 %v1642, %v1641
    %v1647 = vpack.i.b16 %v1559, %v1510
    %v1649 = vshrl.u32 %v1510, 16
    %v1650 = vshrl.u32 %v1559, 16
    %v1651 = vpack.i.b16 %v1650, %v1649
    %v1655 = vpack.i.b16 %v1576, %v1527
    %v1657 = vshrl.u32 %v1527, 16
    %v1658 = vshrl.u32 %v1576, 16
    %v1659 = vpack.i.b16 %v1658, %v1657
    %v1663 = vpack.i.b16 %v1567, %v1518
    %v1665 = vshrl.u32 %v1518, 16
    %v1666 = vshrl.u32 %v1567, 16
    %v1667 = vpack.i.b16 %v1666, %v1665
    %v1671 = vpack.i.b16 %v1577, %v1528
    %v1673 = vshrl.u32 %v1528, 16
    %v1674 = vshrl.u32 %v1577, 16
    %v1675 = vpack.i.b16 %v1674, %v1673
    %v1679 = vpack.i.b16 %v1574, %v1525
    %v1681 = vshrl.u32 %v1525, 16
    %v1682 = vshrl.u32 %v1574, 16
    %v1683 = vpack.i.b16 %v1682, %v1681
    %v1687 = vpack.i.b16 %v1578, %v1529
    %v1689 = vshrl.u32 %v1529, 16
    %v1690 = vshrl.u32 %v1578, 16
    %v1691 = vpack.i.b16 %v1690, %v1689
    %v1695 = vpack.i.b16 %v1618, %v1593
    %v1697 = vshrl.u32 %v1593, 16
    %v1698 = vshrl.u32 %v1618, 16
    %v1699 = vpack.i.b16 %v1698, %v1697
    %v1703 = vpack.i.b16 %v1626, %v1601
    %v1705 = vshrl.u32 %v1601, 16
    %v1706 = vshrl.u32 %v1626, 16
    %v1707 = vpack.i.b16 %v1706, %v1705
    %v1711 = vpack.i.b16 %v1625, %v1600
    %v1713 = vshrl.u32 %v1600, 16
    %v1714 = vshrl.u32 %v1625, 16
    %v1715 = vpack.i.b16 %v1714, %v1713
    %v1719 = vpack.i.b16 %v1627, %v1602
    %v1721 = vshrl.u32 %v1602, 16
    %v1722 = vshrl.u32 %v1627, 16
    %v1723 = vpack.i.b16 %v1722, %v1721
    %v1727 = vpack.i.b16 %v1628, %v1603
    %v1729 = vld [vmem:[%s6] sm:$0xf]
    %v1730 = vld [vmem:[%s6 + $0x4] sm:$0xf]
    %v1731 = vld [vmem:[%s6 + $0x8] sm:$0xf]
    %v1732 = vld [vmem:[%s6 + $0xc] sm:$0xf]
    %v1733 = vld [vmem:[%s6 + $0x10] sm:$0xf]
    %v1734 = vld [vmem:[%s6 + $0x14] sm:$0xf]
    %v1735 = vld [vmem:[%s6 + $0x18] sm:$0xf]
    %v1736 = vld [vmem:[%s6 + $0x1c] sm:$0xf]
    %v1737 = vld [vmem:[%s6 + $0x20] sm:$0xf]
    %v1738 = vld [vmem:[%s6 + $0x24] sm:$0xf]
    %v1739 = vld [vmem:[%s6 + $0x28] sm:$0xf]
    %v1740 = vld [vmem:[%s6 + $0x2c] sm:$0xf]
    %v1741 = vld [vmem:[%s6 + $0x30] sm:$0xf]
    %v1742 = vld [vmem:[%s6 + $0x34] sm:$0xf]
    %v1743 = vld [vmem:[%s6 + $0x38] sm:$0xf]
    %v1744 = vld [vmem:[%s6 + $0x3c] sm:$0xf]
    %v1745 = vld [vmem:[%s6 + $0x40] sm:$0xf]
    %v1746 = vld [vmem:[%s6 + $0x44] sm:$0xf]
    %v1747 = vld [vmem:[%s6 + $0x48] sm:$0xf]
    %v1748 = vld [vmem:[%s6 + $0x4c] sm:$0xf]
    %v1749 = vld [vmem:[%s6 + $0x50] sm:$0xf]
    %v1750 = vld [vmem:[%s6 + $0x54] sm:$0xf]
    %v1751 = vld [vmem:[%s6 + $0x58] sm:$0xf]
    %v1752 = vld [vmem:[%s6 + $0x5c] sm:$0xf]
    %v1753 = vld [vmem:[%s6 + $0x60] sm:$0xf]
    %v1754 = vld [vmem:[%s6 + $0x64] sm:$0xf]
    %v1755 = vld [vmem:[%s6 + $0x68] sm:$0xf]
    %v1756 = vld [vmem:[%s6 + $0x6c] sm:$0xf]
    %v1757 = vld [vmem:[%s6 + $0x70] sm:$0xf]
    %v1758 = vld [vmem:[%s6 + $0x74] sm:$0xf]
    %v1759 = vld [vmem:[%s6 + $0x78] sm:$0xf]
    %v1760 = vld [vmem:[%s6 + $0x7c] sm:$0xf]
    %v1761 = vld [vmem:[%s6 + $0x80] sm:$0xf]
    %v1762 = vld [vmem:[%s6 + $0x84] sm:$0xf]
    %v1763 = vld [vmem:[%s6 + $0x88] sm:$0xf]
    %v1764 = vld [vmem:[%s6 + $0x8c] sm:$0xf]
    %v1765 = vld [vmem:[%s6 + $0x90] sm:$0xf]
    %v1766 = vld [vmem:[%s6 + $0x94] sm:$0xf]
    %v1767 = vld [vmem:[%s6 + $0x98] sm:$0xf]
    %v1768 = vld [vmem:[%s6 + $0x9c] sm:$0xf]
    %v1769 = vld [vmem:[%s6 + $0xa0] sm:$0xf]
    %v1770 = vld [vmem:[%s6 + $0xa4] sm:$0xf]
    %v1771 = vld [vmem:[%s6 + $0xa8] sm:$0xf]
    %v1772 = vld [vmem:[%s6 + $0xac] sm:$0xf]
    %v1773 = vld [vmem:[%s6 + $0xb0] sm:$0xf]
    %v1774 = vld [vmem:[%s6 + $0xb4] sm:$0xf]
    %v1775 = vld [vmem:[%s6 + $0xb8] sm:$0xf]
    %v1776 = vld [vmem:[%s6 + $0xbc] sm:$0xf]
    %v1777 = vld [vmem:[%s6 + $0xc0] sm:$0xf]
    %v1778 = vld [vmem:[%s6 + $0xc4] sm:$0xf]
    %v1779 = vld [vmem:[%s6 + $0xc8] sm:$0xf]
    %v1780 = vld [vmem:[%s6 + $0xcc] sm:$0xf]
    %v1781 = vld [vmem:[%s6 + $0xd0] sm:$0xf]
    %v1782 = vld [vmem:[%s6 + $0xd4] sm:$0xf]
    %v1783 = vld [vmem:[%s6 + $0xd8] sm:$0xf]
    %v1784 = vld [vmem:[%s6 + $0xdc] sm:$0xf]
    %v1785 = vld [vmem:[%s6 + $0xe0] sm:$0xf]
    %v1786 = vld [vmem:[%s6 + $0xe4] sm:$0xf]
    %v1787 = vld [vmem:[%s6 + $0xe8] sm:$0xf]
    %v1788 = vld [vmem:[%s6 + $0xec] sm:$0xf]
    %v1789 = vld [vmem:[%s6 + $0xf0] sm:$0xf]
    %v1790 = vld [vmem:[%s6 + $0xf4] sm:$0xf]
    %v1791 = vld [vmem:[%s6 + $0xf8] sm:$0xf]
    %v1792 = vld [vmem:[%s6 + $0xfc] sm:$0xf]
    %v1793 = vld [vmem:[%s6 + $0x100] sm:$0xf]
    %v1794 = vld [vmem:[%s6 + $0x104] sm:$0xf]
    %v1795 = vld [vmem:[%s6 + $0x108] sm:$0xf]
    %v1796 = vld [vmem:[%s6 + $0x10c] sm:$0xf]
    %v1797 = vld [vmem:[%s6 + $0x110] sm:$0xf]
    %v1798 = vld [vmem:[%s6 + $0x114] sm:$0xf]
    %v1799 = vld [vmem:[%s6 + $0x118] sm:$0xf]
    %v1800 = vld [vmem:[%s6 + $0x11c] sm:$0xf]
    %v1801 = vld [vmem:[%s6 + $0x120] sm:$0xf]
    %v1802 = vld [vmem:[%s6 + $0x124] sm:$0xf]
    %v1803 = vld [vmem:[%s6 + $0x128] sm:$0xf]
    %v1804 = vld [vmem:[%s6 + $0x12c] sm:$0xf]
    %v1805 = vld [vmem:[%s6 + $0x130] sm:$0xf]
    %v1806 = vld [vmem:[%s6 + $0x134] sm:$0xf]
    %v1807 = vld [vmem:[%s6 + $0x138] sm:$0xf]
    %v1808 = vld [vmem:[%s6 + $0x13c] sm:$0xf]
    %v1809 = vld [vmem:[%s6 + $0x140] sm:$0xf]
    %v1810 = vld [vmem:[%s6 + $0x144] sm:$0xf]
    %v1811 = vld [vmem:[%s6 + $0x148] sm:$0xf]
    %v1812 = vld [vmem:[%s6 + $0x14c] sm:$0xf]
    %v1813 = vld [vmem:[%s6 + $0x150] sm:$0xf]
    %v1814 = vld [vmem:[%s6 + $0x154] sm:$0xf]
    %v1815 = vld [vmem:[%s6 + $0x158] sm:$0xf]
    %v1816 = vld [vmem:[%s6 + $0x15c] sm:$0xf]
    %v1817 = vld [vmem:[%s6 + $0x160] sm:$0xf]
    %v1818 = vld [vmem:[%s6 + $0x164] sm:$0xf]
    %v1819 = vld [vmem:[%s6 + $0x168] sm:$0xf]
    %v1820 = vld [vmem:[%s6 + $0x16c] sm:$0xf]
    %v1821 = vld [vmem:[%s6 + $0x170] sm:$0xf]
    %v1822 = vld [vmem:[%s6 + $0x174] sm:$0xf]
    %v1823 = vld [vmem:[%s6 + $0x178] sm:$0xf]
    %v1824 = vld [vmem:[%s6 + $0x17c] sm:$0xf]
    %v1825 = vld [vmem:[%s6 + $0x180] sm:$0xf]
    %v1826 = vld [vmem:[%s6 + $0x184] sm:$0xf]
    %v1827 = vld [vmem:[%s6 + $0x188] sm:$0xf]
    %v1828 = vld [vmem:[%s6 + $0x18c] sm:$0xf]
    %v1829 = vld [vmem:[%s6 + $0x190] sm:$0xf]
    %v1830 = vld [vmem:[%s6 + $0x194] sm:$0xf]
    %v1831 = vld [vmem:[%s6 + $0x198] sm:$0xf]
    %v1832 = vld [vmem:[%s6 + $0x19c] sm:$0xf]
    %v1833 = vld [vmem:[%s6 + $0x1a0] sm:$0xf]
    %v1834 = vld [vmem:[%s6 + $0x1a4] sm:$0xf]
    %v1835 = vld [vmem:[%s6 + $0x1a8] sm:$0xf]
    %v1836 = vld [vmem:[%s6 + $0x1ac] sm:$0xf]
    %v1837 = vld [vmem:[%s6 + $0x1b0] sm:$0xf]
    %v1838 = vld [vmem:[%s6 + $0x1b4] sm:$0xf]
    %v1839 = vld [vmem:[%s6 + $0x1b8] sm:$0xf]
    %v1840 = vld [vmem:[%s6 + $0x1bc] sm:$0xf]
    %v1841 = vld [vmem:[%s6 + $0x1c0] sm:$0xf]
    %v1842 = vld [vmem:[%s6 + $0x1c4] sm:$0xf]
    %v1843 = vld [vmem:[%s6 + $0x1c8] sm:$0xf]
    %v1844 = vld [vmem:[%s6 + $0x1cc] sm:$0xf]
    %v1845 = vld [vmem:[%s6 + $0x1d0] sm:$0xf]
    %v1846 = vld [vmem:[%s6 + $0x1d4] sm:$0xf]
    %v1847 = vld [vmem:[%s6 + $0x1d8] sm:$0xf]
    %v1848 = vld [vmem:[%s6 + $0x1dc] sm:$0xf]
    %v1849 = vld [vmem:[%s6 + $0x1e0] sm:$0xf]
    %v1850 = vld [vmem:[%s6 + $0x1e4] sm:$0xf]
    %v1851 = vld [vmem:[%s6 + $0x1e8] sm:$0xf]
    %v1852 = vld [vmem:[%s6 + $0x1ec] sm:$0xf]
    %v1853 = vld [vmem:[%s6 + $0x1f0] sm:$0xf]
    %v1854 = vld [vmem:[%s6 + $0x1f4] sm:$0xf]
    %v1855 = vld [vmem:[%s6 + $0x1f8] sm:$0xf]
    %v1856 = vld [vmem:[%s6 + $0x1fc] sm:$0xf]
    %v1857 = vld [vmem:[%s6 + $0x200] sm:$0xf]
    %v1858 = vld [vmem:[%s6 + $0x204] sm:$0xf]
    %v1859 = vld [vmem:[%s6 + $0x208] sm:$0xf]
    %v1860 = vld [vmem:[%s6 + $0x20c] sm:$0xf]
    %v1861 = vld [vmem:[%s6 + $0x210] sm:$0xf]
    %v1862 = vld [vmem:[%s6 + $0x214] sm:$0xf]
    %v1863 = vld [vmem:[%s6 + $0x218] sm:$0xf]
    %v1864 = vld [vmem:[%s6 + $0x21c] sm:$0xf]
    %v1865 = vld [vmem:[%s6 + $0x220] sm:$0xf]
    %v1866 = vld [vmem:[%s6 + $0x224] sm:$0xf]
    %v1867 = vld [vmem:[%s6 + $0x228] sm:$0xf]
    %v1868 = vld [vmem:[%s6 + $0x22c] sm:$0xf]
    %v1869 = vld [vmem:[%s6 + $0x230] sm:$0xf]
    %v1870 = vld [vmem:[%s6 + $0x234] sm:$0xf]
    %v1871 = vld [vmem:[%s6 + $0x238] sm:$0xf]
    %v1872 = vld [vmem:[%s6 + $0x23c] sm:$0xf]
    %v1873 = vld [vmem:[%s6 + $0x240] sm:$0xf]
    %v1874 = vld [vmem:[%s6 + $0x244] sm:$0xf]
    %v1875 = vld [vmem:[%s6 + $0x248] sm:$0xf]
    %v1876 = vld [vmem:[%s6 + $0x24c] sm:$0xf]
    %v1877 = vld [vmem:[%s6 + $0x250] sm:$0xf]
    %v1878 = vld [vmem:[%s6 + $0x254] sm:$0xf]
    %v1879 = vld [vmem:[%s6 + $0x258] sm:$0xf]
    %v1880 = vld [vmem:[%s6 + $0x25c] sm:$0xf]
    %v1881 = vld [vmem:[%s6 + $0x260] sm:$0xf]
    %v1882 = vld [vmem:[%s6 + $0x264] sm:$0xf]
    %v1883 = vld [vmem:[%s6 + $0x268] sm:$0xf]
    %v1884 = vld [vmem:[%s6 + $0x26c] sm:$0xf]
    %v1885 = vld [vmem:[%s6 + $0x270] sm:$0xf]
    %v1886 = vld [vmem:[%s6 + $0x274] sm:$0xf]
    %v1887 = vld [vmem:[%s6 + $0x278] sm:$0xf]
    %v1888 = vld [vmem:[%s6 + $0x27c] sm:$0xf]
    %v1889 = vld [vmem:[%s6 + $0x280] sm:$0xf]
    %v1890 = vld [vmem:[%s6 + $0x284] sm:$0xf]
    %v1891 = vld [vmem:[%s6 + $0x288] sm:$0xf]
    %v1892 = vld [vmem:[%s6 + $0x28c] sm:$0xf]
    %v1893 = vld [vmem:[%s6 + $0x290] sm:$0xf]
    %v1894 = vld [vmem:[%s6 + $0x294] sm:$0xf]
    %v1895 = vld [vmem:[%s6 + $0x298] sm:$0xf]
    %v1896 = vld [vmem:[%s6 + $0x29c] sm:$0xf]
    %v1897 = vld [vmem:[%s6 + $0x2a0] sm:$0xf]
    %v1898 = vld [vmem:[%s6 + $0x2a4] sm:$0xf]
    %v1899 = vld [vmem:[%s6 + $0x2a8] sm:$0xf]
    %v1900 = vld [vmem:[%s6 + $0x2ac] sm:$0xf]
    %v1901 = vld [vmem:[%s6 + $0x2b0] sm:$0xf]
    %v1902 = vld [vmem:[%s6 + $0x2b4] sm:$0xf]
    %v1903 = vld [vmem:[%s6 + $0x2b8] sm:$0xf]
    %v1904 = vld [vmem:[%s6 + $0x2bc] sm:$0xf]
    %v1905 = vld [vmem:[%s6 + $0x2c0] sm:$0xf]
    %v1906 = vld [vmem:[%s6 + $0x2c4] sm:$0xf]
    %v1907 = vld [vmem:[%s6 + $0x2c8] sm:$0xf]
    %v1908 = vld [vmem:[%s6 + $0x2cc] sm:$0xf]
    %v1909 = vld [vmem:[%s6 + $0x2d0] sm:$0xf]
    %v1910 = vld [vmem:[%s6 + $0x2d4] sm:$0xf]
    %v1911 = vld [vmem:[%s6 + $0x2d8] sm:$0xf]
    %v1912 = vld [vmem:[%s6 + $0x2dc] sm:$0xf]
    %v1913 = vld [vmem:[%s6 + $0x2e0] sm:$0xf]
    %v1914 = vld [vmem:[%s6 + $0x2e4] sm:$0xf]
    %v1915 = vld [vmem:[%s6 + $0x2e8] sm:$0xf]
    %v1916 = vld [vmem:[%s6 + $0x2ec] sm:$0xf]
    %v1917 = vld [vmem:[%s6 + $0x2f0] sm:$0xf]
    %v1918 = vld [vmem:[%s6 + $0x2f4] sm:$0xf]
    %v1919 = vld [vmem:[%s6 + $0x2f8] sm:$0xf]
    %v1920 = vld [vmem:[%s6 + $0x2fc] sm:$0xf]
    %v1921 = vld [vmem:[%s6 + $0x300] sm:$0xf]
    %v1922 = vld [vmem:[%s6 + $0x304] sm:$0xf]
    %v1923 = vld [vmem:[%s6 + $0x308] sm:$0xf]
    %v1924 = vld [vmem:[%s6 + $0x30c] sm:$0xf]
    %v1925 = vld [vmem:[%s6 + $0x310] sm:$0xf]
    %v1926 = vld [vmem:[%s6 + $0x314] sm:$0xf]
    %v1927 = vld [vmem:[%s6 + $0x318] sm:$0xf]
    %v1928 = vld [vmem:[%s6 + $0x31c] sm:$0xf]
    %v1929 = vld [vmem:[%s6 + $0x320] sm:$0xf]
    %v1930 = vld [vmem:[%s6 + $0x324] sm:$0xf]
    %v1931 = vld [vmem:[%s6 + $0x328] sm:$0xf]
    %v1932 = vld [vmem:[%s6 + $0x32c] sm:$0xf]
    %v1933 = vld [vmem:[%s6 + $0x330] sm:$0xf]
    %v1934 = vld [vmem:[%s6 + $0x334] sm:$0xf]
    %v1935 = vld [vmem:[%s6 + $0x338] sm:$0xf]
    %v1936 = vld [vmem:[%s6 + $0x33c] sm:$0xf]
    %v1937 = vld [vmem:[%s6 + $0x340] sm:$0xf]
    %v1938 = vld [vmem:[%s6 + $0x344] sm:$0xf]
    %v1939 = vld [vmem:[%s6 + $0x348] sm:$0xf]
    %v1940 = vld [vmem:[%s6 + $0x34c] sm:$0xf]
    %v1941 = vld [vmem:[%s6 + $0x350] sm:$0xf]
    %v1942 = vld [vmem:[%s6 + $0x354] sm:$0xf]
    %v1943 = vld [vmem:[%s6 + $0x358] sm:$0xf]
    %v1944 = vld [vmem:[%s6 + $0x35c] sm:$0xf]
    %v1945 = vld [vmem:[%s6 + $0x360] sm:$0xf]
    %v1946 = vld [vmem:[%s6 + $0x364] sm:$0xf]
    %v1947 = vld [vmem:[%s6 + $0x368] sm:$0xf]
    %v1948 = vld [vmem:[%s6 + $0x36c] sm:$0xf]
    %v1949 = vld [vmem:[%s6 + $0x370] sm:$0xf]
    %v1950 = vld [vmem:[%s6 + $0x374] sm:$0xf]
    %v1951 = vld [vmem:[%s6 + $0x378] sm:$0xf]
    %v1952 = vld [vmem:[%s6 + $0x37c] sm:$0xf]
    %v1953 = vld [vmem:[%s6 + $0x380] sm:$0xf]
    %v1954 = vld [vmem:[%s6 + $0x384] sm:$0xf]
    %v1955 = vld [vmem:[%s6 + $0x388] sm:$0xf]
    %v1956 = vld [vmem:[%s6 + $0x38c] sm:$0xf]
    %v1957 = vld [vmem:[%s6 + $0x390] sm:$0xf]
    %v1958 = vld [vmem:[%s6 + $0x394] sm:$0xf]
    %v1959 = vld [vmem:[%s6 + $0x398] sm:$0xf]
    %v1960 = vld [vmem:[%s6 + $0x39c] sm:$0xf]
    %v1961 = vld [vmem:[%s6 + $0x3a0] sm:$0xf]
    %v1962 = vld [vmem:[%s6 + $0x3a4] sm:$0xf]
    %v1963 = vld [vmem:[%s6 + $0x3a8] sm:$0xf]
    %v1964 = vld [vmem:[%s6 + $0x3ac] sm:$0xf]
    %v1965 = vld [vmem:[%s6 + $0x3b0] sm:$0xf]
    %v1966 = vld [vmem:[%s6 + $0x3b4] sm:$0xf]
    %v1967 = vld [vmem:[%s6 + $0x3b8] sm:$0xf]
    %v1968 = vld [vmem:[%s6 + $0x3bc] sm:$0xf]
    %v1969 = vld [vmem:[%s6 + $0x3c0] sm:$0xf]
    %v1970 = vld [vmem:[%s6 + $0x3c4] sm:$0xf]
    %v1971 = vld [vmem:[%s6 + $0x3c8] sm:$0xf]
    %v1972 = vld [vmem:[%s6 + $0x3cc] sm:$0xf]
    %v1973 = vld [vmem:[%s6 + $0x3d0] sm:$0xf]
    %v1974 = vld [vmem:[%s6 + $0x3d4] sm:$0xf]
    %v1975 = vld [vmem:[%s6 + $0x3d8] sm:$0xf]
    %v1976 = vld [vmem:[%s6 + $0x3dc] sm:$0xf]
    %v1977 = vld [vmem:[%s6 + $0x3e0] sm:$0xf]
    %v1978 = vld [vmem:[%s6 + $0x3e4] sm:$0xf]
    %v1979 = vld [vmem:[%s6 + $0x3e8] sm:$0xf]
    %v1980 = vld [vmem:[%s6 + $0x3ec] sm:$0xf]
    %v1981 = vld [vmem:[%s6 + $0x3f0] sm:$0xf]
    %v1982 = vld [vmem:[%s6 + $0x3f4] sm:$0xf]
    %v1983 = vld [vmem:[%s6 + $0x3f8] sm:$0xf]
    %v1984 = vld [vmem:[%s6 + $0x3fc] sm:$0xf]
    %v1985 = vld [vmem:[%s6 + $0x400] sm:$0xf]
    %v1986 = vld [vmem:[%s6 + $0x404] sm:$0xf]
    %v1987 = vld [vmem:[%s6 + $0x408] sm:$0xf]
    %v1988 = vld [vmem:[%s6 + $0x40c] sm:$0xf]
    %v1989 = vld [vmem:[%s6 + $0x410] sm:$0xf]
    %v1990 = vld [vmem:[%s6 + $0x414] sm:$0xf]
    %v1991 = vld [vmem:[%s6 + $0x418] sm:$0xf]
    %v1992 = vld [vmem:[%s6 + $0x41c] sm:$0xf]
    %v1993 = vld [vmem:[%s6 + $0x420] sm:$0xf]
    %v1994 = vld [vmem:[%s6 + $0x424] sm:$0xf]
    %v1995 = vld [vmem:[%s6 + $0x428] sm:$0xf]
    %v1996 = vld [vmem:[%s6 + $0x42c] sm:$0xf]
    %v1997 = vld [vmem:[%s6 + $0x430] sm:$0xf]
    %v1998 = vld [vmem:[%s6 + $0x434] sm:$0xf]
    %v1999 = vld [vmem:[%s6 + $0x438] sm:$0xf]
    %v2000 = vld [vmem:[%s6 + $0x43c] sm:$0xf]
    %v2001 = vld [vmem:[%s6 + $0x440] sm:$0xf]
    %v2002 = vld [vmem:[%s6 + $0x444] sm:$0xf]
    %v2003 = vld [vmem:[%s6 + $0x448] sm:$0xf]
    %v2004 = vld [vmem:[%s6 + $0x44c] sm:$0xf]
    %v2005 = vld [vmem:[%s6 + $0x450] sm:$0xf]
    %v2006 = vld [vmem:[%s6 + $0x454] sm:$0xf]
    %v2007 = vld [vmem:[%s6 + $0x458] sm:$0xf]
    %v2008 = vld [vmem:[%s6 + $0x45c] sm:$0xf]
    %v2009 = vld [vmem:[%s6 + $0x460] sm:$0xf]
    %v2010 = vld [vmem:[%s6 + $0x464] sm:$0xf]
    %v2011 = vld [vmem:[%s6 + $0x468] sm:$0xf]
    %v2012 = vld [vmem:[%s6 + $0x46c] sm:$0xf]
    %v2013 = vld [vmem:[%s6 + $0x470] sm:$0xf]
    %v2014 = vld [vmem:[%s6 + $0x474] sm:$0xf]
    %v2015 = vld [vmem:[%s6 + $0x478] sm:$0xf]
    %v2016 = vld [vmem:[%s6 + $0x47c] sm:$0xf]
    %v2017 = vld [vmem:[%s6 + $0x480] sm:$0xf]
    %v2018 = vld [vmem:[%s6 + $0x484] sm:$0xf]
    %v2019 = vld [vmem:[%s6 + $0x488] sm:$0xf]
    %v2020 = vld [vmem:[%s6 + $0x48c] sm:$0xf]
    %v2021 = vld [vmem:[%s6 + $0x490] sm:$0xf]
    %v2022 = vld [vmem:[%s6 + $0x494] sm:$0xf]
    %v2023 = vld [vmem:[%s6 + $0x498] sm:$0xf]
    %v2024 = vld [vmem:[%s6 + $0x49c] sm:$0xf]
    %v2025 = vld [vmem:[%s6 + $0x4a0] sm:$0xf]
    %v2026 = vld [vmem:[%s6 + $0x4a4] sm:$0xf]
    %v2027 = vld [vmem:[%s6 + $0x4a8] sm:$0xf]
    %v2028 = vld [vmem:[%s6 + $0x4ac] sm:$0xf]
    %v2029 = vld [vmem:[%s6 + $0x4b0] sm:$0xf]
    %v2030 = vld [vmem:[%s6 + $0x4b4] sm:$0xf]
    %v2031 = vld [vmem:[%s6 + $0x4b8] sm:$0xf]
    %v2032 = vld [vmem:[%s6 + $0x4bc] sm:$0xf]
    %v2033 = vld [vmem:[%s6 + $0x4c0] sm:$0xf]
    %v2034 = vld [vmem:[%s6 + $0x4c4] sm:$0xf]
    %v2035 = vld [vmem:[%s6 + $0x4c8] sm:$0xf]
    %v2036 = vld [vmem:[%s6 + $0x4cc] sm:$0xf]
    %v2037 = vld [vmem:[%s6 + $0x4d0] sm:$0xf]
    %v2038 = vld [vmem:[%s6 + $0x4d4] sm:$0xf]
    %v2039 = vld [vmem:[%s6 + $0x4d8] sm:$0xf]
    %v2040 = vld [vmem:[%s6 + $0x4dc] sm:$0xf]
    %v2041 = vld [vmem:[%s6 + $0x4e0] sm:$0xf]
    %v2042 = vld [vmem:[%s6 + $0x4e4] sm:$0xf]
    %v2043 = vld [vmem:[%s6 + $0x4e8] sm:$0xf]
    %v2044 = vld [vmem:[%s6 + $0x4ec] sm:$0xf]
    %v2045 = vld [vmem:[%s6 + $0x4f0] sm:$0xf]
    %v2046 = vld [vmem:[%s6 + $0x4f4] sm:$0xf]
    %v2047 = vld [vmem:[%s6 + $0x4f8] sm:$0xf]
    %v2048 = vld [vmem:[%s6 + $0x4fc] sm:$0xf]
    %v2049 = vld [vmem:[%s6 + $0x500] sm:$0xf]
    %v2050 = vld [vmem:[%s6 + $0x504] sm:$0xf]
    %v2051 = vld [vmem:[%s6 + $0x508] sm:$0xf]
    %v2052 = vld [vmem:[%s6 + $0x50c] sm:$0xf]
    %v2053 = vld [vmem:[%s6 + $0x510] sm:$0xf]
    %v2054 = vld [vmem:[%s6 + $0x514] sm:$0xf]
    %v2055 = vld [vmem:[%s6 + $0x518] sm:$0xf]
    %v2056 = vld [vmem:[%s6 + $0x51c] sm:$0xf]
    %v2057 = vld [vmem:[%s6 + $0x520] sm:$0xf]
    %v2058 = vld [vmem:[%s6 + $0x524] sm:$0xf]
    %v2059 = vld [vmem:[%s6 + $0x528] sm:$0xf]
    %v2060 = vld [vmem:[%s6 + $0x52c] sm:$0xf]
    %v2061 = vld [vmem:[%s6 + $0x530] sm:$0xf]
    %v2062 = vld [vmem:[%s6 + $0x534] sm:$0xf]
    %v2063 = vld [vmem:[%s6 + $0x538] sm:$0xf]
    %v2064 = vld [vmem:[%s6 + $0x53c] sm:$0xf]
    %v2065 = vld [vmem:[%s6 + $0x540] sm:$0xf]
    %v2066 = vld [vmem:[%s6 + $0x544] sm:$0xf]
    %v2067 = vld [vmem:[%s6 + $0x548] sm:$0xf]
    %v2068 = vld [vmem:[%s6 + $0x54c] sm:$0xf]
    %v2069 = vld [vmem:[%s6 + $0x550] sm:$0xf]
    %v2070 = vld [vmem:[%s6 + $0x554] sm:$0xf]
    %v2071 = vld [vmem:[%s6 + $0x558] sm:$0xf]
    %v2072 = vld [vmem:[%s6 + $0x55c] sm:$0xf]
    %v2073 = vld [vmem:[%s6 + $0x560] sm:$0xf]
    %v2074 = vld [vmem:[%s6 + $0x564] sm:$0xf]
    %v2075 = vld [vmem:[%s6 + $0x568] sm:$0xf]
    %v2076 = vld [vmem:[%s6 + $0x56c] sm:$0xf]
    %v2077 = vld [vmem:[%s6 + $0x570] sm:$0xf]
    %v2078 = vld [vmem:[%s6 + $0x574] sm:$0xf]
    %v2079 = vld [vmem:[%s6 + $0x578] sm:$0xf]
    %v2080 = vld [vmem:[%s6 + $0x57c] sm:$0xf]
    %v2081 = vld [vmem:[%s6 + $0x580] sm:$0xf]
    %v2082 = vld [vmem:[%s6 + $0x584] sm:$0xf]
    %v2083 = vld [vmem:[%s6 + $0x588] sm:$0xf]
    %v2084 = vld [vmem:[%s6 + $0x58c] sm:$0xf]
    %v2085 = vld [vmem:[%s6 + $0x590] sm:$0xf]
    %v2086 = vld [vmem:[%s6 + $0x594] sm:$0xf]
    %v2087 = vld [vmem:[%s6 + $0x598] sm:$0xf]
    %v2088 = vld [vmem:[%s6 + $0x59c] sm:$0xf]
    %v2089 = vld [vmem:[%s6 + $0x5a0] sm:$0xf]
    %v2090 = vld [vmem:[%s6 + $0x5a4] sm:$0xf]
    %v2091 = vld [vmem:[%s6 + $0x5a8] sm:$0xf]
    %v2092 = vld [vmem:[%s6 + $0x5ac] sm:$0xf]
    %v2093 = vld [vmem:[%s6 + $0x5b0] sm:$0xf]
    %v2094 = vld [vmem:[%s6 + $0x5b4] sm:$0xf]
    %v2095 = vld [vmem:[%s6 + $0x5b8] sm:$0xf]
    %v2096 = vld [vmem:[%s6 + $0x5bc] sm:$0xf]
    %v2097 = vld [vmem:[%s6 + $0x5c0] sm:$0xf]
    %v2098 = vld [vmem:[%s6 + $0x5c4] sm:$0xf]
    %v2099 = vld [vmem:[%s6 + $0x5c8] sm:$0xf]
    %v2100 = vld [vmem:[%s6 + $0x5cc] sm:$0xf]
    %v2101 = vld [vmem:[%s6 + $0x5d0] sm:$0xf]
    %v2102 = vld [vmem:[%s6 + $0x5d4] sm:$0xf]
    %v2103 = vld [vmem:[%s6 + $0x5d8] sm:$0xf]
    %v2104 = vld [vmem:[%s6 + $0x5dc] sm:$0xf]
    %v2105 = vld [vmem:[%s6 + $0x5e0] sm:$0xf]
    %v2106 = vld [vmem:[%s6 + $0x5e4] sm:$0xf]
    %v2107 = vld [vmem:[%s6 + $0x5e8] sm:$0xf]
    %v2108 = vld [vmem:[%s6 + $0x5ec] sm:$0xf]
    %v2109 = vld [vmem:[%s6 + $0x5f0] sm:$0xf]
    %v2110 = vld [vmem:[%s6 + $0x5f4] sm:$0xf]
    %v2111 = vld [vmem:[%s6 + $0x5f8] sm:$0xf]
    %v2112 = vld [vmem:[%s6 + $0x5fc] sm:$0xf]
    %v2113 = vld [vmem:[%s6 + $0x600] sm:$0xf]
    %v2114 = vld [vmem:[%s6 + $0x604] sm:$0xf]
    %v2115 = vld [vmem:[%s6 + $0x608] sm:$0xf]
    %v2116 = vld [vmem:[%s6 + $0x60c] sm:$0xf]
    %v2117 = vld [vmem:[%s6 + $0x610] sm:$0xf]
    %v2118 = vld [vmem:[%s6 + $0x614] sm:$0xf]
    %v2119 = vld [vmem:[%s6 + $0x618] sm:$0xf]
    %v2120 = vld [vmem:[%s6 + $0x61c] sm:$0xf]
    %v2121 = vld [vmem:[%s6 + $0x620] sm:$0xf]
    %v2122 = vld [vmem:[%s6 + $0x624] sm:$0xf]
    %v2123 = vld [vmem:[%s6 + $0x628] sm:$0xf]
    %v2124 = vld [vmem:[%s6 + $0x62c] sm:$0xf]
    %v2125 = vld [vmem:[%s6 + $0x630] sm:$0xf]
    %v2126 = vld [vmem:[%s6 + $0x634] sm:$0xf]
    %v2127 = vld [vmem:[%s6 + $0x638] sm:$0xf]
    %v2128 = vld [vmem:[%s6 + $0x63c] sm:$0xf]
    %v2129 = vld [vmem:[%s8] sm:$0x1]
    %v2131 = vlaneseq
    %v2132 = vshrl.u32 %v2131, 7
    %v2133 = vsub.s32 0, %v2132
    %v2134 = vrot.slane %v2129, %v2133
    %v2536 = vunpack.c.l.b16 %v1729
    %v2537 = vunpack.c.l.b16 %v1730
    %v2538 = vunpack.c.l.b16 %v1731
    %v2539 = vunpack.c.l.b16 %v1732
    %v2540 = vunpack.c.l.b16 %v1733
    %v2541 = vunpack.c.l.b16 %v1734
    %v2542 = vunpack.c.l.b16 %v1735
    %v2543 = vunpack.c.l.b16 %v1736
    %v2544 = vunpack.c.l.b16 %v1737
    %v2545 = vunpack.c.l.b16 %v1738
    %v2546 = vunpack.c.l.b16 %v1739
    %v2547 = vunpack.c.l.b16 %v1740
    %v2548 = vunpack.c.l.b16 %v1741
    %v2549 = vunpack.c.l.b16 %v1742
    %v2550 = vunpack.c.l.b16 %v1743
    %v2551 = vunpack.c.l.b16 %v1744
    %v2552 = vunpack.c.l.b16 %v1745
    %v2553 = vunpack.c.l.b16 %v1746
    %v2554 = vunpack.c.l.b16 %v1747
    %v2555 = vunpack.c.l.b16 %v1748
    %v2556 = vunpack.c.l.b16 %v1749
    %v2557 = vunpack.c.l.b16 %v1750
    %v2558 = vunpack.c.l.b16 %v1751
    %v2559 = vunpack.c.l.b16 %v1752
    %v2560 = vunpack.c.l.b16 %v1753
    %v2561 = vunpack.c.l.b16 %v1754
    %v2562 = vunpack.c.l.b16 %v1755
    %v2563 = vunpack.c.l.b16 %v1756
    %v2564 = vunpack.c.l.b16 %v1757
    %v2565 = vunpack.c.l.b16 %v1758
    %v2566 = vunpack.c.l.b16 %v1759
    %v2567 = vunpack.c.l.b16 %v1760
    %v2568 = vunpack.c.l.b16 %v1761
    %v2569 = vunpack.c.l.b16 %v1762
    %v2570 = vunpack.c.l.b16 %v1763
    %v2571 = vunpack.c.l.b16 %v1764
    %v2572 = vunpack.c.l.b16 %v1765
    %v2573 = vunpack.c.l.b16 %v1766
    %v2574 = vunpack.c.l.b16 %v1767
    %v2575 = vunpack.c.l.b16 %v1768
    %v2576 = vunpack.c.l.b16 %v1769
    %v2577 = vunpack.c.l.b16 %v1770
    %v2578 = vunpack.c.l.b16 %v1771
    %v2579 = vunpack.c.l.b16 %v1772
    %v2580 = vunpack.c.l.b16 %v1773
    %v2581 = vunpack.c.l.b16 %v1774
    %v2582 = vunpack.c.l.b16 %v1775
    %v2583 = vunpack.c.l.b16 %v1776
    %v2584 = vunpack.c.l.b16 %v1777
    %v2585 = vunpack.c.l.b16 %v1778
    %v2586 = vunpack.c.l.b16 %v1779
    %v2587 = vunpack.c.l.b16 %v1780
    %v2588 = vunpack.c.l.b16 %v1781
    %v2589 = vunpack.c.l.b16 %v1782
    %v2590 = vunpack.c.l.b16 %v1783
    %v2591 = vunpack.c.l.b16 %v1784
    %v2592 = vunpack.c.l.b16 %v1785
    %v2593 = vunpack.c.l.b16 %v1786
    %v2594 = vunpack.c.l.b16 %v1787
    %v2595 = vunpack.c.l.b16 %v1788
    %v2596 = vunpack.c.l.b16 %v1789
    %v2597 = vunpack.c.l.b16 %v1790
    %v2598 = vunpack.c.l.b16 %v1791
    %v2599 = vunpack.c.l.b16 %v1792
    %v2600 = vunpack.c.l.b16 %v1793
    %v2601 = vunpack.c.l.b16 %v1794
    %v2602 = vunpack.c.l.b16 %v1795
    %v2603 = vunpack.c.l.b16 %v1796
    %v2604 = vunpack.c.l.b16 %v1797
    %v2605 = vunpack.c.l.b16 %v1798
    %v2606 = vunpack.c.l.b16 %v1799
    %v2607 = vunpack.c.l.b16 %v1800
    %v2608 = vunpack.c.l.b16 %v1801
    %v2609 = vunpack.c.l.b16 %v1802
    %v2610 = vunpack.c.l.b16 %v1803
    %v2611 = vunpack.c.l.b16 %v1804
    %v2612 = vunpack.c.l.b16 %v1805
    %v2613 = vunpack.c.l.b16 %v1806
    %v2614 = vunpack.c.l.b16 %v1807
    %v2615 = vunpack.c.l.b16 %v1808
    %v2616 = vunpack.c.l.b16 %v1809
    %v2617 = vunpack.c.l.b16 %v1810
    %v2618 = vunpack.c.l.b16 %v1811
    %v2619 = vunpack.c.l.b16 %v1812
    %v2620 = vunpack.c.l.b16 %v1813
    %v2621 = vunpack.c.l.b16 %v1814
    %v2622 = vunpack.c.l.b16 %v1815
    %v2623 = vunpack.c.l.b16 %v1816
    %v2624 = vunpack.c.l.b16 %v1817
    %v2625 = vunpack.c.l.b16 %v1818
    %v2626 = vunpack.c.l.b16 %v1819
    %v2627 = vunpack.c.l.b16 %v1820
    %v2628 = vunpack.c.l.b16 %v1821
    %v2629 = vunpack.c.l.b16 %v1822
    %v2630 = vunpack.c.l.b16 %v1823
    %v2631 = vunpack.c.l.b16 %v1824
    %v2632 = vunpack.c.l.b16 %v1825
    %v2633 = vunpack.c.l.b16 %v1826
    %v2634 = vunpack.c.l.b16 %v1827
    %v2635 = vunpack.c.l.b16 %v1828
    %v2636 = vunpack.c.l.b16 %v1829
    %v2637 = vunpack.c.l.b16 %v1830
    %v2638 = vunpack.c.l.b16 %v1831
    %v2639 = vunpack.c.l.b16 %v1832
    %v2640 = vunpack.c.l.b16 %v1833
    %v2641 = vunpack.c.l.b16 %v1834
    %v2642 = vunpack.c.l.b16 %v1835
    %v2643 = vunpack.c.l.b16 %v1836
    %v2644 = vunpack.c.l.b16 %v1837
    %v2645 = vunpack.c.l.b16 %v1838
    %v2646 = vunpack.c.l.b16 %v1839
    %v2647 = vunpack.c.l.b16 %v1840
    %v2648 = vunpack.c.l.b16 %v1841
    %v2649 = vunpack.c.l.b16 %v1842
    %v2650 = vunpack.c.l.b16 %v1843
    %v2651 = vunpack.c.l.b16 %v1844
    %v2652 = vunpack.c.l.b16 %v1845
    %v2653 = vunpack.c.l.b16 %v1846
    %v2654 = vunpack.c.l.b16 %v1847
    %v2655 = vunpack.c.l.b16 %v1848
    %v2656 = vunpack.c.l.b16 %v1849
    %v2657 = vunpack.c.l.b16 %v1850
    %v2658 = vunpack.c.l.b16 %v1851
    %v2659 = vunpack.c.l.b16 %v1852
    %v2660 = vunpack.c.l.b16 %v1853
    %v2661 = vunpack.c.l.b16 %v1854
    %v2662 = vunpack.c.l.b16 %v1855
    %v2663 = vunpack.c.l.b16 %v1856
    %v2664 = vunpack.c.l.b16 %v1857
    %v2665 = vunpack.c.l.b16 %v1858
    %v2666 = vunpack.c.l.b16 %v1859
    %v2667 = vunpack.c.l.b16 %v1860
    %v2668 = vunpack.c.l.b16 %v1861
    %v2669 = vunpack.c.l.b16 %v1862
    %v2670 = vunpack.c.l.b16 %v1863
    %v2671 = vunpack.c.l.b16 %v1864
    %v2672 = vunpack.c.l.b16 %v1865
    %v2673 = vunpack.c.l.b16 %v1866
    %v2674 = vunpack.c.l.b16 %v1867
    %v2675 = vunpack.c.l.b16 %v1868
    %v2676 = vunpack.c.l.b16 %v1869
    %v2677 = vunpack.c.l.b16 %v1870
    %v2678 = vunpack.c.l.b16 %v1871
    %v2679 = vunpack.c.l.b16 %v1872
    %v2680 = vunpack.c.l.b16 %v1873
    %v2681 = vunpack.c.l.b16 %v1874
    %v2682 = vunpack.c.l.b16 %v1875
    %v2683 = vunpack.c.l.b16 %v1876
    %v2684 = vunpack.c.l.b16 %v1877
    %v2685 = vunpack.c.l.b16 %v1878
    %v2686 = vunpack.c.l.b16 %v1879
    %v2687 = vunpack.c.l.b16 %v1880
    %v2688 = vunpack.c.l.b16 %v1881
    %v2689 = vunpack.c.l.b16 %v1882
    %v2690 = vunpack.c.l.b16 %v1883
    %v2691 = vunpack.c.l.b16 %v1884
    %v2692 = vunpack.c.l.b16 %v1885
    %v2693 = vunpack.c.l.b16 %v1886
    %v2694 = vunpack.c.l.b16 %v1887
    %v2695 = vunpack.c.l.b16 %v1888
    %v2696 = vunpack.c.l.b16 %v1889
    %v2697 = vunpack.c.l.b16 %v1890
    %v2698 = vunpack.c.l.b16 %v1891
    %v2699 = vunpack.c.l.b16 %v1892
    %v2700 = vunpack.c.l.b16 %v1893
    %v2701 = vunpack.c.l.b16 %v1894
    %v2702 = vunpack.c.l.b16 %v1895
    %v2703 = vunpack.c.l.b16 %v1896
    %v2704 = vunpack.c.l.b16 %v1897
    %v2705 = vunpack.c.l.b16 %v1898
    %v2706 = vunpack.c.l.b16 %v1899
    %v2707 = vunpack.c.l.b16 %v1900
    %v2708 = vunpack.c.l.b16 %v1901
    %v2709 = vunpack.c.l.b16 %v1902
    %v2710 = vunpack.c.l.b16 %v1903
    %v2711 = vunpack.c.l.b16 %v1904
    %v2712 = vunpack.c.l.b16 %v1905
    %v2713 = vunpack.c.l.b16 %v1906
    %v2714 = vunpack.c.l.b16 %v1907
    %v2715 = vunpack.c.l.b16 %v1908
    %v2716 = vunpack.c.l.b16 %v1909
    %v2717 = vunpack.c.l.b16 %v1910
    %v2718 = vunpack.c.l.b16 %v1911
    %v2719 = vunpack.c.l.b16 %v1912
    %v2720 = vunpack.c.l.b16 %v1913
    %v2721 = vunpack.c.l.b16 %v1914
    %v2722 = vunpack.c.l.b16 %v1915
    %v2723 = vunpack.c.l.b16 %v1916
    %v2724 = vunpack.c.l.b16 %v1917
    %v2725 = vunpack.c.l.b16 %v1918
    %v2726 = vunpack.c.l.b16 %v1919
    %v2727 = vunpack.c.l.b16 %v1920
    %v2728 = vunpack.c.l.b16 %v1921
    %v2729 = vunpack.c.l.b16 %v1922
    %v2730 = vunpack.c.l.b16 %v1923
    %v2731 = vunpack.c.l.b16 %v1924
    %v2732 = vunpack.c.l.b16 %v1925
    %v2733 = vunpack.c.l.b16 %v1926
    %v2734 = vunpack.c.l.b16 %v1927
    %v2735 = vunpack.c.l.b16 %v1928
    %v2736 = vunpack.c.l.b16 %v1929
    %v2737 = vunpack.c.l.b16 %v1930
    %v2738 = vunpack.c.l.b16 %v1931
    %v2739 = vunpack.c.l.b16 %v1932
    %v2740 = vunpack.c.l.b16 %v1933
    %v2741 = vunpack.c.l.b16 %v1934
    %v2742 = vunpack.c.l.b16 %v1935
    %v2743 = vunpack.c.l.b16 %v1936
    %v2744 = vunpack.c.l.b16 %v1937
    %v2745 = vunpack.c.l.b16 %v1938
    %v2746 = vunpack.c.l.b16 %v1939
    %v2747 = vunpack.c.l.b16 %v1940
    %v2748 = vunpack.c.l.b16 %v1941
    %v2749 = vunpack.c.l.b16 %v1942
    %v2750 = vunpack.c.l.b16 %v1943
    %v2751 = vunpack.c.l.b16 %v1944
    %v2752 = vunpack.c.l.b16 %v1945
    %v2753 = vunpack.c.l.b16 %v1946
    %v2754 = vunpack.c.l.b16 %v1947
    %v2755 = vunpack.c.l.b16 %v1948
    %v2756 = vunpack.c.l.b16 %v1949
    %v2757 = vunpack.c.l.b16 %v1950
    %v2758 = vunpack.c.l.b16 %v1951
    %v2759 = vunpack.c.l.b16 %v1952
    %v2760 = vunpack.c.l.b16 %v1953
    %v2761 = vunpack.c.l.b16 %v1954
    %v2762 = vunpack.c.l.b16 %v1955
    %v2763 = vunpack.c.l.b16 %v1956
    %v2764 = vunpack.c.l.b16 %v1957
    %v2765 = vunpack.c.l.b16 %v1958
    %v2766 = vunpack.c.l.b16 %v1959
    %v2767 = vunpack.c.l.b16 %v1960
    %v2768 = vunpack.c.l.b16 %v1961
    %v2769 = vunpack.c.l.b16 %v1962
    %v2770 = vunpack.c.l.b16 %v1963
    %v2771 = vunpack.c.l.b16 %v1964
    %v2772 = vunpack.c.l.b16 %v1965
    %v2773 = vunpack.c.l.b16 %v1966
    %v2774 = vunpack.c.l.b16 %v1967
    %v2775 = vunpack.c.l.b16 %v1968
    %v2776 = vunpack.c.l.b16 %v1969
    %v2777 = vunpack.c.l.b16 %v1970
    %v2778 = vunpack.c.l.b16 %v1971
    %v2779 = vunpack.c.l.b16 %v1972
    %v2780 = vunpack.c.l.b16 %v1973
    %v2781 = vunpack.c.l.b16 %v1974
    %v2782 = vunpack.c.l.b16 %v1975
    %v2783 = vunpack.c.l.b16 %v1976
    %v2784 = vunpack.c.l.b16 %v1977
    %v2785 = vunpack.c.l.b16 %v1978
    %v2786 = vunpack.c.l.b16 %v1979
    %v2787 = vunpack.c.l.b16 %v1980
    %v2788 = vunpack.c.l.b16 %v1981
    %v2789 = vunpack.c.l.b16 %v1982
    %v2790 = vunpack.c.l.b16 %v1983
    %v2791 = vunpack.c.l.b16 %v1984
    %v2792 = vunpack.c.l.b16 %v1985
    %v2793 = vunpack.c.l.b16 %v1986
    %v2794 = vunpack.c.l.b16 %v1987
    %v2795 = vunpack.c.l.b16 %v1988
    %v2796 = vunpack.c.l.b16 %v1989
    %v2797 = vunpack.c.l.b16 %v1990
    %v2798 = vunpack.c.l.b16 %v1991
    %v2799 = vunpack.c.l.b16 %v1992
    %v2800 = vunpack.c.l.b16 %v1993
    %v2801 = vunpack.c.l.b16 %v1994
    %v2802 = vunpack.c.l.b16 %v1995
    %v2803 = vunpack.c.l.b16 %v1996
    %v2804 = vunpack.c.l.b16 %v1997
    %v2805 = vunpack.c.l.b16 %v1998
    %v2806 = vunpack.c.l.b16 %v1999
    %v2807 = vunpack.c.l.b16 %v2000
    %v2808 = vunpack.c.l.b16 %v2001
    %v2809 = vunpack.c.l.b16 %v2002
    %v2810 = vunpack.c.l.b16 %v2003
    %v2811 = vunpack.c.l.b16 %v2004
    %v2812 = vunpack.c.l.b16 %v2005
    %v2813 = vunpack.c.l.b16 %v2006
    %v2814 = vunpack.c.l.b16 %v2007
    %v2815 = vunpack.c.l.b16 %v2008
    %v2816 = vunpack.c.l.b16 %v2009
    %v2817 = vunpack.c.l.b16 %v2010
    %v2818 = vunpack.c.l.b16 %v2011
    %v2819 = vunpack.c.l.b16 %v2012
    %v2820 = vunpack.c.l.b16 %v2013
    %v2821 = vunpack.c.l.b16 %v2014
    %v2822 = vunpack.c.l.b16 %v2015
    %v2823 = vunpack.c.l.b16 %v2016
    %v2824 = vunpack.c.l.b16 %v2017
    %v2825 = vunpack.c.l.b16 %v2018
    %v2826 = vunpack.c.l.b16 %v2019
    %v2827 = vunpack.c.l.b16 %v2020
    %v2828 = vunpack.c.l.b16 %v2021
    %v2829 = vunpack.c.l.b16 %v2022
    %v2830 = vunpack.c.l.b16 %v2023
    %v2831 = vunpack.c.l.b16 %v2024
    %v2832 = vunpack.c.l.b16 %v2025
    %v2833 = vunpack.c.l.b16 %v2026
    %v2834 = vunpack.c.l.b16 %v2027
    %v2835 = vunpack.c.l.b16 %v2028
    %v2836 = vunpack.c.l.b16 %v2029
    %v2837 = vunpack.c.l.b16 %v2030
    %v2838 = vunpack.c.l.b16 %v2031
    %v2839 = vunpack.c.l.b16 %v2032
    %v2840 = vunpack.c.l.b16 %v2033
    %v2841 = vunpack.c.l.b16 %v2034
    %v2842 = vunpack.c.l.b16 %v2035
    %v2843 = vunpack.c.l.b16 %v2036
    %v2844 = vunpack.c.l.b16 %v2037
    %v2845 = vunpack.c.l.b16 %v2038
    %v2846 = vunpack.c.l.b16 %v2039
    %v2847 = vunpack.c.l.b16 %v2040
    %v2848 = vunpack.c.l.b16 %v2041
    %v2849 = vunpack.c.l.b16 %v2042
    %v2850 = vunpack.c.l.b16 %v2043
    %v2851 = vunpack.c.l.b16 %v2044
    %v2852 = vunpack.c.l.b16 %v2045
    %v2853 = vunpack.c.l.b16 %v2046
    %v2854 = vunpack.c.l.b16 %v2047
    %v2855 = vunpack.c.l.b16 %v2048
    %v2856 = vunpack.c.l.b16 %v2049
    %v2857 = vunpack.c.l.b16 %v2050
    %v2858 = vunpack.c.l.b16 %v2051
    %v2859 = vunpack.c.l.b16 %v2052
    %v2860 = vunpack.c.l.b16 %v2053
    %v2861 = vunpack.c.l.b16 %v2054
    %v2862 = vunpack.c.l.b16 %v2055
    %v2863 = vunpack.c.l.b16 %v2056
    %v2864 = vunpack.c.l.b16 %v2057
    %v2865 = vunpack.c.l.b16 %v2058
    %v2866 = vunpack.c.l.b16 %v2059
    %v2867 = vunpack.c.l.b16 %v2060
    %v2868 = vunpack.c.l.b16 %v2061
    %v2869 = vunpack.c.l.b16 %v2062
    %v2870 = vunpack.c.l.b16 %v2063
    %v2871 = vunpack.c.l.b16 %v2064
    %v2872 = vunpack.c.l.b16 %v2065
    %v2873 = vunpack.c.l.b16 %v2066
    %v2874 = vunpack.c.l.b16 %v2067
    %v2875 = vunpack.c.l.b16 %v2068
    %v2876 = vunpack.c.l.b16 %v2069
    %v2877 = vunpack.c.l.b16 %v2070
    %v2878 = vunpack.c.l.b16 %v2071
    %v2879 = vunpack.c.l.b16 %v2072
    %v2880 = vunpack.c.l.b16 %v2073
    %v2881 = vunpack.c.l.b16 %v2074
    %v2882 = vunpack.c.l.b16 %v2075
    %v2883 = vunpack.c.l.b16 %v2076
    %v2884 = vunpack.c.l.b16 %v2077
    %v2885 = vunpack.c.l.b16 %v2078
    %v2886 = vunpack.c.l.b16 %v2079
    %v2887 = vunpack.c.l.b16 %v2080
    %v2888 = vunpack.c.l.b16 %v2081
    %v2889 = vunpack.c.l.b16 %v2082
    %v2890 = vunpack.c.l.b16 %v2083
    %v2891 = vunpack.c.l.b16 %v2084
    %v2892 = vunpack.c.l.b16 %v2085
    %v2893 = vunpack.c.l.b16 %v2086
    %v2894 = vunpack.c.l.b16 %v2087
    %v2895 = vunpack.c.l.b16 %v2088
    %v2896 = vunpack.c.l.b16 %v2089
    %v2897 = vunpack.c.l.b16 %v2090
    %v2898 = vunpack.c.l.b16 %v2091
    %v2899 = vunpack.c.l.b16 %v2092
    %v2900 = vunpack.c.l.b16 %v2093
    %v2901 = vunpack.c.l.b16 %v2094
    %v2902 = vunpack.c.l.b16 %v2095
    %v2903 = vunpack.c.l.b16 %v2096
    %v2904 = vunpack.c.l.b16 %v2097
    %v2905 = vunpack.c.l.b16 %v2098
    %v2906 = vunpack.c.l.b16 %v2099
    %v2907 = vunpack.c.l.b16 %v2100
    %v2908 = vunpack.c.l.b16 %v2101
    %v2909 = vunpack.c.l.b16 %v2102
    %v2910 = vunpack.c.l.b16 %v2103
    %v2911 = vunpack.c.l.b16 %v2104
    %v2912 = vunpack.c.l.b16 %v2105
    %v2913 = vunpack.c.l.b16 %v2106
    %v2914 = vunpack.c.l.b16 %v2107
    %v2915 = vunpack.c.l.b16 %v2108
    %v2916 = vunpack.c.l.b16 %v2109
    %v2917 = vunpack.c.l.b16 %v2110
    %v2918 = vunpack.c.l.b16 %v2111
    %v2919 = vunpack.c.l.b16 %v2112
    %v2920 = vunpack.c.l.b16 %v2113
    %v2921 = vunpack.c.l.b16 %v2114
    %v2922 = vunpack.c.l.b16 %v2115
    %v2923 = vunpack.c.l.b16 %v2116
    %v2924 = vunpack.c.l.b16 %v2117
    %v2925 = vunpack.c.l.b16 %v2118
    %v2926 = vunpack.c.l.b16 %v2119
    %v2927 = vunpack.c.l.b16 %v2120
    %v2928 = vunpack.c.l.b16 %v2121
    %v2929 = vunpack.c.l.b16 %v2122
    %v2930 = vunpack.c.l.b16 %v2123
    %v2931 = vunpack.c.l.b16 %v2124
    %v2932 = vunpack.c.l.b16 %v2125
    %v2933 = vunpack.c.l.b16 %v2126
    %v2934 = vunpack.c.l.b16 %v2127
    %v2935 = vunpack.c.l.b16 %v2128
    %v2936 = vpack.c.b16 %v2537, %v2536
    %v2937 = vpack.c.b16 %v2539, %v2538
    %v2938 = vpack.c.b16 %v2541, %v2540
    %v2939 = vpack.c.b16 %v2543, %v2542
    %v2940 = vpack.c.b16 %v2545, %v2544
    %v2941 = vpack.c.b16 %v2547, %v2546
    %v2942 = vpack.c.b16 %v2549, %v2548
    %v2943 = vpack.c.b16 %v2551, %v2550
    %v2944 = vpack.c.b16 %v2553, %v2552
    %v2945 = vpack.c.b16 %v2555, %v2554
    %v2946 = vpack.c.b16 %v2557, %v2556
    %v2947 = vpack.c.b16 %v2559, %v2558
    %v2948 = vpack.c.b16 %v2561, %v2560
    %v2949 = vpack.c.b16 %v2563, %v2562
    %v2950 = vpack.c.b16 %v2565, %v2564
    %v2951 = vpack.c.b16 %v2567, %v2566
    %v2952 = vpack.c.b16 %v2569, %v2568
    %v2953 = vpack.c.b16 %v2571, %v2570
    %v2954 = vpack.c.b16 %v2573, %v2572
    %v2955 = vpack.c.b16 %v2575, %v2574
    %v2956 = vpack.c.b16 %v2577, %v2576
    %v2957 = vpack.c.b16 %v2579, %v2578
    %v2958 = vpack.c.b16 %v2581, %v2580
    %v2959 = vpack.c.b16 %v2583, %v2582
    %v2960 = vpack.c.b16 %v2585, %v2584
    %v2961 = vpack.c.b16 %v2587, %v2586
    %v2962 = vpack.c.b16 %v2589, %v2588
    %v2963 = vpack.c.b16 %v2591, %v2590
    %v2964 = vpack.c.b16 %v2593, %v2592
    %v2965 = vpack.c.b16 %v2595, %v2594
    %v2966 = vpack.c.b16 %v2597, %v2596
    %v2967 = vpack.c.b16 %v2599, %v2598
    %v2968 = vpack.c.b16 %v2601, %v2600
    %v2969 = vpack.c.b16 %v2603, %v2602
    %v2970 = vpack.c.b16 %v2605, %v2604
    %v2971 = vpack.c.b16 %v2607, %v2606
    %v2972 = vpack.c.b16 %v2609, %v2608
    %v2973 = vpack.c.b16 %v2611, %v2610
    %v2974 = vpack.c.b16 %v2613, %v2612
    %v2975 = vpack.c.b16 %v2615, %v2614
    %v2976 = vpack.c.b16 %v2617, %v2616
    %v2977 = vpack.c.b16 %v2619, %v2618
    %v2978 = vpack.c.b16 %v2621, %v2620
    %v2979 = vpack.c.b16 %v2623, %v2622
    %v2980 = vpack.c.b16 %v2625, %v2624
    %v2981 = vpack.c.b16 %v2627, %v2626
    %v2982 = vpack.c.b16 %v2629, %v2628
    %v2983 = vpack.c.b16 %v2631, %v2630
    %v2984 = vpack.c.b16 %v2633, %v2632
    %v2985 = vpack.c.b16 %v2635, %v2634
    %v2986 = vpack.c.b16 %v2637, %v2636
    %v2987 = vpack.c.b16 %v2639, %v2638
    %v2988 = vpack.c.b16 %v2641, %v2640
    %v2989 = vpack.c.b16 %v2643, %v2642
    %v2990 = vpack.c.b16 %v2645, %v2644
    %v2991 = vpack.c.b16 %v2647, %v2646
    %v2992 = vpack.c.b16 %v2649, %v2648
    %v2993 = vpack.c.b16 %v2651, %v2650
    %v2994 = vpack.c.b16 %v2653, %v2652
    %v2995 = vpack.c.b16 %v2655, %v2654
    %v2996 = vpack.c.b16 %v2657, %v2656
    %v2997 = vpack.c.b16 %v2659, %v2658
    %v2998 = vpack.c.b16 %v2661, %v2660
    %v2999 = vpack.c.b16 %v2663, %v2662
    %v3000 = vpack.c.b16 %v2665, %v2664
    %v3001 = vpack.c.b16 %v2667, %v2666
    %v3002 = vpack.c.b16 %v2669, %v2668
    %v3003 = vpack.c.b16 %v2671, %v2670
    %v3004 = vpack.c.b16 %v2673, %v2672
    %v3005 = vpack.c.b16 %v2675, %v2674
    %v3006 = vpack.c.b16 %v2677, %v2676
    %v3007 = vpack.c.b16 %v2679, %v2678
    %v3008 = vpack.c.b16 %v2681, %v2680
    %v3009 = vpack.c.b16 %v2683, %v2682
    %v3010 = vpack.c.b16 %v2685, %v2684
    %v3011 = vpack.c.b16 %v2687, %v2686
    %v3012 = vpack.c.b16 %v2689, %v2688
    %v3013 = vpack.c.b16 %v2691, %v2690
    %v3014 = vpack.c.b16 %v2693, %v2692
    %v3015 = vpack.c.b16 %v2695, %v2694
    %v3016 = vpack.c.b16 %v2697, %v2696
    %v3017 = vpack.c.b16 %v2699, %v2698
    %v3018 = vpack.c.b16 %v2701, %v2700
    %v3019 = vpack.c.b16 %v2703, %v2702
    %v3020 = vpack.c.b16 %v2705, %v2704
    %v3021 = vpack.c.b16 %v2707, %v2706
    %v3022 = vpack.c.b16 %v2709, %v2708
    %v3023 = vpack.c.b16 %v2711, %v2710
    %v3024 = vpack.c.b16 %v2713, %v2712
    %v3025 = vpack.c.b16 %v2715, %v2714
    %v3026 = vpack.c.b16 %v2717, %v2716
    %v3027 = vpack.c.b16 %v2719, %v2718
    %v3028 = vpack.c.b16 %v2721, %v2720
    %v3029 = vpack.c.b16 %v2723, %v2722
    %v3030 = vpack.c.b16 %v2725, %v2724
    %v3031 = vpack.c.b16 %v2727, %v2726
    %v3032 = vpack.c.b16 %v2729, %v2728
    %v3033 = vpack.c.b16 %v2731, %v2730
    %v3034 = vpack.c.b16 %v2733, %v2732
    %v3035 = vpack.c.b16 %v2735, %v2734
    %v3036 = vpack.c.b16 %v2737, %v2736
    %v3037 = vpack.c.b16 %v2739, %v2738
    %v3038 = vpack.c.b16 %v2741, %v2740
    %v3039 = vpack.c.b16 %v2743, %v2742
    %v3040 = vpack.c.b16 %v2745, %v2744
    %v3041 = vpack.c.b16 %v2747, %v2746
    %v3042 = vpack.c.b16 %v2749, %v2748
    %v3043 = vpack.c.b16 %v2751, %v2750
    %v3044 = vpack.c.b16 %v2753, %v2752
    %v3045 = vpack.c.b16 %v2755, %v2754
    %v3046 = vpack.c.b16 %v2757, %v2756
    %v3047 = vpack.c.b16 %v2759, %v2758
    %v3048 = vpack.c.b16 %v2761, %v2760
    %v3049 = vpack.c.b16 %v2763, %v2762
    %v3050 = vpack.c.b16 %v2765, %v2764
    %v3051 = vpack.c.b16 %v2767, %v2766
    %v3052 = vpack.c.b16 %v2769, %v2768
    %v3053 = vpack.c.b16 %v2771, %v2770
    %v3054 = vpack.c.b16 %v2773, %v2772
    %v3055 = vpack.c.b16 %v2775, %v2774
    %v3056 = vpack.c.b16 %v2777, %v2776
    %v3057 = vpack.c.b16 %v2779, %v2778
    %v3058 = vpack.c.b16 %v2781, %v2780
    %v3059 = vpack.c.b16 %v2783, %v2782
    %v3060 = vpack.c.b16 %v2785, %v2784
    %v3061 = vpack.c.b16 %v2787, %v2786
    %v3062 = vpack.c.b16 %v2789, %v2788
    %v3063 = vpack.c.b16 %v2791, %v2790
    %v3064 = vpack.c.b16 %v2793, %v2792
    %v3065 = vpack.c.b16 %v2795, %v2794
    %v3066 = vpack.c.b16 %v2797, %v2796
    %v3067 = vpack.c.b16 %v2799, %v2798
    %v3068 = vpack.c.b16 %v2801, %v2800
    %v3069 = vpack.c.b16 %v2803, %v2802
    %v3070 = vpack.c.b16 %v2805, %v2804
    %v3071 = vpack.c.b16 %v2807, %v2806
    %v3072 = vpack.c.b16 %v2809, %v2808
    %v3073 = vpack.c.b16 %v2811, %v2810
    %v3074 = vpack.c.b16 %v2813, %v2812
    %v3075 = vpack.c.b16 %v2815, %v2814
    %v3076 = vpack.c.b16 %v2817, %v2816
    %v3077 = vpack.c.b16 %v2819, %v2818
    %v3078 = vpack.c.b16 %v2821, %v2820
    %v3079 = vpack.c.b16 %v2823, %v2822
    %v3080 = vpack.c.b16 %v2825, %v2824
    %v3081 = vpack.c.b16 %v2827, %v2826
    %v3082 = vpack.c.b16 %v2829, %v2828
    %v3083 = vpack.c.b16 %v2831, %v2830
    %v3084 = vpack.c.b16 %v2833, %v2832
    %v3085 = vpack.c.b16 %v2835, %v2834
    %v3086 = vpack.c.b16 %v2837, %v2836
    %v3087 = vpack.c.b16 %v2839, %v2838
    %v3088 = vpack.c.b16 %v2841, %v2840
    %v3089 = vpack.c.b16 %v2843, %v2842
    %v3090 = vpack.c.b16 %v2845, %v2844
    %v3091 = vpack.c.b16 %v2847, %v2846
    %v3092 = vpack.c.b16 %v2849, %v2848
    %v3093 = vpack.c.b16 %v2851, %v2850
    %v3094 = vpack.c.b16 %v2853, %v2852
    %v3095 = vpack.c.b16 %v2855, %v2854
    %v3096 = vpack.c.b16 %v2857, %v2856
    %v3097 = vpack.c.b16 %v2859, %v2858
    %v3098 = vpack.c.b16 %v2861, %v2860
    %v3099 = vpack.c.b16 %v2863, %v2862
    %v3100 = vpack.c.b16 %v2865, %v2864
    %v3101 = vpack.c.b16 %v2867, %v2866
    %v3102 = vpack.c.b16 %v2869, %v2868
    %v3103 = vpack.c.b16 %v2871, %v2870
    %v3104 = vpack.c.b16 %v2873, %v2872
    %v3105 = vpack.c.b16 %v2875, %v2874
    %v3106 = vpack.c.b16 %v2877, %v2876
    %v3107 = vpack.c.b16 %v2879, %v2878
    %v3108 = vpack.c.b16 %v2881, %v2880
    %v3109 = vpack.c.b16 %v2883, %v2882
    %v3110 = vpack.c.b16 %v2885, %v2884
    %v3111 = vpack.c.b16 %v2887, %v2886
    %v3112 = vpack.c.b16 %v2889, %v2888
    %v3113 = vpack.c.b16 %v2891, %v2890
    %v3114 = vpack.c.b16 %v2893, %v2892
    %v3115 = vpack.c.b16 %v2895, %v2894
    %v3116 = vpack.c.b16 %v2897, %v2896
    %v3117 = vpack.c.b16 %v2899, %v2898
    %v3118 = vpack.c.b16 %v2901, %v2900
    %v3119 = vpack.c.b16 %v2903, %v2902
    %v3120 = vpack.c.b16 %v2905, %v2904
    %v3121 = vpack.c.b16 %v2907, %v2906
    %v3122 = vpack.c.b16 %v2909, %v2908
    %v3123 = vpack.c.b16 %v2911, %v2910
    %v3124 = vpack.c.b16 %v2913, %v2912
    %v3125 = vpack.c.b16 %v2915, %v2914
    %v3126 = vpack.c.b16 %v2917, %v2916
    %v3127 = vpack.c.b16 %v2919, %v2918
    %v3128 = vpack.c.b16 %v2921, %v2920
    %v3129 = vpack.c.b16 %v2923, %v2922
    %v3130 = vpack.c.b16 %v2925, %v2924
    %v3131 = vpack.c.b16 %v2927, %v2926
    %v3132 = vpack.c.b16 %v2929, %v2928
    %v3133 = vpack.c.b16 %v2931, %v2930
    %v3134 = vpack.c.b16 %v2933, %v2932
    %v3135 = vpack.c.b16 %v2935, %v2934
    %3336 = vmatprep.subr.bf16.mxu0 0
    %3337 = vmatpush1.bf16.msra.mxu0 %v2943
    %3338 = vmatprep.subr.bf16.mxu0 0
    %3339 = vmatpush1.bf16.msra.mxu0 %v2942
    %3340 = vmatprep.subr.bf16.mxu0 0
    %3341 = vmatpush1.bf16.msra.mxu0 %v2941
    %3342 = vmatprep.subr.bf16.mxu0 0
    %3343 = vmatpush1.bf16.msra.mxu0 %v2940
    %3344 = vmatprep.subr.bf16.mxu0 0
    %3345 = vmatpush1.bf16.msra.mxu0 %v2939
    %3346 = vmatprep.subr.bf16.mxu0 0
    %3347 = vmatpush1.bf16.msra.mxu0 %v2938
    %3348 = vmatprep.subr.bf16.mxu0 0
    %3349 = vmatpush1.bf16.msra.mxu0 %v2937
    %3350 = vmatprep.subr.bf16.mxu0 0
    %3351 = vmatpush1.bf16.msra.mxu0 %v2936
    %3352 = vmatprep.subr.bf16.mxu0 0
    %3353 = vmatpush2.bf16.msra.mxu0 %v2951
    %3354 = vmatprep.subr.bf16.mxu0 0
    %3355 = vmatpush2.bf16.msra.mxu0 %v2950
    %3356 = vmatprep.subr.bf16.mxu0 0
    %3357 = vmatpush2.bf16.msra.mxu0 %v2949
    %3358 = vmatprep.subr.bf16.mxu0 0
    %3359 = vmatpush2.bf16.msra.mxu0 %v2948
    %3360 = vmatprep.subr.bf16.mxu0 0
    %3361 = vmatpush2.bf16.msra.mxu0 %v2947
    %3362 = vmatprep.subr.bf16.mxu0 0
    %3363 = vmatpush2.bf16.msra.mxu0 %v2946
    %3364 = vmatprep.subr.bf16.mxu0 0
    %3365 = vmatpush2.bf16.msra.mxu0 %v2945
    %3366 = vmatprep.subr.bf16.mxu0 0
    %3367 = vmatpush2.bf16.msra.mxu0 %v2944
    %3368 = vmatprep.mubr.bf16.mxu0 %v1635
    %3369 = vmatmul.mubr.bf16.gmra.mxu0 %v1631
    %v3370 = vpop.f32.mrf.mxu0
    %v3371 = vadd.f32 %v2134, %v3370
    %v3372 = vpop.f32.mrf.mxu0
    %v3373 = vpop.f32.mrf.mxu0
    %v3374 = vpop.f32.mrf.mxu0
    %3375 = vdwg.mxu0
    %3376 = vmatprep.subr.bf16.mxu0 0
    %3377 = vmatpush1.bf16.msra.mxu0 %v2959
    %3378 = vmatprep.subr.bf16.mxu0 0
    %3379 = vmatpush1.bf16.msra.mxu0 %v2958
    %3380 = vmatprep.subr.bf16.mxu0 0
    %3381 = vmatpush1.bf16.msra.mxu0 %v2957
    %3382 = vmatprep.subr.bf16.mxu0 0
    %3383 = vmatpush1.bf16.msra.mxu0 %v2956
    %3384 = vmatprep.subr.bf16.mxu0 0
    %3385 = vmatpush1.bf16.msra.mxu0 %v2955
    %3386 = vmatprep.subr.bf16.mxu0 0
    %3387 = vmatpush1.bf16.msra.mxu0 %v2954
    %3388 = vmatprep.subr.bf16.mxu0 0
    %3389 = vmatpush1.bf16.msra.mxu0 %v2953
    %3390 = vmatprep.subr.bf16.mxu0 0
    %3391 = vmatpush1.bf16.msra.mxu0 %v2952
    %3392 = vmatprep.subr.bf16.mxu0 0
    %3393 = vmatpush2.bf16.msra.mxu0 %v2967
    %3394 = vmatprep.subr.bf16.mxu0 0
    %3395 = vmatpush2.bf16.msra.mxu0 %v2966
    %3396 = vmatprep.subr.bf16.mxu0 0
    %3397 = vmatpush2.bf16.msra.mxu0 %v2965
    %3398 = vmatprep.subr.bf16.mxu0 0
    %3399 = vmatpush2.bf16.msra.mxu0 %v2964
    %3400 = vmatprep.subr.bf16.mxu0 0
    %3401 = vmatpush2.bf16.msra.mxu0 %v2963
    %3402 = vmatprep.subr.bf16.mxu0 0
    %3403 = vmatpush2.bf16.msra.mxu0 %v2962
    %3404 = vmatprep.subr.bf16.mxu0 0
    %3405 = vmatpush2.bf16.msra.mxu0 %v2961
    %3406 = vmatprep.subr.bf16.mxu0 0
    %3407 = vmatpush2.bf16.msra.mxu0 %v2960
    %3408 = vmatprep.mubr.bf16.mxu0 %v1643
    %3409 = vmatmul.mubr.bf16.gmra.mxu0 %v1639
    %v3410 = vpop.f32.mrf.mxu0
    %v3411 = vadd.f32 %v3371, %v3410
    %v3412 = vpop.f32.mrf.mxu0
    %v3413 = vpop.f32.mrf.mxu0
    %v3414 = vpop.f32.mrf.mxu0
    %3415 = vdwg.mxu0
    %3416 = vmatprep.subr.bf16.mxu0 0
    %3417 = vmatpush1.bf16.msra.mxu0 %v2975
    %3418 = vmatprep.subr.bf16.mxu0 0
    %3419 = vmatpush1.bf16.msra.mxu0 %v2974
    %3420 = vmatprep.subr.bf16.mxu0 0
    %3421 = vmatpush1.bf16.msra.mxu0 %v2973
    %3422 = vmatprep.subr.bf16.mxu0 0
    %3423 = vmatpush1.bf16.msra.mxu0 %v2972
    %3424 = vmatprep.subr.bf16.mxu0 0
    %3425 = vmatpush1.bf16.msra.mxu0 %v2971
    %3426 = vmatprep.subr.bf16.mxu0 0
    %3427 = vmatpush1.bf16.msra.mxu0 %v2970
    %3428 = vmatprep.subr.bf16.mxu0 0
    %3429 = vmatpush1.bf16.msra.mxu0 %v2969
    %3430 = vmatprep.subr.bf16.mxu0 0
    %3431 = vmatpush1.bf16.msra.mxu0 %v2968
    %3432 = vmatprep.subr.bf16.mxu0 0
    %3433 = vmatpush2.bf16.msra.mxu0 %v2983
    %3434 = vmatprep.subr.bf16.mxu0 0
    %3435 = vmatpush2.bf16.msra.mxu0 %v2982
    %3436 = vmatprep.subr.bf16.mxu0 0
    %3437 = vmatpush2.bf16.msra.mxu0 %v2981
    %3438 = vmatprep.subr.bf16.mxu0 0
    %3439 = vmatpush2.bf16.msra.mxu0 %v2980
    %3440 = vmatprep.subr.bf16.mxu0 0
    %3441 = vmatpush2.bf16.msra.mxu0 %v2979
    %3442 = vmatprep.subr.bf16.mxu0 0
    %3443 = vmatpush2.bf16.msra.mxu0 %v2978
    %3444 = vmatprep.subr.bf16.mxu0 0
    %3445 = vmatpush2.bf16.msra.mxu0 %v2977
    %3446 = vmatprep.subr.bf16.mxu0 0
    %3447 = vmatpush2.bf16.msra.mxu0 %v2976
    %3448 = vmatprep.mubr.bf16.mxu0 %v1651
    %3449 = vmatmul.mubr.bf16.gmra.mxu0 %v1647
    %v3450 = vpop.f32.mrf.mxu0
    %v3451 = vadd.f32 %v3411, %v3450
    %v3452 = vpop.f32.mrf.mxu0
    %v3453 = vpop.f32.mrf.mxu0
    %v3454 = vpop.f32.mrf.mxu0
    %3455 = vdwg.mxu0
    %3456 = vmatprep.subr.bf16.mxu0 0
    %3457 = vmatpush1.bf16.msra.mxu0 %v2991
    %3458 = vmatprep.subr.bf16.mxu0 0
    %3459 = vmatpush1.bf16.msra.mxu0 %v2990
    %3460 = vmatprep.subr.bf16.mxu0 0
    %3461 = vmatpush1.bf16.msra.mxu0 %v2989
    %3462 = vmatprep.subr.bf16.mxu0 0
    %3463 = vmatpush1.bf16.msra.mxu0 %v2988
    %3464 = vmatprep.subr.bf16.mxu0 0
    %3465 = vmatpush1.bf16.msra.mxu0 %v2987
    %3466 = vmatprep.subr.bf16.mxu0 0
    %3467 = vmatpush1.bf16.msra.mxu0 %v2986
    %3468 = vmatprep.subr.bf16.mxu0 0
    %3469 = vmatpush1.bf16.msra.mxu0 %v2985
    %3470 = vmatprep.subr.bf16.mxu0 0
    %3471 = vmatpush1.bf16.msra.mxu0 %v2984
    %3472 = vmatprep.subr.bf16.mxu0 0
    %3473 = vmatpush2.bf16.msra.mxu0 %v2999
    %3474 = vmatprep.subr.bf16.mxu0 0
    %3475 = vmatpush2.bf16.msra.mxu0 %v2998
    %3476 = vmatprep.subr.bf16.mxu0 0
    %3477 = vmatpush2.bf16.msra.mxu0 %v2997
    %3478 = vmatprep.subr.bf16.mxu0 0
    %3479 = vmatpush2.bf16.msra.mxu0 %v2996
    %3480 = vmatprep.subr.bf16.mxu0 0
    %3481 = vmatpush2.bf16.msra.mxu0 %v2995
    %3482 = vmatprep.subr.bf16.mxu0 0
    %3483 = vmatpush2.bf16.msra.mxu0 %v2994
    %3484 = vmatprep.subr.bf16.mxu0 0
    %3485 = vmatpush2.bf16.msra.mxu0 %v2993
    %3486 = vmatprep.subr.bf16.mxu0 0
    %3487 = vmatpush2.bf16.msra.mxu0 %v2992
    %3488 = vmatprep.mubr.bf16.mxu0 %v1659
    %3489 = vmatmul.mubr.bf16.gmra.mxu0 %v1655
    %v3490 = vpop.f32.mrf.mxu0
    %v3491 = vadd.f32 %v3451, %v3490
    %v3492 = vpop.f32.mrf.mxu0
    %v3493 = vpop.f32.mrf.mxu0
    %v3494 = vpop.f32.mrf.mxu0
    %3495 = vdwg.mxu0
    %3496 = vmatprep.subr.bf16.mxu0 0
    %3497 = vmatpush1.bf16.msra.mxu0 %v3007
    %3498 = vmatprep.subr.bf16.mxu0 0
    %3499 = vmatpush1.bf16.msra.mxu0 %v3006
    %3500 = vmatprep.subr.bf16.mxu0 0
    %3501 = vmatpush1.bf16.msra.mxu0 %v3005
    %3502 = vmatprep.subr.bf16.mxu0 0
    %3503 = vmatpush1.bf16.msra.mxu0 %v3004
    %3504 = vmatprep.subr.bf16.mxu0 0
    %3505 = vmatpush1.bf16.msra.mxu0 %v3003
    %3506 = vmatprep.subr.bf16.mxu0 0
    %3507 = vmatpush1.bf16.msra.mxu0 %v3002
    %3508 = vmatprep.subr.bf16.mxu0 0
    %3509 = vmatpush1.bf16.msra.mxu0 %v3001
    %3510 = vmatprep.subr.bf16.mxu0 0
    %3511 = vmatpush1.bf16.msra.mxu0 %v3000
    %3512 = vmatprep.subr.bf16.mxu0 0
    %3513 = vmatpush2.bf16.msra.mxu0 %v3015
    %3514 = vmatprep.subr.bf16.mxu0 0
    %3515 = vmatpush2.bf16.msra.mxu0 %v3014
    %3516 = vmatprep.subr.bf16.mxu0 0
    %3517 = vmatpush2.bf16.msra.mxu0 %v3013
    %3518 = vmatprep.subr.bf16.mxu0 0
    %3519 = vmatpush2.bf16.msra.mxu0 %v3012
    %3520 = vmatprep.subr.bf16.mxu0 0
    %3521 = vmatpush2.bf16.msra.mxu0 %v3011
    %3522 = vmatprep.subr.bf16.mxu0 0
    %3523 = vmatpush2.bf16.msra.mxu0 %v3010
    %3524 = vmatprep.subr.bf16.mxu0 0
    %3525 = vmatpush2.bf16.msra.mxu0 %v3009
    %3526 = vmatprep.subr.bf16.mxu0 0
    %3527 = vmatpush2.bf16.msra.mxu0 %v3008
    %3528 = vmatprep.mubr.bf16.mxu0 %v1667
    %3529 = vmatmul.mubr.bf16.gmra.mxu0 %v1663
    %v3530 = vpop.f32.mrf.mxu0
    %v3531 = vadd.f32 %v3491, %v3530
    %v3532 = vpop.f32.mrf.mxu0
    %v3533 = vpop.f32.mrf.mxu0
    %v3534 = vpop.f32.mrf.mxu0
    %3535 = vdwg.mxu0
    %3536 = vmatprep.subr.bf16.mxu0 0
    %3537 = vmatpush1.bf16.msra.mxu0 %v3023
    %3538 = vmatprep.subr.bf16.mxu0 0
    %3539 = vmatpush1.bf16.msra.mxu0 %v3022
    %3540 = vmatprep.subr.bf16.mxu0 0
    %3541 = vmatpush1.bf16.msra.mxu0 %v3021
    %3542 = vmatprep.subr.bf16.mxu0 0
    %3543 = vmatpush1.bf16.msra.mxu0 %v3020
    %3544 = vmatprep.subr.bf16.mxu0 0
    %3545 = vmatpush1.bf16.msra.mxu0 %v3019
    %3546 = vmatprep.subr.bf16.mxu0 0
    %3547 = vmatpush1.bf16.msra.mxu0 %v3018
    %3548 = vmatprep.subr.bf16.mxu0 0
    %3549 = vmatpush1.bf16.msra.mxu0 %v3017
    %3550 = vmatprep.subr.bf16.mxu0 0
    %3551 = vmatpush1.bf16.msra.mxu0 %v3016
    %3552 = vmatprep.subr.bf16.mxu0 0
    %3553 = vmatpush2.bf16.msra.mxu0 %v3031
    %3554 = vmatprep.subr.bf16.mxu0 0
    %3555 = vmatpush2.bf16.msra.mxu0 %v3030
    %3556 = vmatprep.subr.bf16.mxu0 0
    %3557 = vmatpush2.bf16.msra.mxu0 %v3029
    %3558 = vmatprep.subr.bf16.mxu0 0
    %3559 = vmatpush2.bf16.msra.mxu0 %v3028
    %3560 = vmatprep.subr.bf16.mxu0 0
    %3561 = vmatpush2.bf16.msra.mxu0 %v3027
    %3562 = vmatprep.subr.bf16.mxu0 0
    %3563 = vmatpush2.bf16.msra.mxu0 %v3026
    %3564 = vmatprep.subr.bf16.mxu0 0
    %3565 = vmatpush2.bf16.msra.mxu0 %v3025
    %3566 = vmatprep.subr.bf16.mxu0 0
    %3567 = vmatpush2.bf16.msra.mxu0 %v3024
    %3568 = vmatprep.mubr.bf16.mxu0 %v1675
    %3569 = vmatmul.mubr.bf16.gmra.mxu0 %v1671
    %v3570 = vpop.f32.mrf.mxu0
    %v3571 = vadd.f32 %v3531, %v3570
    %v3572 = vpop.f32.mrf.mxu0
    %v3573 = vpop.f32.mrf.mxu0
    %v3574 = vpop.f32.mrf.mxu0
    %3575 = vdwg.mxu0
    %3576 = vmatprep.subr.bf16.mxu0 0
    %3577 = vmatpush1.bf16.msra.mxu0 %v3039
    %3578 = vmatprep.subr.bf16.mxu0 0
    %3579 = vmatpush1.bf16.msra.mxu0 %v3038
    %3580 = vmatprep.subr.bf16.mxu0 0
    %3581 = vmatpush1.bf16.msra.mxu0 %v3037
    %3582 = vmatprep.subr.bf16.mxu0 0
    %3583 = vmatpush1.bf16.msra.mxu0 %v3036
    %3584 = vmatprep.subr.bf16.mxu0 0
    %3585 = vmatpush1.bf16.msra.mxu0 %v3035
    %3586 = vmatprep.subr.bf16.mxu0 0
    %3587 = vmatpush1.bf16.msra.mxu0 %v3034
    %3588 = vmatprep.subr.bf16.mxu0 0
    %3589 = vmatpush1.bf16.msra.mxu0 %v3033
    %3590 = vmatprep.subr.bf16.mxu0 0
    %3591 = vmatpush1.bf16.msra.mxu0 %v3032
    %3592 = vmatprep.subr.bf16.mxu0 0
    %3593 = vmatpush2.bf16.msra.mxu0 %v3047
    %3594 = vmatprep.subr.bf16.mxu0 0
    %3595 = vmatpush2.bf16.msra.mxu0 %v3046
    %3596 = vmatprep.subr.bf16.mxu0 0
    %3597 = vmatpush2.bf16.msra.mxu0 %v3045
    %3598 = vmatprep.subr.bf16.mxu0 0
    %3599 = vmatpush2.bf16.msra.mxu0 %v3044
    %3600 = vmatprep.subr.bf16.mxu0 0
    %3601 = vmatpush2.bf16.msra.mxu0 %v3043
    %3602 = vmatprep.subr.bf16.mxu0 0
    %3603 = vmatpush2.bf16.msra.mxu0 %v3042
    %3604 = vmatprep.subr.bf16.mxu0 0
    %3605 = vmatpush2.bf16.msra.mxu0 %v3041
    %3606 = vmatprep.subr.bf16.mxu0 0
    %3607 = vmatpush2.bf16.msra.mxu0 %v3040
    %3608 = vmatprep.mubr.bf16.mxu0 %v1683
    %3609 = vmatmul.mubr.bf16.gmra.mxu0 %v1679
    %v3610 = vpop.f32.mrf.mxu0
    %v3611 = vadd.f32 %v3571, %v3610
    %v3612 = vpop.f32.mrf.mxu0
    %v3613 = vpop.f32.mrf.mxu0
    %v3614 = vpop.f32.mrf.mxu0
    %3615 = vdwg.mxu0
    %3616 = vmatprep.subr.bf16.mxu0 0
    %3617 = vmatpush1.bf16.msra.mxu0 %v3055
    %3618 = vmatprep.subr.bf16.mxu0 0
    %3619 = vmatpush1.bf16.msra.mxu0 %v3054
    %3620 = vmatprep.subr.bf16.mxu0 0
    %3621 = vmatpush1.bf16.msra.mxu0 %v3053
    %3622 = vmatprep.subr.bf16.mxu0 0
    %3623 = vmatpush1.bf16.msra.mxu0 %v3052
    %3624 = vmatprep.subr.bf16.mxu0 0
    %3625 = vmatpush1.bf16.msra.mxu0 %v3051
    %3626 = vmatprep.subr.bf16.mxu0 0
    %3627 = vmatpush1.bf16.msra.mxu0 %v3050
    %3628 = vmatprep.subr.bf16.mxu0 0
    %3629 = vmatpush1.bf16.msra.mxu0 %v3049
    %3630 = vmatprep.subr.bf16.mxu0 0
    %3631 = vmatpush1.bf16.msra.mxu0 %v3048
    %3632 = vmatprep.subr.bf16.mxu0 0
    %3633 = vmatpush2.bf16.msra.mxu0 %v3063
    %3634 = vmatprep.subr.bf16.mxu0 0
    %3635 = vmatpush2.bf16.msra.mxu0 %v3062
    %3636 = vmatprep.subr.bf16.mxu0 0
    %3637 = vmatpush2.bf16.msra.mxu0 %v3061
    %3638 = vmatprep.subr.bf16.mxu0 0
    %3639 = vmatpush2.bf16.msra.mxu0 %v3060
    %3640 = vmatprep.subr.bf16.mxu0 0
    %3641 = vmatpush2.bf16.msra.mxu0 %v3059
    %3642 = vmatprep.subr.bf16.mxu0 0
    %3643 = vmatpush2.bf16.msra.mxu0 %v3058
    %3644 = vmatprep.subr.bf16.mxu0 0
    %3645 = vmatpush2.bf16.msra.mxu0 %v3057
    %3646 = vmatprep.subr.bf16.mxu0 0
    %3647 = vmatpush2.bf16.msra.mxu0 %v3056
    %3648 = vmatprep.mubr.bf16.mxu0 %v1691
    %3649 = vmatmul.mubr.bf16.gmra.mxu0 %v1687
    %v3650 = vpop.f32.mrf.mxu0
    %v3651 = vadd.f32 %v3611, %v3650
    %v3652 = vpop.f32.mrf.mxu0
    %v3653 = vpop.f32.mrf.mxu0
    %v3654 = vpop.f32.mrf.mxu0
    %3655 = vdwg.mxu0
    %3656 = vmatprep.subr.bf16.mxu0 0
    %3657 = vmatpush1.bf16.msra.mxu0 %v3071
    %3658 = vmatprep.subr.bf16.mxu0 0
    %3659 = vmatpush1.bf16.msra.mxu0 %v3070
    %3660 = vmatprep.subr.bf16.mxu0 0
    %3661 = vmatpush1.bf16.msra.mxu0 %v3069
    %3662 = vmatprep.subr.bf16.mxu0 0
    %3663 = vmatpush1.bf16.msra.mxu0 %v3068
    %3664 = vmatprep.subr.bf16.mxu0 0
    %3665 = vmatpush1.bf16.msra.mxu0 %v3067
    %3666 = vmatprep.subr.bf16.mxu0 0
    %3667 = vmatpush1.bf16.msra.mxu0 %v3066
    %3668 = vmatprep.subr.bf16.mxu0 0
    %3669 = vmatpush1.bf16.msra.mxu0 %v3065
    %3670 = vmatprep.subr.bf16.mxu0 0
    %3671 = vmatpush1.bf16.msra.mxu0 %v3064
    %3672 = vmatprep.subr.bf16.mxu0 0
    %3673 = vmatpush2.bf16.msra.mxu0 %v3079
    %3674 = vmatprep.subr.bf16.mxu0 0
    %3675 = vmatpush2.bf16.msra.mxu0 %v3078
    %3676 = vmatprep.subr.bf16.mxu0 0
    %3677 = vmatpush2.bf16.msra.mxu0 %v3077
    %3678 = vmatprep.subr.bf16.mxu0 0
    %3679 = vmatpush2.bf16.msra.mxu0 %v3076
    %3680 = vmatprep.subr.bf16.mxu0 0
    %3681 = vmatpush2.bf16.msra.mxu0 %v3075
    %3682 = vmatprep.subr.bf16.mxu0 0
    %3683 = vmatpush2.bf16.msra.mxu0 %v3074
    %3684 = vmatprep.subr.bf16.mxu0 0
    %3685 = vmatpush2.bf16.msra.mxu0 %v3073
    %3686 = vmatprep.subr.bf16.mxu0 0
    %3687 = vmatpush2.bf16.msra.mxu0 %v3072
    %3688 = vmatprep.mubr.bf16.mxu0 %v1699
    %3689 = vmatmul.mubr.bf16.gmra.mxu0 %v1695
    %v3690 = vpop.f32.mrf.mxu0
    %v3691 = vadd.f32 %v3651, %v3690
    %v3692 = vpop.f32.mrf.mxu0
    %v3693 = vpop.f32.mrf.mxu0
    %v3694 = vpop.f32.mrf.mxu0
    %3695 = vdwg.mxu0
    %3696 = vmatprep.subr.bf16.mxu0 0
    %3697 = vmatpush1.bf16.msra.mxu0 %v3087
    %3698 = vmatprep.subr.bf16.mxu0 0
    %3699 = vmatpush1.bf16.msra.mxu0 %v3086
    %3700 = vmatprep.subr.bf16.mxu0 0
    %3701 = vmatpush1.bf16.msra.mxu0 %v3085
    %3702 = vmatprep.subr.bf16.mxu0 0
    %3703 = vmatpush1.bf16.msra.mxu0 %v3084
    %3704 = vmatprep.subr.bf16.mxu0 0
    %3705 = vmatpush1.bf16.msra.mxu0 %v3083
    %3706 = vmatprep.subr.bf16.mxu0 0
    %3707 = vmatpush1.bf16.msra.mxu0 %v3082
    %3708 = vmatprep.subr.bf16.mxu0 0
    %3709 = vmatpush1.bf16.msra.mxu0 %v3081
    %3710 = vmatprep.subr.bf16.mxu0 0
    %3711 = vmatpush1.bf16.msra.mxu0 %v3080
    %3712 = vmatprep.subr.bf16.mxu0 0
    %3713 = vmatpush2.bf16.msra.mxu0 %v3095
    %3714 = vmatprep.subr.bf16.mxu0 0
    %3715 = vmatpush2.bf16.msra.mxu0 %v3094
    %3716 = vmatprep.subr.bf16.mxu0 0
    %3717 = vmatpush2.bf16.msra.mxu0 %v3093
    %3718 = vmatprep.subr.bf16.mxu0 0
    %3719 = vmatpush2.bf16.msra.mxu0 %v3092
    %3720 = vmatprep.subr.bf16.mxu0 0
    %3721 = vmatpush2.bf16.msra.mxu0 %v3091
    %3722 = vmatprep.subr.bf16.mxu0 0
    %3723 = vmatpush2.bf16.msra.mxu0 %v3090
    %3724 = vmatprep.subr.bf16.mxu0 0
    %3725 = vmatpush2.bf16.msra.mxu0 %v3089
    %3726 = vmatprep.subr.bf16.mxu0 0
    %3727 = vmatpush2.bf16.msra.mxu0 %v3088
    %3728 = vmatprep.mubr.bf16.mxu0 %v1707
    %3729 = vmatmul.mubr.bf16.gmra.mxu0 %v1703
    %v3730 = vpop.f32.mrf.mxu0
    %v3731 = vadd.f32 %v3691, %v3730
    %v3732 = vpop.f32.mrf.mxu0
    %v3733 = vpop.f32.mrf.mxu0
    %v3734 = vpop.f32.mrf.mxu0
    %3735 = vdwg.mxu0
    %3736 = vmatprep.subr.bf16.mxu0 0
    %3737 = vmatpush1.bf16.msra.mxu0 %v3103
    %3738 = vmatprep.subr.bf16.mxu0 0
    %3739 = vmatpush1.bf16.msra.mxu0 %v3102
    %3740 = vmatprep.subr.bf16.mxu0 0
    %3741 = vmatpush1.bf16.msra.mxu0 %v3101
    %3742 = vmatprep.subr.bf16.mxu0 0
    %3743 = vmatpush1.bf16.msra.mxu0 %v3100
    %3744 = vmatprep.subr.bf16.mxu0 0
    %3745 = vmatpush1.bf16.msra.mxu0 %v3099
    %3746 = vmatprep.subr.bf16.mxu0 0
    %3747 = vmatpush1.bf16.msra.mxu0 %v3098
    %3748 = vmatprep.subr.bf16.mxu0 0
    %3749 = vmatpush1.bf16.msra.mxu0 %v3097
    %3750 = vmatprep.subr.bf16.mxu0 0
    %3751 = vmatpush1.bf16.msra.mxu0 %v3096
    %3752 = vmatprep.subr.bf16.mxu0 0
    %3753 = vmatpush2.bf16.msra.mxu0 %v3111
    %3754 = vmatprep.subr.bf16.mxu0 0
    %3755 = vmatpush2.bf16.msra.mxu0 %v3110
    %3756 = vmatprep.subr.bf16.mxu0 0
    %3757 = vmatpush2.bf16.msra.mxu0 %v3109
    %3758 = vmatprep.subr.bf16.mxu0 0
    %3759 = vmatpush2.bf16.msra.mxu0 %v3108
    %3760 = vmatprep.subr.bf16.mxu0 0
    %3761 = vmatpush2.bf16.msra.mxu0 %v3107
    %3762 = vmatprep.subr.bf16.mxu0 0
    %3763 = vmatpush2.bf16.msra.mxu0 %v3106
    %3764 = vmatprep.subr.bf16.mxu0 0
    %3765 = vmatpush2.bf16.msra.mxu0 %v3105
    %3766 = vmatprep.subr.bf16.mxu0 0
    %3767 = vmatpush2.bf16.msra.mxu0 %v3104
    %3768 = vmatprep.mubr.bf16.mxu0 %v1715
    %3769 = vmatmul.mubr.bf16.gmra.mxu0 %v1711
    %v3770 = vpop.f32.mrf.mxu0
    %v3771 = vadd.f32 %v3731, %v3770
    %v3772 = vpop.f32.mrf.mxu0
    %v3773 = vpop.f32.mrf.mxu0
    %v3774 = vpop.f32.mrf.mxu0
    %3775 = vdwg.mxu0
    %3776 = vmatprep.subr.bf16.mxu0 0
    %3777 = vmatpush1.bf16.msra.mxu0 %v3119
    %3778 = vmatprep.subr.bf16.mxu0 0
    %3779 = vmatpush1.bf16.msra.mxu0 %v3118
    %3780 = vmatprep.subr.bf16.mxu0 0
    %3781 = vmatpush1.bf16.msra.mxu0 %v3117
    %3782 = vmatprep.subr.bf16.mxu0 0
    %3783 = vmatpush1.bf16.msra.mxu0 %v3116
    %3784 = vmatprep.subr.bf16.mxu0 0
    %3785 = vmatpush1.bf16.msra.mxu0 %v3115
    %3786 = vmatprep.subr.bf16.mxu0 0
    %3787 = vmatpush1.bf16.msra.mxu0 %v3114
    %3788 = vmatprep.subr.bf16.mxu0 0
    %3789 = vmatpush1.bf16.msra.mxu0 %v3113
    %3790 = vmatprep.subr.bf16.mxu0 0
    %3791 = vmatpush1.bf16.msra.mxu0 %v3112
    %3792 = vmatprep.subr.bf16.mxu0 0
    %3793 = vmatpush2.bf16.msra.mxu0 %v3127
    %3794 = vmatprep.subr.bf16.mxu0 0
    %3795 = vmatpush2.bf16.msra.mxu0 %v3126
    %3796 = vmatprep.subr.bf16.mxu0 0
    %3797 = vmatpush2.bf16.msra.mxu0 %v3125
    %3798 = vmatprep.subr.bf16.mxu0 0
    %3799 = vmatpush2.bf16.msra.mxu0 %v3124
    %3800 = vmatprep.subr.bf16.mxu0 0
    %3801 = vmatpush2.bf16.msra.mxu0 %v3123
    %3802 = vmatprep.subr.bf16.mxu0 0
    %3803 = vmatpush2.bf16.msra.mxu0 %v3122
    %3804 = vmatprep.subr.bf16.mxu0 0
    %3805 = vmatpush2.bf16.msra.mxu0 %v3121
    %3806 = vmatprep.subr.bf16.mxu0 0
    %3807 = vmatpush2.bf16.msra.mxu0 %v3120
    %3808 = vmatprep.mubr.bf16.mxu0 %v1723
    %3809 = vmatmul.mubr.bf16.gmra.mxu0 %v1719
    %v3810 = vpop.f32.mrf.mxu0
    %v3811 = vadd.f32 %v3771, %v3810
    %v3812 = vpop.f32.mrf.mxu0
    %v3813 = vpop.f32.mrf.mxu0
    %v3814 = vpop.f32.mrf.mxu0
    %3815 = vdwg.mxu0
    %3816 = vmatprep.subr.bf16.mxu0 0
    %3817 = vmatpush1.bf16.msra.mxu0 %v3135
    %3818 = vmatprep.subr.bf16.mxu0 0
    %3819 = vmatpush1.bf16.msra.mxu0 %v3134
    %3820 = vmatprep.subr.bf16.mxu0 0
    %3821 = vmatpush1.bf16.msra.mxu0 %v3133
    %3822 = vmatprep.subr.bf16.mxu0 0
    %3823 = vmatpush1.bf16.msra.mxu0 %v3132
    %3824 = vmatprep.subr.bf16.mxu0 0
    %3825 = vmatpush1.bf16.msra.mxu0 %v3131
    %3826 = vmatprep.subr.bf16.mxu0 0
    %3827 = vmatpush1.bf16.msra.mxu0 %v3130
    %3828 = vmatprep.subr.bf16.mxu0 0
    %3829 = vmatpush1.bf16.msra.mxu0 %v3129
    %3830 = vmatprep.subr.bf16.mxu0 0
    %3831 = vmatpush1.bf16.msra.mxu0 %v3128
    %3832 = vmatprep.subr.bf16.mxu0 0
    %3833 = vmatpush2.bf16.msra.mxu0 0
    %3834 = vmatprep.subr.bf16.mxu0 0
    %3835 = vmatpush2.bf16.msra.mxu0 0
    %3836 = vmatprep.subr.bf16.mxu0 0
    %3837 = vmatpush2.bf16.msra.mxu0 0
    %3838 = vmatprep.subr.bf16.mxu0 0
    %3839 = vmatpush2.bf16.msra.mxu0 0
    %3840 = vmatprep.subr.bf16.mxu0 0
    %3841 = vmatpush2.bf16.msra.mxu0 0
    %3842 = vmatprep.subr.bf16.mxu0 0
    %3843 = vmatpush2.bf16.msra.mxu0 0
    %3844 = vmatprep.subr.bf16.mxu0 0
    %3845 = vmatpush2.bf16.msra.mxu0 0
    %3846 = vmatprep.subr.bf16.mxu0 0
    %3847 = vmatpush2.bf16.msra.mxu0 0
    %3848 = vmatprep.mubr.bf16.mxu0 0
    %3849 = vmatmul.mubr.bf16.gmra.mxu0 %v1727
    %v3850 = vpop.f32.mrf.mxu0
    %v3851 = vadd.f32 %v3811, %v3850
    %v3852 = vpop.f32.mrf.mxu0
    %v3853 = vpop.f32.mrf.mxu0
    %v3854 = vpop.f32.mrf.mxu0
    %3855 = vdwg.mxu0
    %v3856 = vld [vmem:[%s1] sm:$0xf]
    %v3857 = vld [vmem:[%s1 + $0x4] sm:$0xf]
    %v3858 = vld [vmem:[%s1 + $0x8] sm:$0xf]
    %v3859 = vld [vmem:[%s1 + $0xc] sm:$0xf]
    %v3860 = vld [vmem:[%s1 + $0x10] sm:$0xf]
    %v3861 = vld [vmem:[%s1 + $0x14] sm:$0xf]
    %v3862 = vld [vmem:[%s1 + $0x18] sm:$0x7]
    %v3863 = vld [vmem:[%s1 + $0x1c] sm:$0xf]
    %v3864 = vld [vmem:[%s1 + $0x20] sm:$0xf]
    %v3865 = vld [vmem:[%s1 + $0x24] sm:$0xf]
    %v3866 = vld [vmem:[%s1 + $0x28] sm:$0xf]
    %v3867 = vld [vmem:[%s1 + $0x2c] sm:$0xf]
    %v3868 = vld [vmem:[%s1 + $0x30] sm:$0xf]
    %v3869 = vld [vmem:[%s1 + $0x34] sm:$0x7]
    %v3870 = vld [vmem:[%s4] sm:$0xf]
    %v3871 = vld [vmem:[%s4 + $0x4] sm:$0xf]
    %v3872 = vld [vmem:[%s4 + $0x8] sm:$0xf]
    %v3873 = vld [vmem:[%s4 + $0xc] sm:$0xf]
    %v3874 = vld [vmem:[%s4 + $0x10] sm:$0xf]
    %v3875 = vld [vmem:[%s4 + $0x14] sm:$0xf]
    %v3876 = vld [vmem:[%s4 + $0x18] sm:$0xf]
    %v3877 = vld [vmem:[%s4 + $0x1c] sm:$0xf]
    %v3878 = vld [vmem:[%s4 + $0x20] sm:$0xf]
    %v3879 = vld [vmem:[%s4 + $0x24] sm:$0xf]
    %v3880 = vld [vmem:[%s4 + $0x28] sm:$0xf]
    %v3881 = vld [vmem:[%s4 + $0x2c] sm:$0xf]
    %v3882 = vld [vmem:[%s4 + $0x30] sm:$0xf]
    %v3883 = vld [vmem:[%s4 + $0x34] sm:$0xf]
    %v3884 = vld [vmem:[%s4 + $0x38] sm:$0xf]
    %v3885 = vld [vmem:[%s4 + $0x3c] sm:$0xf]
    %v3886 = vld [vmem:[%s4 + $0x40] sm:$0xf]
    %v3887 = vld [vmem:[%s4 + $0x44] sm:$0xf]
    %v3888 = vld [vmem:[%s4 + $0x48] sm:$0xf]
    %v3889 = vld [vmem:[%s4 + $0x4c] sm:$0xf]
    %v3890 = vld [vmem:[%s5] sm:$0x1]
    %v3905 = vunpack.c.l.b16 %v3856
    %v3906 = vunpack.c.l.b16 %v3857
    %v3907 = vunpack.c.l.b16 %v3858
    %v3908 = vunpack.c.l.b16 %v3859
    %v3909 = vunpack.c.l.b16 %v3860
    %v3910 = vunpack.c.l.b16 %v3861
    %v3911 = vunpack.c.l.b16 %v3862
    %v3912 = vunpack.c.l.b16 %v3863
    %v3913 = vunpack.c.l.b16 %v3864
    %v3914 = vunpack.c.l.b16 %v3865
    %v3915 = vunpack.c.l.b16 %v3866
    %v3916 = vunpack.c.l.b16 %v3867
    %v3917 = vunpack.c.l.b16 %v3868
    %v3918 = vunpack.c.l.b16 %v3869
    %v3919 = vpack.c.b16 %v3906, %v3905
    %v3920 = vpack.c.b16 %v3908, %v3907
    %v3921 = vpack.c.b16 %v3910, %v3909
    %v3922 = vpack.c.b16 %v3911, %v3911
    %v3923 = vpack.c.b16 %v3913, %v3912
    %v3924 = vpack.c.b16 %v3915, %v3914
    %v3925 = vpack.c.b16 %v3917, %v3916
    %v3926 = vpack.c.b16 %v3918, %v3918
    %v3928 = vshrl.u32 %v3919, 16
    %v3930 = vshll.u32 %v3919, 16
    %v3932 = vrot.slane %v3930, 1
    %v3933 = vor.u32 %v3928, %v3932
    %v3935 = vshll.u32 %v3920, 16
    %v3937 = vrot.slane %v3935, 1
    %v3938 = vsel %vm132, %v3933, %v3937
    %v3939 = vshrl.u32 %v3920, 16
    %v3941 = vor.u32 %v3939, %v3937
    %v3943 = vshll.u32 %v3921, 16
    %v3945 = vrot.slane %v3943, 1
    %v3946 = vsel %vm132, %v3941, %v3945
    %v3947 = vshrl.u32 %v3921, 16
    %v3949 = vor.u32 %v3947, %v3945
    %v3951 = vshll.u32 %v3922, 16
    %v3953 = vrot.slane %v3951, 1
    %v3954 = vsel %vm132, %v3949, %v3953
    %v3955 = vshrl.u32 %v3922, 16
    %v3957 = vor.u32 %v3955, %v3953
    %v3959 = vshrl.u32 %v3923, 16
    %v3961 = vshll.u32 %v3923, 16
    %v3963 = vrot.slane %v3961, 1
    %v3964 = vor.u32 %v3959, %v3963
    %v3966 = vshll.u32 %v3924, 16
    %v3968 = vrot.slane %v3966, 1
    %v3969 = vsel %vm132, %v3964, %v3968
    %v3970 = vshrl.u32 %v3924, 16
    %v3972 = vor.u32 %v3970, %v3968
    %v3974 = vshll.u32 %v3925, 16
    %v3976 = vrot.slane %v3974, 1
    %v3977 = vsel %vm132, %v3972, %v3976
    %v3978 = vshrl.u32 %v3925, 16
    %v3980 = vor.u32 %v3978, %v3976
    %v3982 = vshll.u32 %v3926, 16
    %v3984 = vrot.slane %v3982, 1
    %v3985 = vsel %vm132, %v3980, %v3984
    %v3986 = vshrl.u32 %v3926, 16
    %v3988 = vor.u32 %v3986, %v3984
    %3989 = vrot.lane.b32.xlu0 %v3938, 32
    %v3990 = vpop.permute.xlu0 %3989
    %3991 = vrot.lane.b32.xlu0 %v3946, 32
    %v3992 = vpop.permute.xlu0 %3991
    %3993 = vrot.lane.b32.xlu0 %v3954, 32
    %v3994 = vpop.permute.xlu0 %3993
    %3995 = vrot.lane.b32.xlu0 %v3957, 32
    %v3996 = vpop.permute.xlu0 %3995
    %3997 = vrot.lane.b32.xlu0 %v3969, 32
    %v3998 = vpop.permute.xlu0 %3997
    %3999 = vrot.lane.b32.xlu0 %v3977, 32
    %v4000 = vpop.permute.xlu0 %3999
    %4001 = vrot.lane.b32.xlu0 %v3985, 32
    %v4002 = vpop.permute.xlu0 %4001
    %4003 = vrot.lane.b32.xlu0 %v3988, 32
    %v4004 = vpop.permute.xlu0 %4003
    %v4005 = vrot.slane %v3919, 1
    %v4006 = vrot.slane %v3920, 1
    %v4007 = vsel %vm211, %v4005, %v4006
    %v4008 = vrot.slane %v3921, 1
    %v4009 = vsel %vm211, %v4006, %v4008
    %v4010 = vrot.slane %v3922, 1
    %v4011 = vsel %vm211, %v4008, %v4010
    %v4012 = vrot.slane %v3923, 1
    %v4013 = vrot.slane %v3924, 1
    %v4014 = vsel %vm211, %v4012, %v4013
    %v4015 = vrot.slane %v3925, 1
    %v4016 = vsel %vm211, %v4013, %v4015
    %v4017 = vrot.slane %v3926, 1
    %v4018 = vsel %vm211, %v4015, %v4017
    %4019 = vrot.lane.b32.xlu0 %v4007, 64
    %v4020 = vpop.permute.xlu0 %4019
    %4021 = vrot.lane.b32.xlu0 %v4009, 64
    %v4022 = vpop.permute.xlu0 %4021
    %4023 = vrot.lane.b32.xlu0 %v4011, 64
    %v4024 = vpop.permute.xlu0 %4023
    %4025 = vrot.lane.b32.xlu0 %v4010, 64
    %v4026 = vpop.permute.xlu0 %4025
    %4027 = vrot.lane.b32.xlu0 %v4014, 64
    %v4028 = vpop.permute.xlu0 %4027
    %4029 = vrot.lane.b32.xlu0 %v4016, 64
    %v4030 = vpop.permute.xlu0 %4029
    %4031 = vrot.lane.b32.xlu0 %v4018, 64
    %v4032 = vpop.permute.xlu0 %4031
    %4033 = vrot.lane.b32.xlu0 %v4017, 64
    %v4034 = vpop.permute.xlu0 %4033
    %v4035 = vrot.slane %v3928, 1
    %v4036 = vrot.slane %v3930, 2
    %v4037 = vor.u32 %v4035, %v4036
    %v4038 = vrot.slane %v3939, 1
    %v4039 = vrot.slane %v3935, 2
    %v4040 = vor.u32 %v4038, %v4039
    %v4041 = vsel %vm242, %v4037, %v4040
    %v4042 = vrot.slane %v3947, 1
    %v4043 = vrot.slane %v3943, 2
    %v4044 = vor.u32 %v4042, %v4043
    %v4045 = vsel %vm242, %v4040, %v4044
    %v4046 = vrot.slane %v3955, 1
    %v4047 = vrot.slane %v3951, 2
    %v4048 = vor.u32 %v4046, %v4047
    %v4049 = vsel %vm242, %v4044, %v4048
    %v4050 = vrot.slane %v3959, 1
    %v4051 = vrot.slane %v3961, 2
    %v4052 = vor.u32 %v4050, %v4051
    %v4053 = vrot.slane %v3970, 1
    %v4054 = vrot.slane %v3966, 2
    %v4055 = vor.u32 %v4053, %v4054
    %v4056 = vsel %vm242, %v4052, %v4055
    %v4057 = vrot.slane %v3978, 1
    %v4058 = vrot.slane %v3974, 2
    %v4059 = vor.u32 %v4057, %v4058
    %v4060 = vsel %vm242, %v4055, %v4059
    %v4061 = vrot.slane %v3986, 1
    %v4062 = vrot.slane %v3982, 2
    %v4063 = vor.u32 %v4061, %v4062
    %v4064 = vsel %vm242, %v4059, %v4063
    %4065 = vrot.lane.b32.xlu0 %v4041, 96
    %v4066 = vpop.permute.xlu0 %4065
    %4067 = vrot.lane.b32.xlu0 %v4045, 96
    %v4068 = vpop.permute.xlu0 %4067
    %4069 = vrot.lane.b32.xlu0 %v4049, 96
    %v4070 = vpop.permute.xlu0 %4069
    %4071 = vrot.lane.b32.xlu0 %v4048, 96
    %v4072 = vpop.permute.xlu0 %4071
    %4073 = vrot.lane.b32.xlu0 %v4056, 96
    %v4074 = vpop.permute.xlu0 %4073
    %4075 = vrot.lane.b32.xlu0 %v4060, 96
    %v4076 = vpop.permute.xlu0 %4075
    %4077 = vrot.lane.b32.xlu0 %v4064, 96
    %v4078 = vpop.permute.xlu0 %4077
    %4079 = vrot.lane.b32.xlu0 %v4063, 96
    %v4080 = vpop.permute.xlu0 %4079
    %v4081 = vrot.slane %v3919, 2
    %v4082 = vrot.slane %v3920, 2
    %v4083 = vsel %vm289, %v4081, %v4082
    %v4084 = vrot.slane %v3921, 2
    %v4085 = vsel %vm289, %v4082, %v4084
    %v4086 = vrot.slane %v3922, 2
    %v4087 = vsel %vm289, %v4084, %v4086
    %v4088 = vrot.slane %v3923, 2
    %v4089 = vrot.slane %v3924, 2
    %v4090 = vsel %vm289, %v4088, %v4089
    %v4091 = vrot.slane %v3925, 2
    %v4092 = vsel %vm289, %v4089, %v4091
    %v4093 = vrot.slane %v3926, 2
    %v4094 = vsel %vm289, %v4091, %v4093
    %v4096 = vsel %vm304, %v3919, %v3990
    %v4098 = vsel %vm304, %v3920, %v3992
    %v4100 = vsel %vm304, %v3921, %v3994
    %v4102 = vsel %vm304, %v3922, %v3996
    %v4104 = vsel %vm304, %v3923, %v3998
    %v4106 = vsel %vm304, %v3924, %v4000
    %v4108 = vsel %vm304, %v3925, %v4002
    %v4110 = vsel %vm304, %v3926, %v4004
    %v4112 = vsel %vm321, %v4096, %v4020
    %v4114 = vsel %vm321, %v4098, %v4022
    %v4116 = vsel %vm321, %v4100, %v4024
    %v4118 = vsel %vm321, %v4102, %v4026
    %v4120 = vsel %vm321, %v4104, %v4028
    %v4122 = vsel %vm321, %v4106, %v4030
    %v4124 = vsel %vm321, %v4108, %v4032
    %v4126 = vsel %vm321, %v4110, %v4034
    %v4128 = vsel %vm338, %v4112, %v4066
    %v4130 = vsel %vm338, %v4114, %v4068
    %v4132 = vsel %vm338, %v4116, %v4070
    %v4134 = vsel %vm338, %v4118, %v4072
    %v4136 = vsel %vm338, %v4120, %v4074
    %v4138 = vsel %vm338, %v4122, %v4076
    %v4140 = vsel %vm338, %v4124, %v4078
    %v4142 = vsel %vm338, %v4126, %v4080
    %v4151 = vcombine.low %v4128, %v4083
    %v4152 = vcombine.high %v4128, %v4083
    %v4154 = vunpack.c.l.s4 1966171168
    %v4155 = vunpack.c.0.s8 %v4154
    %v4156 = vlaneseq
    %v4157 = vshrl.u32 %v4156, 7
    %v4158 = vsub.s32 %v4155, %v4157
    %v4159 = vrot.slane %v4151, %v4158
    %v4161 = vunpack.c.l.s4 1966171168
    %v4162 = vunpack.c.0.s8 %v4161
    %v4163 = vlaneseq
    %v4164 = vshrl.u32 %v4163, 7
    %v4165 = vsub.s32 %v4162, %v4164
    %v4166 = vrot.slane %v4152, %v4165
    %v4167 = vcombine.high %v4159, %v4159
    %v4168 = vcombine.high %v4166, %v4166
    %v4170 = vunpack.c.l.s4 1966171168
    %v4171 = vunpack.c.0.s8 %v4170
    %v4172 = vlaneseq
    %v4173 = vshrl.u32 %v4172, 7
    %v4174 = vsub.s32 %v4171, %v4173
    %v4175 = vrot.slane %v4159, %v4174
    %v4177 = vunpack.c.l.s4 1966171168
    %v4178 = vunpack.c.0.s8 %v4177
    %v4179 = vlaneseq
    %v4180 = vshrl.u32 %v4179, 7
    %v4181 = vsub.s32 %v4178, %v4180
    %v4182 = vrot.slane %v4166, %v4181
    %v4184 = vunpack.c.l.s4 1966171168
    %v4185 = vunpack.c.0.s8 %v4184
    %v4186 = vlaneseq
    %v4187 = vshrl.u32 %v4186, 7
    %v4188 = vsub.s32 %v4185, %v4187
    %v4189 = vrot.slane %v4167, %v4188
    %v4191 = vunpack.c.l.s4 1966171168
    %v4192 = vunpack.c.0.s8 %v4191
    %v4193 = vlaneseq
    %v4194 = vshrl.u32 %v4193, 7
    %v4195 = vsub.s32 %v4192, %v4194
    %v4196 = vrot.slane %v4168, %v4195
    %v4197 = vcombine.high %v4175, %v4175
    %v4198 = vcombine.high %v4182, %v4182
    %v4199 = vcombine.high %v4189, %v4189
    %v4200 = vcombine.high %v4196, %v4196
    %v4201 = vcombine.low %v4130, %v4085
    %v4202 = vcombine.high %v4130, %v4085
    %v4204 = vunpack.c.l.s4 1966171168
    %v4205 = vunpack.c.0.s8 %v4204
    %v4206 = vlaneseq
    %v4207 = vshrl.u32 %v4206, 7
    %v4208 = vsub.s32 %v4205, %v4207
    %v4209 = vrot.slane %v4201, %v4208
    %v4211 = vunpack.c.l.s4 1966171168
    %v4212 = vunpack.c.0.s8 %v4211
    %v4213 = vlaneseq
    %v4214 = vshrl.u32 %v4213, 7
    %v4215 = vsub.s32 %v4212, %v4214
    %v4216 = vrot.slane %v4202, %v4215
    %v4217 = vcombine.high %v4209, %v4209
    %v4218 = vcombine.high %v4216, %v4216
    %v4220 = vunpack.c.l.s4 1966171168
    %v4221 = vunpack.c.0.s8 %v4220
    %v4222 = vlaneseq
    %v4223 = vshrl.u32 %v4222, 7
    %v4224 = vsub.s32 %v4221, %v4223
    %v4225 = vrot.slane %v4209, %v4224
    %v4227 = vunpack.c.l.s4 1966171168
    %v4228 = vunpack.c.0.s8 %v4227
    %v4229 = vlaneseq
    %v4230 = vshrl.u32 %v4229, 7
    %v4231 = vsub.s32 %v4228, %v4230
    %v4232 = vrot.slane %v4216, %v4231
    %v4234 = vunpack.c.l.s4 1966171168
    %v4235 = vunpack.c.0.s8 %v4234
    %v4236 = vlaneseq
    %v4237 = vshrl.u32 %v4236, 7
    %v4238 = vsub.s32 %v4235, %v4237
    %v4239 = vrot.slane %v4217, %v4238
    %v4241 = vunpack.c.l.s4 1966171168
    %v4242 = vunpack.c.0.s8 %v4241
    %v4243 = vlaneseq
    %v4244 = vshrl.u32 %v4243, 7
    %v4245 = vsub.s32 %v4242, %v4244
    %v4246 = vrot.slane %v4218, %v4245
    %v4247 = vcombine.high %v4225, %v4225
    %v4248 = vcombine.high %v4232, %v4232
    %v4249 = vcombine.high %v4239, %v4239
    %v4250 = vcombine.high %v4246, %v4246
    %v4251 = vcombine.low %v4132, %v4087
    %v4252 = vcombine.high %v4132, %v4087
    %v4254 = vunpack.c.l.s4 1966171168
    %v4255 = vunpack.c.0.s8 %v4254
    %v4256 = vlaneseq
    %v4257 = vshrl.u32 %v4256, 7
    %v4258 = vsub.s32 %v4255, %v4257
    %v4259 = vrot.slane %v4251, %v4258
    %v4261 = vunpack.c.l.s4 1966171168
    %v4262 = vunpack.c.0.s8 %v4261
    %v4263 = vlaneseq
    %v4264 = vshrl.u32 %v4263, 7
    %v4265 = vsub.s32 %v4262, %v4264
    %v4266 = vrot.slane %v4252, %v4265
    %v4267 = vcombine.high %v4259, %v4259
    %v4268 = vcombine.high %v4266, %v4266
    %v4270 = vunpack.c.l.s4 1966171168
    %v4271 = vunpack.c.0.s8 %v4270
    %v4272 = vlaneseq
    %v4273 = vshrl.u32 %v4272, 7
    %v4274 = vsub.s32 %v4271, %v4273
    %v4275 = vrot.slane %v4259, %v4274
    %v4277 = vunpack.c.l.s4 1966171168
    %v4278 = vunpack.c.0.s8 %v4277
    %v4279 = vlaneseq
    %v4280 = vshrl.u32 %v4279, 7
    %v4281 = vsub.s32 %v4278, %v4280
    %v4282 = vrot.slane %v4266, %v4281
    %v4284 = vunpack.c.l.s4 1966171168
    %v4285 = vunpack.c.0.s8 %v4284
    %v4286 = vlaneseq
    %v4287 = vshrl.u32 %v4286, 7
    %v4288 = vsub.s32 %v4285, %v4287
    %v4289 = vrot.slane %v4267, %v4288
    %v4291 = vunpack.c.l.s4 1966171168
    %v4292 = vunpack.c.0.s8 %v4291
    %v4293 = vlaneseq
    %v4294 = vshrl.u32 %v4293, 7
    %v4295 = vsub.s32 %v4292, %v4294
    %v4296 = vrot.slane %v4268, %v4295
    %v4297 = vcombine.high %v4275, %v4275
    %v4298 = vcombine.high %v4282, %v4282
    %v4299 = vcombine.high %v4289, %v4289
    %v4300 = vcombine.high %v4296, %v4296
    %v4301 = vcombine.low %v4134, %v4086
    %v4303 = vunpack.c.l.s4 1966171168
    %v4304 = vunpack.c.0.s8 %v4303
    %v4305 = vlaneseq
    %v4306 = vshrl.u32 %v4305, 7
    %v4307 = vsub.s32 %v4304, %v4306
    %v4308 = vrot.slane %v4301, %v4307
    %v4310 = vunpack.c.l.s4 1966171168
    %v4311 = vunpack.c.0.s8 %v4310
    %v4312 = vlaneseq
    %v4313 = vshrl.u32 %v4312, 7
    %v4314 = vsub.s32 %v4311, %v4313
    %v4315 = vrot.slane %v4308, %v4314
    %v4316 = vcombine.low %v4136, %v4090
    %v4317 = vcombine.high %v4136, %v4090
    %v4319 = vunpack.c.l.s4 1966171168
    %v4320 = vunpack.c.0.s8 %v4319
    %v4321 = vlaneseq
    %v4322 = vshrl.u32 %v4321, 7
    %v4323 = vsub.s32 %v4320, %v4322
    %v4324 = vrot.slane %v4316, %v4323
    %v4326 = vunpack.c.l.s4 1966171168
    %v4327 = vunpack.c.0.s8 %v4326
    %v4328 = vlaneseq
    %v4329 = vshrl.u32 %v4328, 7
    %v4330 = vsub.s32 %v4327, %v4329
    %v4331 = vrot.slane %v4317, %v4330
    %v4332 = vcombine.high %v4324, %v4324
    %v4333 = vcombine.high %v4331, %v4331
    %v4335 = vunpack.c.l.s4 1966171168
    %v4336 = vunpack.c.0.s8 %v4335
    %v4337 = vlaneseq
    %v4338 = vshrl.u32 %v4337, 7
    %v4339 = vsub.s32 %v4336, %v4338
    %v4340 = vrot.slane %v4324, %v4339
    %v4342 = vunpack.c.l.s4 1966171168
    %v4343 = vunpack.c.0.s8 %v4342
    %v4344 = vlaneseq
    %v4345 = vshrl.u32 %v4344, 7
    %v4346 = vsub.s32 %v4343, %v4345
    %v4347 = vrot.slane %v4331, %v4346
    %v4349 = vunpack.c.l.s4 1966171168
    %v4350 = vunpack.c.0.s8 %v4349
    %v4351 = vlaneseq
    %v4352 = vshrl.u32 %v4351, 7
    %v4353 = vsub.s32 %v4350, %v4352
    %v4354 = vrot.slane %v4332, %v4353
    %v4356 = vunpack.c.l.s4 1966171168
    %v4357 = vunpack.c.0.s8 %v4356
    %v4358 = vlaneseq
    %v4359 = vshrl.u32 %v4358, 7
    %v4360 = vsub.s32 %v4357, %v4359
    %v4361 = vrot.slane %v4333, %v4360
    %v4362 = vcombine.high %v4340, %v4340
    %v4363 = vcombine.high %v4347, %v4347
    %v4364 = vcombine.high %v4354, %v4354
    %v4365 = vcombine.high %v4361, %v4361
    %v4366 = vcombine.low %v4138, %v4092
    %v4367 = vcombine.high %v4138, %v4092
    %v4369 = vunpack.c.l.s4 1966171168
    %v4370 = vunpack.c.0.s8 %v4369
    %v4371 = vlaneseq
    %v4372 = vshrl.u32 %v4371, 7
    %v4373 = vsub.s32 %v4370, %v4372
    %v4374 = vrot.slane %v4366, %v4373
    %v4376 = vunpack.c.l.s4 1966171168
    %v4377 = vunpack.c.0.s8 %v4376
    %v4378 = vlaneseq
    %v4379 = vshrl.u32 %v4378, 7
    %v4380 = vsub.s32 %v4377, %v4379
    %v4381 = vrot.slane %v4367, %v4380
    %v4382 = vcombine.high %v4374, %v4374
    %v4383 = vcombine.high %v4381, %v4381
    %v4385 = vunpack.c.l.s4 1966171168
    %v4386 = vunpack.c.0.s8 %v4385
    %v4387 = vlaneseq
    %v4388 = vshrl.u32 %v4387, 7
    %v4389 = vsub.s32 %v4386, %v4388
    %v4390 = vrot.slane %v4374, %v4389
    %v4392 = vunpack.c.l.s4 1966171168
    %v4393 = vunpack.c.0.s8 %v4392
    %v4394 = vlaneseq
    %v4395 = vshrl.u32 %v4394, 7
    %v4396 = vsub.s32 %v4393, %v4395
    %v4397 = vrot.slane %v4381, %v4396
    %v4399 = vunpack.c.l.s4 1966171168
    %v4400 = vunpack.c.0.s8 %v4399
    %v4401 = vlaneseq
    %v4402 = vshrl.u32 %v4401, 7
    %v4403 = vsub.s32 %v4400, %v4402
    %v4404 = vrot.slane %v4382, %v4403
    %v4406 = vunpack.c.l.s4 1966171168
    %v4407 = vunpack.c.0.s8 %v4406
    %v4408 = vlaneseq
    %v4409 = vshrl.u32 %v4408, 7
    %v4410 = vsub.s32 %v4407, %v4409
    %v4411 = vrot.slane %v4383, %v4410
    %v4412 = vcombine.high %v4390, %v4390
    %v4413 = vcombine.high %v4397, %v4397
    %v4414 = vcombine.high %v4404, %v4404
    %v4415 = vcombine.high %v4411, %v4411
    %v4416 = vcombine.low %v4140, %v4094
    %v4417 = vcombine.high %v4140, %v4094
    %v4419 = vunpack.c.l.s4 1966171168
    %v4420 = vunpack.c.0.s8 %v4419
    %v4421 = vlaneseq
    %v4422 = vshrl.u32 %v4421, 7
    %v4423 = vsub.s32 %v4420, %v4422
    %v4424 = vrot.slane %v4416, %v4423
    %v4426 = vunpack.c.l.s4 1966171168
    %v4427 = vunpack.c.0.s8 %v4426
    %v4428 = vlaneseq
    %v4429 = vshrl.u32 %v4428, 7
    %v4430 = vsub.s32 %v4427, %v4429
    %v4431 = vrot.slane %v4417, %v4430
    %v4432 = vcombine.high %v4424, %v4424
    %v4433 = vcombine.high %v4431, %v4431
    %v4435 = vunpack.c.l.s4 1966171168
    %v4436 = vunpack.c.0.s8 %v4435
    %v4437 = vlaneseq
    %v4438 = vshrl.u32 %v4437, 7
    %v4439 = vsub.s32 %v4436, %v4438
    %v4440 = vrot.slane %v4424, %v4439
    %v4442 = vunpack.c.l.s4 1966171168
    %v4443 = vunpack.c.0.s8 %v4442
    %v4444 = vlaneseq
    %v4445 = vshrl.u32 %v4444, 7
    %v4446 = vsub.s32 %v4443, %v4445
    %v4447 = vrot.slane %v4431, %v4446
    %v4449 = vunpack.c.l.s4 1966171168
    %v4450 = vunpack.c.0.s8 %v4449
    %v4451 = vlaneseq
    %v4452 = vshrl.u32 %v4451, 7
    %v4453 = vsub.s32 %v4450, %v4452
    %v4454 = vrot.slane %v4432, %v4453
    %v4456 = vunpack.c.l.s4 1966171168
    %v4457 = vunpack.c.0.s8 %v4456
    %v4458 = vlaneseq
    %v4459 = vshrl.u32 %v4458, 7
    %v4460 = vsub.s32 %v4457, %v4459
    %v4461 = vrot.slane %v4433, %v4460
    %v4462 = vcombine.high %v4440, %v4440
    %v4463 = vcombine.high %v4447, %v4447
    %v4464 = vcombine.high %v4454, %v4454
    %v4465 = vcombine.high %v4461, %v4461
    %v4466 = vcombine.low %v4142, %v4093
    %v4468 = vunpack.c.l.s4 1966171168
    %v4469 = vunpack.c.0.s8 %v4468
    %v4470 = vlaneseq
    %v4471 = vshrl.u32 %v4470, 7
    %v4472 = vsub.s32 %v4469, %v4471
    %v4473 = vrot.slane %v4466, %v4472
    %v4475 = vunpack.c.l.s4 1966171168
    %v4476 = vunpack.c.0.s8 %v4475
    %v4477 = vlaneseq
    %v4478 = vshrl.u32 %v4477, 7
    %v4479 = vsub.s32 %v4476, %v4478
    %v4480 = vrot.slane %v4473, %v4479
    %v4482 = vlaneseq
    %v4483 = vshrl.u32 %v4482, 7
    %v4484 = vsub.s32 0, %v4483
    %v4485 = vrot.slane %v3890, %v4484
    %v4487 = vcombine.low %v4175, %v4189
    %v4488 = vcombine.low %v4197, %v4199
    %v4489 = vcombine.low %v4182, %v4196
    %v4490 = vcombine.low %v4198, %v4200
    %v4492 = vunpack.c.l.s4 1966171168
    %v4493 = vunpack.c.0.s8 %v4492
    %v4494 = vlaneseq
    %v4495 = vshrl.u32 %v4494, 7
    %v4496 = vsub.s32 %v4493, %v4495
    %v4497 = vrot.slane %v4487, %v4496
    %v4499 = vunpack.c.l.s4 1966171168
    %v4500 = vunpack.c.0.s8 %v4499
    %v4501 = vlaneseq
    %v4502 = vshrl.u32 %v4501, 7
    %v4503 = vsub.s32 %v4500, %v4502
    %v4504 = vrot.slane %v4488, %v4503
    %v4506 = vunpack.c.l.s4 1966171168
    %v4507 = vunpack.c.0.s8 %v4506
    %v4508 = vlaneseq
    %v4509 = vshrl.u32 %v4508, 7
    %v4510 = vsub.s32 %v4507, %v4509
    %v4511 = vrot.slane %v4489, %v4510
    %v4513 = vunpack.c.l.s4 1966171168
    %v4514 = vunpack.c.0.s8 %v4513
    %v4515 = vlaneseq
    %v4516 = vshrl.u32 %v4515, 7
    %v4517 = vsub.s32 %v4514, %v4516
    %v4518 = vrot.slane %v4490, %v4517
    %v4519 = vcombine.low %v4497, %v4504
    %v4520 = vcombine.high %v4497, %v4504
    %v4521 = vcombine.low %v4511, %v4518
    %v4522 = vcombine.high %v4511, %v4518
    %v4524 = vunpack.c.l.s4 1966171168
    %v4525 = vunpack.c.0.s8 %v4524
    %v4526 = vlaneseq
    %v4527 = vshrl.u32 %v4526, 7
    %v4528 = vsub.s32 %v4525, %v4527
    %v4529 = vrot.slane %v4519, %v4528
    %v4531 = vunpack.c.l.s4 1966171168
    %v4532 = vunpack.c.0.s8 %v4531
    %v4533 = vlaneseq
    %v4534 = vshrl.u32 %v4533, 7
    %v4535 = vsub.s32 %v4532, %v4534
    %v4536 = vrot.slane %v4520, %v4535
    %v4538 = vunpack.c.l.s4 1966171168
    %v4539 = vunpack.c.0.s8 %v4538
    %v4540 = vlaneseq
    %v4541 = vshrl.u32 %v4540, 7
    %v4542 = vsub.s32 %v4539, %v4541
    %v4543 = vrot.slane %v4521, %v4542
    %v4545 = vunpack.c.l.s4 1966171168
    %v4546 = vunpack.c.0.s8 %v4545
    %v4547 = vlaneseq
    %v4548 = vshrl.u32 %v4547, 7
    %v4549 = vsub.s32 %v4546, %v4548
    %v4550 = vrot.slane %v4522, %v4549
    %v4551 = vcombine.low %v4529, %v4543
    %v4552 = vcombine.low %v4536, %v4550
    %v4553 = vcombine.low %v4225, %v4239
    %v4554 = vcombine.low %v4247, %v4249
    %v4555 = vcombine.low %v4232, %v4246
    %v4556 = vcombine.low %v4248, %v4250
    %v4558 = vunpack.c.l.s4 1966171168
    %v4559 = vunpack.c.0.s8 %v4558
    %v4560 = vlaneseq
    %v4561 = vshrl.u32 %v4560, 7
    %v4562 = vsub.s32 %v4559, %v4561
    %v4563 = vrot.slane %v4553, %v4562
    %v4565 = vunpack.c.l.s4 1966171168
    %v4566 = vunpack.c.0.s8 %v4565
    %v4567 = vlaneseq
    %v4568 = vshrl.u32 %v4567, 7
    %v4569 = vsub.s32 %v4566, %v4568
    %v4570 = vrot.slane %v4554, %v4569
    %v4572 = vunpack.c.l.s4 1966171168
    %v4573 = vunpack.c.0.s8 %v4572
    %v4574 = vlaneseq
    %v4575 = vshrl.u32 %v4574, 7
    %v4576 = vsub.s32 %v4573, %v4575
    %v4577 = vrot.slane %v4555, %v4576
    %v4579 = vunpack.c.l.s4 1966171168
    %v4580 = vunpack.c.0.s8 %v4579
    %v4581 = vlaneseq
    %v4582 = vshrl.u32 %v4581, 7
    %v4583 = vsub.s32 %v4580, %v4582
    %v4584 = vrot.slane %v4556, %v4583
    %v4585 = vcombine.low %v4563, %v4570
    %v4586 = vcombine.high %v4563, %v4570
    %v4587 = vcombine.low %v4577, %v4584
    %v4588 = vcombine.high %v4577, %v4584
    %v4590 = vunpack.c.l.s4 1966171168
    %v4591 = vunpack.c.0.s8 %v4590
    %v4592 = vlaneseq
    %v4593 = vshrl.u32 %v4592, 7
    %v4594 = vsub.s32 %v4591, %v4593
    %v4595 = vrot.slane %v4585, %v4594
    %v4597 = vunpack.c.l.s4 1966171168
    %v4598 = vunpack.c.0.s8 %v4597
    %v4599 = vlaneseq
    %v4600 = vshrl.u32 %v4599, 7
    %v4601 = vsub.s32 %v4598, %v4600
    %v4602 = vrot.slane %v4586, %v4601
    %v4604 = vunpack.c.l.s4 1966171168
    %v4605 = vunpack.c.0.s8 %v4604
    %v4606 = vlaneseq
    %v4607 = vshrl.u32 %v4606, 7
    %v4608 = vsub.s32 %v4605, %v4607
    %v4609 = vrot.slane %v4587, %v4608
    %v4611 = vunpack.c.l.s4 1966171168
    %v4612 = vunpack.c.0.s8 %v4611
    %v4613 = vlaneseq
    %v4614 = vshrl.u32 %v4613, 7
    %v4615 = vsub.s32 %v4612, %v4614
    %v4616 = vrot.slane %v4588, %v4615
    %v4617 = vcombine.low %v4595, %v4609
    %v4618 = vcombine.low %v4602, %v4616
    %v4619 = vcombine.low %v4275, %v4289
    %v4620 = vcombine.low %v4297, %v4299
    %v4621 = vcombine.low %v4282, %v4296
    %v4622 = vcombine.low %v4298, %v4300
    %v4624 = vunpack.c.l.s4 1966171168
    %v4625 = vunpack.c.0.s8 %v4624
    %v4626 = vlaneseq
    %v4627 = vshrl.u32 %v4626, 7
    %v4628 = vsub.s32 %v4625, %v4627
    %v4629 = vrot.slane %v4619, %v4628
    %v4631 = vunpack.c.l.s4 1966171168
    %v4632 = vunpack.c.0.s8 %v4631
    %v4633 = vlaneseq
    %v4634 = vshrl.u32 %v4633, 7
    %v4635 = vsub.s32 %v4632, %v4634
    %v4636 = vrot.slane %v4620, %v4635
    %v4638 = vunpack.c.l.s4 1966171168
    %v4639 = vunpack.c.0.s8 %v4638
    %v4640 = vlaneseq
    %v4641 = vshrl.u32 %v4640, 7
    %v4642 = vsub.s32 %v4639, %v4641
    %v4643 = vrot.slane %v4621, %v4642
    %v4645 = vunpack.c.l.s4 1966171168
    %v4646 = vunpack.c.0.s8 %v4645
    %v4647 = vlaneseq
    %v4648 = vshrl.u32 %v4647, 7
    %v4649 = vsub.s32 %v4646, %v4648
    %v4650 = vrot.slane %v4622, %v4649
    %v4651 = vcombine.low %v4629, %v4636
    %v4652 = vcombine.high %v4629, %v4636
    %v4653 = vcombine.low %v4643, %v4650
    %v4654 = vcombine.high %v4643, %v4650
    %v4656 = vunpack.c.l.s4 1966171168
    %v4657 = vunpack.c.0.s8 %v4656
    %v4658 = vlaneseq
    %v4659 = vshrl.u32 %v4658, 7
    %v4660 = vsub.s32 %v4657, %v4659
    %v4661 = vrot.slane %v4651, %v4660
    %v4663 = vunpack.c.l.s4 1966171168
    %v4664 = vunpack.c.0.s8 %v4663
    %v4665 = vlaneseq
    %v4666 = vshrl.u32 %v4665, 7
    %v4667 = vsub.s32 %v4664, %v4666
    %v4668 = vrot.slane %v4652, %v4667
    %v4670 = vunpack.c.l.s4 1966171168
    %v4671 = vunpack.c.0.s8 %v4670
    %v4672 = vlaneseq
    %v4673 = vshrl.u32 %v4672, 7
    %v4674 = vsub.s32 %v4671, %v4673
    %v4675 = vrot.slane %v4653, %v4674
    %v4677 = vunpack.c.l.s4 1966171168
    %v4678 = vunpack.c.0.s8 %v4677
    %v4679 = vlaneseq
    %v4680 = vshrl.u32 %v4679, 7
    %v4681 = vsub.s32 %v4678, %v4680
    %v4682 = vrot.slane %v4654, %v4681
    %v4683 = vcombine.low %v4661, %v4675
    %v4684 = vcombine.low %v4668, %v4682
    %v4685 = vcombine.low %v4315, %v4340
    %v4686 = vcombine.low %v4354, %v4362
    %v4687 = vcombine.low %v4364, %v4347
    %v4688 = vcombine.low %v4361, %v4363
    %v4690 = vunpack.c.l.s4 1966171168
    %v4691 = vunpack.c.0.s8 %v4690
    %v4692 = vlaneseq
    %v4693 = vshrl.u32 %v4692, 7
    %v4694 = vsub.s32 %v4691, %v4693
    %v4695 = vrot.slane %v4685, %v4694
    %v4697 = vunpack.c.l.s4 1966171168
    %v4698 = vunpack.c.0.s8 %v4697
    %v4699 = vlaneseq
    %v4700 = vshrl.u32 %v4699, 7
    %v4701 = vsub.s32 %v4698, %v4700
    %v4702 = vrot.slane %v4686, %v4701
    %v4704 = vunpack.c.l.s4 1966171168
    %v4705 = vunpack.c.0.s8 %v4704
    %v4706 = vlaneseq
    %v4707 = vshrl.u32 %v4706, 7
    %v4708 = vsub.s32 %v4705, %v4707
    %v4709 = vrot.slane %v4687, %v4708
    %v4711 = vunpack.c.l.s4 1966171168
    %v4712 = vunpack.c.0.s8 %v4711
    %v4713 = vlaneseq
    %v4714 = vshrl.u32 %v4713, 7
    %v4715 = vsub.s32 %v4712, %v4714
    %v4716 = vrot.slane %v4688, %v4715
    %v4717 = vcombine.low %v4695, %v4702
    %v4718 = vcombine.high %v4695, %v4702
    %v4719 = vcombine.low %v4709, %v4716
    %v4720 = vcombine.high %v4709, %v4716
    %v4722 = vunpack.c.l.s4 1966171168
    %v4723 = vunpack.c.0.s8 %v4722
    %v4724 = vlaneseq
    %v4725 = vshrl.u32 %v4724, 7
    %v4726 = vsub.s32 %v4723, %v4725
    %v4727 = vrot.slane %v4717, %v4726
    %v4729 = vunpack.c.l.s4 1966171168
    %v4730 = vunpack.c.0.s8 %v4729
    %v4731 = vlaneseq
    %v4732 = vshrl.u32 %v4731, 7
    %v4733 = vsub.s32 %v4730, %v4732
    %v4734 = vrot.slane %v4718, %v4733
    %v4736 = vunpack.c.l.s4 1966171168
    %v4737 = vunpack.c.0.s8 %v4736
    %v4738 = vlaneseq
    %v4739 = vshrl.u32 %v4738, 7
    %v4740 = vsub.s32 %v4737, %v4739
    %v4741 = vrot.slane %v4719, %v4740
    %v4743 = vunpack.c.l.s4 1966171168
    %v4744 = vunpack.c.0.s8 %v4743
    %v4745 = vlaneseq
    %v4746 = vshrl.u32 %v4745, 7
    %v4747 = vsub.s32 %v4744, %v4746
    %v4748 = vrot.slane %v4720, %v4747
    %v4749 = vcombine.low %v4727, %v4741
    %v4750 = vcombine.low %v4734, %v4748
    %v4751 = vcombine.low %v4365, %v4390
    %v4752 = vcombine.low %v4404, %v4412
    %v4753 = vcombine.low %v4414, %v4397
    %v4754 = vcombine.low %v4411, %v4413
    %v4756 = vunpack.c.l.s4 1966171168
    %v4757 = vunpack.c.0.s8 %v4756
    %v4758 = vlaneseq
    %v4759 = vshrl.u32 %v4758, 7
    %v4760 = vsub.s32 %v4757, %v4759
    %v4761 = vrot.slane %v4751, %v4760
    %v4763 = vunpack.c.l.s4 1966171168
    %v4764 = vunpack.c.0.s8 %v4763
    %v4765 = vlaneseq
    %v4766 = vshrl.u32 %v4765, 7
    %v4767 = vsub.s32 %v4764, %v4766
    %v4768 = vrot.slane %v4752, %v4767
    %v4770 = vunpack.c.l.s4 1966171168
    %v4771 = vunpack.c.0.s8 %v4770
    %v4772 = vlaneseq
    %v4773 = vshrl.u32 %v4772, 7
    %v4774 = vsub.s32 %v4771, %v4773
    %v4775 = vrot.slane %v4753, %v4774
    %v4777 = vunpack.c.l.s4 1966171168
    %v4778 = vunpack.c.0.s8 %v4777
    %v4779 = vlaneseq
    %v4780 = vshrl.u32 %v4779, 7
    %v4781 = vsub.s32 %v4778, %v4780
    %v4782 = vrot.slane %v4754, %v4781
    %v4783 = vcombine.low %v4761, %v4768
    %v4784 = vcombine.high %v4761, %v4768
    %v4785 = vcombine.low %v4775, %v4782
    %v4786 = vcombine.high %v4775, %v4782
    %v4788 = vunpack.c.l.s4 1966171168
    %v4789 = vunpack.c.0.s8 %v4788
    %v4790 = vlaneseq
    %v4791 = vshrl.u32 %v4790, 7
    %v4792 = vsub.s32 %v4789, %v4791
    %v4793 = vrot.slane %v4783, %v4792
    %v4795 = vunpack.c.l.s4 1966171168
    %v4796 = vunpack.c.0.s8 %v4795
    %v4797 = vlaneseq
    %v4798 = vshrl.u32 %v4797, 7
    %v4799 = vsub.s32 %v4796, %v4798
    %v4800 = vrot.slane %v4784, %v4799
    %v4802 = vunpack.c.l.s4 1966171168
    %v4803 = vunpack.c.0.s8 %v4802
    %v4804 = vlaneseq
    %v4805 = vshrl.u32 %v4804, 7
    %v4806 = vsub.s32 %v4803, %v4805
    %v4807 = vrot.slane %v4785, %v4806
    %v4809 = vunpack.c.l.s4 1966171168
    %v4810 = vunpack.c.0.s8 %v4809
    %v4811 = vlaneseq
    %v4812 = vshrl.u32 %v4811, 7
    %v4813 = vsub.s32 %v4810, %v4812
    %v4814 = vrot.slane %v4786, %v4813
    %v4815 = vcombine.low %v4793, %v4807
    %v4816 = vcombine.low %v4800, %v4814
    %v4817 = vcombine.low %v4415, %v4440
    %v4818 = vcombine.low %v4454, %v4462
    %v4819 = vcombine.low %v4464, %v4447
    %v4820 = vcombine.low %v4461, %v4463
    %v4822 = vunpack.c.l.s4 1966171168
    %v4823 = vunpack.c.0.s8 %v4822
    %v4824 = vlaneseq
    %v4825 = vshrl.u32 %v4824, 7
    %v4826 = vsub.s32 %v4823, %v4825
    %v4827 = vrot.slane %v4817, %v4826
    %v4829 = vunpack.c.l.s4 1966171168
    %v4830 = vunpack.c.0.s8 %v4829
    %v4831 = vlaneseq
    %v4832 = vshrl.u32 %v4831, 7
    %v4833 = vsub.s32 %v4830, %v4832
    %v4834 = vrot.slane %v4818, %v4833
    %v4836 = vunpack.c.l.s4 1966171168
    %v4837 = vunpack.c.0.s8 %v4836
    %v4838 = vlaneseq
    %v4839 = vshrl.u32 %v4838, 7
    %v4840 = vsub.s32 %v4837, %v4839
    %v4841 = vrot.slane %v4819, %v4840
    %v4843 = vunpack.c.l.s4 1966171168
    %v4844 = vunpack.c.0.s8 %v4843
    %v4845 = vlaneseq
    %v4846 = vshrl.u32 %v4845, 7
    %v4847 = vsub.s32 %v4844, %v4846
    %v4848 = vrot.slane %v4820, %v4847
    %v4849 = vcombine.low %v4827, %v4834
    %v4850 = vcombine.high %v4827, %v4834
    %v4851 = vcombine.low %v4841, %v4848
    %v4852 = vcombine.high %v4841, %v4848
    %v4854 = vunpack.c.l.s4 1966171168
    %v4855 = vunpack.c.0.s8 %v4854
    %v4856 = vlaneseq
    %v4857 = vshrl.u32 %v4856, 7
    %v4858 = vsub.s32 %v4855, %v4857
    %v4859 = vrot.slane %v4849, %v4858
    %v4861 = vunpack.c.l.s4 1966171168
    %v4862 = vunpack.c.0.s8 %v4861
    %v4863 = vlaneseq
    %v4864 = vshrl.u32 %v4863, 7
    %v4865 = vsub.s32 %v4862, %v4864
    %v4866 = vrot.slane %v4850, %v4865
    %v4868 = vunpack.c.l.s4 1966171168
    %v4869 = vunpack.c.0.s8 %v4868
    %v4870 = vlaneseq
    %v4871 = vshrl.u32 %v4870, 7
    %v4872 = vsub.s32 %v4869, %v4871
    %v4873 = vrot.slane %v4851, %v4872
    %v4875 = vunpack.c.l.s4 1966171168
    %v4876 = vunpack.c.0.s8 %v4875
    %v4877 = vlaneseq
    %v4878 = vshrl.u32 %v4877, 7
    %v4879 = vsub.s32 %v4876, %v4878
    %v4880 = vrot.slane %v4852, %v4879
    %v4881 = vcombine.low %v4859, %v4873
    %v4882 = vcombine.low %v4866, %v4880
    %v4883 = vcombine.low %v4465, %v4480
    %v4885 = vunpack.c.l.s4 1966171168
    %v4886 = vunpack.c.0.s8 %v4885
    %v4887 = vlaneseq
    %v4888 = vshrl.u32 %v4887, 7
    %v4889 = vsub.s32 %v4886, %v4888
    %v4890 = vrot.slane %v4883, %v4889
    %v4891 = vcombine.high %v4890, %v4890
    %v4893 = vunpack.c.l.s4 1966171168
    %v4894 = vunpack.c.0.s8 %v4893
    %v4895 = vlaneseq
    %v4896 = vshrl.u32 %v4895, 7
    %v4897 = vsub.s32 %v4894, %v4896
    %v4898 = vrot.slane %v4890, %v4897
    %v4900 = vunpack.c.l.s4 1966171168
    %v4901 = vunpack.c.0.s8 %v4900
    %v4902 = vlaneseq
    %v4903 = vshrl.u32 %v4902, 7
    %v4904 = vsub.s32 %v4901, %v4903
    %v4905 = vrot.slane %v4891, %v4904
    %v4933 = vunpack.c.l.b16 %v3870
    %v4934 = vunpack.c.l.b16 %v3871
    %v4935 = vunpack.c.l.b16 %v3872
    %v4936 = vunpack.c.l.b16 %v3873
    %v4937 = vunpack.c.l.b16 %v3874
    %v4938 = vunpack.c.l.b16 %v3875
    %v4939 = vunpack.c.l.b16 %v3876
    %v4940 = vunpack.c.l.b16 %v3877
    %v4941 = vunpack.c.l.b16 %v3878
    %v4942 = vunpack.c.l.b16 %v3879
    %v4943 = vunpack.c.l.b16 %v3880
    %v4944 = vunpack.c.l.b16 %v3881
    %v4945 = vunpack.c.l.b16 %v3882
    %v4946 = vunpack.c.l.b16 %v3883
    %v4947 = vunpack.c.l.b16 %v3884
    %v4948 = vunpack.c.l.b16 %v3885
    %v4949 = vunpack.c.l.b16 %v3886
    %v4950 = vunpack.c.l.b16 %v3887
    %v4951 = vunpack.c.l.b16 %v3888
    %v4952 = vunpack.c.l.b16 %v3889
    %v4953 = vpack.c.b16 %v4934, %v4933
    %v4954 = vpack.c.b16 %v4936, %v4935
    %v4955 = vpack.c.b16 %v4938, %v4937
    %v4956 = vpack.c.b16 %v4940, %v4939
    %v4957 = vpack.c.b16 %v4942, %v4941
    %v4958 = vpack.c.b16 %v4944, %v4943
    %v4959 = vpack.c.b16 %v4946, %v4945
    %v4960 = vpack.c.b16 %v4948, %v4947
    %v4961 = vpack.c.b16 %v4950, %v4949
    %v4962 = vpack.c.b16 %v4952, %v4951
    %v4974 = vsel %vm304, %v4552, 0
    %v4977 = vsel %vm304, %v4618, 0
    %v4980 = vsel %vm304, %v4684, 0
    %v4983 = vsel %vm304, %v4750, 0
    %v4986 = vsel %vm304, %v4816, 0
    %v4989 = vsel %vm304, %v4882, 0
    %v4992 = vsel %vm304, %v4905, 0
    %4994 = vmatprep.subr.bf16.mxu0 0
    %4995 = vmatpush1.bf16.msra.mxu0 %v4960
    %4996 = vmatprep.subr.bf16.mxu0 0
    %4997 = vmatpush1.bf16.msra.mxu0 %v4959
    %4998 = vmatprep.subr.bf16.mxu0 0
    %4999 = vmatpush1.bf16.msra.mxu0 %v4958
    %5000 = vmatprep.subr.bf16.mxu0 0
    %5001 = vmatpush1.bf16.msra.mxu0 %v4957
    %5002 = vmatprep.subr.bf16.mxu0 0
    %5003 = vmatpush1.bf16.msra.mxu0 %v4956
    %5004 = vmatprep.subr.bf16.mxu0 0
    %5005 = vmatpush1.bf16.msra.mxu0 %v4955
    %5006 = vmatprep.subr.bf16.mxu0 0
    %5007 = vmatpush1.bf16.msra.mxu0 %v4954
    %5008 = vmatprep.subr.bf16.mxu0 0
    %5009 = vmatpush1.bf16.msra.mxu0 %v4953
    %5010 = vmatprep.subr.bf16.mxu0 0
    %5011 = vmatpush2.bf16.msra.mxu0 0
    %5012 = vmatprep.subr.bf16.mxu0 0
    %5013 = vmatpush2.bf16.msra.mxu0 0
    %5014 = vmatprep.subr.bf16.mxu0 0
    %5015 = vmatpush2.bf16.msra.mxu0 0
    %5016 = vmatprep.subr.bf16.mxu0 0
    %5017 = vmatpush2.bf16.msra.mxu0 0
    %5018 = vmatprep.subr.bf16.mxu0 0
    %5019 = vmatpush2.bf16.msra.mxu0 0
    %5020 = vmatprep.subr.bf16.mxu0 0
    %5021 = vmatpush2.bf16.msra.mxu0 0
    %5022 = vmatprep.subr.bf16.mxu0 0
    %5023 = vmatpush2.bf16.msra.mxu0 %v4962
    %5024 = vmatprep.subr.bf16.mxu0 0
    %5025 = vmatpush2.bf16.msra.mxu0 %v4961
    %5026 = vmatprep.mubr.bf16.mxu0 %v4974
    %5027 = vmatmul.mubr.bf16.gmra.mxu0 %v4551
    %v5028 = vpop.f32.mrf.mxu0
    %v5029 = vadd.f32 %v4485, %v5028
    %v5030 = vpop.f32.mrf.mxu0
    %v5031 = vpop.f32.mrf.mxu0
    %v5032 = vadd.f32 %v4485, %v5031
    %v5033 = vpop.f32.mrf.mxu0
    %5034 = vmatprep.mubr.bf16.mxu0 %v4977
    %5035 = vmatmul.mubr.bf16.gmra.mxu0 %v4617
    %v5036 = vpop.f32.mrf.mxu0
    %v5037 = vadd.f32 %v4485, %v5036
    %v5038 = vpop.f32.mrf.mxu0
    %v5039 = vpop.f32.mrf.mxu0
    %v5040 = vadd.f32 %v4485, %v5039
    %v5041 = vpop.f32.mrf.mxu0
    %5042 = vmatprep.mubr.bf16.mxu0 %v4980
    %5043 = vmatmul.mubr.bf16.gmra.mxu0 %v4683
    %v5044 = vpop.f32.mrf.mxu0
    %v5045 = vadd.f32 %v4485, %v5044
    %v5046 = vpop.f32.mrf.mxu0
    %v5047 = vpop.f32.mrf.mxu0
    %v5048 = vadd.f32 %v4485, %v5047
    %v5049 = vpop.f32.mrf.mxu0
    %5050 = vmatprep.mubr.bf16.mxu0 %v4983
    %5051 = vmatmul.mubr.bf16.gmra.mxu0 %v4749
    %v5052 = vpop.f32.mrf.mxu0
    %v5053 = vadd.f32 %v4485, %v5052
    %v5054 = vpop.f32.mrf.mxu0
    %v5055 = vpop.f32.mrf.mxu0
    %v5056 = vadd.f32 %v4485, %v5055
    %v5057 = vpop.f32.mrf.mxu0
    %5058 = vmatprep.mubr.bf16.mxu0 %v4986
    %5059 = vmatmul.mubr.bf16.gmra.mxu0 %v4815
    %v5060 = vpop.f32.mrf.mxu0
    %v5061 = vadd.f32 %v4485, %v5060
    %v5062 = vpop.f32.mrf.mxu0
    %v5063 = vpop.f32.mrf.mxu0
    %v5064 = vadd.f32 %v4485, %v5063
    %v5065 = vpop.f32.mrf.mxu0
    %5066 = vmatprep.mubr.bf16.mxu0 %v4989
    %5067 = vmatmul.mubr.bf16.gmra.mxu0 %v4881
    %v5068 = vpop.f32.mrf.mxu0
    %v5069 = vadd.f32 %v4485, %v5068
    %v5070 = vpop.f32.mrf.mxu0
    %v5071 = vpop.f32.mrf.mxu0
    %v5072 = vadd.f32 %v4485, %v5071
    %v5073 = vpop.f32.mrf.mxu0
    %5074 = vmatprep.mubr.bf16.mxu0 %v4992
    %5075 = vmatmul.mubr.bf16.gmra.mxu0 %v4898
    %v5076 = vpop.f32.mrf.mxu0
    %v5077 = vadd.f32 %v4485, %v5076
    %v5078 = vpop.f32.mrf.mxu0
    %v5079 = vpop.f32.mrf.mxu0
    %v5080 = vpop.f32.mrf.mxu0
    %5081 = vdwg.mxu0
    %v5082 = vmax.f32 %v5029, 0.0
    %v5083 = vmax.f32 %v5032, 0.0
    %v5084 = vmax.f32 %v5037, 0.0
    %v5085 = vmax.f32 %v5040, 0.0
    %v5086 = vmax.f32 %v5045, 0.0
    %v5087 = vmax.f32 %v5048, 0.0
    %v5088 = vmax.f32 %v5053, 0.0
    %v5089 = vmax.f32 %v5056, 0.0
    %v5090 = vmax.f32 %v5061, 0.0
    %v5091 = vmax.f32 %v5064, 0.0
    %v5092 = vmax.f32 %v5069, 0.0
    %v5093 = vmax.f32 %v5072, 0.0
    %v5094 = vmax.f32 %v5077, 0.0
    %v5095 = vsel %vm1307, %v5082, 0.0
    %v5096 = vrot.slane %v5082, 1
    %v5097 = vsel %vm1310, %v5096, %v5095
    %v5098 = vrot.slane %v5082, 2
    %v5099 = vsel %vm1313, %v5098, %v5097
    %v5100 = vrot.slane %v5082, 3
    %v5101 = vsel %vm1316, %v5100, %v5099
    %v5102 = vrot.slane %v5083, 4
    %v5103 = vsel %vm1319, %v5102, %v5101
    %v5104 = vrot.slane %v5083, 5
    %v5105 = vsel %vm1322, %v5104, %v5103
    %v5106 = vrot.slane %v5083, 6
    %v5107 = vsel %vm1325, %v5106, %v5105
    %v5108 = vrot.slane %v5083, 7
    %v5109 = vsel %vm1328, %v5108, %v5107
    %v5110 = vsel %vm1307, %v5096, 0.0
    %v5111 = vsel %vm1310, %v5098, %v5110
    %v5112 = vsel %vm1313, %v5100, %v5111
    %v5113 = vrot.slane %v5082, 4
    %v5114 = vsel %vm1316, %v5113, %v5112
    %v5115 = vsel %vm1319, %v5104, %v5114
    %v5116 = vsel %vm1322, %v5106, %v5115
    %v5117 = vsel %vm1325, %v5108, %v5116
    %v5118 = vsel %vm1328, %v5083, %v5117
    %v5119 = vsel %vm1307, %v5084, 0.0
    %v5120 = vrot.slane %v5084, 1
    %v5121 = vsel %vm1310, %v5120, %v5119
    %v5122 = vrot.slane %v5084, 2
    %v5123 = vsel %vm1313, %v5122, %v5121
    %v5124 = vrot.slane %v5084, 3
    %v5125 = vsel %vm1316, %v5124, %v5123
    %v5126 = vrot.slane %v5085, 4
    %v5127 = vsel %vm1319, %v5126, %v5125
    %v5128 = vrot.slane %v5085, 5
    %v5129 = vsel %vm1322, %v5128, %v5127
    %v5130 = vrot.slane %v5085, 6
    %v5131 = vsel %vm1325, %v5130, %v5129
    %v5132 = vrot.slane %v5085, 7
    %v5133 = vsel %vm1328, %v5132, %v5131
    %v5134 = vsel %vm1307, %v5120, 0.0
    %v5135 = vsel %vm1310, %v5122, %v5134
    %v5136 = vsel %vm1313, %v5124, %v5135
    %v5137 = vrot.slane %v5084, 4
    %v5138 = vsel %vm1316, %v5137, %v5136
    %v5139 = vsel %vm1319, %v5128, %v5138
    %v5140 = vsel %vm1322, %v5130, %v5139
    %v5141 = vsel %vm1325, %v5132, %v5140
    %v5142 = vsel %vm1328, %v5085, %v5141
    %v5143 = vsel %vm1307, %v5086, 0.0
    %v5144 = vrot.slane %v5086, 1
    %v5145 = vsel %vm1310, %v5144, %v5143
    %v5146 = vrot.slane %v5086, 2
    %v5147 = vsel %vm1313, %v5146, %v5145
    %v5148 = vrot.slane %v5086, 3
    %v5149 = vsel %vm1316, %v5148, %v5147
    %v5150 = vrot.slane %v5087, 4
    %v5151 = vsel %vm1319, %v5150, %v5149
    %v5152 = vrot.slane %v5087, 5
    %v5153 = vsel %vm1322, %v5152, %v5151
    %v5154 = vrot.slane %v5087, 6
    %v5155 = vsel %vm1325, %v5154, %v5153
    %v5156 = vrot.slane %v5087, 7
    %v5157 = vsel %vm1328, %v5156, %v5155
    %v5158 = vsel %vm1307, %v5144, 0.0
    %v5159 = vsel %vm1310, %v5146, %v5158
    %v5160 = vsel %vm1313, %v5148, %v5159
    %v5161 = vrot.slane %v5086, 4
    %v5162 = vsel %vm1316, %v5161, %v5160
    %v5163 = vsel %vm1319, %v5152, %v5162
    %v5164 = vsel %vm1322, %v5154, %v5163
    %v5165 = vsel %vm1325, %v5156, %v5164
    %v5166 = vsel %vm1328, %v5087, %v5165
    %v5167 = vsel %vm1307, %v5088, 0.0
    %v5168 = vrot.slane %v5088, 1
    %v5169 = vsel %vm1307, %v5168, 0.0
    %v5170 = vrot.slane %v5088, 2
    %v5171 = vsel %vm1307, %v5170, 0.0
    %v5172 = vrot.slane %v5088, 3
    %v5173 = vsel %vm1310, %v5172, %v5171
    %v5174 = vrot.slane %v5088, 4
    %v5175 = vsel %vm1313, %v5174, %v5173
    %v5176 = vrot.slane %v5089, 5
    %v5177 = vsel %vm1316, %v5176, %v5175
    %v5178 = vrot.slane %v5089, 6
    %v5179 = vsel %vm1319, %v5178, %v5177
    %v5180 = vrot.slane %v5089, 7
    %v5181 = vsel %vm1322, %v5180, %v5179
    %v5182 = vsel %vm1325, %v5089, %v5181
    %v5183 = vrot.slane %v5090, 1
    %v5184 = vsel %vm1328, %v5183, %v5182
    %v5185 = vsel %vm1307, %v5172, 0.0
    %v5186 = vsel %vm1310, %v5174, %v5185
    %v5187 = vrot.slane %v5088, 5
    %v5188 = vsel %vm1313, %v5187, %v5186
    %v5189 = vsel %vm1316, %v5178, %v5188
    %v5190 = vsel %vm1319, %v5180, %v5189
    %v5191 = vsel %vm1322, %v5089, %v5190
    %v5192 = vrot.slane %v5089, 1
    %v5193 = vsel %vm1325, %v5192, %v5191
    %v5194 = vrot.slane %v5090, 2
    %v5195 = vsel %vm1328, %v5194, %v5193
    %v5196 = vsel %vm1307, %v5194, 0.0
    %v5197 = vrot.slane %v5090, 3
    %v5198 = vsel %vm1310, %v5197, %v5196
    %v5199 = vrot.slane %v5090, 4
    %v5200 = vsel %vm1313, %v5199, %v5198
    %v5201 = vrot.slane %v5091, 5
    %v5202 = vsel %vm1316, %v5201, %v5200
    %v5203 = vrot.slane %v5091, 6
    %v5204 = vsel %vm1319, %v5203, %v5202
    %v5205 = vrot.slane %v5091, 7
    %v5206 = vsel %vm1322, %v5205, %v5204
    %v5207 = vsel %vm1325, %v5091, %v5206
    %v5208 = vrot.slane %v5092, 1
    %v5209 = vsel %vm1328, %v5208, %v5207
    %v5210 = vsel %vm1307, %v5197, 0.0
    %v5211 = vsel %vm1310, %v5199, %v5210
    %v5212 = vrot.slane %v5090, 5
    %v5213 = vsel %vm1313, %v5212, %v5211
    %v5214 = vsel %vm1316, %v5203, %v5213
    %v5215 = vsel %vm1319, %v5205, %v5214
    %v5216 = vsel %vm1322, %v5091, %v5215
    %v5217 = vrot.slane %v5091, 1
    %v5218 = vsel %vm1325, %v5217, %v5216
    %v5219 = vrot.slane %v5092, 2
    %v5220 = vsel %vm1328, %v5219, %v5218
    %v5221 = vsel %vm1307, %v5219, 0.0
    %v5222 = vrot.slane %v5092, 3
    %v5223 = vsel %vm1310, %v5222, %v5221
    %v5224 = vrot.slane %v5092, 4
    %v5225 = vsel %vm1313, %v5224, %v5223
    %v5226 = vrot.slane %v5093, 5
    %v5227 = vsel %vm1316, %v5226, %v5225
    %v5228 = vrot.slane %v5093, 6
    %v5229 = vsel %vm1319, %v5228, %v5227
    %v5230 = vrot.slane %v5093, 7
    %v5231 = vsel %vm1322, %v5230, %v5229
    %v5232 = vsel %vm1325, %v5093, %v5231
    %v5233 = vrot.slane %v5094, 1
    %v5234 = vsel %vm1328, %v5233, %v5232
    %v5235 = vsel %vm1307, %v5222, 0.0
    %v5236 = vsel %vm1310, %v5224, %v5235
    %v5237 = vrot.slane %v5092, 5
    %v5238 = vsel %vm1313, %v5237, %v5236
    %v5239 = vsel %vm1316, %v5228, %v5238
    %v5240 = vsel %vm1319, %v5230, %v5239
    %v5241 = vsel %vm1322, %v5093, %v5240
    %v5242 = vrot.slane %v5093, 1
    %v5243 = vsel %vm1325, %v5242, %v5241
    %v5244 = vrot.slane %v5094, 2
    %v5245 = vsel %vm1328, %v5244, %v5243
    %v5246 = vsel %vm1307, %v5244, 0.0
    %v5247 = vrot.slane %v5094, 3
    %v5248 = vsel %vm1307, %v5247, 0.0
    %v5249 = vmax.f32 %v5109, %v5118
    %v5250 = vmax.f32 %v5133, %v5142
    %v5251 = vmax.f32 %v5157, %v5166
    %v5252 = vmax.f32 %v5167, %v5169
    %v5253 = vmax.f32 %v5184, %v5195
    %v5254 = vmax.f32 %v5209, %v5220
    %v5255 = vmax.f32 %v5234, %v5245
    %v5256 = vmax.f32 %v5246, %v5248
    %v5257 = vpack.c.bf16 %v5250, %v5249
    %v5258 = vpack.c.bf16 %v5252, %v5251
    %v5259 = vpack.c.bf16 %v5254, %v5253
    %v5260 = vpack.c.bf16 %v5256, %v5255
    %v5261 = vcombine.high %v5257, 0
    %v5263 = vunpack.c.l.s4 1983009808
    %v5264 = vunpack.c.0.s8 %v5263
    %v5265 = vlaneseq
    %v5266 = vshrl.u32 %v5265, 7
    %v5267 = vsub.s32 %v5264, %v5266
    %v5268 = vrot.slane %v5257, %v5267
    %v5270 = vunpack.c.l.s4 1983009808
    %v5271 = vunpack.c.0.s8 %v5270
    %v5272 = vlaneseq
    %v5273 = vshrl.u32 %v5272, 7
    %v5274 = vsub.s32 %v5271, %v5273
    %v5275 = vrot.slane %v5261, %v5274
    %v5276 = vcombine.high %v5268, 0
    %v5278 = vunpack.c.l.s4 1934713408
    %v5279 = vunpack.c.0.s8 %v5278
    %v5280 = vlaneseq
    %v5281 = vshrl.u32 %v5280, 7
    %v5282 = vsub.s32 %v5279, %v5281
    %v5283 = vrot.slane %v5268, %v5282
    %v5285 = vunpack.c.l.s4 1934713408
    %v5286 = vunpack.c.0.s8 %v5285
    %v5287 = vlaneseq
    %v5288 = vshrl.u32 %v5287, 7
    %v5289 = vsub.s32 %v5286, %v5288
    %v5290 = vrot.slane %v5276, %v5289
    %v5291 = vcombine.high %v5275, 0
    %v5293 = vunpack.c.l.s4 1934713408
    %v5294 = vunpack.c.0.s8 %v5293
    %v5295 = vlaneseq
    %v5296 = vshrl.u32 %v5295, 7
    %v5297 = vsub.s32 %v5294, %v5296
    %v5298 = vrot.slane %v5275, %v5297
    %v5300 = vunpack.c.l.s4 1934713408
    %v5301 = vunpack.c.0.s8 %v5300
    %v5302 = vlaneseq
    %v5303 = vshrl.u32 %v5302, 7
    %v5304 = vsub.s32 %v5301, %v5303
    %v5305 = vrot.slane %v5291, %v5304
    %v5306 = vcombine.high %v5283, 0
    %v5307 = vcombine.high %v5290, 0
    %v5308 = vcombine.high %v5298, 0
    %v5309 = vcombine.high %v5305, 0
    %v5310 = vcombine.high %v5259, 0
    %v5312 = vunpack.c.l.s4 1983009808
    %v5313 = vunpack.c.0.s8 %v5312
    %v5314 = vlaneseq
    %v5315 = vshrl.u32 %v5314, 7
    %v5316 = vsub.s32 %v5313, %v5315
    %v5317 = vrot.slane %v5259, %v5316
    %v5319 = vunpack.c.l.s4 1983009808
    %v5320 = vunpack.c.0.s8 %v5319
    %v5321 = vlaneseq
    %v5322 = vshrl.u32 %v5321, 7
    %v5323 = vsub.s32 %v5320, %v5322
    %v5324 = vrot.slane %v5310, %v5323
    %v5325 = vcombine.high %v5317, 0
    %v5327 = vunpack.c.l.s4 1934713408
    %v5328 = vunpack.c.0.s8 %v5327
    %v5329 = vlaneseq
    %v5330 = vshrl.u32 %v5329, 7
    %v5331 = vsub.s32 %v5328, %v5330
    %v5332 = vrot.slane %v5317, %v5331
    %v5334 = vunpack.c.l.s4 1934713408
    %v5335 = vunpack.c.0.s8 %v5334
    %v5336 = vlaneseq
    %v5337 = vshrl.u32 %v5336, 7
    %v5338 = vsub.s32 %v5335, %v5337
    %v5339 = vrot.slane %v5325, %v5338
    %v5340 = vcombine.high %v5324, 0
    %v5342 = vunpack.c.l.s4 1934713408
    %v5343 = vunpack.c.0.s8 %v5342
    %v5344 = vlaneseq
    %v5345 = vshrl.u32 %v5344, 7
    %v5346 = vsub.s32 %v5343, %v5345
    %v5347 = vrot.slane %v5324, %v5346
    %v5349 = vunpack.c.l.s4 1934713408
    %v5350 = vunpack.c.0.s8 %v5349
    %v5351 = vlaneseq
    %v5352 = vshrl.u32 %v5351, 7
    %v5353 = vsub.s32 %v5350, %v5352
    %v5354 = vrot.slane %v5340, %v5353
    %v5355 = vcombine.high %v5332, 0
    %v5356 = vcombine.high %v5339, 0
    %v5357 = vcombine.high %v5347, 0
    %v5358 = vcombine.high %v5354, 0
    %v5360 = vunpack.c.l.s4 1983009808
    %v5361 = vunpack.c.0.s8 %v5360
    %v5362 = vlaneseq
    %v5363 = vshrl.u32 %v5362, 7
    %v5364 = vsub.s32 %v5361, %v5363
    %v5365 = vrot.slane %v5258, %v5364
    %v5366 = vcombine.high %v5365, 0
    %v5368 = vunpack.c.l.s4 1934713408
    %v5369 = vunpack.c.0.s8 %v5368
    %v5370 = vlaneseq
    %v5371 = vshrl.u32 %v5370, 7
    %v5372 = vsub.s32 %v5369, %v5371
    %v5373 = vrot.slane %v5365, %v5372
    %v5375 = vunpack.c.l.s4 1934713408
    %v5376 = vunpack.c.0.s8 %v5375
    %v5377 = vlaneseq
    %v5378 = vshrl.u32 %v5377, 7
    %v5379 = vsub.s32 %v5376, %v5378
    %v5380 = vrot.slane %v5366, %v5379
    %v5381 = vcombine.high %v5373, 0
    %v5382 = vcombine.high %v5380, 0
    %v5383 = vcombine.high %v5258, 0
    %v5385 = vunpack.c.l.s4 1983009808
    %v5386 = vunpack.c.0.s8 %v5385
    %v5387 = vlaneseq
    %v5388 = vshrl.u32 %v5387, 7
    %v5389 = vsub.s32 %v5386, %v5388
    %v5390 = vrot.slane %v5260, %v5389
    %v5391 = vcombine.high %v5390, 0
    %v5393 = vunpack.c.l.s4 1934713408
    %v5394 = vunpack.c.0.s8 %v5393
    %v5395 = vlaneseq
    %v5396 = vshrl.u32 %v5395, 7
    %v5397 = vsub.s32 %v5394, %v5396
    %v5398 = vrot.slane %v5390, %v5397
    %v5400 = vunpack.c.l.s4 1934713408
    %v5401 = vunpack.c.0.s8 %v5400
    %v5402 = vlaneseq
    %v5403 = vshrl.u32 %v5402, 7
    %v5404 = vsub.s32 %v5401, %v5403
    %v5405 = vrot.slane %v5391, %v5404
    %v5406 = vcombine.high %v5398, 0
    %v5407 = vcombine.high %v5405, 0
    %v5408 = vcombine.high %v5260, 0
    %v5411 = vpack.i.b16 %v5332, %v5283
    %v5413 = vshrl.u32 %v5283, 16
    %v5414 = vshrl.u32 %v5332, 16
    %v5415 = vpack.i.b16 %v5414, %v5413
    %v5419 = vpack.i.b16 %v5355, %v5306
    %v5421 = vshrl.u32 %v5306, 16
    %v5422 = vshrl.u32 %v5355, 16
    %v5423 = vpack.i.b16 %v5422, %v5421
    %v5427 = vpack.i.b16 %v5339, %v5290
    %v5429 = vshrl.u32 %v5290, 16
    %v5430 = vshrl.u32 %v5339, 16
    %v5431 = vpack.i.b16 %v5430, %v5429
    %v5435 = vpack.i.b16 %v5356, %v5307
    %v5437 = vshrl.u32 %v5307, 16
    %v5438 = vshrl.u32 %v5356, 16
    %v5439 = vpack.i.b16 %v5438, %v5437
    %v5443 = vpack.i.b16 %v5347, %v5298
    %v5445 = vshrl.u32 %v5298, 16
    %v5446 = vshrl.u32 %v5347, 16
    %v5447 = vpack.i.b16 %v5446, %v5445
    %v5451 = vpack.i.b16 %v5357, %v5308
    %v5453 = vshrl.u32 %v5308, 16
    %v5454 = vshrl.u32 %v5357, 16
    %v5455 = vpack.i.b16 %v5454, %v5453
    %v5459 = vpack.i.b16 %v5354, %v5305
    %v5461 = vshrl.u32 %v5305, 16
    %v5462 = vshrl.u32 %v5354, 16
    %v5463 = vpack.i.b16 %v5462, %v5461
    %v5467 = vpack.i.b16 %v5358, %v5309
    %v5469 = vshrl.u32 %v5309, 16
    %v5470 = vshrl.u32 %v5358, 16
    %v5471 = vpack.i.b16 %v5470, %v5469
    %v5475 = vpack.i.b16 %v5398, %v5373
    %v5477 = vshrl.u32 %v5373, 16
    %v5478 = vshrl.u32 %v5398, 16
    %v5479 = vpack.i.b16 %v5478, %v5477
    %v5483 = vpack.i.b16 %v5406, %v5381
    %v5485 = vshrl.u32 %v5381, 16
    %v5486 = vshrl.u32 %v5406, 16
    %v5487 = vpack.i.b16 %v5486, %v5485
    %v5491 = vpack.i.b16 %v5405, %v5380
    %v5493 = vshrl.u32 %v5380, 16
    %v5494 = vshrl.u32 %v5405, 16
    %v5495 = vpack.i.b16 %v5494, %v5493
    %v5499 = vpack.i.b16 %v5407, %v5382
    %v5501 = vshrl.u32 %v5382, 16
    %v5502 = vshrl.u32 %v5407, 16
    %v5503 = vpack.i.b16 %v5502, %v5501
    %v5507 = vpack.i.b16 %v5408, %v5383
    %v5509 = vld [vmem:[#allocation3] sm:$0xf]
    %v5510 = vld [vmem:[#allocation3 + $0x4] sm:$0xf]
    %v5511 = vld [vmem:[#allocation3 + $0x8] sm:$0xf]
    %v5512 = vld [vmem:[#allocation3 + $0xc] sm:$0xf]
    %v5513 = vld [vmem:[#allocation3 + $0x10] sm:$0xf]
    %v5514 = vld [vmem:[#allocation3 + $0x14] sm:$0xf]
    %v5515 = vld [vmem:[#allocation3 + $0x18] sm:$0xf]
    %v5516 = vld [vmem:[#allocation3 + $0x1c] sm:$0xf]
    %v5517 = vld [vmem:[#allocation3 + $0x20] sm:$0xf]
    %v5518 = vld [vmem:[#allocation3 + $0x24] sm:$0xf]
    %v5519 = vld [vmem:[#allocation3 + $0x28] sm:$0xf]
    %v5520 = vld [vmem:[#allocation3 + $0x2c] sm:$0xf]
    %v5521 = vld [vmem:[#allocation3 + $0x30] sm:$0xf]
    %v5522 = vld [vmem:[#allocation3 + $0x34] sm:$0xf]
    %v5523 = vld [vmem:[#allocation3 + $0x38] sm:$0xf]
    %v5524 = vld [vmem:[#allocation3 + $0x3c] sm:$0xf]
    %v5525 = vld [vmem:[#allocation3 + $0x40] sm:$0xf]
    %v5526 = vld [vmem:[#allocation3 + $0x44] sm:$0xf]
    %v5527 = vld [vmem:[#allocation3 + $0x48] sm:$0xf]
    %v5528 = vld [vmem:[#allocation3 + $0x4c] sm:$0xf]
    %v5529 = vld [vmem:[#allocation3 + $0x50] sm:$0xf]
    %v5530 = vld [vmem:[#allocation3 + $0x54] sm:$0xf]
    %v5531 = vld [vmem:[#allocation3 + $0x58] sm:$0xf]
    %v5532 = vld [vmem:[#allocation3 + $0x5c] sm:$0xf]
    %v5533 = vld [vmem:[#allocation3 + $0x60] sm:$0xf]
    %v5534 = vld [vmem:[#allocation3 + $0x64] sm:$0xf]
    %v5535 = vld [vmem:[#allocation3 + $0x68] sm:$0xf]
    %v5536 = vld [vmem:[#allocation3 + $0x6c] sm:$0xf]
    %v5537 = vld [vmem:[#allocation3 + $0x70] sm:$0xf]
    %v5538 = vld [vmem:[#allocation3 + $0x74] sm:$0xf]
    %v5539 = vld [vmem:[#allocation3 + $0x78] sm:$0xf]
    %v5540 = vld [vmem:[#allocation3 + $0x7c] sm:$0xf]
    %v5541 = vld [vmem:[#allocation3 + $0x80] sm:$0xf]
    %v5542 = vld [vmem:[#allocation3 + $0x84] sm:$0xf]
    %v5543 = vld [vmem:[#allocation3 + $0x88] sm:$0xf]
    %v5544 = vld [vmem:[#allocation3 + $0x8c] sm:$0xf]
    %v5545 = vld [vmem:[#allocation3 + $0x90] sm:$0xf]
    %v5546 = vld [vmem:[#allocation3 + $0x94] sm:$0xf]
    %v5547 = vld [vmem:[#allocation3 + $0x98] sm:$0xf]
    %v5548 = vld [vmem:[#allocation3 + $0x9c] sm:$0xf]
    %v5549 = vld [vmem:[#allocation3 + $0xa0] sm:$0xf]
    %v5550 = vld [vmem:[#allocation3 + $0xa4] sm:$0xf]
    %v5551 = vld [vmem:[#allocation3 + $0xa8] sm:$0xf]
    %v5552 = vld [vmem:[#allocation3 + $0xac] sm:$0xf]
    %v5553 = vld [vmem:[#allocation3 + $0xb0] sm:$0xf]
    %v5554 = vld [vmem:[#allocation3 + $0xb4] sm:$0xf]
    %v5555 = vld [vmem:[#allocation3 + $0xb8] sm:$0xf]
    %v5556 = vld [vmem:[#allocation3 + $0xbc] sm:$0xf]
    %v5557 = vld [vmem:[#allocation3 + $0xc0] sm:$0xf]
    %v5558 = vld [vmem:[#allocation3 + $0xc4] sm:$0xf]
    %v5559 = vld [vmem:[#allocation3 + $0xc8] sm:$0xf]
    %v5560 = vld [vmem:[#allocation3 + $0xcc] sm:$0xf]
    %v5561 = vld [vmem:[#allocation3 + $0xd0] sm:$0xf]
    %v5562 = vld [vmem:[#allocation3 + $0xd4] sm:$0xf]
    %v5563 = vld [vmem:[#allocation3 + $0xd8] sm:$0xf]
    %v5564 = vld [vmem:[#allocation3 + $0xdc] sm:$0xf]
    %v5565 = vld [vmem:[#allocation3 + $0xe0] sm:$0xf]
    %v5566 = vld [vmem:[#allocation3 + $0xe4] sm:$0xf]
    %v5567 = vld [vmem:[#allocation3 + $0xe8] sm:$0xf]
    %v5568 = vld [vmem:[#allocation3 + $0xec] sm:$0xf]
    %v5569 = vld [vmem:[#allocation3 + $0xf0] sm:$0xf]
    %v5570 = vld [vmem:[#allocation3 + $0xf4] sm:$0xf]
    %v5571 = vld [vmem:[#allocation3 + $0xf8] sm:$0xf]
    %v5572 = vld [vmem:[#allocation3 + $0xfc] sm:$0xf]
    %v5573 = vld [vmem:[#allocation3 + $0x100] sm:$0xf]
    %v5574 = vld [vmem:[#allocation3 + $0x104] sm:$0xf]
    %v5575 = vld [vmem:[#allocation3 + $0x108] sm:$0xf]
    %v5576 = vld [vmem:[#allocation3 + $0x10c] sm:$0xf]
    %v5577 = vld [vmem:[#allocation3 + $0x110] sm:$0xf]
    %v5578 = vld [vmem:[#allocation3 + $0x114] sm:$0xf]
    %v5579 = vld [vmem:[#allocation3 + $0x118] sm:$0xf]
    %v5580 = vld [vmem:[#allocation3 + $0x11c] sm:$0xf]
    %v5581 = vld [vmem:[#allocation3 + $0x120] sm:$0xf]
    %v5582 = vld [vmem:[#allocation3 + $0x124] sm:$0xf]
    %v5583 = vld [vmem:[#allocation3 + $0x128] sm:$0xf]
    %v5584 = vld [vmem:[#allocation3 + $0x12c] sm:$0xf]
    %v5585 = vld [vmem:[#allocation3 + $0x130] sm:$0xf]
    %v5586 = vld [vmem:[#allocation3 + $0x134] sm:$0xf]
    %v5587 = vld [vmem:[#allocation3 + $0x138] sm:$0xf]
    %v5588 = vld [vmem:[#allocation3 + $0x13c] sm:$0xf]
    %v5589 = vld [vmem:[#allocation3 + $0x140] sm:$0xf]
    %v5590 = vld [vmem:[#allocation3 + $0x144] sm:$0xf]
    %v5591 = vld [vmem:[#allocation3 + $0x148] sm:$0xf]
    %v5592 = vld [vmem:[#allocation3 + $0x14c] sm:$0xf]
    %v5593 = vld [vmem:[#allocation3 + $0x150] sm:$0xf]
    %v5594 = vld [vmem:[#allocation3 + $0x154] sm:$0xf]
    %v5595 = vld [vmem:[#allocation3 + $0x158] sm:$0xf]
    %v5596 = vld [vmem:[#allocation3 + $0x15c] sm:$0xf]
    %v5597 = vld [vmem:[#allocation3 + $0x160] sm:$0xf]
    %v5598 = vld [vmem:[#allocation3 + $0x164] sm:$0xf]
    %v5599 = vld [vmem:[#allocation3 + $0x168] sm:$0xf]
    %v5600 = vld [vmem:[#allocation3 + $0x16c] sm:$0xf]
    %v5601 = vld [vmem:[#allocation3 + $0x170] sm:$0xf]
    %v5602 = vld [vmem:[#allocation3 + $0x174] sm:$0xf]
    %v5603 = vld [vmem:[#allocation3 + $0x178] sm:$0xf]
    %v5604 = vld [vmem:[#allocation3 + $0x17c] sm:$0xf]
    %v5605 = vld [vmem:[#allocation3 + $0x180] sm:$0xf]
    %v5606 = vld [vmem:[#allocation3 + $0x184] sm:$0xf]
    %v5607 = vld [vmem:[#allocation3 + $0x188] sm:$0xf]
    %v5608 = vld [vmem:[#allocation3 + $0x18c] sm:$0xf]
    %v5609 = vld [vmem:[#allocation3 + $0x190] sm:$0xf]
    %v5610 = vld [vmem:[#allocation3 + $0x194] sm:$0xf]
    %v5611 = vld [vmem:[#allocation3 + $0x198] sm:$0xf]
    %v5612 = vld [vmem:[#allocation3 + $0x19c] sm:$0xf]
    %v5613 = vld [vmem:[#allocation3 + $0x1a0] sm:$0xf]
    %v5614 = vld [vmem:[#allocation3 + $0x1a4] sm:$0xf]
    %v5615 = vld [vmem:[#allocation3 + $0x1a8] sm:$0xf]
    %v5616 = vld [vmem:[#allocation3 + $0x1ac] sm:$0xf]
    %v5617 = vld [vmem:[#allocation3 + $0x1b0] sm:$0xf]
    %v5618 = vld [vmem:[#allocation3 + $0x1b4] sm:$0xf]
    %v5619 = vld [vmem:[#allocation3 + $0x1b8] sm:$0xf]
    %v5620 = vld [vmem:[#allocation3 + $0x1bc] sm:$0xf]
    %v5621 = vld [vmem:[#allocation3 + $0x1c0] sm:$0xf]
    %v5622 = vld [vmem:[#allocation3 + $0x1c4] sm:$0xf]
    %v5623 = vld [vmem:[#allocation3 + $0x1c8] sm:$0xf]
    %v5624 = vld [vmem:[#allocation3 + $0x1cc] sm:$0xf]
    %v5625 = vld [vmem:[#allocation3 + $0x1d0] sm:$0xf]
    %v5626 = vld [vmem:[#allocation3 + $0x1d4] sm:$0xf]
    %v5627 = vld [vmem:[#allocation3 + $0x1d8] sm:$0xf]
    %v5628 = vld [vmem:[#allocation3 + $0x1dc] sm:$0xf]
    %v5629 = vld [vmem:[#allocation3 + $0x1e0] sm:$0xf]
    %v5630 = vld [vmem:[#allocation3 + $0x1e4] sm:$0xf]
    %v5631 = vld [vmem:[#allocation3 + $0x1e8] sm:$0xf]
    %v5632 = vld [vmem:[#allocation3 + $0x1ec] sm:$0xf]
    %v5633 = vld [vmem:[#allocation3 + $0x1f0] sm:$0xf]
    %v5634 = vld [vmem:[#allocation3 + $0x1f4] sm:$0xf]
    %v5635 = vld [vmem:[#allocation3 + $0x1f8] sm:$0xf]
    %v5636 = vld [vmem:[#allocation3 + $0x1fc] sm:$0xf]
    %v5637 = vld [vmem:[#allocation3 + $0x200] sm:$0xf]
    %v5638 = vld [vmem:[#allocation3 + $0x204] sm:$0xf]
    %v5639 = vld [vmem:[#allocation3 + $0x208] sm:$0xf]
    %v5640 = vld [vmem:[#allocation3 + $0x20c] sm:$0xf]
    %v5641 = vld [vmem:[#allocation3 + $0x210] sm:$0xf]
    %v5642 = vld [vmem:[#allocation3 + $0x214] sm:$0xf]
    %v5643 = vld [vmem:[#allocation3 + $0x218] sm:$0xf]
    %v5644 = vld [vmem:[#allocation3 + $0x21c] sm:$0xf]
    %v5645 = vld [vmem:[#allocation3 + $0x220] sm:$0xf]
    %v5646 = vld [vmem:[#allocation3 + $0x224] sm:$0xf]
    %v5647 = vld [vmem:[#allocation3 + $0x228] sm:$0xf]
    %v5648 = vld [vmem:[#allocation3 + $0x22c] sm:$0xf]
    %v5649 = vld [vmem:[#allocation3 + $0x230] sm:$0xf]
    %v5650 = vld [vmem:[#allocation3 + $0x234] sm:$0xf]
    %v5651 = vld [vmem:[#allocation3 + $0x238] sm:$0xf]
    %v5652 = vld [vmem:[#allocation3 + $0x23c] sm:$0xf]
    %v5653 = vld [vmem:[#allocation3 + $0x240] sm:$0xf]
    %v5654 = vld [vmem:[#allocation3 + $0x244] sm:$0xf]
    %v5655 = vld [vmem:[#allocation3 + $0x248] sm:$0xf]
    %v5656 = vld [vmem:[#allocation3 + $0x24c] sm:$0xf]
    %v5657 = vld [vmem:[#allocation3 + $0x250] sm:$0xf]
    %v5658 = vld [vmem:[#allocation3 + $0x254] sm:$0xf]
    %v5659 = vld [vmem:[#allocation3 + $0x258] sm:$0xf]
    %v5660 = vld [vmem:[#allocation3 + $0x25c] sm:$0xf]
    %v5661 = vld [vmem:[#allocation3 + $0x260] sm:$0xf]
    %v5662 = vld [vmem:[#allocation3 + $0x264] sm:$0xf]
    %v5663 = vld [vmem:[#allocation3 + $0x268] sm:$0xf]
    %v5664 = vld [vmem:[#allocation3 + $0x26c] sm:$0xf]
    %v5665 = vld [vmem:[#allocation3 + $0x270] sm:$0xf]
    %v5666 = vld [vmem:[#allocation3 + $0x274] sm:$0xf]
    %v5667 = vld [vmem:[#allocation3 + $0x278] sm:$0xf]
    %v5668 = vld [vmem:[#allocation3 + $0x27c] sm:$0xf]
    %v5669 = vld [vmem:[#allocation3 + $0x280] sm:$0xf]
    %v5670 = vld [vmem:[#allocation3 + $0x284] sm:$0xf]
    %v5671 = vld [vmem:[#allocation3 + $0x288] sm:$0xf]
    %v5672 = vld [vmem:[#allocation3 + $0x28c] sm:$0xf]
    %v5673 = vld [vmem:[#allocation3 + $0x290] sm:$0xf]
    %v5674 = vld [vmem:[#allocation3 + $0x294] sm:$0xf]
    %v5675 = vld [vmem:[#allocation3 + $0x298] sm:$0xf]
    %v5676 = vld [vmem:[#allocation3 + $0x29c] sm:$0xf]
    %v5677 = vld [vmem:[#allocation3 + $0x2a0] sm:$0xf]
    %v5678 = vld [vmem:[#allocation3 + $0x2a4] sm:$0xf]
    %v5679 = vld [vmem:[#allocation3 + $0x2a8] sm:$0xf]
    %v5680 = vld [vmem:[#allocation3 + $0x2ac] sm:$0xf]
    %v5681 = vld [vmem:[#allocation3 + $0x2b0] sm:$0xf]
    %v5682 = vld [vmem:[#allocation3 + $0x2b4] sm:$0xf]
    %v5683 = vld [vmem:[#allocation3 + $0x2b8] sm:$0xf]
    %v5684 = vld [vmem:[#allocation3 + $0x2bc] sm:$0xf]
    %v5685 = vld [vmem:[#allocation3 + $0x2c0] sm:$0xf]
    %v5686 = vld [vmem:[#allocation3 + $0x2c4] sm:$0xf]
    %v5687 = vld [vmem:[#allocation3 + $0x2c8] sm:$0xf]
    %v5688 = vld [vmem:[#allocation3 + $0x2cc] sm:$0xf]
    %v5689 = vld [vmem:[#allocation3 + $0x2d0] sm:$0xf]
    %v5690 = vld [vmem:[#allocation3 + $0x2d4] sm:$0xf]
    %v5691 = vld [vmem:[#allocation3 + $0x2d8] sm:$0xf]
    %v5692 = vld [vmem:[#allocation3 + $0x2dc] sm:$0xf]
    %v5693 = vld [vmem:[#allocation3 + $0x2e0] sm:$0xf]
    %v5694 = vld [vmem:[#allocation3 + $0x2e4] sm:$0xf]
    %v5695 = vld [vmem:[#allocation3 + $0x2e8] sm:$0xf]
    %v5696 = vld [vmem:[#allocation3 + $0x2ec] sm:$0xf]
    %v5697 = vld [vmem:[#allocation3 + $0x2f0] sm:$0xf]
    %v5698 = vld [vmem:[#allocation3 + $0x2f4] sm:$0xf]
    %v5699 = vld [vmem:[#allocation3 + $0x2f8] sm:$0xf]
    %v5700 = vld [vmem:[#allocation3 + $0x2fc] sm:$0xf]
    %v5701 = vld [vmem:[#allocation3 + $0x300] sm:$0xf]
    %v5702 = vld [vmem:[#allocation3 + $0x304] sm:$0xf]
    %v5703 = vld [vmem:[#allocation3 + $0x308] sm:$0xf]
    %v5704 = vld [vmem:[#allocation3 + $0x30c] sm:$0xf]
    %v5705 = vld [vmem:[#allocation3 + $0x310] sm:$0xf]
    %v5706 = vld [vmem:[#allocation3 + $0x314] sm:$0xf]
    %v5707 = vld [vmem:[#allocation3 + $0x318] sm:$0xf]
    %v5708 = vld [vmem:[#allocation3 + $0x31c] sm:$0xf]
    %v5709 = vld [vmem:[#allocation3 + $0x320] sm:$0xf]
    %v5710 = vld [vmem:[#allocation3 + $0x324] sm:$0xf]
    %v5711 = vld [vmem:[#allocation3 + $0x328] sm:$0xf]
    %v5712 = vld [vmem:[#allocation3 + $0x32c] sm:$0xf]
    %v5713 = vld [vmem:[#allocation3 + $0x330] sm:$0xf]
    %v5714 = vld [vmem:[#allocation3 + $0x334] sm:$0xf]
    %v5715 = vld [vmem:[#allocation3 + $0x338] sm:$0xf]
    %v5716 = vld [vmem:[#allocation3 + $0x33c] sm:$0xf]
    %v5717 = vld [vmem:[#allocation3 + $0x340] sm:$0xf]
    %v5718 = vld [vmem:[#allocation3 + $0x344] sm:$0xf]
    %v5719 = vld [vmem:[#allocation3 + $0x348] sm:$0xf]
    %v5720 = vld [vmem:[#allocation3 + $0x34c] sm:$0xf]
    %v5721 = vld [vmem:[#allocation3 + $0x350] sm:$0xf]
    %v5722 = vld [vmem:[#allocation3 + $0x354] sm:$0xf]
    %v5723 = vld [vmem:[#allocation3 + $0x358] sm:$0xf]
    %v5724 = vld [vmem:[#allocation3 + $0x35c] sm:$0xf]
    %v5725 = vld [vmem:[#allocation3 + $0x360] sm:$0xf]
    %v5726 = vld [vmem:[#allocation3 + $0x364] sm:$0xf]
    %v5727 = vld [vmem:[#allocation3 + $0x368] sm:$0xf]
    %v5728 = vld [vmem:[#allocation3 + $0x36c] sm:$0xf]
    %v5729 = vld [vmem:[#allocation3 + $0x370] sm:$0xf]
    %v5730 = vld [vmem:[#allocation3 + $0x374] sm:$0xf]
    %v5731 = vld [vmem:[#allocation3 + $0x378] sm:$0xf]
    %v5732 = vld [vmem:[#allocation3 + $0x37c] sm:$0xf]
    %v5733 = vld [vmem:[#allocation3 + $0x380] sm:$0xf]
    %v5734 = vld [vmem:[#allocation3 + $0x384] sm:$0xf]
    %v5735 = vld [vmem:[#allocation3 + $0x388] sm:$0xf]
    %v5736 = vld [vmem:[#allocation3 + $0x38c] sm:$0xf]
    %v5737 = vld [vmem:[#allocation3 + $0x390] sm:$0xf]
    %v5738 = vld [vmem:[#allocation3 + $0x394] sm:$0xf]
    %v5739 = vld [vmem:[#allocation3 + $0x398] sm:$0xf]
    %v5740 = vld [vmem:[#allocation3 + $0x39c] sm:$0xf]
    %v5741 = vld [vmem:[#allocation3 + $0x3a0] sm:$0xf]
    %v5742 = vld [vmem:[#allocation3 + $0x3a4] sm:$0xf]
    %v5743 = vld [vmem:[#allocation3 + $0x3a8] sm:$0xf]
    %v5744 = vld [vmem:[#allocation3 + $0x3ac] sm:$0xf]
    %v5745 = vld [vmem:[#allocation3 + $0x3b0] sm:$0xf]
    %v5746 = vld [vmem:[#allocation3 + $0x3b4] sm:$0xf]
    %v5747 = vld [vmem:[#allocation3 + $0x3b8] sm:$0xf]
    %v5748 = vld [vmem:[#allocation3 + $0x3bc] sm:$0xf]
    %v5749 = vld [vmem:[#allocation3 + $0x3c0] sm:$0xf]
    %v5750 = vld [vmem:[#allocation3 + $0x3c4] sm:$0xf]
    %v5751 = vld [vmem:[#allocation3 + $0x3c8] sm:$0xf]
    %v5752 = vld [vmem:[#allocation3 + $0x3cc] sm:$0xf]
    %v5753 = vld [vmem:[#allocation3 + $0x3d0] sm:$0xf]
    %v5754 = vld [vmem:[#allocation3 + $0x3d4] sm:$0xf]
    %v5755 = vld [vmem:[#allocation3 + $0x3d8] sm:$0xf]
    %v5756 = vld [vmem:[#allocation3 + $0x3dc] sm:$0xf]
    %v5757 = vld [vmem:[#allocation3 + $0x3e0] sm:$0xf]
    %v5758 = vld [vmem:[#allocation3 + $0x3e4] sm:$0xf]
    %v5759 = vld [vmem:[#allocation3 + $0x3e8] sm:$0xf]
    %v5760 = vld [vmem:[#allocation3 + $0x3ec] sm:$0xf]
    %v5761 = vld [vmem:[#allocation3 + $0x3f0] sm:$0xf]
    %v5762 = vld [vmem:[#allocation3 + $0x3f4] sm:$0xf]
    %v5763 = vld [vmem:[#allocation3 + $0x3f8] sm:$0xf]
    %v5764 = vld [vmem:[#allocation3 + $0x3fc] sm:$0xf]
    %v5765 = vld [vmem:[#allocation3 + $0x400] sm:$0xf]
    %v5766 = vld [vmem:[#allocation3 + $0x404] sm:$0xf]
    %v5767 = vld [vmem:[#allocation3 + $0x408] sm:$0xf]
    %v5768 = vld [vmem:[#allocation3 + $0x40c] sm:$0xf]
    %v5769 = vld [vmem:[#allocation3 + $0x410] sm:$0xf]
    %v5770 = vld [vmem:[#allocation3 + $0x414] sm:$0xf]
    %v5771 = vld [vmem:[#allocation3 + $0x418] sm:$0xf]
    %v5772 = vld [vmem:[#allocation3 + $0x41c] sm:$0xf]
    %v5773 = vld [vmem:[#allocation3 + $0x420] sm:$0xf]
    %v5774 = vld [vmem:[#allocation3 + $0x424] sm:$0xf]
    %v5775 = vld [vmem:[#allocation3 + $0x428] sm:$0xf]
    %v5776 = vld [vmem:[#allocation3 + $0x42c] sm:$0xf]
    %v5777 = vld [vmem:[#allocation3 + $0x430] sm:$0xf]
    %v5778 = vld [vmem:[#allocation3 + $0x434] sm:$0xf]
    %v5779 = vld [vmem:[#allocation3 + $0x438] sm:$0xf]
    %v5780 = vld [vmem:[#allocation3 + $0x43c] sm:$0xf]
    %v5781 = vld [vmem:[#allocation3 + $0x440] sm:$0xf]
    %v5782 = vld [vmem:[#allocation3 + $0x444] sm:$0xf]
    %v5783 = vld [vmem:[#allocation3 + $0x448] sm:$0xf]
    %v5784 = vld [vmem:[#allocation3 + $0x44c] sm:$0xf]
    %v5785 = vld [vmem:[#allocation3 + $0x450] sm:$0xf]
    %v5786 = vld [vmem:[#allocation3 + $0x454] sm:$0xf]
    %v5787 = vld [vmem:[#allocation3 + $0x458] sm:$0xf]
    %v5788 = vld [vmem:[#allocation3 + $0x45c] sm:$0xf]
    %v5789 = vld [vmem:[#allocation3 + $0x460] sm:$0xf]
    %v5790 = vld [vmem:[#allocation3 + $0x464] sm:$0xf]
    %v5791 = vld [vmem:[#allocation3 + $0x468] sm:$0xf]
    %v5792 = vld [vmem:[#allocation3 + $0x46c] sm:$0xf]
    %v5793 = vld [vmem:[#allocation3 + $0x470] sm:$0xf]
    %v5794 = vld [vmem:[#allocation3 + $0x474] sm:$0xf]
    %v5795 = vld [vmem:[#allocation3 + $0x478] sm:$0xf]
    %v5796 = vld [vmem:[#allocation3 + $0x47c] sm:$0xf]
    %v5797 = vld [vmem:[#allocation3 + $0x480] sm:$0xf]
    %v5798 = vld [vmem:[#allocation3 + $0x484] sm:$0xf]
    %v5799 = vld [vmem:[#allocation3 + $0x488] sm:$0xf]
    %v5800 = vld [vmem:[#allocation3 + $0x48c] sm:$0xf]
    %v5801 = vld [vmem:[#allocation3 + $0x490] sm:$0xf]
    %v5802 = vld [vmem:[#allocation3 + $0x494] sm:$0xf]
    %v5803 = vld [vmem:[#allocation3 + $0x498] sm:$0xf]
    %v5804 = vld [vmem:[#allocation3 + $0x49c] sm:$0xf]
    %v5805 = vld [vmem:[#allocation3 + $0x4a0] sm:$0xf]
    %v5806 = vld [vmem:[#allocation3 + $0x4a4] sm:$0xf]
    %v5807 = vld [vmem:[#allocation3 + $0x4a8] sm:$0xf]
    %v5808 = vld [vmem:[#allocation3 + $0x4ac] sm:$0xf]
    %v5809 = vld [vmem:[#allocation3 + $0x4b0] sm:$0xf]
    %v5810 = vld [vmem:[#allocation3 + $0x4b4] sm:$0xf]
    %v5811 = vld [vmem:[#allocation3 + $0x4b8] sm:$0xf]
    %v5812 = vld [vmem:[#allocation3 + $0x4bc] sm:$0xf]
    %v5813 = vld [vmem:[#allocation3 + $0x4c0] sm:$0xf]
    %v5814 = vld [vmem:[#allocation3 + $0x4c4] sm:$0xf]
    %v5815 = vld [vmem:[#allocation3 + $0x4c8] sm:$0xf]
    %v5816 = vld [vmem:[#allocation3 + $0x4cc] sm:$0xf]
    %v5817 = vld [vmem:[#allocation3 + $0x4d0] sm:$0xf]
    %v5818 = vld [vmem:[#allocation3 + $0x4d4] sm:$0xf]
    %v5819 = vld [vmem:[#allocation3 + $0x4d8] sm:$0xf]
    %v5820 = vld [vmem:[#allocation3 + $0x4dc] sm:$0xf]
    %v5821 = vld [vmem:[#allocation3 + $0x4e0] sm:$0xf]
    %v5822 = vld [vmem:[#allocation3 + $0x4e4] sm:$0xf]
    %v5823 = vld [vmem:[#allocation3 + $0x4e8] sm:$0xf]
    %v5824 = vld [vmem:[#allocation3 + $0x4ec] sm:$0xf]
    %v5825 = vld [vmem:[#allocation3 + $0x4f0] sm:$0xf]
    %v5826 = vld [vmem:[#allocation3 + $0x4f4] sm:$0xf]
    %v5827 = vld [vmem:[#allocation3 + $0x4f8] sm:$0xf]
    %v5828 = vld [vmem:[#allocation3 + $0x4fc] sm:$0xf]
    %v5829 = vld [vmem:[#allocation3 + $0x500] sm:$0xf]
    %v5830 = vld [vmem:[#allocation3 + $0x504] sm:$0xf]
    %v5831 = vld [vmem:[#allocation3 + $0x508] sm:$0xf]
    %v5832 = vld [vmem:[#allocation3 + $0x50c] sm:$0xf]
    %v5833 = vld [vmem:[#allocation3 + $0x510] sm:$0xf]
    %v5834 = vld [vmem:[#allocation3 + $0x514] sm:$0xf]
    %v5835 = vld [vmem:[#allocation3 + $0x518] sm:$0xf]
    %v5836 = vld [vmem:[#allocation3 + $0x51c] sm:$0xf]
    %v5837 = vld [vmem:[#allocation3 + $0x520] sm:$0xf]
    %v5838 = vld [vmem:[#allocation3 + $0x524] sm:$0xf]
    %v5839 = vld [vmem:[#allocation3 + $0x528] sm:$0xf]
    %v5840 = vld [vmem:[#allocation3 + $0x52c] sm:$0xf]
    %v5841 = vld [vmem:[#allocation3 + $0x530] sm:$0xf]
    %v5842 = vld [vmem:[#allocation3 + $0x534] sm:$0xf]
    %v5843 = vld [vmem:[#allocation3 + $0x538] sm:$0xf]
    %v5844 = vld [vmem:[#allocation3 + $0x53c] sm:$0xf]
    %v5845 = vld [vmem:[#allocation3 + $0x540] sm:$0xf]
    %v5846 = vld [vmem:[#allocation3 + $0x544] sm:$0xf]
    %v5847 = vld [vmem:[#allocation3 + $0x548] sm:$0xf]
    %v5848 = vld [vmem:[#allocation3 + $0x54c] sm:$0xf]
    %v5849 = vld [vmem:[#allocation3 + $0x550] sm:$0xf]
    %v5850 = vld [vmem:[#allocation3 + $0x554] sm:$0xf]
    %v5851 = vld [vmem:[#allocation3 + $0x558] sm:$0xf]
    %v5852 = vld [vmem:[#allocation3 + $0x55c] sm:$0xf]
    %v5853 = vld [vmem:[#allocation3 + $0x560] sm:$0xf]
    %v5854 = vld [vmem:[#allocation3 + $0x564] sm:$0xf]
    %v5855 = vld [vmem:[#allocation3 + $0x568] sm:$0xf]
    %v5856 = vld [vmem:[#allocation3 + $0x56c] sm:$0xf]
    %v5857 = vld [vmem:[#allocation3 + $0x570] sm:$0xf]
    %v5858 = vld [vmem:[#allocation3 + $0x574] sm:$0xf]
    %v5859 = vld [vmem:[#allocation3 + $0x578] sm:$0xf]
    %v5860 = vld [vmem:[#allocation3 + $0x57c] sm:$0xf]
    %v5861 = vld [vmem:[#allocation3 + $0x580] sm:$0xf]
    %v5862 = vld [vmem:[#allocation3 + $0x584] sm:$0xf]
    %v5863 = vld [vmem:[#allocation3 + $0x588] sm:$0xf]
    %v5864 = vld [vmem:[#allocation3 + $0x58c] sm:$0xf]
    %v5865 = vld [vmem:[#allocation3 + $0x590] sm:$0xf]
    %v5866 = vld [vmem:[#allocation3 + $0x594] sm:$0xf]
    %v5867 = vld [vmem:[#allocation3 + $0x598] sm:$0xf]
    %v5868 = vld [vmem:[#allocation3 + $0x59c] sm:$0xf]
    %v5869 = vld [vmem:[#allocation3 + $0x5a0] sm:$0xf]
    %v5870 = vld [vmem:[#allocation3 + $0x5a4] sm:$0xf]
    %v5871 = vld [vmem:[#allocation3 + $0x5a8] sm:$0xf]
    %v5872 = vld [vmem:[#allocation3 + $0x5ac] sm:$0xf]
    %v5873 = vld [vmem:[#allocation3 + $0x5b0] sm:$0xf]
    %v5874 = vld [vmem:[#allocation3 + $0x5b4] sm:$0xf]
    %v5875 = vld [vmem:[#allocation3 + $0x5b8] sm:$0xf]
    %v5876 = vld [vmem:[#allocation3 + $0x5bc] sm:$0xf]
    %v5877 = vld [vmem:[#allocation3 + $0x5c0] sm:$0xf]
    %v5878 = vld [vmem:[#allocation3 + $0x5c4] sm:$0xf]
    %v5879 = vld [vmem:[#allocation3 + $0x5c8] sm:$0xf]
    %v5880 = vld [vmem:[#allocation3 + $0x5cc] sm:$0xf]
    %v5881 = vld [vmem:[#allocation3 + $0x5d0] sm:$0xf]
    %v5882 = vld [vmem:[#allocation3 + $0x5d4] sm:$0xf]
    %v5883 = vld [vmem:[#allocation3 + $0x5d8] sm:$0xf]
    %v5884 = vld [vmem:[#allocation3 + $0x5dc] sm:$0xf]
    %v5885 = vld [vmem:[#allocation3 + $0x5e0] sm:$0xf]
    %v5886 = vld [vmem:[#allocation3 + $0x5e4] sm:$0xf]
    %v5887 = vld [vmem:[#allocation3 + $0x5e8] sm:$0xf]
    %v5888 = vld [vmem:[#allocation3 + $0x5ec] sm:$0xf]
    %v5889 = vld [vmem:[#allocation3 + $0x5f0] sm:$0xf]
    %v5890 = vld [vmem:[#allocation3 + $0x5f4] sm:$0xf]
    %v5891 = vld [vmem:[#allocation3 + $0x5f8] sm:$0xf]
    %v5892 = vld [vmem:[#allocation3 + $0x5fc] sm:$0xf]
    %v5893 = vld [vmem:[#allocation3 + $0x600] sm:$0xf]
    %v5894 = vld [vmem:[#allocation3 + $0x604] sm:$0xf]
    %v5895 = vld [vmem:[#allocation3 + $0x608] sm:$0xf]
    %v5896 = vld [vmem:[#allocation3 + $0x60c] sm:$0xf]
    %v5897 = vld [vmem:[#allocation3 + $0x610] sm:$0xf]
    %v5898 = vld [vmem:[#allocation3 + $0x614] sm:$0xf]
    %v5899 = vld [vmem:[#allocation3 + $0x618] sm:$0xf]
    %v5900 = vld [vmem:[#allocation3 + $0x61c] sm:$0xf]
    %v5901 = vld [vmem:[#allocation3 + $0x620] sm:$0xf]
    %v5902 = vld [vmem:[#allocation3 + $0x624] sm:$0xf]
    %v5903 = vld [vmem:[#allocation3 + $0x628] sm:$0xf]
    %v5904 = vld [vmem:[#allocation3 + $0x62c] sm:$0xf]
    %v5905 = vld [vmem:[#allocation3 + $0x630] sm:$0xf]
    %v5906 = vld [vmem:[#allocation3 + $0x634] sm:$0xf]
    %v5907 = vld [vmem:[#allocation3 + $0x638] sm:$0xf]
    %v5908 = vld [vmem:[#allocation3 + $0x63c] sm:$0xf]
    %v6309 = vunpack.c.l.b16 %v5509
    %v6310 = vunpack.c.l.b16 %v5510
    %v6311 = vunpack.c.l.b16 %v5511
    %v6312 = vunpack.c.l.b16 %v5512
    %v6313 = vunpack.c.l.b16 %v5513
    %v6314 = vunpack.c.l.b16 %v5514
    %v6315 = vunpack.c.l.b16 %v5515
    %v6316 = vunpack.c.l.b16 %v5516
    %v6317 = vunpack.c.l.b16 %v5517
    %v6318 = vunpack.c.l.b16 %v5518
    %v6319 = vunpack.c.l.b16 %v5519
    %v6320 = vunpack.c.l.b16 %v5520
    %v6321 = vunpack.c.l.b16 %v5521
    %v6322 = vunpack.c.l.b16 %v5522
    %v6323 = vunpack.c.l.b16 %v5523
    %v6324 = vunpack.c.l.b16 %v5524
    %v6325 = vunpack.c.l.b16 %v5525
    %v6326 = vunpack.c.l.b16 %v5526
    %v6327 = vunpack.c.l.b16 %v5527
    %v6328 = vunpack.c.l.b16 %v5528
    %v6329 = vunpack.c.l.b16 %v5529
    %v6330 = vunpack.c.l.b16 %v5530
    %v6331 = vunpack.c.l.b16 %v5531
    %v6332 = vunpack.c.l.b16 %v5532
    %v6333 = vunpack.c.l.b16 %v5533
    %v6334 = vunpack.c.l.b16 %v5534
    %v6335 = vunpack.c.l.b16 %v5535
    %v6336 = vunpack.c.l.b16 %v5536
    %v6337 = vunpack.c.l.b16 %v5537
    %v6338 = vunpack.c.l.b16 %v5538
    %v6339 = vunpack.c.l.b16 %v5539
    %v6340 = vunpack.c.l.b16 %v5540
    %v6341 = vunpack.c.l.b16 %v5541
    %v6342 = vunpack.c.l.b16 %v5542
    %v6343 = vunpack.c.l.b16 %v5543
    %v6344 = vunpack.c.l.b16 %v5544
    %v6345 = vunpack.c.l.b16 %v5545
    %v6346 = vunpack.c.l.b16 %v5546
    %v6347 = vunpack.c.l.b16 %v5547
    %v6348 = vunpack.c.l.b16 %v5548
    %v6349 = vunpack.c.l.b16 %v5549
    %v6350 = vunpack.c.l.b16 %v5550
    %v6351 = vunpack.c.l.b16 %v5551
    %v6352 = vunpack.c.l.b16 %v5552
    %v6353 = vunpack.c.l.b16 %v5553
    %v6354 = vunpack.c.l.b16 %v5554
    %v6355 = vunpack.c.l.b16 %v5555
    %v6356 = vunpack.c.l.b16 %v5556
    %v6357 = vunpack.c.l.b16 %v5557
    %v6358 = vunpack.c.l.b16 %v5558
    %v6359 = vunpack.c.l.b16 %v5559
    %v6360 = vunpack.c.l.b16 %v5560
    %v6361 = vunpack.c.l.b16 %v5561
    %v6362 = vunpack.c.l.b16 %v5562
    %v6363 = vunpack.c.l.b16 %v5563
    %v6364 = vunpack.c.l.b16 %v5564
    %v6365 = vunpack.c.l.b16 %v5565
    %v6366 = vunpack.c.l.b16 %v5566
    %v6367 = vunpack.c.l.b16 %v5567
    %v6368 = vunpack.c.l.b16 %v5568
    %v6369 = vunpack.c.l.b16 %v5569
    %v6370 = vunpack.c.l.b16 %v5570
    %v6371 = vunpack.c.l.b16 %v5571
    %v6372 = vunpack.c.l.b16 %v5572
    %v6373 = vunpack.c.l.b16 %v5573
    %v6374 = vunpack.c.l.b16 %v5574
    %v6375 = vunpack.c.l.b16 %v5575
    %v6376 = vunpack.c.l.b16 %v5576
    %v6377 = vunpack.c.l.b16 %v5577
    %v6378 = vunpack.c.l.b16 %v5578
    %v6379 = vunpack.c.l.b16 %v5579
    %v6380 = vunpack.c.l.b16 %v5580
    %v6381 = vunpack.c.l.b16 %v5581
    %v6382 = vunpack.c.l.b16 %v5582
    %v6383 = vunpack.c.l.b16 %v5583
    %v6384 = vunpack.c.l.b16 %v5584
    %v6385 = vunpack.c.l.b16 %v5585
    %v6386 = vunpack.c.l.b16 %v5586
    %v6387 = vunpack.c.l.b16 %v5587
    %v6388 = vunpack.c.l.b16 %v5588
    %v6389 = vunpack.c.l.b16 %v5589
    %v6390 = vunpack.c.l.b16 %v5590
    %v6391 = vunpack.c.l.b16 %v5591
    %v6392 = vunpack.c.l.b16 %v5592
    %v6393 = vunpack.c.l.b16 %v5593
    %v6394 = vunpack.c.l.b16 %v5594
    %v6395 = vunpack.c.l.b16 %v5595
    %v6396 = vunpack.c.l.b16 %v5596
    %v6397 = vunpack.c.l.b16 %v5597
    %v6398 = vunpack.c.l.b16 %v5598
    %v6399 = vunpack.c.l.b16 %v5599
    %v6400 = vunpack.c.l.b16 %v5600
    %v6401 = vunpack.c.l.b16 %v5601
    %v6402 = vunpack.c.l.b16 %v5602
    %v6403 = vunpack.c.l.b16 %v5603
    %v6404 = vunpack.c.l.b16 %v5604
    %v6405 = vunpack.c.l.b16 %v5605
    %v6406 = vunpack.c.l.b16 %v5606
    %v6407 = vunpack.c.l.b16 %v5607
    %v6408 = vunpack.c.l.b16 %v5608
    %v6409 = vunpack.c.l.b16 %v5609
    %v6410 = vunpack.c.l.b16 %v5610
    %v6411 = vunpack.c.l.b16 %v5611
    %v6412 = vunpack.c.l.b16 %v5612
    %v6413 = vunpack.c.l.b16 %v5613
    %v6414 = vunpack.c.l.b16 %v5614
    %v6415 = vunpack.c.l.b16 %v5615
    %v6416 = vunpack.c.l.b16 %v5616
    %v6417 = vunpack.c.l.b16 %v5617
    %v6418 = vunpack.c.l.b16 %v5618
    %v6419 = vunpack.c.l.b16 %v5619
    %v6420 = vunpack.c.l.b16 %v5620
    %v6421 = vunpack.c.l.b16 %v5621
    %v6422 = vunpack.c.l.b16 %v5622
    %v6423 = vunpack.c.l.b16 %v5623
    %v6424 = vunpack.c.l.b16 %v5624
    %v6425 = vunpack.c.l.b16 %v5625
    %v6426 = vunpack.c.l.b16 %v5626
    %v6427 = vunpack.c.l.b16 %v5627
    %v6428 = vunpack.c.l.b16 %v5628
    %v6429 = vunpack.c.l.b16 %v5629
    %v6430 = vunpack.c.l.b16 %v5630
    %v6431 = vunpack.c.l.b16 %v5631
    %v6432 = vunpack.c.l.b16 %v5632
    %v6433 = vunpack.c.l.b16 %v5633
    %v6434 = vunpack.c.l.b16 %v5634
    %v6435 = vunpack.c.l.b16 %v5635
    %v6436 = vunpack.c.l.b16 %v5636
    %v6437 = vunpack.c.l.b16 %v5637
    %v6438 = vunpack.c.l.b16 %v5638
    %v6439 = vunpack.c.l.b16 %v5639
    %v6440 = vunpack.c.l.b16 %v5640
    %v6441 = vunpack.c.l.b16 %v5641
    %v6442 = vunpack.c.l.b16 %v5642
    %v6443 = vunpack.c.l.b16 %v5643
    %v6444 = vunpack.c.l.b16 %v5644
    %v6445 = vunpack.c.l.b16 %v5645
    %v6446 = vunpack.c.l.b16 %v5646
    %v6447 = vunpack.c.l.b16 %v5647
    %v6448 = vunpack.c.l.b16 %v5648
    %v6449 = vunpack.c.l.b16 %v5649
    %v6450 = vunpack.c.l.b16 %v5650
    %v6451 = vunpack.c.l.b16 %v5651
    %v6452 = vunpack.c.l.b16 %v5652
    %v6453 = vunpack.c.l.b16 %v5653
    %v6454 = vunpack.c.l.b16 %v5654
    %v6455 = vunpack.c.l.b16 %v5655
    %v6456 = vunpack.c.l.b16 %v5656
    %v6457 = vunpack.c.l.b16 %v5657
    %v6458 = vunpack.c.l.b16 %v5658
    %v6459 = vunpack.c.l.b16 %v5659
    %v6460 = vunpack.c.l.b16 %v5660
    %v6461 = vunpack.c.l.b16 %v5661
    %v6462 = vunpack.c.l.b16 %v5662
    %v6463 = vunpack.c.l.b16 %v5663
    %v6464 = vunpack.c.l.b16 %v5664
    %v6465 = vunpack.c.l.b16 %v5665
    %v6466 = vunpack.c.l.b16 %v5666
    %v6467 = vunpack.c.l.b16 %v5667
    %v6468 = vunpack.c.l.b16 %v5668
    %v6469 = vunpack.c.l.b16 %v5669
    %v6470 = vunpack.c.l.b16 %v5670
    %v6471 = vunpack.c.l.b16 %v5671
    %v6472 = vunpack.c.l.b16 %v5672
    %v6473 = vunpack.c.l.b16 %v5673
    %v6474 = vunpack.c.l.b16 %v5674
    %v6475 = vunpack.c.l.b16 %v5675
    %v6476 = vunpack.c.l.b16 %v5676
    %v6477 = vunpack.c.l.b16 %v5677
    %v6478 = vunpack.c.l.b16 %v5678
    %v6479 = vunpack.c.l.b16 %v5679
    %v6480 = vunpack.c.l.b16 %v5680
    %v6481 = vunpack.c.l.b16 %v5681
    %v6482 = vunpack.c.l.b16 %v5682
    %v6483 = vunpack.c.l.b16 %v5683
    %v6484 = vunpack.c.l.b16 %v5684
    %v6485 = vunpack.c.l.b16 %v5685
    %v6486 = vunpack.c.l.b16 %v5686
    %v6487 = vunpack.c.l.b16 %v5687
    %v6488 = vunpack.c.l.b16 %v5688
    %v6489 = vunpack.c.l.b16 %v5689
    %v6490 = vunpack.c.l.b16 %v5690
    %v6491 = vunpack.c.l.b16 %v5691
    %v6492 = vunpack.c.l.b16 %v5692
    %v6493 = vunpack.c.l.b16 %v5693
    %v6494 = vunpack.c.l.b16 %v5694
    %v6495 = vunpack.c.l.b16 %v5695
    %v6496 = vunpack.c.l.b16 %v5696
    %v6497 = vunpack.c.l.b16 %v5697
    %v6498 = vunpack.c.l.b16 %v5698
    %v6499 = vunpack.c.l.b16 %v5699
    %v6500 = vunpack.c.l.b16 %v5700
    %v6501 = vunpack.c.l.b16 %v5701
    %v6502 = vunpack.c.l.b16 %v5702
    %v6503 = vunpack.c.l.b16 %v5703
    %v6504 = vunpack.c.l.b16 %v5704
    %v6505 = vunpack.c.l.b16 %v5705
    %v6506 = vunpack.c.l.b16 %v5706
    %v6507 = vunpack.c.l.b16 %v5707
    %v6508 = vunpack.c.l.b16 %v5708
    %v6509 = vunpack.c.l.b16 %v5709
    %v6510 = vunpack.c.l.b16 %v5710
    %v6511 = vunpack.c.l.b16 %v5711
    %v6512 = vunpack.c.l.b16 %v5712
    %v6513 = vunpack.c.l.b16 %v5713
    %v6514 = vunpack.c.l.b16 %v5714
    %v6515 = vunpack.c.l.b16 %v5715
    %v6516 = vunpack.c.l.b16 %v5716
    %v6517 = vunpack.c.l.b16 %v5717
    %v6518 = vunpack.c.l.b16 %v5718
    %v6519 = vunpack.c.l.b16 %v5719
    %v6520 = vunpack.c.l.b16 %v5720
    %v6521 = vunpack.c.l.b16 %v5721
    %v6522 = vunpack.c.l.b16 %v5722
    %v6523 = vunpack.c.l.b16 %v5723
    %v6524 = vunpack.c.l.b16 %v5724
    %v6525 = vunpack.c.l.b16 %v5725
    %v6526 = vunpack.c.l.b16 %v5726
    %v6527 = vunpack.c.l.b16 %v5727
    %v6528 = vunpack.c.l.b16 %v5728
    %v6529 = vunpack.c.l.b16 %v5729
    %v6530 = vunpack.c.l.b16 %v5730
    %v6531 = vunpack.c.l.b16 %v5731
    %v6532 = vunpack.c.l.b16 %v5732
    %v6533 = vunpack.c.l.b16 %v5733
    %v6534 = vunpack.c.l.b16 %v5734
    %v6535 = vunpack.c.l.b16 %v5735
    %v6536 = vunpack.c.l.b16 %v5736
    %v6537 = vunpack.c.l.b16 %v5737
    %v6538 = vunpack.c.l.b16 %v5738
    %v6539 = vunpack.c.l.b16 %v5739
    %v6540 = vunpack.c.l.b16 %v5740
    %v6541 = vunpack.c.l.b16 %v5741
    %v6542 = vunpack.c.l.b16 %v5742
    %v6543 = vunpack.c.l.b16 %v5743
    %v6544 = vunpack.c.l.b16 %v5744
    %v6545 = vunpack.c.l.b16 %v5745
    %v6546 = vunpack.c.l.b16 %v5746
    %v6547 = vunpack.c.l.b16 %v5747
    %v6548 = vunpack.c.l.b16 %v5748
    %v6549 = vunpack.c.l.b16 %v5749
    %v6550 = vunpack.c.l.b16 %v5750
    %v6551 = vunpack.c.l.b16 %v5751
    %v6552 = vunpack.c.l.b16 %v5752
    %v6553 = vunpack.c.l.b16 %v5753
    %v6554 = vunpack.c.l.b16 %v5754
    %v6555 = vunpack.c.l.b16 %v5755
    %v6556 = vunpack.c.l.b16 %v5756
    %v6557 = vunpack.c.l.b16 %v5757
    %v6558 = vunpack.c.l.b16 %v5758
    %v6559 = vunpack.c.l.b16 %v5759
    %v6560 = vunpack.c.l.b16 %v5760
    %v6561 = vunpack.c.l.b16 %v5761
    %v6562 = vunpack.c.l.b16 %v5762
    %v6563 = vunpack.c.l.b16 %v5763
    %v6564 = vunpack.c.l.b16 %v5764
    %v6565 = vunpack.c.l.b16 %v5765
    %v6566 = vunpack.c.l.b16 %v5766
    %v6567 = vunpack.c.l.b16 %v5767
    %v6568 = vunpack.c.l.b16 %v5768
    %v6569 = vunpack.c.l.b16 %v5769
    %v6570 = vunpack.c.l.b16 %v5770
    %v6571 = vunpack.c.l.b16 %v5771
    %v6572 = vunpack.c.l.b16 %v5772
    %v6573 = vunpack.c.l.b16 %v5773
    %v6574 = vunpack.c.l.b16 %v5774
    %v6575 = vunpack.c.l.b16 %v5775
    %v6576 = vunpack.c.l.b16 %v5776
    %v6577 = vunpack.c.l.b16 %v5777
    %v6578 = vunpack.c.l.b16 %v5778
    %v6579 = vunpack.c.l.b16 %v5779
    %v6580 = vunpack.c.l.b16 %v5780
    %v6581 = vunpack.c.l.b16 %v5781
    %v6582 = vunpack.c.l.b16 %v5782
    %v6583 = vunpack.c.l.b16 %v5783
    %v6584 = vunpack.c.l.b16 %v5784
    %v6585 = vunpack.c.l.b16 %v5785
    %v6586 = vunpack.c.l.b16 %v5786
    %v6587 = vunpack.c.l.b16 %v5787
    %v6588 = vunpack.c.l.b16 %v5788
    %v6589 = vunpack.c.l.b16 %v5789
    %v6590 = vunpack.c.l.b16 %v5790
    %v6591 = vunpack.c.l.b16 %v5791
    %v6592 = vunpack.c.l.b16 %v5792
    %v6593 = vunpack.c.l.b16 %v5793
    %v6594 = vunpack.c.l.b16 %v5794
    %v6595 = vunpack.c.l.b16 %v5795
    %v6596 = vunpack.c.l.b16 %v5796
    %v6597 = vunpack.c.l.b16 %v5797
    %v6598 = vunpack.c.l.b16 %v5798
    %v6599 = vunpack.c.l.b16 %v5799
    %v6600 = vunpack.c.l.b16 %v5800
    %v6601 = vunpack.c.l.b16 %v5801
    %v6602 = vunpack.c.l.b16 %v5802
    %v6603 = vunpack.c.l.b16 %v5803
    %v6604 = vunpack.c.l.b16 %v5804
    %v6605 = vunpack.c.l.b16 %v5805
    %v6606 = vunpack.c.l.b16 %v5806
    %v6607 = vunpack.c.l.b16 %v5807
    %v6608 = vunpack.c.l.b16 %v5808
    %v6609 = vunpack.c.l.b16 %v5809
    %v6610 = vunpack.c.l.b16 %v5810
    %v6611 = vunpack.c.l.b16 %v5811
    %v6612 = vunpack.c.l.b16 %v5812
    %v6613 = vunpack.c.l.b16 %v5813
    %v6614 = vunpack.c.l.b16 %v5814
    %v6615 = vunpack.c.l.b16 %v5815
    %v6616 = vunpack.c.l.b16 %v5816
    %v6617 = vunpack.c.l.b16 %v5817
    %v6618 = vunpack.c.l.b16 %v5818
    %v6619 = vunpack.c.l.b16 %v5819
    %v6620 = vunpack.c.l.b16 %v5820
    %v6621 = vunpack.c.l.b16 %v5821
    %v6622 = vunpack.c.l.b16 %v5822
    %v6623 = vunpack.c.l.b16 %v5823
    %v6624 = vunpack.c.l.b16 %v5824
    %v6625 = vunpack.c.l.b16 %v5825
    %v6626 = vunpack.c.l.b16 %v5826
    %v6627 = vunpack.c.l.b16 %v5827
    %v6628 = vunpack.c.l.b16 %v5828
    %v6629 = vunpack.c.l.b16 %v5829
    %v6630 = vunpack.c.l.b16 %v5830
    %v6631 = vunpack.c.l.b16 %v5831
    %v6632 = vunpack.c.l.b16 %v5832
    %v6633 = vunpack.c.l.b16 %v5833
    %v6634 = vunpack.c.l.b16 %v5834
    %v6635 = vunpack.c.l.b16 %v5835
    %v6636 = vunpack.c.l.b16 %v5836
    %v6637 = vunpack.c.l.b16 %v5837
    %v6638 = vunpack.c.l.b16 %v5838
    %v6639 = vunpack.c.l.b16 %v5839
    %v6640 = vunpack.c.l.b16 %v5840
    %v6641 = vunpack.c.l.b16 %v5841
    %v6642 = vunpack.c.l.b16 %v5842
    %v6643 = vunpack.c.l.b16 %v5843
    %v6644 = vunpack.c.l.b16 %v5844
    %v6645 = vunpack.c.l.b16 %v5845
    %v6646 = vunpack.c.l.b16 %v5846
    %v6647 = vunpack.c.l.b16 %v5847
    %v6648 = vunpack.c.l.b16 %v5848
    %v6649 = vunpack.c.l.b16 %v5849
    %v6650 = vunpack.c.l.b16 %v5850
    %v6651 = vunpack.c.l.b16 %v5851
    %v6652 = vunpack.c.l.b16 %v5852
    %v6653 = vunpack.c.l.b16 %v5853
    %v6654 = vunpack.c.l.b16 %v5854
    %v6655 = vunpack.c.l.b16 %v5855
    %v6656 = vunpack.c.l.b16 %v5856
    %v6657 = vunpack.c.l.b16 %v5857
    %v6658 = vunpack.c.l.b16 %v5858
    %v6659 = vunpack.c.l.b16 %v5859
    %v6660 = vunpack.c.l.b16 %v5860
    %v6661 = vunpack.c.l.b16 %v5861
    %v6662 = vunpack.c.l.b16 %v5862
    %v6663 = vunpack.c.l.b16 %v5863
    %v6664 = vunpack.c.l.b16 %v5864
    %v6665 = vunpack.c.l.b16 %v5865
    %v6666 = vunpack.c.l.b16 %v5866
    %v6667 = vunpack.c.l.b16 %v5867
    %v6668 = vunpack.c.l.b16 %v5868
    %v6669 = vunpack.c.l.b16 %v5869
    %v6670 = vunpack.c.l.b16 %v5870
    %v6671 = vunpack.c.l.b16 %v5871
    %v6672 = vunpack.c.l.b16 %v5872
    %v6673 = vunpack.c.l.b16 %v5873
    %v6674 = vunpack.c.l.b16 %v5874
    %v6675 = vunpack.c.l.b16 %v5875
    %v6676 = vunpack.c.l.b16 %v5876
    %v6677 = vunpack.c.l.b16 %v5877
    %v6678 = vunpack.c.l.b16 %v5878
    %v6679 = vunpack.c.l.b16 %v5879
    %v6680 = vunpack.c.l.b16 %v5880
    %v6681 = vunpack.c.l.b16 %v5881
    %v6682 = vunpack.c.l.b16 %v5882
    %v6683 = vunpack.c.l.b16 %v5883
    %v6684 = vunpack.c.l.b16 %v5884
    %v6685 = vunpack.c.l.b16 %v5885
    %v6686 = vunpack.c.l.b16 %v5886
    %v6687 = vunpack.c.l.b16 %v5887
    %v6688 = vunpack.c.l.b16 %v5888
    %v6689 = vunpack.c.l.b16 %v5889
    %v6690 = vunpack.c.l.b16 %v5890
    %v6691 = vunpack.c.l.b16 %v5891
    %v6692 = vunpack.c.l.b16 %v5892
    %v6693 = vunpack.c.l.b16 %v5893
    %v6694 = vunpack.c.l.b16 %v5894
    %v6695 = vunpack.c.l.b16 %v5895
    %v6696 = vunpack.c.l.b16 %v5896
    %v6697 = vunpack.c.l.b16 %v5897
    %v6698 = vunpack.c.l.b16 %v5898
    %v6699 = vunpack.c.l.b16 %v5899
    %v6700 = vunpack.c.l.b16 %v5900
    %v6701 = vunpack.c.l.b16 %v5901
    %v6702 = vunpack.c.l.b16 %v5902
    %v6703 = vunpack.c.l.b16 %v5903
    %v6704 = vunpack.c.l.b16 %v5904
    %v6705 = vunpack.c.l.b16 %v5905
    %v6706 = vunpack.c.l.b16 %v5906
    %v6707 = vunpack.c.l.b16 %v5907
    %v6708 = vunpack.c.l.b16 %v5908
    %v6709 = vpack.c.b16 %v6310, %v6309
    %v6710 = vpack.c.b16 %v6312, %v6311
    %v6711 = vpack.c.b16 %v6314, %v6313
    %v6712 = vpack.c.b16 %v6316, %v6315
    %v6713 = vpack.c.b16 %v6318, %v6317
    %v6714 = vpack.c.b16 %v6320, %v6319
    %v6715 = vpack.c.b16 %v6322, %v6321
    %v6716 = vpack.c.b16 %v6324, %v6323
    %v6717 = vpack.c.b16 %v6326, %v6325
    %v6718 = vpack.c.b16 %v6328, %v6327
    %v6719 = vpack.c.b16 %v6330, %v6329
    %v6720 = vpack.c.b16 %v6332, %v6331
    %v6721 = vpack.c.b16 %v6334, %v6333
    %v6722 = vpack.c.b16 %v6336, %v6335
    %v6723 = vpack.c.b16 %v6338, %v6337
    %v6724 = vpack.c.b16 %v6340, %v6339
    %v6725 = vpack.c.b16 %v6342, %v6341
    %v6726 = vpack.c.b16 %v6344, %v6343
    %v6727 = vpack.c.b16 %v6346, %v6345
    %v6728 = vpack.c.b16 %v6348, %v6347
    %v6729 = vpack.c.b16 %v6350, %v6349
    %v6730 = vpack.c.b16 %v6352, %v6351
    %v6731 = vpack.c.b16 %v6354, %v6353
    %v6732 = vpack.c.b16 %v6356, %v6355
    %v6733 = vpack.c.b16 %v6358, %v6357
    %v6734 = vpack.c.b16 %v6360, %v6359
    %v6735 = vpack.c.b16 %v6362, %v6361
    %v6736 = vpack.c.b16 %v6364, %v6363
    %v6737 = vpack.c.b16 %v6366, %v6365
    %v6738 = vpack.c.b16 %v6368, %v6367
    %v6739 = vpack.c.b16 %v6370, %v6369
    %v6740 = vpack.c.b16 %v6372, %v6371
    %v6741 = vpack.c.b16 %v6374, %v6373
    %v6742 = vpack.c.b16 %v6376, %v6375
    %v6743 = vpack.c.b16 %v6378, %v6377
    %v6744 = vpack.c.b16 %v6380, %v6379
    %v6745 = vpack.c.b16 %v6382, %v6381
    %v6746 = vpack.c.b16 %v6384, %v6383
    %v6747 = vpack.c.b16 %v6386, %v6385
    %v6748 = vpack.c.b16 %v6388, %v6387
    %v6749 = vpack.c.b16 %v6390, %v6389
    %v6750 = vpack.c.b16 %v6392, %v6391
    %v6751 = vpack.c.b16 %v6394, %v6393
    %v6752 = vpack.c.b16 %v6396, %v6395
    %v6753 = vpack.c.b16 %v6398, %v6397
    %v6754 = vpack.c.b16 %v6400, %v6399
    %v6755 = vpack.c.b16 %v6402, %v6401
    %v6756 = vpack.c.b16 %v6404, %v6403
    %v6757 = vpack.c.b16 %v6406, %v6405
    %v6758 = vpack.c.b16 %v6408, %v6407
    %v6759 = vpack.c.b16 %v6410, %v6409
    %v6760 = vpack.c.b16 %v6412, %v6411
    %v6761 = vpack.c.b16 %v6414, %v6413
    %v6762 = vpack.c.b16 %v6416, %v6415
    %v6763 = vpack.c.b16 %v6418, %v6417
    %v6764 = vpack.c.b16 %v6420, %v6419
    %v6765 = vpack.c.b16 %v6422, %v6421
    %v6766 = vpack.c.b16 %v6424, %v6423
    %v6767 = vpack.c.b16 %v6426, %v6425
    %v6768 = vpack.c.b16 %v6428, %v6427
    %v6769 = vpack.c.b16 %v6430, %v6429
    %v6770 = vpack.c.b16 %v6432, %v6431
    %v6771 = vpack.c.b16 %v6434, %v6433
    %v6772 = vpack.c.b16 %v6436, %v6435
    %v6773 = vpack.c.b16 %v6438, %v6437
    %v6774 = vpack.c.b16 %v6440, %v6439
    %v6775 = vpack.c.b16 %v6442, %v6441
    %v6776 = vpack.c.b16 %v6444, %v6443
    %v6777 = vpack.c.b16 %v6446, %v6445
    %v6778 = vpack.c.b16 %v6448, %v6447
    %v6779 = vpack.c.b16 %v6450, %v6449
    %v6780 = vpack.c.b16 %v6452, %v6451
    %v6781 = vpack.c.b16 %v6454, %v6453
    %v6782 = vpack.c.b16 %v6456, %v6455
    %v6783 = vpack.c.b16 %v6458, %v6457
    %v6784 = vpack.c.b16 %v6460, %v6459
    %v6785 = vpack.c.b16 %v6462, %v6461
    %v6786 = vpack.c.b16 %v6464, %v6463
    %v6787 = vpack.c.b16 %v6466, %v6465
    %v6788 = vpack.c.b16 %v6468, %v6467
    %v6789 = vpack.c.b16 %v6470, %v6469
    %v6790 = vpack.c.b16 %v6472, %v6471
    %v6791 = vpack.c.b16 %v6474, %v6473
    %v6792 = vpack.c.b16 %v6476, %v6475
    %v6793 = vpack.c.b16 %v6478, %v6477
    %v6794 = vpack.c.b16 %v6480, %v6479
    %v6795 = vpack.c.b16 %v6482, %v6481
    %v6796 = vpack.c.b16 %v6484, %v6483
    %v6797 = vpack.c.b16 %v6486, %v6485
    %v6798 = vpack.c.b16 %v6488, %v6487
    %v6799 = vpack.c.b16 %v6490, %v6489
    %v6800 = vpack.c.b16 %v6492, %v6491
    %v6801 = vpack.c.b16 %v6494, %v6493
    %v6802 = vpack.c.b16 %v6496, %v6495
    %v6803 = vpack.c.b16 %v6498, %v6497
    %v6804 = vpack.c.b16 %v6500, %v6499
    %v6805 = vpack.c.b16 %v6502, %v6501
    %v6806 = vpack.c.b16 %v6504, %v6503
    %v6807 = vpack.c.b16 %v6506, %v6505
    %v6808 = vpack.c.b16 %v6508, %v6507
    %v6809 = vpack.c.b16 %v6510, %v6509
    %v6810 = vpack.c.b16 %v6512, %v6511
    %v6811 = vpack.c.b16 %v6514, %v6513
    %v6812 = vpack.c.b16 %v6516, %v6515
    %v6813 = vpack.c.b16 %v6518, %v6517
    %v6814 = vpack.c.b16 %v6520, %v6519
    %v6815 = vpack.c.b16 %v6522, %v6521
    %v6816 = vpack.c.b16 %v6524, %v6523
    %v6817 = vpack.c.b16 %v6526, %v6525
    %v6818 = vpack.c.b16 %v6528, %v6527
    %v6819 = vpack.c.b16 %v6530, %v6529
    %v6820 = vpack.c.b16 %v6532, %v6531
    %v6821 = vpack.c.b16 %v6534, %v6533
    %v6822 = vpack.c.b16 %v6536, %v6535
    %v6823 = vpack.c.b16 %v6538, %v6537
    %v6824 = vpack.c.b16 %v6540, %v6539
    %v6825 = vpack.c.b16 %v6542, %v6541
    %v6826 = vpack.c.b16 %v6544, %v6543
    %v6827 = vpack.c.b16 %v6546, %v6545
    %v6828 = vpack.c.b16 %v6548, %v6547
    %v6829 = vpack.c.b16 %v6550, %v6549
    %v6830 = vpack.c.b16 %v6552, %v6551
    %v6831 = vpack.c.b16 %v6554, %v6553
    %v6832 = vpack.c.b16 %v6556, %v6555
    %v6833 = vpack.c.b16 %v6558, %v6557
    %v6834 = vpack.c.b16 %v6560, %v6559
    %v6835 = vpack.c.b16 %v6562, %v6561
    %v6836 = vpack.c.b16 %v6564, %v6563
    %v6837 = vpack.c.b16 %v6566, %v6565
    %v6838 = vpack.c.b16 %v6568, %v6567
    %v6839 = vpack.c.b16 %v6570, %v6569
    %v6840 = vpack.c.b16 %v6572, %v6571
    %v6841 = vpack.c.b16 %v6574, %v6573
    %v6842 = vpack.c.b16 %v6576, %v6575
    %v6843 = vpack.c.b16 %v6578, %v6577
    %v6844 = vpack.c.b16 %v6580, %v6579
    %v6845 = vpack.c.b16 %v6582, %v6581
    %v6846 = vpack.c.b16 %v6584, %v6583
    %v6847 = vpack.c.b16 %v6586, %v6585
    %v6848 = vpack.c.b16 %v6588, %v6587
    %v6849 = vpack.c.b16 %v6590, %v6589
    %v6850 = vpack.c.b16 %v6592, %v6591
    %v6851 = vpack.c.b16 %v6594, %v6593
    %v6852 = vpack.c.b16 %v6596, %v6595
    %v6853 = vpack.c.b16 %v6598, %v6597
    %v6854 = vpack.c.b16 %v6600, %v6599
    %v6855 = vpack.c.b16 %v6602, %v6601
    %v6856 = vpack.c.b16 %v6604, %v6603
    %v6857 = vpack.c.b16 %v6606, %v6605
    %v6858 = vpack.c.b16 %v6608, %v6607
    %v6859 = vpack.c.b16 %v6610, %v6609
    %v6860 = vpack.c.b16 %v6612, %v6611
    %v6861 = vpack.c.b16 %v6614, %v6613
    %v6862 = vpack.c.b16 %v6616, %v6615
    %v6863 = vpack.c.b16 %v6618, %v6617
    %v6864 = vpack.c.b16 %v6620, %v6619
    %v6865 = vpack.c.b16 %v6622, %v6621
    %v6866 = vpack.c.b16 %v6624, %v6623
    %v6867 = vpack.c.b16 %v6626, %v6625
    %v6868 = vpack.c.b16 %v6628, %v6627
    %v6869 = vpack.c.b16 %v6630, %v6629
    %v6870 = vpack.c.b16 %v6632, %v6631
    %v6871 = vpack.c.b16 %v6634, %v6633
    %v6872 = vpack.c.b16 %v6636, %v6635
    %v6873 = vpack.c.b16 %v6638, %v6637
    %v6874 = vpack.c.b16 %v6640, %v6639
    %v6875 = vpack.c.b16 %v6642, %v6641
    %v6876 = vpack.c.b16 %v6644, %v6643
    %v6877 = vpack.c.b16 %v6646, %v6645
    %v6878 = vpack.c.b16 %v6648, %v6647
    %v6879 = vpack.c.b16 %v6650, %v6649
    %v6880 = vpack.c.b16 %v6652, %v6651
    %v6881 = vpack.c.b16 %v6654, %v6653
    %v6882 = vpack.c.b16 %v6656, %v6655
    %v6883 = vpack.c.b16 %v6658, %v6657
    %v6884 = vpack.c.b16 %v6660, %v6659
    %v6885 = vpack.c.b16 %v6662, %v6661
    %v6886 = vpack.c.b16 %v6664, %v6663
    %v6887 = vpack.c.b16 %v6666, %v6665
    %v6888 = vpack.c.b16 %v6668, %v6667
    %v6889 = vpack.c.b16 %v6670, %v6669
    %v6890 = vpack.c.b16 %v6672, %v6671
    %v6891 = vpack.c.b16 %v6674, %v6673
    %v6892 = vpack.c.b16 %v6676, %v6675
    %v6893 = vpack.c.b16 %v6678, %v6677
    %v6894 = vpack.c.b16 %v6680, %v6679
    %v6895 = vpack.c.b16 %v6682, %v6681
    %v6896 = vpack.c.b16 %v6684, %v6683
    %v6897 = vpack.c.b16 %v6686, %v6685
    %v6898 = vpack.c.b16 %v6688, %v6687
    %v6899 = vpack.c.b16 %v6690, %v6689
    %v6900 = vpack.c.b16 %v6692, %v6691
    %v6901 = vpack.c.b16 %v6694, %v6693
    %v6902 = vpack.c.b16 %v6696, %v6695
    %v6903 = vpack.c.b16 %v6698, %v6697
    %v6904 = vpack.c.b16 %v6700, %v6699
    %v6905 = vpack.c.b16 %v6702, %v6701
    %v6906 = vpack.c.b16 %v6704, %v6703
    %v6907 = vpack.c.b16 %v6706, %v6705
    %v6908 = vpack.c.b16 %v6708, %v6707
    %7109 = vmatprep.subr.bf16.mxu0 0
    %7110 = vmatpush1.bf16.msra.mxu0 %v6716
    %7111 = vmatprep.subr.bf16.mxu0 0
    %7112 = vmatpush1.bf16.msra.mxu0 %v6715
    %7113 = vmatprep.subr.bf16.mxu0 0
    %7114 = vmatpush1.bf16.msra.mxu0 %v6714
    %7115 = vmatprep.subr.bf16.mxu0 0
    %7116 = vmatpush1.bf16.msra.mxu0 %v6713
    %7117 = vmatprep.subr.bf16.mxu0 0
    %7118 = vmatpush1.bf16.msra.mxu0 %v6712
    %7119 = vmatprep.subr.bf16.mxu0 0
    %7120 = vmatpush1.bf16.msra.mxu0 %v6711
    %7121 = vmatprep.subr.bf16.mxu0 0
    %7122 = vmatpush1.bf16.msra.mxu0 %v6710
    %7123 = vmatprep.subr.bf16.mxu0 0
    %7124 = vmatpush1.bf16.msra.mxu0 %v6709
    %7125 = vmatprep.subr.bf16.mxu0 0
    %7126 = vmatpush2.bf16.msra.mxu0 %v6724
    %7127 = vmatprep.subr.bf16.mxu0 0
    %7128 = vmatpush2.bf16.msra.mxu0 %v6723
    %7129 = vmatprep.subr.bf16.mxu0 0
    %7130 = vmatpush2.bf16.msra.mxu0 %v6722
    %7131 = vmatprep.subr.bf16.mxu0 0
    %7132 = vmatpush2.bf16.msra.mxu0 %v6721
    %7133 = vmatprep.subr.bf16.mxu0 0
    %7134 = vmatpush2.bf16.msra.mxu0 %v6720
    %7135 = vmatprep.subr.bf16.mxu0 0
    %7136 = vmatpush2.bf16.msra.mxu0 %v6719
    %7137 = vmatprep.subr.bf16.mxu0 0
    %7138 = vmatpush2.bf16.msra.mxu0 %v6718
    %7139 = vmatprep.subr.bf16.mxu0 0
    %7140 = vmatpush2.bf16.msra.mxu0 %v6717
    %7141 = vmatprep.mubr.bf16.mxu0 %v5415
    %7142 = vmatmul.mubr.bf16.gmra.mxu0 %v5411
    %v7143 = vpop.f32.mrf.mxu0
    %v7144 = vadd.f32 0.0, %v7143
    %v7145 = vpop.f32.mrf.mxu0
    %v7146 = vpop.f32.mrf.mxu0
    %v7147 = vpop.f32.mrf.mxu0
    %7148 = vdwg.mxu0
    %7149 = vmatprep.subr.bf16.mxu0 0
    %7150 = vmatpush1.bf16.msra.mxu0 %v6732
    %7151 = vmatprep.subr.bf16.mxu0 0
    %7152 = vmatpush1.bf16.msra.mxu0 %v6731
    %7153 = vmatprep.subr.bf16.mxu0 0
    %7154 = vmatpush1.bf16.msra.mxu0 %v6730
    %7155 = vmatprep.subr.bf16.mxu0 0
    %7156 = vmatpush1.bf16.msra.mxu0 %v6729
    %7157 = vmatprep.subr.bf16.mxu0 0
    %7158 = vmatpush1.bf16.msra.mxu0 %v6728
    %7159 = vmatprep.subr.bf16.mxu0 0
    %7160 = vmatpush1.bf16.msra.mxu0 %v6727
    %7161 = vmatprep.subr.bf16.mxu0 0
    %7162 = vmatpush1.bf16.msra.mxu0 %v6726
    %7163 = vmatprep.subr.bf16.mxu0 0
    %7164 = vmatpush1.bf16.msra.mxu0 %v6725
    %7165 = vmatprep.subr.bf16.mxu0 0
    %7166 = vmatpush2.bf16.msra.mxu0 %v6740
    %7167 = vmatprep.subr.bf16.mxu0 0
    %7168 = vmatpush2.bf16.msra.mxu0 %v6739
    %7169 = vmatprep.subr.bf16.mxu0 0
    %7170 = vmatpush2.bf16.msra.mxu0 %v6738
    %7171 = vmatprep.subr.bf16.mxu0 0
    %7172 = vmatpush2.bf16.msra.mxu0 %v6737
    %7173 = vmatprep.subr.bf16.mxu0 0
    %7174 = vmatpush2.bf16.msra.mxu0 %v6736
    %7175 = vmatprep.subr.bf16.mxu0 0
    %7176 = vmatpush2.bf16.msra.mxu0 %v6735
    %7177 = vmatprep.subr.bf16.mxu0 0
    %7178 = vmatpush2.bf16.msra.mxu0 %v6734
    %7179 = vmatprep.subr.bf16.mxu0 0
    %7180 = vmatpush2.bf16.msra.mxu0 %v6733
    %7181 = vmatprep.mubr.bf16.mxu0 %v5423
    %7182 = vmatmul.mubr.bf16.gmra.mxu0 %v5419
    %v7183 = vpop.f32.mrf.mxu0
    %v7184 = vadd.f32 %v7144, %v7183
    %v7185 = vpop.f32.mrf.mxu0
    %v7186 = vpop.f32.mrf.mxu0
    %v7187 = vpop.f32.mrf.mxu0
    %7188 = vdwg.mxu0
    %7189 = vmatprep.subr.bf16.mxu0 0
    %7190 = vmatpush1.bf16.msra.mxu0 %v6748
    %7191 = vmatprep.subr.bf16.mxu0 0
    %7192 = vmatpush1.bf16.msra.mxu0 %v6747
    %7193 = vmatprep.subr.bf16.mxu0 0
    %7194 = vmatpush1.bf16.msra.mxu0 %v6746
    %7195 = vmatprep.subr.bf16.mxu0 0
    %7196 = vmatpush1.bf16.msra.mxu0 %v6745
    %7197 = vmatprep.subr.bf16.mxu0 0
    %7198 = vmatpush1.bf16.msra.mxu0 %v6744
    %7199 = vmatprep.subr.bf16.mxu0 0
    %7200 = vmatpush1.bf16.msra.mxu0 %v6743
    %7201 = vmatprep.subr.bf16.mxu0 0
    %7202 = vmatpush1.bf16.msra.mxu0 %v6742
    %7203 = vmatprep.subr.bf16.mxu0 0
    %7204 = vmatpush1.bf16.msra.mxu0 %v6741
    %7205 = vmatprep.subr.bf16.mxu0 0
    %7206 = vmatpush2.bf16.msra.mxu0 %v6756
    %7207 = vmatprep.subr.bf16.mxu0 0
    %7208 = vmatpush2.bf16.msra.mxu0 %v6755
    %7209 = vmatprep.subr.bf16.mxu0 0
    %7210 = vmatpush2.bf16.msra.mxu0 %v6754
    %7211 = vmatprep.subr.bf16.mxu0 0
    %7212 = vmatpush2.bf16.msra.mxu0 %v6753
    %7213 = vmatprep.subr.bf16.mxu0 0
    %7214 = vmatpush2.bf16.msra.mxu0 %v6752
    %7215 = vmatprep.subr.bf16.mxu0 0
    %7216 = vmatpush2.bf16.msra.mxu0 %v6751
    %7217 = vmatprep.subr.bf16.mxu0 0
    %7218 = vmatpush2.bf16.msra.mxu0 %v6750
    %7219 = vmatprep.subr.bf16.mxu0 0
    %7220 = vmatpush2.bf16.msra.mxu0 %v6749
    %7221 = vmatprep.mubr.bf16.mxu0 %v5431
    %7222 = vmatmul.mubr.bf16.gmra.mxu0 %v5427
    %v7223 = vpop.f32.mrf.mxu0
    %v7224 = vadd.f32 %v7184, %v7223
    %v7225 = vpop.f32.mrf.mxu0
    %v7226 = vpop.f32.mrf.mxu0
    %v7227 = vpop.f32.mrf.mxu0
    %7228 = vdwg.mxu0
    %7229 = vmatprep.subr.bf16.mxu0 0
    %7230 = vmatpush1.bf16.msra.mxu0 %v6764
    %7231 = vmatprep.subr.bf16.mxu0 0
    %7232 = vmatpush1.bf16.msra.mxu0 %v6763
    %7233 = vmatprep.subr.bf16.mxu0 0
    %7234 = vmatpush1.bf16.msra.mxu0 %v6762
    %7235 = vmatprep.subr.bf16.mxu0 0
    %7236 = vmatpush1.bf16.msra.mxu0 %v6761
    %7237 = vmatprep.subr.bf16.mxu0 0
    %7238 = vmatpush1.bf16.msra.mxu0 %v6760
    %7239 = vmatprep.subr.bf16.mxu0 0
    %7240 = vmatpush1.bf16.msra.mxu0 %v6759
    %7241 = vmatprep.subr.bf16.mxu0 0
    %7242 = vmatpush1.bf16.msra.mxu0 %v6758
    %7243 = vmatprep.subr.bf16.mxu0 0
    %7244 = vmatpush1.bf16.msra.mxu0 %v6757
    %7245 = vmatprep.subr.bf16.mxu0 0
    %7246 = vmatpush2.bf16.msra.mxu0 %v6772
    %7247 = vmatprep.subr.bf16.mxu0 0
    %7248 = vmatpush2.bf16.msra.mxu0 %v6771
    %7249 = vmatprep.subr.bf16.mxu0 0
    %7250 = vmatpush2.bf16.msra.mxu0 %v6770
    %7251 = vmatprep.subr.bf16.mxu0 0
    %7252 = vmatpush2.bf16.msra.mxu0 %v6769
    %7253 = vmatprep.subr.bf16.mxu0 0
    %7254 = vmatpush2.bf16.msra.mxu0 %v6768
    %7255 = vmatprep.subr.bf16.mxu0 0
    %7256 = vmatpush2.bf16.msra.mxu0 %v6767
    %7257 = vmatprep.subr.bf16.mxu0 0
    %7258 = vmatpush2.bf16.msra.mxu0 %v6766
    %7259 = vmatprep.subr.bf16.mxu0 0
    %7260 = vmatpush2.bf16.msra.mxu0 %v6765
    %7261 = vmatprep.mubr.bf16.mxu0 %v5439
    %7262 = vmatmul.mubr.bf16.gmra.mxu0 %v5435
    %v7263 = vpop.f32.mrf.mxu0
    %v7264 = vadd.f32 %v7224, %v7263
    %v7265 = vpop.f32.mrf.mxu0
    %v7266 = vpop.f32.mrf.mxu0
    %v7267 = vpop.f32.mrf.mxu0
    %7268 = vdwg.mxu0
    %7269 = vmatprep.subr.bf16.mxu0 0
    %7270 = vmatpush1.bf16.msra.mxu0 %v6780
    %7271 = vmatprep.subr.bf16.mxu0 0
    %7272 = vmatpush1.bf16.msra.mxu0 %v6779
    %7273 = vmatprep.subr.bf16.mxu0 0
    %7274 = vmatpush1.bf16.msra.mxu0 %v6778
    %7275 = vmatprep.subr.bf16.mxu0 0
    %7276 = vmatpush1.bf16.msra.mxu0 %v6777
    %7277 = vmatprep.subr.bf16.mxu0 0
    %7278 = vmatpush1.bf16.msra.mxu0 %v6776
    %7279 = vmatprep.subr.bf16.mxu0 0
    %7280 = vmatpush1.bf16.msra.mxu0 %v6775
    %7281 = vmatprep.subr.bf16.mxu0 0
    %7282 = vmatpush1.bf16.msra.mxu0 %v6774
    %7283 = vmatprep.subr.bf16.mxu0 0
    %7284 = vmatpush1.bf16.msra.mxu0 %v6773
    %7285 = vmatprep.subr.bf16.mxu0 0
    %7286 = vmatpush2.bf16.msra.mxu0 %v6788
    %7287 = vmatprep.subr.bf16.mxu0 0
    %7288 = vmatpush2.bf16.msra.mxu0 %v6787
    %7289 = vmatprep.subr.bf16.mxu0 0
    %7290 = vmatpush2.bf16.msra.mxu0 %v6786
    %7291 = vmatprep.subr.bf16.mxu0 0
    %7292 = vmatpush2.bf16.msra.mxu0 %v6785
    %7293 = vmatprep.subr.bf16.mxu0 0
    %7294 = vmatpush2.bf16.msra.mxu0 %v6784
    %7295 = vmatprep.subr.bf16.mxu0 0
    %7296 = vmatpush2.bf16.msra.mxu0 %v6783
    %7297 = vmatprep.subr.bf16.mxu0 0
    %7298 = vmatpush2.bf16.msra.mxu0 %v6782
    %7299 = vmatprep.subr.bf16.mxu0 0
    %7300 = vmatpush2.bf16.msra.mxu0 %v6781
    %7301 = vmatprep.mubr.bf16.mxu0 %v5447
    %7302 = vmatmul.mubr.bf16.gmra.mxu0 %v5443
    %v7303 = vpop.f32.mrf.mxu0
    %v7304 = vadd.f32 %v7264, %v7303
    %v7305 = vpop.f32.mrf.mxu0
    %v7306 = vpop.f32.mrf.mxu0
    %v7307 = vpop.f32.mrf.mxu0
    %7308 = vdwg.mxu0
    %7309 = vmatprep.subr.bf16.mxu0 0
    %7310 = vmatpush1.bf16.msra.mxu0 %v6796
    %7311 = vmatprep.subr.bf16.mxu0 0
    %7312 = vmatpush1.bf16.msra.mxu0 %v6795
    %7313 = vmatprep.subr.bf16.mxu0 0
    %7314 = vmatpush1.bf16.msra.mxu0 %v6794
    %7315 = vmatprep.subr.bf16.mxu0 0
    %7316 = vmatpush1.bf16.msra.mxu0 %v6793
    %7317 = vmatprep.subr.bf16.mxu0 0
    %7318 = vmatpush1.bf16.msra.mxu0 %v6792
    %7319 = vmatprep.subr.bf16.mxu0 0
    %7320 = vmatpush1.bf16.msra.mxu0 %v6791
    %7321 = vmatprep.subr.bf16.mxu0 0
    %7322 = vmatpush1.bf16.msra.mxu0 %v6790
    %7323 = vmatprep.subr.bf16.mxu0 0
    %7324 = vmatpush1.bf16.msra.mxu0 %v6789
    %7325 = vmatprep.subr.bf16.mxu0 0
    %7326 = vmatpush2.bf16.msra.mxu0 %v6804
    %7327 = vmatprep.subr.bf16.mxu0 0
    %7328 = vmatpush2.bf16.msra.mxu0 %v6803
    %7329 = vmatprep.subr.bf16.mxu0 0
    %7330 = vmatpush2.bf16.msra.mxu0 %v6802
    %7331 = vmatprep.subr.bf16.mxu0 0
    %7332 = vmatpush2.bf16.msra.mxu0 %v6801
    %7333 = vmatprep.subr.bf16.mxu0 0
    %7334 = vmatpush2.bf16.msra.mxu0 %v6800
    %7335 = vmatprep.subr.bf16.mxu0 0
    %7336 = vmatpush2.bf16.msra.mxu0 %v6799
    %7337 = vmatprep.subr.bf16.mxu0 0
    %7338 = vmatpush2.bf16.msra.mxu0 %v6798
    %7339 = vmatprep.subr.bf16.mxu0 0
    %7340 = vmatpush2.bf16.msra.mxu0 %v6797
    %7341 = vmatprep.mubr.bf16.mxu0 %v5455
    %7342 = vmatmul.mubr.bf16.gmra.mxu0 %v5451
    %v7343 = vpop.f32.mrf.mxu0
    %v7344 = vadd.f32 %v7304, %v7343
    %v7345 = vpop.f32.mrf.mxu0
    %v7346 = vpop.f32.mrf.mxu0
    %v7347 = vpop.f32.mrf.mxu0
    %7348 = vdwg.mxu0
    %7349 = vmatprep.subr.bf16.mxu0 0
    %7350 = vmatpush1.bf16.msra.mxu0 %v6812
    %7351 = vmatprep.subr.bf16.mxu0 0
    %7352 = vmatpush1.bf16.msra.mxu0 %v6811
    %7353 = vmatprep.subr.bf16.mxu0 0
    %7354 = vmatpush1.bf16.msra.mxu0 %v6810
    %7355 = vmatprep.subr.bf16.mxu0 0
    %7356 = vmatpush1.bf16.msra.mxu0 %v6809
    %7357 = vmatprep.subr.bf16.mxu0 0
    %7358 = vmatpush1.bf16.msra.mxu0 %v6808
    %7359 = vmatprep.subr.bf16.mxu0 0
    %7360 = vmatpush1.bf16.msra.mxu0 %v6807
    %7361 = vmatprep.subr.bf16.mxu0 0
    %7362 = vmatpush1.bf16.msra.mxu0 %v6806
    %7363 = vmatprep.subr.bf16.mxu0 0
    %7364 = vmatpush1.bf16.msra.mxu0 %v6805
    %7365 = vmatprep.subr.bf16.mxu0 0
    %7366 = vmatpush2.bf16.msra.mxu0 %v6820
    %7367 = vmatprep.subr.bf16.mxu0 0
    %7368 = vmatpush2.bf16.msra.mxu0 %v6819
    %7369 = vmatprep.subr.bf16.mxu0 0
    %7370 = vmatpush2.bf16.msra.mxu0 %v6818
    %7371 = vmatprep.subr.bf16.mxu0 0
    %7372 = vmatpush2.bf16.msra.mxu0 %v6817
    %7373 = vmatprep.subr.bf16.mxu0 0
    %7374 = vmatpush2.bf16.msra.mxu0 %v6816
    %7375 = vmatprep.subr.bf16.mxu0 0
    %7376 = vmatpush2.bf16.msra.mxu0 %v6815
    %7377 = vmatprep.subr.bf16.mxu0 0
    %7378 = vmatpush2.bf16.msra.mxu0 %v6814
    %7379 = vmatprep.subr.bf16.mxu0 0
    %7380 = vmatpush2.bf16.msra.mxu0 %v6813
    %7381 = vmatprep.mubr.bf16.mxu0 %v5463
    %7382 = vmatmul.mubr.bf16.gmra.mxu0 %v5459
    %v7383 = vpop.f32.mrf.mxu0
    %v7384 = vadd.f32 %v7344, %v7383
    %v7385 = vpop.f32.mrf.mxu0
    %v7386 = vpop.f32.mrf.mxu0
    %v7387 = vpop.f32.mrf.mxu0
    %7388 = vdwg.mxu0
    %7389 = vmatprep.subr.bf16.mxu0 0
    %7390 = vmatpush1.bf16.msra.mxu0 %v6828
    %7391 = vmatprep.subr.bf16.mxu0 0
    %7392 = vmatpush1.bf16.msra.mxu0 %v6827
    %7393 = vmatprep.subr.bf16.mxu0 0
    %7394 = vmatpush1.bf16.msra.mxu0 %v6826
    %7395 = vmatprep.subr.bf16.mxu0 0
    %7396 = vmatpush1.bf16.msra.mxu0 %v6825
    %7397 = vmatprep.subr.bf16.mxu0 0
    %7398 = vmatpush1.bf16.msra.mxu0 %v6824
    %7399 = vmatprep.subr.bf16.mxu0 0
    %7400 = vmatpush1.bf16.msra.mxu0 %v6823
    %7401 = vmatprep.subr.bf16.mxu0 0
    %7402 = vmatpush1.bf16.msra.mxu0 %v6822
    %7403 = vmatprep.subr.bf16.mxu0 0
    %7404 = vmatpush1.bf16.msra.mxu0 %v6821
    %7405 = vmatprep.subr.bf16.mxu0 0
    %7406 = vmatpush2.bf16.msra.mxu0 %v6836
    %7407 = vmatprep.subr.bf16.mxu0 0
    %7408 = vmatpush2.bf16.msra.mxu0 %v6835
    %7409 = vmatprep.subr.bf16.mxu0 0
    %7410 = vmatpush2.bf16.msra.mxu0 %v6834
    %7411 = vmatprep.subr.bf16.mxu0 0
    %7412 = vmatpush2.bf16.msra.mxu0 %v6833
    %7413 = vmatprep.subr.bf16.mxu0 0
    %7414 = vmatpush2.bf16.msra.mxu0 %v6832
    %7415 = vmatprep.subr.bf16.mxu0 0
    %7416 = vmatpush2.bf16.msra.mxu0 %v6831
    %7417 = vmatprep.subr.bf16.mxu0 0
    %7418 = vmatpush2.bf16.msra.mxu0 %v6830
    %7419 = vmatprep.subr.bf16.mxu0 0
    %7420 = vmatpush2.bf16.msra.mxu0 %v6829
    %7421 = vmatprep.mubr.bf16.mxu0 %v5471
    %7422 = vmatmul.mubr.bf16.gmra.mxu0 %v5467
    %v7423 = vpop.f32.mrf.mxu0
    %v7424 = vadd.f32 %v7384, %v7423
    %v7425 = vpop.f32.mrf.mxu0
    %v7426 = vpop.f32.mrf.mxu0
    %v7427 = vpop.f32.mrf.mxu0
    %7428 = vdwg.mxu0
    %7429 = vmatprep.subr.bf16.mxu0 0
    %7430 = vmatpush1.bf16.msra.mxu0 %v6844
    %7431 = vmatprep.subr.bf16.mxu0 0
    %7432 = vmatpush1.bf16.msra.mxu0 %v6843
    %7433 = vmatprep.subr.bf16.mxu0 0
    %7434 = vmatpush1.bf16.msra.mxu0 %v6842
    %7435 = vmatprep.subr.bf16.mxu0 0
    %7436 = vmatpush1.bf16.msra.mxu0 %v6841
    %7437 = vmatprep.subr.bf16.mxu0 0
    %7438 = vmatpush1.bf16.msra.mxu0 %v6840
    %7439 = vmatprep.subr.bf16.mxu0 0
    %7440 = vmatpush1.bf16.msra.mxu0 %v6839
    %7441 = vmatprep.subr.bf16.mxu0 0
    %7442 = vmatpush1.bf16.msra.mxu0 %v6838
    %7443 = vmatprep.subr.bf16.mxu0 0
    %7444 = vmatpush1.bf16.msra.mxu0 %v6837
    %7445 = vmatprep.subr.bf16.mxu0 0
    %7446 = vmatpush2.bf16.msra.mxu0 %v6852
    %7447 = vmatprep.subr.bf16.mxu0 0
    %7448 = vmatpush2.bf16.msra.mxu0 %v6851
    %7449 = vmatprep.subr.bf16.mxu0 0
    %7450 = vmatpush2.bf16.msra.mxu0 %v6850
    %7451 = vmatprep.subr.bf16.mxu0 0
    %7452 = vmatpush2.bf16.msra.mxu0 %v6849
    %7453 = vmatprep.subr.bf16.mxu0 0
    %7454 = vmatpush2.bf16.msra.mxu0 %v6848
    %7455 = vmatprep.subr.bf16.mxu0 0
    %7456 = vmatpush2.bf16.msra.mxu0 %v6847
    %7457 = vmatprep.subr.bf16.mxu0 0
    %7458 = vmatpush2.bf16.msra.mxu0 %v6846
    %7459 = vmatprep.subr.bf16.mxu0 0
    %7460 = vmatpush2.bf16.msra.mxu0 %v6845
    %7461 = vmatprep.mubr.bf16.mxu0 %v5479
    %7462 = vmatmul.mubr.bf16.gmra.mxu0 %v5475
    %v7463 = vpop.f32.mrf.mxu0
    %v7464 = vadd.f32 %v7424, %v7463
    %v7465 = vpop.f32.mrf.mxu0
    %v7466 = vpop.f32.mrf.mxu0
    %v7467 = vpop.f32.mrf.mxu0
    %7468 = vdwg.mxu0
    %7469 = vmatprep.subr.bf16.mxu0 0
    %7470 = vmatpush1.bf16.msra.mxu0 %v6860
    %7471 = vmatprep.subr.bf16.mxu0 0
    %7472 = vmatpush1.bf16.msra.mxu0 %v6859
    %7473 = vmatprep.subr.bf16.mxu0 0
    %7474 = vmatpush1.bf16.msra.mxu0 %v6858
    %7475 = vmatprep.subr.bf16.mxu0 0
    %7476 = vmatpush1.bf16.msra.mxu0 %v6857
    %7477 = vmatprep.subr.bf16.mxu0 0
    %7478 = vmatpush1.bf16.msra.mxu0 %v6856
    %7479 = vmatprep.subr.bf16.mxu0 0
    %7480 = vmatpush1.bf16.msra.mxu0 %v6855
    %7481 = vmatprep.subr.bf16.mxu0 0
    %7482 = vmatpush1.bf16.msra.mxu0 %v6854
    %7483 = vmatprep.subr.bf16.mxu0 0
    %7484 = vmatpush1.bf16.msra.mxu0 %v6853
    %7485 = vmatprep.subr.bf16.mxu0 0
    %7486 = vmatpush2.bf16.msra.mxu0 %v6868
    %7487 = vmatprep.subr.bf16.mxu0 0
    %7488 = vmatpush2.bf16.msra.mxu0 %v6867
    %7489 = vmatprep.subr.bf16.mxu0 0
    %7490 = vmatpush2.bf16.msra.mxu0 %v6866
    %7491 = vmatprep.subr.bf16.mxu0 0
    %7492 = vmatpush2.bf16.msra.mxu0 %v6865
    %7493 = vmatprep.subr.bf16.mxu0 0
    %7494 = vmatpush2.bf16.msra.mxu0 %v6864
    %7495 = vmatprep.subr.bf16.mxu0 0
    %7496 = vmatpush2.bf16.msra.mxu0 %v6863
    %7497 = vmatprep.subr.bf16.mxu0 0
    %7498 = vmatpush2.bf16.msra.mxu0 %v6862
    %7499 = vmatprep.subr.bf16.mxu0 0
    %7500 = vmatpush2.bf16.msra.mxu0 %v6861
    %7501 = vmatprep.mubr.bf16.mxu0 %v5487
    %7502 = vmatmul.mubr.bf16.gmra.mxu0 %v5483
    %v7503 = vpop.f32.mrf.mxu0
    %v7504 = vadd.f32 %v7464, %v7503
    %v7505 = vpop.f32.mrf.mxu0
    %v7506 = vpop.f32.mrf.mxu0
    %v7507 = vpop.f32.mrf.mxu0
    %7508 = vdwg.mxu0
    %7509 = vmatprep.subr.bf16.mxu0 0
    %7510 = vmatpush1.bf16.msra.mxu0 %v6876
    %7511 = vmatprep.subr.bf16.mxu0 0
    %7512 = vmatpush1.bf16.msra.mxu0 %v6875
    %7513 = vmatprep.subr.bf16.mxu0 0
    %7514 = vmatpush1.bf16.msra.mxu0 %v6874
    %7515 = vmatprep.subr.bf16.mxu0 0
    %7516 = vmatpush1.bf16.msra.mxu0 %v6873
    %7517 = vmatprep.subr.bf16.mxu0 0
    %7518 = vmatpush1.bf16.msra.mxu0 %v6872
    %7519 = vmatprep.subr.bf16.mxu0 0
    %7520 = vmatpush1.bf16.msra.mxu0 %v6871
    %7521 = vmatprep.subr.bf16.mxu0 0
    %7522 = vmatpush1.bf16.msra.mxu0 %v6870
    %7523 = vmatprep.subr.bf16.mxu0 0
    %7524 = vmatpush1.bf16.msra.mxu0 %v6869
    %7525 = vmatprep.subr.bf16.mxu0 0
    %7526 = vmatpush2.bf16.msra.mxu0 %v6884
    %7527 = vmatprep.subr.bf16.mxu0 0
    %7528 = vmatpush2.bf16.msra.mxu0 %v6883
    %7529 = vmatprep.subr.bf16.mxu0 0
    %7530 = vmatpush2.bf16.msra.mxu0 %v6882
    %7531 = vmatprep.subr.bf16.mxu0 0
    %7532 = vmatpush2.bf16.msra.mxu0 %v6881
    %7533 = vmatprep.subr.bf16.mxu0 0
    %7534 = vmatpush2.bf16.msra.mxu0 %v6880
    %7535 = vmatprep.subr.bf16.mxu0 0
    %7536 = vmatpush2.bf16.msra.mxu0 %v6879
    %7537 = vmatprep.subr.bf16.mxu0 0
    %7538 = vmatpush2.bf16.msra.mxu0 %v6878
    %7539 = vmatprep.subr.bf16.mxu0 0
    %7540 = vmatpush2.bf16.msra.mxu0 %v6877
    %7541 = vmatprep.mubr.bf16.mxu0 %v5495
    %7542 = vmatmul.mubr.bf16.gmra.mxu0 %v5491
    %v7543 = vpop.f32.mrf.mxu0
    %v7544 = vadd.f32 %v7504, %v7543
    %v7545 = vpop.f32.mrf.mxu0
    %v7546 = vpop.f32.mrf.mxu0
    %v7547 = vpop.f32.mrf.mxu0
    %7548 = vdwg.mxu0
    %7549 = vmatprep.subr.bf16.mxu0 0
    %7550 = vmatpush1.bf16.msra.mxu0 %v6892
    %7551 = vmatprep.subr.bf16.mxu0 0
    %7552 = vmatpush1.bf16.msra.mxu0 %v6891
    %7553 = vmatprep.subr.bf16.mxu0 0
    %7554 = vmatpush1.bf16.msra.mxu0 %v6890
    %7555 = vmatprep.subr.bf16.mxu0 0
    %7556 = vmatpush1.bf16.msra.mxu0 %v6889
    %7557 = vmatprep.subr.bf16.mxu0 0
    %7558 = vmatpush1.bf16.msra.mxu0 %v6888
    %7559 = vmatprep.subr.bf16.mxu0 0
    %7560 = vmatpush1.bf16.msra.mxu0 %v6887
    %7561 = vmatprep.subr.bf16.mxu0 0
    %7562 = vmatpush1.bf16.msra.mxu0 %v6886
    %7563 = vmatprep.subr.bf16.mxu0 0
    %7564 = vmatpush1.bf16.msra.mxu0 %v6885
    %7565 = vmatprep.subr.bf16.mxu0 0
    %7566 = vmatpush2.bf16.msra.mxu0 %v6900
    %7567 = vmatprep.subr.bf16.mxu0 0
    %7568 = vmatpush2.bf16.msra.mxu0 %v6899
    %7569 = vmatprep.subr.bf16.mxu0 0
    %7570 = vmatpush2.bf16.msra.mxu0 %v6898
    %7571 = vmatprep.subr.bf16.mxu0 0
    %7572 = vmatpush2.bf16.msra.mxu0 %v6897
    %7573 = vmatprep.subr.bf16.mxu0 0
    %7574 = vmatpush2.bf16.msra.mxu0 %v6896
    %7575 = vmatprep.subr.bf16.mxu0 0
    %7576 = vmatpush2.bf16.msra.mxu0 %v6895
    %7577 = vmatprep.subr.bf16.mxu0 0
    %7578 = vmatpush2.bf16.msra.mxu0 %v6894
    %7579 = vmatprep.subr.bf16.mxu0 0
    %7580 = vmatpush2.bf16.msra.mxu0 %v6893
    %7581 = vmatprep.mubr.bf16.mxu0 %v5503
    %7582 = vmatmul.mubr.bf16.gmra.mxu0 %v5499
    %v7583 = vpop.f32.mrf.mxu0
    %v7584 = vadd.f32 %v7544, %v7583
    %v7585 = vpop.f32.mrf.mxu0
    %v7586 = vpop.f32.mrf.mxu0
    %v7587 = vpop.f32.mrf.mxu0
    %7588 = vdwg.mxu0
    %7589 = vmatprep.subr.bf16.mxu0 0
    %7590 = vmatpush1.bf16.msra.mxu0 %v6908
    %7591 = vmatprep.subr.bf16.mxu0 0
    %7592 = vmatpush1.bf16.msra.mxu0 %v6907
    %7593 = vmatprep.subr.bf16.mxu0 0
    %7594 = vmatpush1.bf16.msra.mxu0 %v6906
    %7595 = vmatprep.subr.bf16.mxu0 0
    %7596 = vmatpush1.bf16.msra.mxu0 %v6905
    %7597 = vmatprep.subr.bf16.mxu0 0
    %7598 = vmatpush1.bf16.msra.mxu0 %v6904
    %7599 = vmatprep.subr.bf16.mxu0 0
    %7600 = vmatpush1.bf16.msra.mxu0 %v6903
    %7601 = vmatprep.subr.bf16.mxu0 0
    %7602 = vmatpush1.bf16.msra.mxu0 %v6902
    %7603 = vmatprep.subr.bf16.mxu0 0
    %7604 = vmatpush1.bf16.msra.mxu0 %v6901
    %7605 = vmatprep.subr.bf16.mxu0 0
    %7606 = vmatpush2.bf16.msra.mxu0 0
    %7607 = vmatprep.subr.bf16.mxu0 0
    %7608 = vmatpush2.bf16.msra.mxu0 0
    %7609 = vmatprep.subr.bf16.mxu0 0
    %7610 = vmatpush2.bf16.msra.mxu0 0
    %7611 = vmatprep.subr.bf16.mxu0 0
    %7612 = vmatpush2.bf16.msra.mxu0 0
    %7613 = vmatprep.subr.bf16.mxu0 0
    %7614 = vmatpush2.bf16.msra.mxu0 0
    %7615 = vmatprep.subr.bf16.mxu0 0
    %7616 = vmatpush2.bf16.msra.mxu0 0
    %7617 = vmatprep.subr.bf16.mxu0 0
    %7618 = vmatpush2.bf16.msra.mxu0 0
    %7619 = vmatprep.subr.bf16.mxu0 0
    %7620 = vmatpush2.bf16.msra.mxu0 0
    %7621 = vmatprep.mubr.bf16.mxu0 0
    %7622 = vmatmul.mubr.bf16.gmra.mxu0 %v5507
    %v7623 = vpop.f32.mrf.mxu0
    %v7624 = vadd.f32 %v7584, %v7623
    %v7625 = vpop.f32.mrf.mxu0
    %v7626 = vpop.f32.mrf.mxu0
    %v7627 = vpop.f32.mrf.mxu0
    %7628 = vdwg.mxu0
    %v7629 = vadd.f32 %v3851, %v7624
    %v7630 = vmax.f32 %v7629, 0.0
    %v7631 = vpack.c.bf16 %v7630, %v7630
    %v7632 = vld [vmem:[%s9] sm:$0xf]
    %v7633 = vld [vmem:[%s9 + $0x4] sm:$0xf]
    %v7634 = vld [vmem:[%s9 + $0x8] sm:$0xf]
    %v7635 = vld [vmem:[%s9 + $0xc] sm:$0xf]
    %v7636 = vld [vmem:[%s9 + $0x10] sm:$0xf]
    %v7637 = vld [vmem:[%s9 + $0x14] sm:$0xf]
    %v7638 = vld [vmem:[%s9 + $0x18] sm:$0xf]
    %v7639 = vld [vmem:[%s9 + $0x1c] sm:$0xf]
    %v7640 = vld [vmem:[%s9 + $0x20] sm:$0xf]
    %v7641 = vld [vmem:[%s9 + $0x24] sm:$0xf]
    %v7642 = vld [vmem:[%s9 + $0x28] sm:$0xf]
    %v7643 = vld [vmem:[%s9 + $0x2c] sm:$0xf]
    %v7644 = vld [vmem:[%s9 + $0x30] sm:$0xf]
    %v7645 = vld [vmem:[%s9 + $0x34] sm:$0xf]
    %v7646 = vld [vmem:[%s9 + $0x38] sm:$0xf]
    %v7647 = vld [vmem:[%s9 + $0x3c] sm:$0xf]
    %v7648 = vld [vmem:[%s10] sm:$0x1]
    %v7650 = vlaneseq
    %v7651 = vshrl.u32 %v7650, 7
    %v7652 = vsub.s32 0, %v7651
    %v7653 = vrot.slane %v7648, %v7652
    %v7671 = vunpack.c.l.b16 %v7632
    %v7672 = vunpack.c.l.b16 %v7633
    %v7673 = vunpack.c.l.b16 %v7634
    %v7674 = vunpack.c.l.b16 %v7635
    %v7675 = vunpack.c.l.b16 %v7636
    %v7676 = vunpack.c.l.b16 %v7637
    %v7677 = vunpack.c.l.b16 %v7638
    %v7678 = vunpack.c.l.b16 %v7639
    %v7679 = vunpack.c.l.b16 %v7640
    %v7680 = vunpack.c.l.b16 %v7641
    %v7681 = vunpack.c.l.b16 %v7642
    %v7682 = vunpack.c.l.b16 %v7643
    %v7683 = vunpack.c.l.b16 %v7644
    %v7684 = vunpack.c.l.b16 %v7645
    %v7685 = vunpack.c.l.b16 %v7646
    %v7686 = vunpack.c.l.b16 %v7647
    %v7687 = vpack.c.b16 %v7672, %v7671
    %v7688 = vpack.c.b16 %v7674, %v7673
    %v7689 = vpack.c.b16 %v7676, %v7675
    %v7690 = vpack.c.b16 %v7678, %v7677
    %v7691 = vpack.c.b16 %v7680, %v7679
    %v7692 = vpack.c.b16 %v7682, %v7681
    %v7693 = vpack.c.b16 %v7684, %v7683
    %v7694 = vpack.c.b16 %v7686, %v7685
    %7703 = vmatprep.subr.bf16.mxu0 0
    %7704 = vmatpush1.bf16.msra.mxu0 %v7694
    %7705 = vmatprep.subr.bf16.mxu0 0
    %7706 = vmatpush1.bf16.msra.mxu0 %v7693
    %7707 = vmatprep.subr.bf16.mxu0 0
    %7708 = vmatpush1.bf16.msra.mxu0 %v7692
    %7709 = vmatprep.subr.bf16.mxu0 0
    %7710 = vmatpush1.bf16.msra.mxu0 %v7691
    %7711 = vmatprep.subr.bf16.mxu0 0
    %7712 = vmatpush1.bf16.msra.mxu0 %v7690
    %7713 = vmatprep.subr.bf16.mxu0 0
    %7714 = vmatpush1.bf16.msra.mxu0 %v7689
    %7715 = vmatprep.subr.bf16.mxu0 0
    %7716 = vmatpush1.bf16.msra.mxu0 %v7688
    %7717 = vmatprep.subr.bf16.mxu0 0
    %7718 = vmatpush1.bf16.msra.mxu0 %v7687
    %7719 = vmatprep.subr.bf16.mxu0 0
    %7720 = vmatpush2.bf16.msra.mxu0 0
    %7721 = vmatprep.subr.bf16.mxu0 0
    %7722 = vmatpush2.bf16.msra.mxu0 0
    %7723 = vmatprep.subr.bf16.mxu0 0
    %7724 = vmatpush2.bf16.msra.mxu0 0
    %7725 = vmatprep.subr.bf16.mxu0 0
    %7726 = vmatpush2.bf16.msra.mxu0 0
    %7727 = vmatprep.subr.bf16.mxu0 0
    %7728 = vmatpush2.bf16.msra.mxu0 0
    %7729 = vmatprep.subr.bf16.mxu0 0
    %7730 = vmatpush2.bf16.msra.mxu0 0
    %7731 = vmatprep.subr.bf16.mxu0 0
    %7732 = vmatpush2.bf16.msra.mxu0 0
    %7733 = vmatprep.subr.bf16.mxu0 0
    %7734 = vmatpush2.bf16.msra.mxu0 0
    %7735 = vmatprep.mubr.bf16.mxu0 0
    %7736 = vmatmul.mubr.bf16.gmra.mxu0 %v7631
    %v7737 = vpop.f32.mrf.mxu0
    %v7738 = vadd.f32 %v7653, %v7737
    %v7739 = vpop.f32.mrf.mxu0
    %v7740 = vpop.f32.mrf.mxu0
    %v7741 = vpop.f32.mrf.mxu0
    %7742 = vdwg.mxu0
    %v7743 = vmax.f32 %v7738, 0.0
    %v7744 = vld [vmem:[%s11] sm:$0x1]
    %v7746 = vlaneseq
    %v7747 = vshrl.u32 %v7746, 7
    %v7748 = vsub.s32 0, %v7747
    %v7749 = vrot.slane %v7744, %v7748
    %v7751 = vmul.f32 %v7743, %v7749
    %vm7752 = vcmask 517120
    %v7753 = vsel %vm7752, %v7751, 0.0
    %7754 = vadd.xlane.f32.xlu0 %v7753
    %v7755 = vpop.xlane.xlu0 %7754
    %v7756 = vld [vmem:[#allocation2] sm:$0x1]
    %v7758 = vlaneseq
    %v7759 = vshrl.u32 %v7758, 7
    %v7760 = vsub.s32 0, %v7759
    %v7761 = vrot.slane %v7756, %v7760
    %v7763 = vadd.f32 %v7755, %v7761
    %v7764 = vxor.u32 %v7763, 2147483648
    %v7765 = vmul.f32 %v7764, 1.442695
    %v7766 = vpow.pop %v7765
    %v7767 = vadd.f32 %v7766, 1.0
    %v7768 = vrcp.pop %v7767
    %v7769 = vmul.f32 1.0, %v7768
    %vm7770 = vcmask 1024
    %7771 = vst.msk [vmem:[%s13] sm:$0x3] %vm7770, %v7769
    // Predicated region
    $region58: #{multicnn_forward.1} parent=1 // pred_check
      _
    $region59: #{multicnn_forward.1} parent=1 // pred_check_branch
      %7773 = sbr.rel (0) target = $region61
    $region60: #{multicnn_forward.1} parent=1 // pred_region
      _
    $region61: #{multicnn_forward.1} parent=1 // pred_fallthru
      _
    // Predicated region
    $region62: #{multicnn_forward.1} parent=1 // pred_check
      _
    $region63: #{multicnn_forward.1} parent=1 // pred_check_branch
      %7775 = sbr.rel (0) target = $region65
    $region64: #{multicnn_forward.1} parent=1 // pred_region
      _
    $region65: #{multicnn_forward.1} parent=1 // pred_fallthru
      _
    %7776 = vsyncpa [#allocation4], 1

</llo_original>
